<compile_context>
chip_gen: v7x
topology: tpu7x:2x2x1
jax: 0.10.0
libtpu: 0.0.40
codegen_flags: <defaults>
</compile_context>

<pallas_src>
import jax
import jax.numpy as jnp
from jax import lax
from jax.experimental import pallas as pl
from jax.experimental.pallas import tpu as pltpu


# ----------------------------------------------------------------------------
# Kernel 1: 3x3 "same" conv  +  bias  +  ReLU  +  2x2 max-pool (stride 2)
# grid = (batch, pooled-row blocks).  The padded image block is resident across
# the row-block axis; each step slices its haloed row slab with pl.ds, runs one
# im2col MXU matmul (bf16 in / f32 acc), pools in registers and does a
# lane-dense (rb, Wo*Cout) store.
# ----------------------------------------------------------------------------
def _make_conv_relu_pool_kernel(H, W, Cin, Cout, rb):
    Wo = W // 2
    rows = 2 * rb                       # conv-output rows produced per grid step

    def kernel(xp_ref, w_ref, b_ref, o_ref):
        # xp_ref: (1, H+2, W+2, Cin)  zero-padded input (same block for all row steps)
        # w_ref : (9*Cin, Cout) bf16  conv weight reshaped at init, (dy, dx, ci) order
        # b_ref : (1, Cout)  f32
        # o_ref : (1, rb, Wo*Cout)    lane-dense pooled output row block
        r = pl.program_id(1)
        row0 = pl.multiple_of(r * rows, rows)
        # Haloed row slab for this block: (rows+2, W+2, Cin).
        slab = xp_ref[0, pl.ds(row0, rows + 2), :, :]

        # im2col: one (rows*W, 9*Cin) matmul instead of 9 tiny dots.
        cols = [slab[dy:dy + rows, dx:dx + W, :].reshape(rows * W, Cin)
                for dy in range(3) for dx in range(3)]
        patches = jnp.concatenate(cols, axis=1).astype(jnp.bfloat16)    # (rows*W, 9*Cin)
        acc = jnp.dot(patches, w_ref[...],
                      preferred_element_type=jnp.float32)               # (rows*W, Cout)
        acc = jnp.maximum(acc + b_ref[...], 0.0)                        # bias + ReLU

        # 2x2 max-pool, stride 2 -- reshape/index/max, no per-column concatenation.
        a4 = acc.reshape(rb, 2, W, Cout)
        hp = jnp.maximum(a4[:, 0], a4[:, 1])                            # H-pool -> (rb, W, Cout)
        w4 = hp.reshape(rb, Wo, 2, Cout)
        out = jnp.maximum(w4[:, :, 0, :], w4[:, :, 1, :])               # W-pool -> (rb, Wo, Cout)
        o_ref[...] = out.reshape(1, rb, Wo * Cout)                      # lane-dense store

    return kernel


def _pick_rb(Ho):
    """Pooled rows per grid step: multiple of 8 (f32 sublane tile) or the full Ho."""
    if Ho <= 8:
        return Ho
    best = Ho
    rb = 8
    while rb <= min(16, Ho - 1):        # 8..16 pooled rows per step at real sizes
        if Ho % rb == 0:
            best = rb
        rb += 8
    return best


def conv_relu_pool(x_nhwc, w_mat, b):
    """x_nhwc: (B,H,W,Cin) f32; w_mat: (9*Cin, Cout) bf16; b: (Cout,) -> (B,H//2,W//2,Cout) f32."""
    B, H, W, Cin = x_nhwc.shape
    Cout = w_mat.shape[-1]
    Ho, Wo = H // 2, W // 2
    rb = _pick_rb(Ho)
    n_rb = Ho // rb
    xp = jnp.pad(x_nhwc, ((0, 0), (1, 1), (1, 1), (0, 0)))
    kernel = _make_conv_relu_pool_kernel(H, W, Cin, Cout, rb)
    out = pl.pallas_call(
        kernel,
        out_shape=jax.ShapeDtypeStruct((B, Ho, Wo * Cout), jnp.float32),
        grid_spec=pltpu.PrefetchScalarGridSpec(
            num_scalar_prefetch=0,
            grid=(B, n_rb),
            in_specs=[
                pl.BlockSpec((1, H + 2, W + 2, Cin), lambda b_, r: (b_, 0, 0, 0)),
                pl.BlockSpec((9 * Cin, Cout), lambda b_, r: (0, 0)),
                pl.BlockSpec((1, Cout), lambda b_, r: (0, 0)),
            ],
            out_specs=pl.BlockSpec((1, rb, Wo * Cout), lambda b_, r: (b_, r, 0)),
        ),
        compiler_params=pltpu.CompilerParams(
            dimension_semantics=("parallel", "arbitrary"),
            vmem_limit_bytes=64 * 1024 * 1024),
    )(xp, w_mat, b.reshape(1, Cout))
    # Free (contiguous) reshape back to NHWC for the next layer / flatten.
    return out.reshape(B, Ho, Wo, Cout)


# ----------------------------------------------------------------------------
# Kernel 2: fused fc1 (K-tiled, accumulated) + ReLU + fc2, single pallas_call.
# ----------------------------------------------------------------------------
def _fused_fc_kernel(x_ref, w1_ref, b1_ref, w2_ref, b2_ref, o_ref, acc_ref):
    @pl.when(pl.program_id(0) == 0)
    def _():
        acc_ref[...] = jnp.zeros_like(acc_ref)

    acc_ref[...] += jnp.dot(x_ref[...].astype(jnp.bfloat16), w1_ref[...],
                            preferred_element_type=jnp.float32)

    @pl.when(pl.program_id(0) == pl.num_programs(0) - 1)
    def _():
        h = jnp.maximum(acc_ref[...] + b1_ref[...], 0.0)               # fc1 bias + ReLU
        o_ref[...] = (jnp.dot(h, w2_ref[...],
                              preferred_element_type=jnp.float32)
                      + b2_ref[...])                                   # fc2


def _pick_tk(K, cap=16384):
    """Largest multiple-of-128 divisor of K <= cap (>=2 K-steps when possible)."""
    cap = min(cap, max(128, K // 2))
    best = K                            # fallback: single block (resource hazard for huge odd K)
    t = 128
    while t <= min(K, cap):
        if K % t == 0:
            best = t
        t += 128
    return best


def fused_fc(x, w1, b1, w2, b2):
    B, K = x.shape
    N1 = w1.shape[1]
    N2 = w2.shape[1]
    tk = _pick_tk(K)
    nk = K // tk
    return pl.pallas_call(
        _fused_fc_kernel,
        out_shape=jax.ShapeDtypeStruct((B, N2), jnp.float32),
        grid_spec=pltpu.PrefetchScalarGridSpec(
            num_scalar_prefetch=0,
            grid=(nk,),
            in_specs=[
                pl.BlockSpec((B, tk), lambda k: (0, k)),
                pl.BlockSpec((tk, N1), lambda k: (k, 0)),
                pl.BlockSpec((1, N1), lambda k: (0, 0)),
                pl.BlockSpec((N1, N2), lambda k: (0, 0)),
                pl.BlockSpec((1, N2), lambda k: (0, 0)),
            ],
            out_specs=pl.BlockSpec((B, N2), lambda k: (0, 0)),
            scratch_shapes=[pltpu.VMEM((B, N1), jnp.float32)],
        ),
        compiler_params=pltpu.CompilerParams(
            dimension_semantics=("arbitrary",),
            vmem_limit_bytes=64 * 1024 * 1024),
    )(x, w1, b1.reshape(1, N1), w2, b2.reshape(1, N2))


# ----------------------------------------------------------------------------
# Full forward pass
# ----------------------------------------------------------------------------
@jax.jit
def simple_cnn_forward(x_nchw, rparams):
    x = jnp.transpose(x_nchw, (0, 2, 3, 1))                        # NCHW -> NHWC (input only)
    x = conv_relu_pool(x, rparams["w1m"], rparams["b1"])           # conv1 + relu + pool1
    x = conv_relu_pool(x, rparams["w2m"], rparams["b2"])           # conv2 + relu + pool2
    # NHWC flatten is a free reshape; wfc1 rows were permuted once at init so this
    # matches torch's NCHW `x.view(B, -1)` flatten exactly (no runtime transpose).
    x = x.reshape(x.shape[0], -1)
    return fused_fc(x, rparams["wfc1n"], rparams["bfc1"],
                    rparams["wfc2"], rparams["bfc2"])              # fc1 + relu + fc2 fused


def init_params(key, H, W, num_classes=2):
    """Params in torch-equivalent layout (HWIO conv weights, NCHW-flatten fc1 rows)."""
    ks = jax.random.split(key, 8)

    def unif(k, shape, fan_in):
        bound = 1.0 / (fan_in ** 0.5)
        return jax.random.uniform(k, shape, jnp.float32, -bound, bound)

    fc1_in = 32 * (H // 4) * (W // 4)
    return dict(
        w1=unif(ks[0], (3, 3, 3, 16), 3 * 3 * 3),
        b1=unif(ks[1], (16,), 3 * 3 * 3),
        w2=unif(ks[2], (3, 3, 16, 32), 16 * 3 * 3),
        b2=unif(ks[3], (32,), 16 * 3 * 3),
        wfc1=unif(ks[4], (fc1_in, 128), fc1_in),   # rows in torch (C,H,W) flatten order
        bfc1=unif(ks[5], (128,), fc1_in),
        wfc2=unif(ks[6], (128, num_classes), 128),
        bfc2=unif(ks[7], (num_classes,), 128),
    )


def prepare_params(params, H, W):
    """One-time weight repacking / bf16 casting for the Pallas kernels (not per forward)."""
    C2 = params["w2"].shape[-1]
    Hp, Wp = H // 4, W // 4
    # Conv weights -> (9*Cin, Cout) matching the in-kernel (dy, dx, ci) patch order; bf16.
    w1m = params["w1"].reshape(-1, params["w1"].shape[-1]).astype(jnp.bfloat16)
    w2m = params["w2"].reshape(-1, params["w2"].shape[-1]).astype(jnp.bfloat16)
    # Permute fc1 rows from NCHW-flatten order to NHWC-flatten order; bf16 (halves HBM stream).
    n_hidden = params["wfc1"].shape[-1]
    wfc1n = (params["wfc1"].reshape(C2, Hp, Wp, n_hidden)
             .transpose(1, 2, 0, 3)
             .reshape(Hp * Wp * C2, n_hidden)
             .astype(jnp.bfloat16))
    return dict(w1m=w1m, b1=params["b1"], w2m=w2m, b2=params["b2"],
                wfc1n=wfc1n, bfc1=params["bfc1"],
                wfc2=params["wfc2"], bfc2=params["bfc2"])


# Pure-JAX reference for correctness checking (no Pallas), torch-equivalent layout.
def _reference_forward(x_nchw, params):
    def conv(x, w, b):
        y = lax.conv_general_dilated(
            x, w, window_strides=(1, 1), padding="SAME",
            dimension_numbers=("NCHW", "HWIO", "NCHW"))
        return jnp.maximum(y + b[None, :, None, None], 0.0)

    def pool(x):
        return lax.reduce_window(x, -jnp.inf, lax.max,
                                 window_dimensions=(1, 1, 2, 2),
                                 window_strides=(1, 1, 2, 2), padding="VALID")

    x = pool(conv(x_nchw, params["w1"], params["b1"]))
    x = pool(conv(x, params["w2"], params["b2"]))
    x = x.reshape(x.shape[0], -1)
    x = jnp.maximum(x @ params["wfc1"] + params["bfc1"], 0.0)
    return x @ params["wfc2"] + params["bfc2"]


if __name__ == "__main__":
    # 32x32 spatial keeps things small while exercising the pooled-row-block grid axis
    # (conv1 runs 2 row blocks per image) and the fc1 K accumulation (2 K-tiles).
    B, C, H, W = 2, 3, 32, 32
    key = jax.random.PRNGKey(0)
    kx, kp = jax.random.split(key)
    x = jax.random.normal(kx, (B, C, H, W), jnp.float32)
    params = init_params(kp, H, W, num_classes=2)
    rparams = prepare_params(params, H, W)

    out = jax.block_until_ready(simple_cnn_forward(x, rparams))
    assert out.shape == (B, 2), out.shape

    ref = jax.block_until_ready(_reference_forward(x, params))
    assert jnp.allclose(out, ref, atol=2e-2, rtol=2e-2), (out, ref)

    print("KERNEL_OK")
</pallas_src>

<mosaic_0001>
module attributes {stable_mosaic.version = 11 : i64} {
  func.func @kernel(%arg0: i32, %arg1: i32, %arg2: memref<1x34x34x3xf32, #tpu.memory_space<vmem>>, %arg3: memref<27x16xbf16, #tpu.memory_space<vmem>>, %arg4: memref<1x16xf32, #tpu.memory_space<vmem>>, %arg5: memref<1x8x256xf32, #tpu.memory_space<vmem>>) attributes {dimension_semantics = [#tpu.dimension_semantics<parallel>, #tpu.dimension_semantics<arbitrary>], iteration_bounds = array<i64: 2, 2>, scalar_prefetch = 0 : i64, scratch_operands = 0 : i64, tpu.core_type = #tpu.core_type<tc>, window_params = [{transform_indices = @transform_0, window_bounds = array<i64: 1, 34, 34, 3>}, {pipeline_mode = #tpu.pipeline_mode<synchronous>, transform_indices = @transform_1, window_bounds = array<i64: 27, 16>}, {pipeline_mode = #tpu.pipeline_mode<synchronous>, transform_indices = @transform_2, window_bounds = array<i64: 1, 16>}, {transform_indices = @transform_3, window_bounds = array<i64: 1, 8, 256>}]} {
    %c16_i32 = arith.constant 16 : i32
    %0 = arith.muli %arg1, %c16_i32 : i32
    %1 = tpu.assume_multiple %0, 16 : i32
    %c0 = arith.constant 0 : index
    %2 = arith.index_cast %1 : i32 to index
    %c0_0 = arith.constant 0 : index
    %c0_1 = arith.constant 0 : index
    %3 = vector.load %arg2[%c0, %2, %c0_0, %c0_1] : memref<1x34x34x3xf32, #tpu.memory_space<vmem>>, vector<1x18x34x3xf32>
    %4 = vector.shape_cast %3 : vector<1x18x34x3xf32> to vector<18x34x3xf32>
    %5 = vector.extract_strided_slice %4 {offsets = [0, 0, 0], sizes = [16, 32, 3], strides = [1, 1, 1]} : vector<18x34x3xf32> to vector<16x32x3xf32>
    %6 = vector.shape_cast %5 : vector<16x32x3xf32> to vector<512x3xf32>
    %7 = vector.extract_strided_slice %4 {offsets = [0, 1, 0], sizes = [16, 32, 3], strides = [1, 1, 1]} : vector<18x34x3xf32> to vector<16x32x3xf32>
    %8 = vector.shape_cast %7 : vector<16x32x3xf32> to vector<512x3xf32>
    %9 = vector.extract_strided_slice %4 {offsets = [0, 2, 0], sizes = [16, 32, 3], strides = [1, 1, 1]} : vector<18x34x3xf32> to vector<16x32x3xf32>
    %10 = vector.shape_cast %9 : vector<16x32x3xf32> to vector<512x3xf32>
    %11 = vector.extract_strided_slice %4 {offsets = [1, 0, 0], sizes = [16, 32, 3], strides = [1, 1, 1]} : vector<18x34x3xf32> to vector<16x32x3xf32>
    %12 = vector.shape_cast %11 : vector<16x32x3xf32> to vector<512x3xf32>
    %13 = vector.extract_strided_slice %4 {offsets = [1, 1, 0], sizes = [16, 32, 3], strides = [1, 1, 1]} : vector<18x34x3xf32> to vector<16x32x3xf32>
    %14 = vector.shape_cast %13 : vector<16x32x3xf32> to vector<512x3xf32>
    %15 = vector.extract_strided_slice %4 {offsets = [1, 2, 0], sizes = [16, 32, 3], strides = [1, 1, 1]} : vector<18x34x3xf32> to vector<16x32x3xf32>
    %16 = vector.shape_cast %15 : vector<16x32x3xf32> to vector<512x3xf32>
    %17 = vector.extract_strided_slice %4 {offsets = [2, 0, 0], sizes = [16, 32, 3], strides = [1, 1, 1]} : vector<18x34x3xf32> to vector<16x32x3xf32>
    %18 = vector.shape_cast %17 : vector<16x32x3xf32> to vector<512x3xf32>
    %19 = vector.extract_strided_slice %4 {offsets = [2, 1, 0], sizes = [16, 32, 3], strides = [1, 1, 1]} : vector<18x34x3xf32> to vector<16x32x3xf32>
    %20 = vector.shape_cast %19 : vector<16x32x3xf32> to vector<512x3xf32>
    %21 = vector.extract_strided_slice %4 {offsets = [2, 2, 0], sizes = [16, 32, 3], strides = [1, 1, 1]} : vector<18x34x3xf32> to vector<16x32x3xf32>
    %22 = vector.shape_cast %21 : vector<16x32x3xf32> to vector<512x3xf32>
    %23 = tpu.concatenate %6, %8, %10, %12, %14, %16, %18, %20, %22 in 1 : vector<512x3xf32>, vector<512x3xf32>, vector<512x3xf32>, vector<512x3xf32>, vector<512x3xf32>, vector<512x3xf32>, vector<512x3xf32>, vector<512x3xf32>, vector<512x3xf32> -> vector<512x27xf32>
    %24 = arith.truncf %23 : vector<512x27xf32> to vector<512x27xbf16>
    %c0_2 = arith.constant 0 : index
    %c0_3 = arith.constant 0 : index
    %25 = vector.load %arg3[%c0_2, %c0_3] : memref<27x16xbf16, #tpu.memory_space<vmem>>, vector<27x16xbf16>
    %cst = arith.constant dense<0.000000e+00> : vector<512x16xf32>
    %26 = tpu.matmul %24, %25, %cst {dimension_numbers = #tpu.dot_dimension_numbers<[1], [0], [0], [1], [0, 0, 1, 1], [], []>} : vector<512x27xbf16>, vector<27x16xbf16>, vector<512x16xf32> -> vector<512x16xf32>
    %c0_4 = arith.constant 0 : index
    %c0_5 = arith.constant 0 : index
    %27 = vector.load %arg4[%c0_4, %c0_5] : memref<1x16xf32, #tpu.memory_space<vmem>>, vector<1x16xf32>
    %28 = vector.broadcast %27 : vector<1x16xf32> to vector<512x16xf32>
    %29 = arith.addf %26, %28 : vector<512x16xf32>
    %cst_6 = arith.constant 0.000000e+00 : f32
    %30 = vector.broadcast %cst_6 : f32 to vector<512x16xf32>
    %31 = arith.maximumf %29, %30 : vector<512x16xf32>
    %32 = vector.shape_cast %31 : vector<512x16xf32> to vector<8x2x32x16xf32>
    %33 = vector.extract_strided_slice %32 {offsets = [0, 0, 0, 0], sizes = [8, 1, 32, 16], strides = [1, 1, 1, 1]} : vector<8x2x32x16xf32> to vector<8x1x32x16xf32>
    %34 = vector.shape_cast %33 : vector<8x1x32x16xf32> to vector<8x32x16xf32>
    %35 = vector.extract_strided_slice %32 {offsets = [0, 1, 0, 0], sizes = [8, 1, 32, 16], strides = [1, 1, 1, 1]} : vector<8x2x32x16xf32> to vector<8x1x32x16xf32>
    %36 = vector.shape_cast %35 : vector<8x1x32x16xf32> to vector<8x32x16xf32>
    %37 = arith.maximumf %34, %36 : vector<8x32x16xf32>
    %38 = vector.shape_cast %37 : vector<8x32x16xf32> to vector<8x16x2x16xf32>
    %39 = vector.extract_strided_slice %38 {offsets = [0, 0, 0, 0], sizes = [8, 16, 1, 16], strides = [1, 1, 1, 1]} : vector<8x16x2x16xf32> to vector<8x16x1x16xf32>
    %40 = vector.shape_cast %39 : vector<8x16x1x16xf32> to vector<8x16x16xf32>
    %41 = vector.extract_strided_slice %38 {offsets = [0, 0, 1, 0], sizes = [8, 16, 1, 16], strides = [1, 1, 1, 1]} : vector<8x16x2x16xf32> to vector<8x16x1x16xf32>
    %42 = vector.shape_cast %41 : vector<8x16x1x16xf32> to vector<8x16x16xf32>
    %43 = arith.maximumf %40, %42 : vector<8x16x16xf32>
    %44 = vector.shape_cast %43 : vector<8x16x16xf32> to vector<1x8x256xf32>
    %c0_7 = arith.constant 0 : index
    %c0_8 = arith.constant 0 : index
    %c0_9 = arith.constant 0 : index
    %45 = vector.load %arg5[%c0_7, %c0_8, %c0_9] : memref<1x8x256xf32, #tpu.memory_space<vmem>>, vector<1x8x256xf32>
    tpu.vector_store %arg5[%c0_7, %c0_8, %c0_9], %44 {strides = array<i32>} : memref<1x8x256xf32, #tpu.memory_space<vmem>>, vector<1x8x256xf32>,
    return
  }
  func.func @transform_0(%arg0: i32, %arg1: i32) -> (i32, i32, i32, i32) {
    %c0_i32 = arith.constant 0 : i32
    %c0_i32_0 = arith.constant 0 : i32
    %c0_i32_1 = arith.constant 0 : i32
    %c0_i32_2 = arith.constant 0 : i32
    return %arg0, %c0_i32, %c0_i32_0, %c0_i32_1 : i32, i32, i32, i32
  }
  func.func @transform_1(%arg0: i32, %arg1: i32) -> (i32, i32) {
    %c0_i32 = arith.constant 0 : i32
    %c0_i32_0 = arith.constant 0 : i32
    %c0_i32_1 = arith.constant 0 : i32
    return %c0_i32, %c0_i32_0 : i32, i32
  }
  func.func @transform_2(%arg0: i32, %arg1: i32) -> (i32, i32) {
    %c0_i32 = arith.constant 0 : i32
    %c0_i32_0 = arith.constant 0 : i32
    %c0_i32_1 = arith.constant 0 : i32
    return %c0_i32, %c0_i32_0 : i32, i32
  }
  func.func @transform_3(%arg0: i32, %arg1: i32) -> (i32, i32, i32) {
    %c0_i32 = arith.constant 0 : i32
    %c0_i32_0 = arith.constant 0 : i32
    return %arg0, %arg1, %c0_i32 : i32, i32, i32
  }
}

module attributes {stable_mosaic.version = 11 : i64} {
  func.func @kernel(%arg0: i32, %arg1: i32, %arg2: memref<1x18x18x16xf32, #tpu.memory_space<vmem>>, %arg3: memref<144x32xbf16, #tpu.memory_space<vmem>>, %arg4: memref<1x32xf32, #tpu.memory_space<vmem>>, %arg5: memref<1x8x256xf32, #tpu.memory_space<vmem>>) attributes {dimension_semantics = [#tpu.dimension_semantics<parallel>, #tpu.dimension_semantics<arbitrary>], iteration_bounds = array<i64: 2, 1>, scalar_prefetch = 0 : i64, scratch_operands = 0 : i64, tpu.core_type = #tpu.core_type<tc>, window_params = [{transform_indices = @transform_0, window_bounds = array<i64: 1, 18, 18, 16>}, {pipeline_mode = #tpu.pipeline_mode<synchronous>, transform_indices = @transform_1, window_bounds = array<i64: 144, 32>}, {pipeline_mode = #tpu.pipeline_mode<synchronous>, transform_indices = @transform_2, window_bounds = array<i64: 1, 32>}, {transform_indices = @transform_3, window_bounds = array<i64: 1, 8, 256>}]} {
    %c16_i32 = arith.constant 16 : i32
    %0 = arith.muli %arg1, %c16_i32 : i32
    %1 = tpu.assume_multiple %0, 16 : i32
    %c0 = arith.constant 0 : index
    %2 = arith.index_cast %1 : i32 to index
    %c0_0 = arith.constant 0 : index
    %c0_1 = arith.constant 0 : index
    %3 = vector.load %arg2[%c0, %2, %c0_0, %c0_1] : memref<1x18x18x16xf32, #tpu.memory_space<vmem>>, vector<1x18x18x16xf32>
    %4 = vector.shape_cast %3 : vector<1x18x18x16xf32> to vector<18x18x16xf32>
    %5 = vector.extract_strided_slice %4 {offsets = [0, 0, 0], sizes = [16, 16, 16], strides = [1, 1, 1]} : vector<18x18x16xf32> to vector<16x16x16xf32>
    %6 = vector.shape_cast %5 : vector<16x16x16xf32> to vector<256x16xf32>
    %7 = vector.extract_strided_slice %4 {offsets = [0, 1, 0], sizes = [16, 16, 16], strides = [1, 1, 1]} : vector<18x18x16xf32> to vector<16x16x16xf32>
    %8 = vector.shape_cast %7 : vector<16x16x16xf32> to vector<256x16xf32>
    %9 = vector.extract_strided_slice %4 {offsets = [0, 2, 0], sizes = [16, 16, 16], strides = [1, 1, 1]} : vector<18x18x16xf32> to vector<16x16x16xf32>
    %10 = vector.shape_cast %9 : vector<16x16x16xf32> to vector<256x16xf32>
    %11 = vector.extract_strided_slice %4 {offsets = [1, 0, 0], sizes = [16, 16, 16], strides = [1, 1, 1]} : vector<18x18x16xf32> to vector<16x16x16xf32>
    %12 = vector.shape_cast %11 : vector<16x16x16xf32> to vector<256x16xf32>
    %13 = vector.extract_strided_slice %4 {offsets = [1, 1, 0], sizes = [16, 16, 16], strides = [1, 1, 1]} : vector<18x18x16xf32> to vector<16x16x16xf32>
    %14 = vector.shape_cast %13 : vector<16x16x16xf32> to vector<256x16xf32>
    %15 = vector.extract_strided_slice %4 {offsets = [1, 2, 0], sizes = [16, 16, 16], strides = [1, 1, 1]} : vector<18x18x16xf32> to vector<16x16x16xf32>
    %16 = vector.shape_cast %15 : vector<16x16x16xf32> to vector<256x16xf32>
    %17 = vector.extract_strided_slice %4 {offsets = [2, 0, 0], sizes = [16, 16, 16], strides = [1, 1, 1]} : vector<18x18x16xf32> to vector<16x16x16xf32>
    %18 = vector.shape_cast %17 : vector<16x16x16xf32> to vector<256x16xf32>
    %19 = vector.extract_strided_slice %4 {offsets = [2, 1, 0], sizes = [16, 16, 16], strides = [1, 1, 1]} : vector<18x18x16xf32> to vector<16x16x16xf32>
    %20 = vector.shape_cast %19 : vector<16x16x16xf32> to vector<256x16xf32>
    %21 = vector.extract_strided_slice %4 {offsets = [2, 2, 0], sizes = [16, 16, 16], strides = [1, 1, 1]} : vector<18x18x16xf32> to vector<16x16x16xf32>
    %22 = vector.shape_cast %21 : vector<16x16x16xf32> to vector<256x16xf32>
    %23 = tpu.concatenate %6, %8, %10, %12, %14, %16, %18, %20, %22 in 1 : vector<256x16xf32>, vector<256x16xf32>, vector<256x16xf32>, vector<256x16xf32>, vector<256x16xf32>, vector<256x16xf32>, vector<256x16xf32>, vector<256x16xf32>, vector<256x16xf32> -> vector<256x144xf32>
    %24 = arith.truncf %23 : vector<256x144xf32> to vector<256x144xbf16>
    %c0_2 = arith.constant 0 : index
    %c0_3 = arith.constant 0 : index
    %25 = vector.load %arg3[%c0_2, %c0_3] : memref<144x32xbf16, #tpu.memory_space<vmem>>, vector<144x32xbf16>
    %cst = arith.constant dense<0.000000e+00> : vector<256x32xf32>
    %26 = tpu.matmul %24, %25, %cst {dimension_numbers = #tpu.dot_dimension_numbers<[1], [0], [0], [1], [0, 0, 1, 1], [], []>} : vector<256x144xbf16>, vector<144x32xbf16>, vector<256x32xf32> -> vector<256x32xf32>
    %c0_4 = arith.constant 0 : index
    %c0_5 = arith.constant 0 : index
    %27 = vector.load %arg4[%c0_4, %c0_5] : memref<1x32xf32, #tpu.memory_space<vmem>>, vector<1x32xf32>
    %28 = vector.broadcast %27 : vector<1x32xf32> to vector<256x32xf32>
    %29 = arith.addf %26, %28 : vector<256x32xf32>
    %cst_6 = arith.constant 0.000000e+00 : f32
    %30 = vector.broadcast %cst_6 : f32 to vector<256x32xf32>
    %31 = arith.maximumf %29, %30 : vector<256x32xf32>
    %32 = vector.shape_cast %31 : vector<256x32xf32> to vector<8x2x16x32xf32>
    %33 = vector.extract_strided_slice %32 {offsets = [0, 0, 0, 0], sizes = [8, 1, 16, 32], strides = [1, 1, 1, 1]} : vector<8x2x16x32xf32> to vector<8x1x16x32xf32>
    %34 = vector.shape_cast %33 : vector<8x1x16x32xf32> to vector<8x16x32xf32>
    %35 = vector.extract_strided_slice %32 {offsets = [0, 1, 0, 0], sizes = [8, 1, 16, 32], strides = [1, 1, 1, 1]} : vector<8x2x16x32xf32> to vector<8x1x16x32xf32>
    %36 = vector.shape_cast %35 : vector<8x1x16x32xf32> to vector<8x16x32xf32>
    %37 = arith.maximumf %34, %36 : vector<8x16x32xf32>
    %38 = vector.shape_cast %37 : vector<8x16x32xf32> to vector<8x8x2x32xf32>
    %39 = vector.extract_strided_slice %38 {offsets = [0, 0, 0, 0], sizes = [8, 8, 1, 32], strides = [1, 1, 1, 1]} : vector<8x8x2x32xf32> to vector<8x8x1x32xf32>
    %40 = vector.shape_cast %39 : vector<8x8x1x32xf32> to vector<8x8x32xf32>
    %41 = vector.extract_strided_slice %38 {offsets = [0, 0, 1, 0], sizes = [8, 8, 1, 32], strides = [1, 1, 1, 1]} : vector<8x8x2x32xf32> to vector<8x8x1x32xf32>
    %42 = vector.shape_cast %41 : vector<8x8x1x32xf32> to vector<8x8x32xf32>
    %43 = arith.maximumf %40, %42 : vector<8x8x32xf32>
    %44 = vector.shape_cast %43 : vector<8x8x32xf32> to vector<1x8x256xf32>
    %c0_7 = arith.constant 0 : index
    %c0_8 = arith.constant 0 : index
    %c0_9 = arith.constant 0 : index
    %45 = vector.load %arg5[%c0_7, %c0_8, %c0_9] : memref<1x8x256xf32, #tpu.memory_space<vmem>>, vector<1x8x256xf32>
    tpu.vector_store %arg5[%c0_7, %c0_8, %c0_9], %44 {strides = array<i32>} : memref<1x8x256xf32, #tpu.memory_space<vmem>>, vector<1x8x256xf32>,
    return
  }
  func.func @transform_0(%arg0: i32, %arg1: i32) -> (i32, i32, i32, i32) {
    %c0_i32 = arith.constant 0 : i32
    %c0_i32_0 = arith.constant 0 : i32
    %c0_i32_1 = arith.constant 0 : i32
    %c0_i32_2 = arith.constant 0 : i32
    return %arg0, %c0_i32, %c0_i32_0, %c0_i32_1 : i32, i32, i32, i32
  }
  func.func @transform_1(%arg0: i32, %arg1: i32) -> (i32, i32) {
    %c0_i32 = arith.constant 0 : i32
    %c0_i32_0 = arith.constant 0 : i32
    %c0_i32_1 = arith.constant 0 : i32
    return %c0_i32, %c0_i32_0 : i32, i32
  }
  func.func @transform_2(%arg0: i32, %arg1: i32) -> (i32, i32) {
    %c0_i32 = arith.constant 0 : i32
    %c0_i32_0 = arith.constant 0 : i32
    %c0_i32_1 = arith.constant 0 : i32
    return %c0_i32, %c0_i32_0 : i32, i32
  }
  func.func @transform_3(%arg0: i32, %arg1: i32) -> (i32, i32, i32) {
    %c0_i32 = arith.constant 0 : i32
    %c0_i32_0 = arith.constant 0 : i32
    return %arg0, %arg1, %c0_i32 : i32, i32, i32
  }
}

module attributes {stable_mosaic.version = 11 : i64} {
  func.func @_fused_fc_kernel(%arg0: i32, %arg1: memref<2x1024xf32, #tpu.memory_space<vmem>>, %arg2: memref<1024x128xbf16, #tpu.memory_space<vmem>>, %arg3: memref<1x128xf32, #tpu.memory_space<vmem>>, %arg4: memref<128x2xf32, #tpu.memory_space<vmem>>, %arg5: memref<1x2xf32, #tpu.memory_space<vmem>>, %arg6: memref<2x2xf32, #tpu.memory_space<vmem>>, %arg7: memref<2x128xf32, #tpu.memory_space<vmem>>) attributes {dimension_semantics = [#tpu.dimension_semantics<arbitrary>], iteration_bounds = array<i64: 2>, scalar_prefetch = 0 : i64, scratch_operands = 1 : i64, tpu.core_type = #tpu.core_type<tc>, window_params = [{transform_indices = @transform_0, window_bounds = array<i64: 2, 1024>}, {transform_indices = @transform_1, window_bounds = array<i64: 1024, 128>}, {pipeline_mode = #tpu.pipeline_mode<synchronous>, transform_indices = @transform_2, window_bounds = array<i64: 1, 128>}, {pipeline_mode = #tpu.pipeline_mode<synchronous>, transform_indices = @transform_3, window_bounds = array<i64: 128, 2>}, {pipeline_mode = #tpu.pipeline_mode<synchronous>, transform_indices = @transform_4, window_bounds = array<i64: 1, 2>}, {pipeline_mode = #tpu.pipeline_mode<synchronous>, transform_indices = @transform_5, window_bounds = array<i64: 2, 2>}]} {
    %c0_i32 = arith.constant 0 : i32
    %0 = arith.cmpi eq, %arg0, %c0_i32 : i32
    %1 = arith.extui %0 : i1 to i32
    %c0_i32_0 = arith.constant 0 : i32
    %2 = arith.cmpi ne, %1, %c0_i32_0 : i32
    scf.if %2 {
      %cst_9 = arith.constant 0.000000e+00 : f32
      %13 = vector.broadcast %cst_9 : f32 to vector<2x128xf32>
      %c0_10 = arith.constant 0 : index
      %c0_11 = arith.constant 0 : index
      %14 = vector.load %arg7[%c0_10, %c0_11] : memref<2x128xf32, #tpu.memory_space<vmem>>, vector<2x128xf32>
      tpu.vector_store %arg7[%c0_10, %c0_11], %13 {strides = array<i32>} : memref<2x128xf32, #tpu.memory_space<vmem>>, vector<2x128xf32>,
    } else {
    }
    %c0 = arith.constant 0 : index
    %c0_1 = arith.constant 0 : index
    %3 = vector.load %arg7[%c0, %c0_1] : memref<2x128xf32, #tpu.memory_space<vmem>>, vector<2x128xf32>
    %c0_2 = arith.constant 0 : index
    %c0_3 = arith.constant 0 : index
    %4 = vector.load %arg1[%c0_2, %c0_3] : memref<2x1024xf32, #tpu.memory_space<vmem>>, vector<2x1024xf32>
    %5 = arith.truncf %4 : vector<2x1024xf32> to vector<2x1024xbf16>
    %c0_4 = arith.constant 0 : index
    %c0_5 = arith.constant 0 : index
    %6 = vector.load %arg2[%c0_4, %c0_5] : memref<1024x128xbf16, #tpu.memory_space<vmem>>, vector<1024x128xbf16>
    %cst = arith.constant dense<0.000000e+00> : vector<2x128xf32>
    %7 = tpu.matmul %5, %6, %cst {dimension_numbers = #tpu.dot_dimension_numbers<[1], [0], [0], [1], [0, 0, 1, 1], [], []>} : vector<2x1024xbf16>, vector<1024x128xbf16>, vector<2x128xf32> -> vector<2x128xf32>
    %8 = arith.addf %3, %7 : vector<2x128xf32>
    %c0_6 = arith.constant 0 : index
    %c0_7 = arith.constant 0 : index
    %9 = vector.load %arg7[%c0_6, %c0_7] : memref<2x128xf32, #tpu.memory_space<vmem>>, vector<2x128xf32>
    tpu.vector_store %arg7[%c0_6, %c0_7], %8 {strides = array<i32>} : memref<2x128xf32, #tpu.memory_space<vmem>>, vector<2x128xf32>,
    %c1_i32 = arith.constant 1 : i32
    %10 = arith.cmpi eq, %arg0, %c1_i32 : i32
    %11 = arith.extui %10 : i1 to i32
    %c0_i32_8 = arith.constant 0 : i32
    %12 = arith.cmpi ne, %11, %c0_i32_8 : i32
    scf.if %12 {
      %c0_9 = arith.constant 0 : index
      %c0_10 = arith.constant 0 : index
      %13 = vector.load %arg7[%c0_9, %c0_10] : memref<2x128xf32, #tpu.memory_space<vmem>>, vector<2x128xf32>
      %c0_11 = arith.constant 0 : index
      %c0_12 = arith.constant 0 : index
      %14 = vector.load %arg3[%c0_11, %c0_12] : memref<1x128xf32, #tpu.memory_space<vmem>>, vector<1x128xf32>
      %15 = vector.broadcast %14 : vector<1x128xf32> to vector<2x128xf32>
      %16 = arith.addf %13, %15 : vector<2x128xf32>
      %cst_13 = arith.constant 0.000000e+00 : f32
      %17 = vector.broadcast %cst_13 : f32 to vector<2x128xf32>
      %18 = arith.maximumf %16, %17 : vector<2x128xf32>
      %c0_14 = arith.constant 0 : index
      %c0_15 = arith.constant 0 : index
      %19 = vector.load %arg4[%c0_14, %c0_15] : memref<128x2xf32, #tpu.memory_space<vmem>>, vector<128x2xf32>
      %cst_16 = arith.constant dense<0.000000e+00> : vector<2x2xf32>
      %20 = tpu.matmul %18, %19, %cst_16 {dimension_numbers = #tpu.dot_dimension_numbers<[1], [0], [0], [1], [0, 0, 1, 1], [], []>} : vector<2x128xf32>, vector<128x2xf32>, vector<2x2xf32> -> vector<2x2xf32>
      %c0_17 = arith.constant 0 : index
      %c0_18 = arith.constant 0 : index
      %21 = vector.load %arg5[%c0_17, %c0_18] : memref<1x2xf32, #tpu.memory_space<vmem>>, vector<1x2xf32>
      %22 = vector.broadcast %21 : vector<1x2xf32> to vector<2x2xf32>
      %23 = arith.addf %20, %22 : vector<2x2xf32>
      %c0_19 = arith.constant 0 : index
      %c0_20 = arith.constant 0 : index
      %24 = vector.load %arg6[%c0_19, %c0_20] : memref<2x2xf32, #tpu.memory_space<vmem>>, vector<2x2xf32>
      tpu.vector_store %arg6[%c0_19, %c0_20], %23 {strides = array<i32>} : memref<2x2xf32, #tpu.memory_space<vmem>>, vector<2x2xf32>,
    } else {
    }
    return
  }
  func.func @transform_0(%arg0: i32) -> (i32, i32) {
    %c0_i32 = arith.constant 0 : i32
    %c0_i32_0 = arith.constant 0 : i32
    return %c0_i32, %arg0 : i32, i32
  }
  func.func @transform_1(%arg0: i32) -> (i32, i32) {
    %c0_i32 = arith.constant 0 : i32
    %c0_i32_0 = arith.constant 0 : i32
    return %arg0, %c0_i32 : i32, i32
  }
  func.func @transform_2(%arg0: i32) -> (i32, i32) {
    %c0_i32 = arith.constant 0 : i32
    %c0_i32_0 = arith.constant 0 : i32
    %c0_i32_1 = arith.constant 0 : i32
    return %c0_i32, %c0_i32_0 : i32, i32
  }
  func.func @transform_3(%arg0: i32) -> (i32, i32) {
    %c0_i32 = arith.constant 0 : i32
    %c0_i32_0 = arith.constant 0 : i32
    %c0_i32_1 = arith.constant 0 : i32
    return %c0_i32, %c0_i32_0 : i32, i32
  }
  func.func @transform_4(%arg0: i32) -> (i32, i32) {
    %c0_i32 = arith.constant 0 : i32
    %c0_i32_0 = arith.constant 0 : i32
    %c0_i32_1 = arith.constant 0 : i32
    return %c0_i32, %c0_i32_0 : i32, i32
  }
  func.func @transform_5(%arg0: i32) -> (i32, i32) {
    %c0_i32 = arith.constant 0 : i32
    %c0_i32_0 = arith.constant 0 : i32
    %c0_i32_1 = arith.constant 0 : i32
    return %c0_i32, %c0_i32_0 : i32, i32
  }
}

</mosaic_0001>

<llo_original>
// kernel: simple_cnn_forward.5
$region0: #{simple_cnn_forward.5}
  #allocation0 [shape = 'u32[]', space=smem, size = 0x4, offset = 0x4, fixed_abs, tag = 'smem constant byte address 0x4 - core index']
  #allocation1 [shape = 'u32[144,128]{1,0:T(1,128)}', space=vmem, size = 0x12000, scoped, tag = 'internal scratch']
  #allocation2 [shape = 'f32[2,128]{1,0:T(2,128)}', space=vmem, size = 0x400, scoped, tag = 'scratch operand']
  %s0 = inlined_call_operand.hbm [shape: f32[2,2048], index: 0, kind: input, shape index: {}]
  %s1 = inlined_call_operand.hbm [shape: bf16[2048,128], index: 1, kind: input, shape index: {}]
  %s2 = inlined_call_operand.hbm [shape: f32[1,128], index: 2, kind: input, shape index: {}]
  %s3 = inlined_call_operand.hbm [shape: f32[128,2], index: 3, kind: input, shape index: {}]
  %s4 = inlined_call_operand.hbm [shape: f32[1,2], index: 4, kind: input, shape index: {}]
  %s5 = inlined_call_operand.hbm [shape: f32[2,2], index: 5, kind: output, shape index: {}]
  %s6 = sld [smem:[#allocation0]]
  $region81: #{simple_cnn_forward.5} parent=0
    _
  %s8 = ssub.s32 1, %s6
  %s9 = scalar_select 0, %s8, %s6
  $region1: #{simple_cnn_forward.5} parent=0
    #allocation3 [shape = 'u8[16384]{0}', space=vmem, size = 0x4000, scoped, tag = 'input window, operand 0']
    #allocation4 [shape = 's32[2]{0}', space=sflag, size = 0x8, scoped, tag = 'scoped memory for simple_cnn_forward.5']
    #allocation5 [shape = 's32[2]{0}', space=sflag, size = 0x8, scoped, tag = 'scoped memory for simple_cnn_forward.5']
    #allocation6 [shape = 'u8[524288]{0}', space=vmem, size = 0x80000, scoped, tag = 'input window, operand 1']
    #allocation7 [shape = 's32[2]{0}', space=sflag, size = 0x8, scoped, tag = 'scoped memory for simple_cnn_forward.5']
    #allocation8 [shape = 'u8[512]{0}', space=vmem, size = 0x400, scoped, tag = 'input window, operand 2, single buffered']
    #allocation9 [shape = 'u8[65536]{0}', space=vmem, size = 0x10000, scoped, tag = 'input window, operand 3, single buffered']
    #allocation10 [shape = 's32[1]{0}', space=sflag, size = 0x4, scoped, tag = 'scoped memory for simple_cnn_forward.5']
    #allocation11 [shape = 'u8[512]{0}', space=vmem, size = 0x400, scoped, tag = 'input window, operand 4, single buffered']
    #allocation12 [shape = 'u8[1024]{0}', space=vmem, size = 0x400, scoped, tag = 'output window, operand 0, single buffered']
    %10 = vsyncpa [#allocation4], 0
    %s11 = scalar_lea.sflag [#allocation4], 1
    %12 = vsyncpa %s11, 0
    %13 = vsyncpa [#allocation7], 0
    %s14 = scalar_lea.sflag [#allocation7], 1
    %15 = vsyncpa %s14, 0
    %16 = vsyncpa [#allocation10], 0
    %17 = vsyncpa [#allocation5], 0
    loop: start=0, step=1, limit=4
    $region2: #{simple_cnn_forward.5} parent=1 // loop_pre_header
      _
    $region3: #{simple_cnn_forward.5} parent=1 // loop_header
      %s19 = sphi 0, %s23
      %p20 = scmp.ge.s32.totalorder %s19, 4
      %s29 = sphi 0, %s31
      %s32 = sphi 0, %s29
      %s33 = sphi 0, %s32
      %s49 = sphi 0, %s33
      %s55 = sphi 0, %s57
      %s58 = sphi 0, %s55
      %s59 = sphi 0, %s58
      %s75 = sphi 0, %s59
      %s79 = sphi 0, %s79
      %s81 = sphi 0, %s79
      %s82 = sphi 0, %s81
      %s96 = sphi 0, %s82
      %s100 = sphi 0, %s100
      %s102 = sphi 0, %s100
      %s103 = sphi 0, %s102
      %s117 = sphi 0, %s103
      %s121 = sphi 0, %s121
      %s123 = sphi 0, %s121
      %s124 = sphi 0, %s123
      %s138 = sphi 0, %s124
      %s142 = sphi 0, %s142
      %s144 = sphi 0, %s142
      %s145 = sphi 0, %s144
      %s159 = sphi 0, %s145
    $region4: #{simple_cnn_forward.5} parent=1 // loop_header_branch
      %22 = sbr.rel (%p20) target = $region8
    $region5: #{simple_cnn_forward.5} parent=1 // loop_body
      %s24 = ssub.s32 %s19, 1
      %s25 = ssub.s32 %s19, 2
      %s26 = sadd.s32 %s19, 1
      %s27 = ssub.s32 %s19, %s26
      %p28 = scmp.eq.s32.totalorder %s27, 0
      %s30 = sadd.s32 %s29, 1
      %s31 = scalar_select %p28, %s29, %s30
      %p34 = pneg %p28
      %p35 = scmp.eq.s32.totalorder %s19, 1
      %p36 = por %p34, %p35
      %p37 = scmp.ne.s32.totalorder %s29, %s32
      %p38 = scmp.eq.s32.totalorder %s19, 0
      %p39 = por %p37, %p38
      %p40 = scmp.ne.s32.totalorder %s29, %s32
      %p41 = scmp.eq.s32.totalorder %s24, 1
      %p42 = por %p40, %p41
      %p43 = scmp.ne.s32.totalorder %s32, %s33
      %p44 = scmp.eq.s32.totalorder %s24, 0
      %p45 = por %p43, %p44
      %p46 = scmp.ne.s32.totalorder %s32, %s33
      %p47 = scmp.eq.s32.totalorder %s25, 1
      %p48 = por %p46, %p47
      %p50 = scmp.ne.s32.totalorder %s33, %s49
      %p51 = scmp.eq.s32.totalorder %s25, 0
      %p52 = por %p50, %p51
      %s53 = ssub.s32 %s19, %s26
      %p54 = scmp.eq.s32.totalorder %s53, 0
      %s56 = sadd.s32 %s55, 1
      %s57 = scalar_select %p54, %s55, %s56
      %p60 = pneg %p54
      %p61 = scmp.eq.s32.totalorder %s19, 1
      %p62 = por %p60, %p61
      %p63 = scmp.ne.s32.totalorder %s55, %s58
      %p64 = scmp.eq.s32.totalorder %s19, 0
      %p65 = por %p63, %p64
      %p66 = scmp.ne.s32.totalorder %s55, %s58
      %p67 = scmp.eq.s32.totalorder %s24, 1
      %p68 = por %p66, %p67
      %p69 = scmp.ne.s32.totalorder %s58, %s59
      %p70 = scmp.eq.s32.totalorder %s24, 0
      %p71 = por %p69, %p70
      %p72 = scmp.ne.s32.totalorder %s58, %s59
      %p73 = scmp.eq.s32.totalorder %s25, 1
      %p74 = por %p72, %p73
      %p76 = scmp.ne.s32.totalorder %s59, %s75
      %p77 = scmp.eq.s32.totalorder %s25, 0
      %p78 = por %p76, %p77
      %s80 = sadd.s32 %s79, 1
      %p83 = scmp.eq.s32.totalorder %s19, 1
      %p84 = scmp.ne.s32.totalorder %s79, %s81
      %p85 = scmp.eq.s32.totalorder %s19, 0
      %p86 = por %p84, %p85
      %p87 = scmp.ne.s32.totalorder %s79, %s81
      %p88 = scmp.eq.s32.totalorder %s24, 1
      %p89 = por %p87, %p88
      %p90 = scmp.ne.s32.totalorder %s81, %s82
      %p91 = scmp.eq.s32.totalorder %s24, 0
      %p92 = por %p90, %p91
      %p93 = scmp.ne.s32.totalorder %s81, %s82
      %p94 = scmp.eq.s32.totalorder %s25, 1
      %p95 = por %p93, %p94
      %p97 = scmp.ne.s32.totalorder %s82, %s96
      %p98 = scmp.eq.s32.totalorder %s25, 0
      %p99 = por %p97, %p98
      %s101 = sadd.s32 %s100, 1
      %p104 = scmp.eq.s32.totalorder %s19, 1
      %p105 = scmp.ne.s32.totalorder %s100, %s102
      %p106 = scmp.eq.s32.totalorder %s19, 0
      %p107 = por %p105, %p106
      %p108 = scmp.ne.s32.totalorder %s100, %s102
      %p109 = scmp.eq.s32.totalorder %s24, 1
      %p110 = por %p108, %p109
      %p111 = scmp.ne.s32.totalorder %s102, %s103
      %p112 = scmp.eq.s32.totalorder %s24, 0
      %p113 = por %p111, %p112
      %p114 = scmp.ne.s32.totalorder %s102, %s103
      %p115 = scmp.eq.s32.totalorder %s25, 1
      %p116 = por %p114, %p115
      %p118 = scmp.ne.s32.totalorder %s103, %s117
      %p119 = scmp.eq.s32.totalorder %s25, 0
      %p120 = por %p118, %p119
      %s122 = sadd.s32 %s121, 1
      %p125 = scmp.eq.s32.totalorder %s19, 1
      %p126 = scmp.ne.s32.totalorder %s121, %s123
      %p127 = scmp.eq.s32.totalorder %s19, 0
      %p128 = por %p126, %p127
      %p129 = scmp.ne.s32.totalorder %s121, %s123
      %p130 = scmp.eq.s32.totalorder %s24, 1
      %p131 = por %p129, %p130
      %p132 = scmp.ne.s32.totalorder %s123, %s124
      %p133 = scmp.eq.s32.totalorder %s24, 0
      %p134 = por %p132, %p133
      %p135 = scmp.ne.s32.totalorder %s123, %s124
      %p136 = scmp.eq.s32.totalorder %s25, 1
      %p137 = por %p135, %p136
      %p139 = scmp.ne.s32.totalorder %s124, %s138
      %p140 = scmp.eq.s32.totalorder %s25, 0
      %p141 = por %p139, %p140
      %s143 = sadd.s32 %s142, 1
      %p146 = scmp.eq.s32.totalorder %s19, 1
      %p147 = scmp.ne.s32.totalorder %s142, %s144
      %p148 = scmp.eq.s32.totalorder %s19, 0
      %p149 = por %p147, %p148
      %p150 = scmp.ne.s32.totalorder %s142, %s144
      %p151 = scmp.eq.s32.totalorder %s24, 1
      %p152 = por %p150, %p151
      %p153 = scmp.ne.s32.totalorder %s144, %s145
      %p154 = scmp.eq.s32.totalorder %s24, 0
      %p155 = por %p153, %p154
      %p156 = scmp.ne.s32.totalorder %s144, %s145
      %p157 = scmp.eq.s32.totalorder %s25, 1
      %p158 = por %p156, %p157
      %p160 = scmp.ne.s32.totalorder %s145, %s159
      %p161 = scmp.eq.s32.totalorder %s25, 0
      %p162 = por %p160, %p161
      %p163 = scmp.le.s32.totalorder 1, %s19
      %p164 = scmp.lt.s32.totalorder %s19, 3
      %p165 = pnand %p163, %p164
      %p166 = pneg %p165
      // Predicated region
      $region9: #{simple_cnn_forward.5} parent=5 // pred_check
        _
      $region10: #{simple_cnn_forward.5} parent=5 // pred_check_branch
        %168 = sbr.rel (%p165) target = $region12
      $region11: #{simple_cnn_forward.5} parent=5 // pred_region
        %s169 = ssub.s32 %s19, 1
        // Predicated region
        $region13: #{simple_cnn_forward.5} parent=11 // pred_check
          %p170 = pneg %p92
        $region14: #{simple_cnn_forward.5} parent=11 // pred_check_branch
          %172 = sbr.rel (%p170) target = $region16
        $region15: #{simple_cnn_forward.5} parent=11 // pred_region
          %s174 = ssub.s32 16, 16
          %175 = vsyncadd [#allocation7], %s174
          %s177 = sshll.u32 [#allocation8], 4
          %s178 = int_to_ptr.vmem [resolvable:$true] %s177
          %180 = dma.hbm_to_vmem [thread:$0]  %s2, 16, %s178, [#allocation7]
        $region16: #{simple_cnn_forward.5} parent=11 // pred_fallthru
          _
        // Predicated region
        $region17: #{simple_cnn_forward.5} parent=11 // pred_check
          %p181 = pneg %p113
        $region18: #{simple_cnn_forward.5} parent=11 // pred_check_branch
          %183 = sbr.rel (%p181) target = $region20
        $region19: #{simple_cnn_forward.5} parent=11 // pred_region
          %s185 = ssub.s32 2048, 2048
          %186 = vsyncadd [#allocation10], %s185
          %s187 = sshll.u32 [#allocation9], 4
          %s188 = int_to_ptr.vmem [resolvable:$true] %s187
          %193 = dma.hbm_to_vmem [thread:$0]  %s3, 2048, %s188, [#allocation10], 128, 128, 8
        $region20: #{simple_cnn_forward.5} parent=11 // pred_fallthru
          _
        // Predicated region
        $region21: #{simple_cnn_forward.5} parent=11 // pred_check
          %p194 = pneg %p134
        $region22: #{simple_cnn_forward.5} parent=11 // pred_check_branch
          %196 = sbr.rel (%p194) target = $region24
        $region23: #{simple_cnn_forward.5} parent=11 // pred_region
          %s198 = ssub.s32 16, 16
          %199 = vsyncadd [#allocation10], %s198
          %s201 = sshll.u32 [#allocation11], 4
          %s202 = int_to_ptr.vmem [resolvable:$true] %s201
          %204 = dma.hbm_to_vmem [thread:$0]  %s4, 16, %s202, [#allocation10]
        $region24: #{simple_cnn_forward.5} parent=11 // pred_fallthru
          _
      $region12: #{simple_cnn_forward.5} parent=5 // pred_fallthru
        _
      %p205 = scmp.lt.s32.totalorder %s19, 2
      // Predicated region
      $region25: #{simple_cnn_forward.5} parent=5 // pred_check
        %p206 = pneg %p205
      $region26: #{simple_cnn_forward.5} parent=5 // pred_check_branch
        %208 = sbr.rel (%p206) target = $region28
      $region27: #{simple_cnn_forward.5} parent=5 // pred_region
        // Predicated region
        $region29: #{simple_cnn_forward.5} parent=27 // pred_check
          %p209 = pneg %p39
        $region30: #{simple_cnn_forward.5} parent=27 // pred_check_branch
          %211 = sbr.rel (%p209) target = $region32
        $region31: #{simple_cnn_forward.5} parent=27 // pred_region
          %s212 = sand.u32 %s29, 1
          %s213 = scalar_lea.sflag [#allocation4], %s212
          %s214 = sand.u32 %s29, 1
          %s215 = smul.addr %s214, 16
          %s216 = scalar_lea.vmem [#allocation3], %s215
          %s217 = smul.u32 8, %s19
          %s219 = ssub.s32 256, 256
          %220 = vsyncadd %s213, %s219
          %s221 = smul.addr %s217, 32
          %s222 = scalar_lea.hbm %s0, %s221
          %s224 = sshll.u32 %s216, 4
          %s225 = int_to_ptr.vmem [resolvable:$true] %s224
          %227 = dma.hbm_to_vmem [thread:$0]  %s222, 256, %s225, %s213
        $region32: #{simple_cnn_forward.5} parent=27 // pred_fallthru
          _
        // Predicated region
        $region33: #{simple_cnn_forward.5} parent=27 // pred_check
          %p228 = pneg %p65
        $region34: #{simple_cnn_forward.5} parent=27 // pred_check_branch
          %230 = sbr.rel (%p228) target = $region36
        $region35: #{simple_cnn_forward.5} parent=27 // pred_region
          %s231 = sand.u32 %s19, 1
          %s232 = scalar_lea.sflag [#allocation7], %s231
          %s233 = sand.u32 %s55, 1
          %s234 = smul.addr %s233, 512
          %s235 = scalar_lea.vmem [#allocation6], %s234
          %s236 = smul.u32 128, %s19
          %s238 = ssub.s32 8192, 8192
          %239 = vsyncadd %s232, %s238
          %s240 = smul.addr %s236, 64
          %s241 = scalar_lea.hbm %s1, %s240
          %s242 = sshll.u32 %s235, 4
          %s243 = int_to_ptr.vmem [resolvable:$true] %s242
          %248 = dma.hbm_to_vmem [thread:$0]  %s241, 8192, %s243, %s232, 64, 64, 4
        $region36: #{simple_cnn_forward.5} parent=27 // pred_fallthru
          _
      $region28: #{simple_cnn_forward.5} parent=5 // pred_fallthru
        _
      %p249 = scmp.le.s32.totalorder 1, %s19
      %p250 = scmp.lt.s32.totalorder %s19, 3
      %p251 = pnand %p249, %p250
      %p252 = pneg %p251
      // Predicated region
      $region37: #{simple_cnn_forward.5} parent=5 // pred_check
        _
      $region38: #{simple_cnn_forward.5} parent=5 // pred_check_branch
        %254 = sbr.rel (%p251) target = $region40
      $region39: #{simple_cnn_forward.5} parent=5 // pred_region
        %s255 = ssub.s32 %s19, 1
        %s256 = sand.u32 %s32, 1
        %s257 = scalar_lea.sflag [#allocation4], %s256
        %s258 = sand.u32 %s32, 1
        %s259 = smul.addr %s258, 16
        %s260 = scalar_lea.vmem [#allocation3], %s259
        // Predicated region
        $region41: #{simple_cnn_forward.5} parent=39 // pred_check
          %p261 = pneg %p45
        $region42: #{simple_cnn_forward.5} parent=39 // pred_check_branch
          %263 = sbr.rel (%p261) target = $region44
        $region43: #{simple_cnn_forward.5} parent=39 // pred_region
          %264 = dma.done %s257, 256
        $region44: #{simple_cnn_forward.5} parent=39 // pred_fallthru
          _
        %s265 = sand.u32 %s24, 1
        %s266 = scalar_lea.sflag [#allocation7], %s265
        %s267 = sand.u32 %s58, 1
        %s268 = smul.addr %s267, 512
        %s269 = scalar_lea.vmem [#allocation6], %s268
        // Predicated region
        $region45: #{simple_cnn_forward.5} parent=39 // pred_check
          %p270 = pneg %p71
        $region46: #{simple_cnn_forward.5} parent=39 // pred_check_branch
          %272 = sbr.rel (%p270) target = $region48
        $region47: #{simple_cnn_forward.5} parent=39 // pred_region
          %273 = dma.done %s266, 8192
        $region48: #{simple_cnn_forward.5} parent=39 // pred_fallthru
          _
        // Predicated region
        $region49: #{simple_cnn_forward.5} parent=39 // pred_check
          %p274 = pneg %p92
        $region50: #{simple_cnn_forward.5} parent=39 // pred_check_branch
          %276 = sbr.rel (%p274) target = $region52
        $region51: #{simple_cnn_forward.5} parent=39 // pred_region
          %277 = dma.done [#allocation7], 16
        $region52: #{simple_cnn_forward.5} parent=39 // pred_fallthru
          _
        // Predicated region
        $region53: #{simple_cnn_forward.5} parent=39 // pred_check
          %p278 = pneg %p113
        $region54: #{simple_cnn_forward.5} parent=39 // pred_check_branch
          %280 = sbr.rel (%p278) target = $region56
        $region55: #{simple_cnn_forward.5} parent=39 // pred_region
          %281 = dma.done [#allocation10], 2048
        $region56: #{simple_cnn_forward.5} parent=39 // pred_fallthru
          _
        // Predicated region
        $region57: #{simple_cnn_forward.5} parent=39 // pred_check
          %p282 = pneg %p134
        $region58: #{simple_cnn_forward.5} parent=39 // pred_check_branch
          %284 = sbr.rel (%p282) target = $region60
        $region59: #{simple_cnn_forward.5} parent=39 // pred_region
          %285 = dma.done [#allocation10], 16
        $region60: #{simple_cnn_forward.5} parent=39 // pred_fallthru
          _
        %s286 = sand.u32 %s32, 1
        %s287 = scalar_lea.sflag [#allocation4], %s286
        %s288 = sand.u32 %s32, 1
        %s289 = smul.addr %s288, 16
        %s290 = scalar_lea.vmem [#allocation3], %s289
        %p291 = pneg %p45
        %p292 = pneg %p42
        %s293 = sand.u32 %s24, 1
        %s294 = scalar_lea.sflag [#allocation7], %s293
        %s295 = sand.u32 %s58, 1
        %s296 = smul.addr %s295, 512
        %s297 = scalar_lea.vmem [#allocation6], %s296
        %p298 = pneg %p71
        %p299 = pneg %p68
        %p300 = pneg %p92
        %p301 = pneg %p89
        %p302 = pneg %p113
        %p303 = pneg %p110
        %p304 = pneg %p134
        %p305 = pneg %p131
        %p306 = pneg %p155
        %p307 = pneg %p152
        %s308 = smul.u32 8, %s24
        %s309 = smul.u32 128, %s24
        %p311 = scmp.eq.s32.totalorder %s24, 0
        // Predicated region
        $region61: #{simple_cnn_forward.5} parent=39 // pred_check
          %p312 = pneg %p311
        $region62: #{simple_cnn_forward.5} parent=39 // pred_check_branch
          %314 = sbr.rel (%p312) target = $region64
        $region63: #{simple_cnn_forward.5} parent=39 // pred_region
          %315 = vst [vmem:[#allocation2] sm:$0x3] 0.0
        $region64: #{simple_cnn_forward.5} parent=39 // pred_fallthru
          _
        %v316 = vld [vmem:[#allocation2] sm:$0x3]
        %v317 = vld [vmem:[%s260] sm:$0xff]
        %v318 = vld [vmem:[%s260 + $0x8] sm:$0xff]
        %v321 = vcombine.high %v317, %v317
        %v323 = vunpack.c.l.s4 1983009808
        %v324 = vunpack.c.0.s8 %v323
        %v325 = vlaneseq
        %v326 = vshrl.u32 %v325, 7
        %v327 = vsub.s32 %v324, %v326
        %v328 = vrot.slane %v317, %v327
        %v330 = vunpack.c.l.s4 1983009808
        %v331 = vunpack.c.0.s8 %v330
        %v332 = vlaneseq
        %v333 = vshrl.u32 %v332, 7
        %v334 = vsub.s32 %v331, %v333
        %v335 = vrot.slane %v321, %v334
        %v336 = vcombine.high %v328, %v328
        %v337 = vcombine.high %v335, %v335
        %v338 = vcombine.high %v318, %v318
        %v340 = vunpack.c.l.s4 1983009808
        %v341 = vunpack.c.0.s8 %v340
        %v342 = vlaneseq
        %v343 = vshrl.u32 %v342, 7
        %v344 = vsub.s32 %v341, %v343
        %v345 = vrot.slane %v318, %v344
        %v347 = vunpack.c.l.s4 1983009808
        %v348 = vunpack.c.0.s8 %v347
        %v349 = vlaneseq
        %v350 = vshrl.u32 %v349, 7
        %v351 = vsub.s32 %v348, %v350
        %v352 = vrot.slane %v338, %v351
        %v353 = vcombine.high %v345, %v345
        %v354 = vcombine.high %v352, %v352
        %v363 = vpack.c.bf16 %v328, %v328
        %v364 = vpack.c.bf16 %v336, %v336
        %v365 = vpack.c.bf16 %v335, %v335
        %v366 = vpack.c.bf16 %v337, %v337
        %v367 = vpack.c.bf16 %v345, %v345
        %v368 = vpack.c.bf16 %v353, %v353
        %v369 = vpack.c.bf16 %v352, %v352
        %v370 = vpack.c.bf16 %v354, %v354
        %v371 = vld [vmem:[%s269] sm:$0xf]
        %v372 = vld [vmem:[%s269 + $0x4] sm:$0xf]
        %v373 = vld [vmem:[%s269 + $0x8] sm:$0xf]
        %v374 = vld [vmem:[%s269 + $0xc] sm:$0xf]
        %v375 = vld [vmem:[%s269 + $0x10] sm:$0xf]
        %v376 = vld [vmem:[%s269 + $0x14] sm:$0xf]
        %v377 = vld [vmem:[%s269 + $0x18] sm:$0xf]
        %v378 = vld [vmem:[%s269 + $0x1c] sm:$0xf]
        %v379 = vld [vmem:[%s269 + $0x20] sm:$0xf]
        %v380 = vld [vmem:[%s269 + $0x24] sm:$0xf]
        %v381 = vld [vmem:[%s269 + $0x28] sm:$0xf]
        %v382 = vld [vmem:[%s269 + $0x2c] sm:$0xf]
        %v383 = vld [vmem:[%s269 + $0x30] sm:$0xf]
        %v384 = vld [vmem:[%s269 + $0x34] sm:$0xf]
        %v385 = vld [vmem:[%s269 + $0x38] sm:$0xf]
        %v386 = vld [vmem:[%s269 + $0x3c] sm:$0xf]
        %v387 = vld [vmem:[%s269 + $0x40] sm:$0xf]
        %v388 = vld [vmem:[%s269 + $0x44] sm:$0xf]
        %v389 = vld [vmem:[%s269 + $0x48] sm:$0xf]
        %v390 = vld [vmem:[%s269 + $0x4c] sm:$0xf]
        %v391 = vld [vmem:[%s269 + $0x50] sm:$0xf]
        %v392 = vld [vmem:[%s269 + $0x54] sm:$0xf]
        %v393 = vld [vmem:[%s269 + $0x58] sm:$0xf]
        %v394 = vld [vmem:[%s269 + $0x5c] sm:$0xf]
        %v395 = vld [vmem:[%s269 + $0x60] sm:$0xf]
        %v396 = vld [vmem:[%s269 + $0x64] sm:$0xf]
        %v397 = vld [vmem:[%s269 + $0x68] sm:$0xf]
        %v398 = vld [vmem:[%s269 + $0x6c] sm:$0xf]
        %v399 = vld [vmem:[%s269 + $0x70] sm:$0xf]
        %v400 = vld [vmem:[%s269 + $0x74] sm:$0xf]
        %v401 = vld [vmem:[%s269 + $0x78] sm:$0xf]
        %v402 = vld [vmem:[%s269 + $0x7c] sm:$0xf]
        %v403 = vld [vmem:[%s269 + $0x80] sm:$0xf]
        %v404 = vld [vmem:[%s269 + $0x84] sm:$0xf]
        %v405 = vld [vmem:[%s269 + $0x88] sm:$0xf]
        %v406 = vld [vmem:[%s269 + $0x8c] sm:$0xf]
        %v407 = vld [vmem:[%s269 + $0x90] sm:$0xf]
        %v408 = vld [vmem:[%s269 + $0x94] sm:$0xf]
        %v409 = vld [vmem:[%s269 + $0x98] sm:$0xf]
        %v410 = vld [vmem:[%s269 + $0x9c] sm:$0xf]
        %v411 = vld [vmem:[%s269 + $0xa0] sm:$0xf]
        %v412 = vld [vmem:[%s269 + $0xa4] sm:$0xf]
        %v413 = vld [vmem:[%s269 + $0xa8] sm:$0xf]
        %v414 = vld [vmem:[%s269 + $0xac] sm:$0xf]
        %v415 = vld [vmem:[%s269 + $0xb0] sm:$0xf]
        %v416 = vld [vmem:[%s269 + $0xb4] sm:$0xf]
        %v417 = vld [vmem:[%s269 + $0xb8] sm:$0xf]
        %v418 = vld [vmem:[%s269 + $0xbc] sm:$0xf]
        %v419 = vld [vmem:[%s269 + $0xc0] sm:$0xf]
        %v420 = vld [vmem:[%s269 + $0xc4] sm:$0xf]
        %v421 = vld [vmem:[%s269 + $0xc8] sm:$0xf]
        %v422 = vld [vmem:[%s269 + $0xcc] sm:$0xf]
        %v423 = vld [vmem:[%s269 + $0xd0] sm:$0xf]
        %v424 = vld [vmem:[%s269 + $0xd4] sm:$0xf]
        %v425 = vld [vmem:[%s269 + $0xd8] sm:$0xf]
        %v426 = vld [vmem:[%s269 + $0xdc] sm:$0xf]
        %v427 = vld [vmem:[%s269 + $0xe0] sm:$0xf]
        %v428 = vld [vmem:[%s269 + $0xe4] sm:$0xf]
        %v429 = vld [vmem:[%s269 + $0xe8] sm:$0xf]
        %v430 = vld [vmem:[%s269 + $0xec] sm:$0xf]
        %v431 = vld [vmem:[%s269 + $0xf0] sm:$0xf]
        %v432 = vld [vmem:[%s269 + $0xf4] sm:$0xf]
        %v433 = vld [vmem:[%s269 + $0xf8] sm:$0xf]
        %v434 = vld [vmem:[%s269 + $0xfc] sm:$0xf]
        %v435 = vld [vmem:[%s269 + $0x100] sm:$0xf]
        %v436 = vld [vmem:[%s269 + $0x104] sm:$0xf]
        %v437 = vld [vmem:[%s269 + $0x108] sm:$0xf]
        %v438 = vld [vmem:[%s269 + $0x10c] sm:$0xf]
        %v439 = vld [vmem:[%s269 + $0x110] sm:$0xf]
        %v440 = vld [vmem:[%s269 + $0x114] sm:$0xf]
        %v441 = vld [vmem:[%s269 + $0x118] sm:$0xf]
        %v442 = vld [vmem:[%s269 + $0x11c] sm:$0xf]
        %v443 = vld [vmem:[%s269 + $0x120] sm:$0xf]
        %v444 = vld [vmem:[%s269 + $0x124] sm:$0xf]
        %v445 = vld [vmem:[%s269 + $0x128] sm:$0xf]
        %v446 = vld [vmem:[%s269 + $0x12c] sm:$0xf]
        %v447 = vld [vmem:[%s269 + $0x130] sm:$0xf]
        %v448 = vld [vmem:[%s269 + $0x134] sm:$0xf]
        %v449 = vld [vmem:[%s269 + $0x138] sm:$0xf]
        %v450 = vld [vmem:[%s269 + $0x13c] sm:$0xf]
        %v451 = vld [vmem:[%s269 + $0x140] sm:$0xf]
        %v452 = vld [vmem:[%s269 + $0x144] sm:$0xf]
        %v453 = vld [vmem:[%s269 + $0x148] sm:$0xf]
        %v454 = vld [vmem:[%s269 + $0x14c] sm:$0xf]
        %v455 = vld [vmem:[%s269 + $0x150] sm:$0xf]
        %v456 = vld [vmem:[%s269 + $0x154] sm:$0xf]
        %v457 = vld [vmem:[%s269 + $0x158] sm:$0xf]
        %v458 = vld [vmem:[%s269 + $0x15c] sm:$0xf]
        %v459 = vld [vmem:[%s269 + $0x160] sm:$0xf]
        %v460 = vld [vmem:[%s269 + $0x164] sm:$0xf]
        %v461 = vld [vmem:[%s269 + $0x168] sm:$0xf]
        %v462 = vld [vmem:[%s269 + $0x16c] sm:$0xf]
        %v463 = vld [vmem:[%s269 + $0x170] sm:$0xf]
        %v464 = vld [vmem:[%s269 + $0x174] sm:$0xf]
        %v465 = vld [vmem:[%s269 + $0x178] sm:$0xf]
        %v466 = vld [vmem:[%s269 + $0x17c] sm:$0xf]
        %v467 = vld [vmem:[%s269 + $0x180] sm:$0xf]
        %v468 = vld [vmem:[%s269 + $0x184] sm:$0xf]
        %v469 = vld [vmem:[%s269 + $0x188] sm:$0xf]
        %v470 = vld [vmem:[%s269 + $0x18c] sm:$0xf]
        %v471 = vld [vmem:[%s269 + $0x190] sm:$0xf]
        %v472 = vld [vmem:[%s269 + $0x194] sm:$0xf]
        %v473 = vld [vmem:[%s269 + $0x198] sm:$0xf]
        %v474 = vld [vmem:[%s269 + $0x19c] sm:$0xf]
        %v475 = vld [vmem:[%s269 + $0x1a0] sm:$0xf]
        %v476 = vld [vmem:[%s269 + $0x1a4] sm:$0xf]
        %v477 = vld [vmem:[%s269 + $0x1a8] sm:$0xf]
        %v478 = vld [vmem:[%s269 + $0x1ac] sm:$0xf]
        %v479 = vld [vmem:[%s269 + $0x1b0] sm:$0xf]
        %v480 = vld [vmem:[%s269 + $0x1b4] sm:$0xf]
        %v481 = vld [vmem:[%s269 + $0x1b8] sm:$0xf]
        %v482 = vld [vmem:[%s269 + $0x1bc] sm:$0xf]
        %v483 = vld [vmem:[%s269 + $0x1c0] sm:$0xf]
        %v484 = vld [vmem:[%s269 + $0x1c4] sm:$0xf]
        %v485 = vld [vmem:[%s269 + $0x1c8] sm:$0xf]
        %v486 = vld [vmem:[%s269 + $0x1cc] sm:$0xf]
        %v487 = vld [vmem:[%s269 + $0x1d0] sm:$0xf]
        %v488 = vld [vmem:[%s269 + $0x1d4] sm:$0xf]
        %v489 = vld [vmem:[%s269 + $0x1d8] sm:$0xf]
        %v490 = vld [vmem:[%s269 + $0x1dc] sm:$0xf]
        %v491 = vld [vmem:[%s269 + $0x1e0] sm:$0xf]
        %v492 = vld [vmem:[%s269 + $0x1e4] sm:$0xf]
        %v493 = vld [vmem:[%s269 + $0x1e8] sm:$0xf]
        %v494 = vld [vmem:[%s269 + $0x1ec] sm:$0xf]
        %v495 = vld [vmem:[%s269 + $0x1f0] sm:$0xf]
        %v496 = vld [vmem:[%s269 + $0x1f4] sm:$0xf]
        %v497 = vld [vmem:[%s269 + $0x1f8] sm:$0xf]
        %v498 = vld [vmem:[%s269 + $0x1fc] sm:$0xf]
        %v627 = vunpack.c.l.b16 %v371
        %v628 = vunpack.c.l.b16 %v372
        %v629 = vunpack.c.l.b16 %v373
        %v630 = vunpack.c.l.b16 %v374
        %v631 = vunpack.c.l.b16 %v375
        %v632 = vunpack.c.l.b16 %v376
        %v633 = vunpack.c.l.b16 %v377
        %v634 = vunpack.c.l.b16 %v378
        %v635 = vunpack.c.l.b16 %v379
        %v636 = vunpack.c.l.b16 %v380
        %v637 = vunpack.c.l.b16 %v381
        %v638 = vunpack.c.l.b16 %v382
        %v639 = vunpack.c.l.b16 %v383
        %v640 = vunpack.c.l.b16 %v384
        %v641 = vunpack.c.l.b16 %v385
        %v642 = vunpack.c.l.b16 %v386
        %v643 = vunpack.c.l.b16 %v387
        %v644 = vunpack.c.l.b16 %v388
        %v645 = vunpack.c.l.b16 %v389
        %v646 = vunpack.c.l.b16 %v390
        %v647 = vunpack.c.l.b16 %v391
        %v648 = vunpack.c.l.b16 %v392
        %v649 = vunpack.c.l.b16 %v393
        %v650 = vunpack.c.l.b16 %v394
        %v651 = vunpack.c.l.b16 %v395
        %v652 = vunpack.c.l.b16 %v396
        %v653 = vunpack.c.l.b16 %v397
        %v654 = vunpack.c.l.b16 %v398
        %v655 = vunpack.c.l.b16 %v399
        %v656 = vunpack.c.l.b16 %v400
        %v657 = vunpack.c.l.b16 %v401
        %v658 = vunpack.c.l.b16 %v402
        %v659 = vunpack.c.l.b16 %v403
        %v660 = vunpack.c.l.b16 %v404
        %v661 = vunpack.c.l.b16 %v405
        %v662 = vunpack.c.l.b16 %v406
        %v663 = vunpack.c.l.b16 %v407
        %v664 = vunpack.c.l.b16 %v408
        %v665 = vunpack.c.l.b16 %v409
        %v666 = vunpack.c.l.b16 %v410
        %v667 = vunpack.c.l.b16 %v411
        %v668 = vunpack.c.l.b16 %v412
        %v669 = vunpack.c.l.b16 %v413
        %v670 = vunpack.c.l.b16 %v414
        %v671 = vunpack.c.l.b16 %v415
        %v672 = vunpack.c.l.b16 %v416
        %v673 = vunpack.c.l.b16 %v417
        %v674 = vunpack.c.l.b16 %v418
        %v675 = vunpack.c.l.b16 %v419
        %v676 = vunpack.c.l.b16 %v420
        %v677 = vunpack.c.l.b16 %v421
        %v678 = vunpack.c.l.b16 %v422
        %v679 = vunpack.c.l.b16 %v423
        %v680 = vunpack.c.l.b16 %v424
        %v681 = vunpack.c.l.b16 %v425
        %v682 = vunpack.c.l.b16 %v426
        %v683 = vunpack.c.l.b16 %v427
        %v684 = vunpack.c.l.b16 %v428
        %v685 = vunpack.c.l.b16 %v429
        %v686 = vunpack.c.l.b16 %v430
        %v687 = vunpack.c.l.b16 %v431
        %v688 = vunpack.c.l.b16 %v432
        %v689 = vunpack.c.l.b16 %v433
        %v690 = vunpack.c.l.b16 %v434
        %v691 = vunpack.c.l.b16 %v435
        %v692 = vunpack.c.l.b16 %v436
        %v693 = vunpack.c.l.b16 %v437
        %v694 = vunpack.c.l.b16 %v438
        %v695 = vunpack.c.l.b16 %v439
        %v696 = vunpack.c.l.b16 %v440
        %v697 = vunpack.c.l.b16 %v441
        %v698 = vunpack.c.l.b16 %v442
        %v699 = vunpack.c.l.b16 %v443
        %v700 = vunpack.c.l.b16 %v444
        %v701 = vunpack.c.l.b16 %v445
        %v702 = vunpack.c.l.b16 %v446
        %v703 = vunpack.c.l.b16 %v447
        %v704 = vunpack.c.l.b16 %v448
        %v705 = vunpack.c.l.b16 %v449
        %v706 = vunpack.c.l.b16 %v450
        %v707 = vunpack.c.l.b16 %v451
        %v708 = vunpack.c.l.b16 %v452
        %v709 = vunpack.c.l.b16 %v453
        %v710 = vunpack.c.l.b16 %v454
        %v711 = vunpack.c.l.b16 %v455
        %v712 = vunpack.c.l.b16 %v456
        %v713 = vunpack.c.l.b16 %v457
        %v714 = vunpack.c.l.b16 %v458
        %v715 = vunpack.c.l.b16 %v459
        %v716 = vunpack.c.l.b16 %v460
        %v717 = vunpack.c.l.b16 %v461
        %v718 = vunpack.c.l.b16 %v462
        %v719 = vunpack.c.l.b16 %v463
        %v720 = vunpack.c.l.b16 %v464
        %v721 = vunpack.c.l.b16 %v465
        %v722 = vunpack.c.l.b16 %v466
        %v723 = vunpack.c.l.b16 %v467
        %v724 = vunpack.c.l.b16 %v468
        %v725 = vunpack.c.l.b16 %v469
        %v726 = vunpack.c.l.b16 %v470
        %v727 = vunpack.c.l.b16 %v471
        %v728 = vunpack.c.l.b16 %v472
        %v729 = vunpack.c.l.b16 %v473
        %v730 = vunpack.c.l.b16 %v474
        %v731 = vunpack.c.l.b16 %v475
        %v732 = vunpack.c.l.b16 %v476
        %v733 = vunpack.c.l.b16 %v477
        %v734 = vunpack.c.l.b16 %v478
        %v735 = vunpack.c.l.b16 %v479
        %v736 = vunpack.c.l.b16 %v480
        %v737 = vunpack.c.l.b16 %v481
        %v738 = vunpack.c.l.b16 %v482
        %v739 = vunpack.c.l.b16 %v483
        %v740 = vunpack.c.l.b16 %v484
        %v741 = vunpack.c.l.b16 %v485
        %v742 = vunpack.c.l.b16 %v486
        %v743 = vunpack.c.l.b16 %v487
        %v744 = vunpack.c.l.b16 %v488
        %v745 = vunpack.c.l.b16 %v489
        %v746 = vunpack.c.l.b16 %v490
        %v747 = vunpack.c.l.b16 %v491
        %v748 = vunpack.c.l.b16 %v492
        %v749 = vunpack.c.l.b16 %v493
        %v750 = vunpack.c.l.b16 %v494
        %v751 = vunpack.c.l.b16 %v495
        %v752 = vunpack.c.l.b16 %v496
        %v753 = vunpack.c.l.b16 %v497
        %v754 = vunpack.c.l.b16 %v498
        %v755 = vpack.c.b16 %v628, %v627
        %v756 = vpack.c.b16 %v630, %v629
        %v757 = vpack.c.b16 %v632, %v631
        %v758 = vpack.c.b16 %v634, %v633
        %v759 = vpack.c.b16 %v636, %v635
        %v760 = vpack.c.b16 %v638, %v637
        %v761 = vpack.c.b16 %v640, %v639
        %v762 = vpack.c.b16 %v642, %v641
        %v763 = vpack.c.b16 %v644, %v643
        %v764 = vpack.c.b16 %v646, %v645
        %v765 = vpack.c.b16 %v648, %v647
        %v766 = vpack.c.b16 %v650, %v649
        %v767 = vpack.c.b16 %v652, %v651
        %v768 = vpack.c.b16 %v654, %v653
        %v769 = vpack.c.b16 %v656, %v655
        %v770 = vpack.c.b16 %v658, %v657
        %v771 = vpack.c.b16 %v660, %v659
        %v772 = vpack.c.b16 %v662, %v661
        %v773 = vpack.c.b16 %v664, %v663
        %v774 = vpack.c.b16 %v666, %v665
        %v775 = vpack.c.b16 %v668, %v667
        %v776 = vpack.c.b16 %v670, %v669
        %v777 = vpack.c.b16 %v672, %v671
        %v778 = vpack.c.b16 %v674, %v673
        %v779 = vpack.c.b16 %v676, %v675
        %v780 = vpack.c.b16 %v678, %v677
        %v781 = vpack.c.b16 %v680, %v679
        %v782 = vpack.c.b16 %v682, %v681
        %v783 = vpack.c.b16 %v684, %v683
        %v784 = vpack.c.b16 %v686, %v685
        %v785 = vpack.c.b16 %v688, %v687
        %v786 = vpack.c.b16 %v690, %v689
        %v787 = vpack.c.b16 %v692, %v691
        %v788 = vpack.c.b16 %v694, %v693
        %v789 = vpack.c.b16 %v696, %v695
        %v790 = vpack.c.b16 %v698, %v697
        %v791 = vpack.c.b16 %v700, %v699
        %v792 = vpack.c.b16 %v702, %v701
        %v793 = vpack.c.b16 %v704, %v703
        %v794 = vpack.c.b16 %v706, %v705
        %v795 = vpack.c.b16 %v708, %v707
        %v796 = vpack.c.b16 %v710, %v709
        %v797 = vpack.c.b16 %v712, %v711
        %v798 = vpack.c.b16 %v714, %v713
        %v799 = vpack.c.b16 %v716, %v715
        %v800 = vpack.c.b16 %v718, %v717
        %v801 = vpack.c.b16 %v720, %v719
        %v802 = vpack.c.b16 %v722, %v721
        %v803 = vpack.c.b16 %v724, %v723
        %v804 = vpack.c.b16 %v726, %v725
        %v805 = vpack.c.b16 %v728, %v727
        %v806 = vpack.c.b16 %v730, %v729
        %v807 = vpack.c.b16 %v732, %v731
        %v808 = vpack.c.b16 %v734, %v733
        %v809 = vpack.c.b16 %v736, %v735
        %v810 = vpack.c.b16 %v738, %v737
        %v811 = vpack.c.b16 %v740, %v739
        %v812 = vpack.c.b16 %v742, %v741
        %v813 = vpack.c.b16 %v744, %v743
        %v814 = vpack.c.b16 %v746, %v745
        %v815 = vpack.c.b16 %v748, %v747
        %v816 = vpack.c.b16 %v750, %v749
        %v817 = vpack.c.b16 %v752, %v751
        %v818 = vpack.c.b16 %v754, %v753
        %883 = vmatprep.subr.bf16.mxu0 0
        %884 = vmatpush1.bf16.msra.mxu0 %v755
        %885 = vmatprep.subr.bf16.mxu0 0
        %886 = vmatpush1.bf16.msra.mxu0 %v756
        %887 = vmatprep.subr.bf16.mxu0 0
        %888 = vmatpush1.bf16.msra.mxu0 %v757
        %889 = vmatprep.subr.bf16.mxu0 0
        %890 = vmatpush1.bf16.msra.mxu0 %v758
        %891 = vmatprep.subr.bf16.mxu0 0
        %892 = vmatpush1.bf16.msra.mxu0 %v759
        %893 = vmatprep.subr.bf16.mxu0 0
        %894 = vmatpush1.bf16.msra.mxu0 %v760
        %895 = vmatprep.subr.bf16.mxu0 0
        %896 = vmatpush1.bf16.msra.mxu0 %v761
        %897 = vmatprep.subr.bf16.mxu0 0
        %898 = vmatpush1.bf16.msra.mxu0 %v762
        %899 = vmatprep.subr.bf16.mxu0 0
        %900 = vmatpush1.bf16.msra.mxu0 %v763
        %901 = vmatprep.subr.bf16.mxu0 0
        %902 = vmatpush1.bf16.msra.mxu0 %v764
        %903 = vmatprep.subr.bf16.mxu0 0
        %904 = vmatpush1.bf16.msra.mxu0 %v765
        %905 = vmatprep.subr.bf16.mxu0 0
        %906 = vmatpush1.bf16.msra.mxu0 %v766
        %907 = vmatprep.subr.bf16.mxu0 0
        %908 = vmatpush1.bf16.msra.mxu0 %v767
        %909 = vmatprep.subr.bf16.mxu0 0
        %910 = vmatpush1.bf16.msra.mxu0 %v768
        %911 = vmatprep.subr.bf16.mxu0 0
        %912 = vmatpush1.bf16.msra.mxu0 %v769
        %913 = vmatprep.subr.bf16.mxu0 0
        %914 = vmatpush1.bf16.msra.mxu0 %v770
        %915 = vmatprep.mubr.bf16.mxu0 %v364
        %916 = vmatmul.mubr.bf16.gmra.mrb[0].mxu0 %v363
        %v917 = vpop.f32.mrb[0].mxu0
        %v918 = vadd.f32 0.0, %v917
        %v919 = vpop.f32.mrb[0].mxu0
        %v920 = vpop.f32.mrb[0].mxu0
        %v921 = vpop.f32.mrb[0].mxu0
        %922 = vdwg.mxu0
        %923 = vmatprep.subr.bf16.mxu0 0
        %924 = vmatpush1.bf16.msra.mxu0 %v771
        %925 = vmatprep.subr.bf16.mxu0 0
        %926 = vmatpush1.bf16.msra.mxu0 %v772
        %927 = vmatprep.subr.bf16.mxu0 0
        %928 = vmatpush1.bf16.msra.mxu0 %v773
        %929 = vmatprep.subr.bf16.mxu0 0
        %930 = vmatpush1.bf16.msra.mxu0 %v774
        %931 = vmatprep.subr.bf16.mxu0 0
        %932 = vmatpush1.bf16.msra.mxu0 %v775
        %933 = vmatprep.subr.bf16.mxu0 0
        %934 = vmatpush1.bf16.msra.mxu0 %v776
        %935 = vmatprep.subr.bf16.mxu0 0
        %936 = vmatpush1.bf16.msra.mxu0 %v777
        %937 = vmatprep.subr.bf16.mxu0 0
        %938 = vmatpush1.bf16.msra.mxu0 %v778
        %939 = vmatprep.subr.bf16.mxu0 0
        %940 = vmatpush1.bf16.msra.mxu0 %v779
        %941 = vmatprep.subr.bf16.mxu0 0
        %942 = vmatpush1.bf16.msra.mxu0 %v780
        %943 = vmatprep.subr.bf16.mxu0 0
        %944 = vmatpush1.bf16.msra.mxu0 %v781
        %945 = vmatprep.subr.bf16.mxu0 0
        %946 = vmatpush1.bf16.msra.mxu0 %v782
        %947 = vmatprep.subr.bf16.mxu0 0
        %948 = vmatpush1.bf16.msra.mxu0 %v783
        %949 = vmatprep.subr.bf16.mxu0 0
        %950 = vmatpush1.bf16.msra.mxu0 %v784
        %951 = vmatprep.subr.bf16.mxu0 0
        %952 = vmatpush1.bf16.msra.mxu0 %v785
        %953 = vmatprep.subr.bf16.mxu0 0
        %954 = vmatpush1.bf16.msra.mxu0 %v786
        %955 = vmatprep.mubr.bf16.mxu0 %v366
        %956 = vmatmul.mubr.bf16.gmra.mrb[0].mxu0 %v365
        %v957 = vpop.f32.mrb[0].mxu0
        %v958 = vadd.f32 %v918, %v957
        %v959 = vpop.f32.mrb[0].mxu0
        %v960 = vpop.f32.mrb[0].mxu0
        %v961 = vpop.f32.mrb[0].mxu0
        %962 = vdwg.mxu0
        %963 = vmatprep.subr.bf16.mxu0 0
        %964 = vmatpush1.bf16.msra.mxu0 %v787
        %965 = vmatprep.subr.bf16.mxu0 0
        %966 = vmatpush1.bf16.msra.mxu0 %v788
        %967 = vmatprep.subr.bf16.mxu0 0
        %968 = vmatpush1.bf16.msra.mxu0 %v789
        %969 = vmatprep.subr.bf16.mxu0 0
        %970 = vmatpush1.bf16.msra.mxu0 %v790
        %971 = vmatprep.subr.bf16.mxu0 0
        %972 = vmatpush1.bf16.msra.mxu0 %v791
        %973 = vmatprep.subr.bf16.mxu0 0
        %974 = vmatpush1.bf16.msra.mxu0 %v792
        %975 = vmatprep.subr.bf16.mxu0 0
        %976 = vmatpush1.bf16.msra.mxu0 %v793
        %977 = vmatprep.subr.bf16.mxu0 0
        %978 = vmatpush1.bf16.msra.mxu0 %v794
        %979 = vmatprep.subr.bf16.mxu0 0
        %980 = vmatpush1.bf16.msra.mxu0 %v795
        %981 = vmatprep.subr.bf16.mxu0 0
        %982 = vmatpush1.bf16.msra.mxu0 %v796
        %983 = vmatprep.subr.bf16.mxu0 0
        %984 = vmatpush1.bf16.msra.mxu0 %v797
        %985 = vmatprep.subr.bf16.mxu0 0
        %986 = vmatpush1.bf16.msra.mxu0 %v798
        %987 = vmatprep.subr.bf16.mxu0 0
        %988 = vmatpush1.bf16.msra.mxu0 %v799
        %989 = vmatprep.subr.bf16.mxu0 0
        %990 = vmatpush1.bf16.msra.mxu0 %v800
        %991 = vmatprep.subr.bf16.mxu0 0
        %992 = vmatpush1.bf16.msra.mxu0 %v801
        %993 = vmatprep.subr.bf16.mxu0 0
        %994 = vmatpush1.bf16.msra.mxu0 %v802
        %995 = vmatprep.mubr.bf16.mxu0 %v368
        %996 = vmatmul.mubr.bf16.gmra.mrb[0].mxu0 %v367
        %v997 = vpop.f32.mrb[0].mxu0
        %v998 = vadd.f32 %v958, %v997
        %v999 = vpop.f32.mrb[0].mxu0
        %v1000 = vpop.f32.mrb[0].mxu0
        %v1001 = vpop.f32.mrb[0].mxu0
        %1002 = vdwg.mxu0
        %1003 = vmatprep.subr.bf16.mxu0 0
        %1004 = vmatpush1.bf16.msra.mxu0 %v803
        %1005 = vmatprep.subr.bf16.mxu0 0
        %1006 = vmatpush1.bf16.msra.mxu0 %v804
        %1007 = vmatprep.subr.bf16.mxu0 0
        %1008 = vmatpush1.bf16.msra.mxu0 %v805
        %1009 = vmatprep.subr.bf16.mxu0 0
        %1010 = vmatpush1.bf16.msra.mxu0 %v806
        %1011 = vmatprep.subr.bf16.mxu0 0
        %1012 = vmatpush1.bf16.msra.mxu0 %v807
        %1013 = vmatprep.subr.bf16.mxu0 0
        %1014 = vmatpush1.bf16.msra.mxu0 %v808
        %1015 = vmatprep.subr.bf16.mxu0 0
        %1016 = vmatpush1.bf16.msra.mxu0 %v809
        %1017 = vmatprep.subr.bf16.mxu0 0
        %1018 = vmatpush1.bf16.msra.mxu0 %v810
        %1019 = vmatprep.subr.bf16.mxu0 0
        %1020 = vmatpush1.bf16.msra.mxu0 %v811
        %1021 = vmatprep.subr.bf16.mxu0 0
        %1022 = vmatpush1.bf16.msra.mxu0 %v812
        %1023 = vmatprep.subr.bf16.mxu0 0
        %1024 = vmatpush1.bf16.msra.mxu0 %v813
        %1025 = vmatprep.subr.bf16.mxu0 0
        %1026 = vmatpush1.bf16.msra.mxu0 %v814
        %1027 = vmatprep.subr.bf16.mxu0 0
        %1028 = vmatpush1.bf16.msra.mxu0 %v815
        %1029 = vmatprep.subr.bf16.mxu0 0
        %1030 = vmatpush1.bf16.msra.mxu0 %v816
        %1031 = vmatprep.subr.bf16.mxu0 0
        %1032 = vmatpush1.bf16.msra.mxu0 %v817
        %1033 = vmatprep.subr.bf16.mxu0 0
        %1034 = vmatpush1.bf16.msra.mxu0 %v818
        %1035 = vmatprep.mubr.bf16.mxu0 %v370
        %1036 = vmatmul.mubr.bf16.gmra.mrb[0].mxu0 %v369
        %v1037 = vpop.f32.mrb[0].mxu0
        %v1038 = vadd.f32 %v998, %v1037
        %v1039 = vpop.f32.mrb[0].mxu0
        %v1040 = vpop.f32.mrb[0].mxu0
        %v1041 = vpop.f32.mrb[0].mxu0
        %1042 = vdwg.mxu0
        %v1043 = vadd.f32 %v316, %v1038
        %1044 = vst [vmem:[#allocation2] sm:$0x3] %v1043
        %p1045 = scmp.eq.s32.totalorder %s24, 1
        // Predicated region
        $region65: #{simple_cnn_forward.5} parent=39 // pred_check
          %p1046 = pneg %p1045
        $region66: #{simple_cnn_forward.5} parent=39 // pred_check_branch
          %1048 = sbr.rel (%p1046) target = $region68
        $region67: #{simple_cnn_forward.5} parent=39 // pred_region
          %v1049 = vld [vmem:[#allocation2] sm:$0x3]
          %v1050 = vld [vmem:[#allocation8] sm:$0x1]
          %v1052 = vlaneseq
          %v1053 = vshrl.u32 %v1052, 7
          %v1054 = vsub.s32 0, %v1053
          %v1055 = vrot.slane %v1050, %v1054
          %v1057 = vadd.f32 %v1049, %v1055
          %v1058 = vmax.f32 %v1057, 0.0
          %v1059 = vld [vmem:[#allocation9] sm:$0xff]
          %v1060 = vld [vmem:[#allocation9 + $0x8] sm:$0xff]
          %v1061 = vld [vmem:[#allocation9 + $0x10] sm:$0xff]
          %v1062 = vld [vmem:[#allocation9 + $0x18] sm:$0xff]
          %v1063 = vld [vmem:[#allocation9 + $0x20] sm:$0xff]
          %v1064 = vld [vmem:[#allocation9 + $0x28] sm:$0xff]
          %v1065 = vld [vmem:[#allocation9 + $0x30] sm:$0xff]
          %v1066 = vld [vmem:[#allocation9 + $0x38] sm:$0xff]
          %v1067 = vld [vmem:[#allocation9 + $0x40] sm:$0xff]
          %v1068 = vld [vmem:[#allocation9 + $0x48] sm:$0xff]
          %v1069 = vld [vmem:[#allocation9 + $0x50] sm:$0xff]
          %v1070 = vld [vmem:[#allocation9 + $0x58] sm:$0xff]
          %v1071 = vld [vmem:[#allocation9 + $0x60] sm:$0xff]
          %v1072 = vld [vmem:[#allocation9 + $0x68] sm:$0xff]
          %v1073 = vld [vmem:[#allocation9 + $0x70] sm:$0xff]
          %v1074 = vld [vmem:[#allocation9 + $0x78] sm:$0xff]
          %v1075 = vld [vmem:[#allocation11] sm:$0x1]
          %v1077 = vlaneseq
          %v1078 = vshrl.u32 %v1077, 7
          %v1079 = vsub.s32 0, %v1078
          %v1080 = vrot.slane %v1075, %v1079
          %1082 = vmatprep.subr.mxu0 0.0
          %1083 = vmatpush1.msra.mxu0 %v1059
          %1084 = vmatprep.subr.mxu0 0.0
          %1085 = vmatpush1.msra.mxu0 %v1060
          %1086 = vmatprep.subr.mxu0 0.0
          %1087 = vmatpush1.msra.mxu0 %v1061
          %1088 = vmatprep.subr.mxu0 0.0
          %1089 = vmatpush1.msra.mxu0 %v1062
          %1090 = vmatprep.subr.mxu0 0.0
          %1091 = vmatpush1.msra.mxu0 %v1063
          %1092 = vmatprep.subr.mxu0 0.0
          %1093 = vmatpush1.msra.mxu0 %v1064
          %1094 = vmatprep.subr.mxu0 0.0
          %1095 = vmatpush1.msra.mxu0 %v1065
          %1096 = vmatprep.subr.mxu0 0.0
          %1097 = vmatpush1.msra.mxu0 %v1066
          %1098 = vmatprep.subr.mxu0 0.0
          %1099 = vmatpush1.msra.mxu0 %v1067
          %1100 = vmatprep.subr.mxu0 0.0
          %1101 = vmatpush1.msra.mxu0 %v1068
          %1102 = vmatprep.subr.mxu0 0.0
          %1103 = vmatpush1.msra.mxu0 %v1069
          %1104 = vmatprep.subr.mxu0 0.0
          %1105 = vmatpush1.msra.mxu0 %v1070
          %1106 = vmatprep.subr.mxu0 0.0
          %1107 = vmatpush1.msra.mxu0 %v1071
          %1108 = vmatprep.subr.mxu0 0.0
          %1109 = vmatpush1.msra.mxu0 %v1072
          %1110 = vmatprep.subr.mxu0 0.0
          %1111 = vmatpush1.msra.mxu0 %v1073
          %1112 = vmatprep.subr.mxu0 0.0
          %1113 = vmatpush1.msra.mxu0 %v1074
          %1114 = vmatprep.subr.mxu0 0.0
          %1115 = vmatpush1.msra.mxu0 0.0
          %1116 = vmatprep.subr.mxu0 0.0
          %1117 = vmatpush1.msra.mxu0 0.0
          %1118 = vmatprep.subr.mxu0 0.0
          %1119 = vmatpush1.msra.mxu0 0.0
          %1120 = vmatprep.subr.mxu0 0.0
          %1121 = vmatpush1.msra.mxu0 0.0
          %1122 = vmatprep.subr.mxu0 0.0
          %1123 = vmatpush1.msra.mxu0 0.0
          %1124 = vmatprep.subr.mxu0 0.0
          %1125 = vmatpush1.msra.mxu0 0.0
          %1126 = vmatprep.subr.mxu0 0.0
          %1127 = vmatpush1.msra.mxu0 0.0
          %1128 = vmatprep.subr.mxu0 0.0
          %1129 = vmatpush1.msra.mxu0 0.0
          %1130 = vmatprep.subr.mxu0 0.0
          %1131 = vmatpush1.msra.mxu0 0.0
          %1132 = vmatprep.subr.mxu0 0.0
          %1133 = vmatpush1.msra.mxu0 0.0
          %1134 = vmatprep.subr.mxu0 0.0
          %1135 = vmatpush1.msra.mxu0 0.0
          %1136 = vmatprep.subr.mxu0 0.0
          %1137 = vmatpush1.msra.mxu0 0.0
          %1138 = vmatprep.subr.mxu0 0.0
          %1139 = vmatpush1.msra.mxu0 0.0
          %1140 = vmatprep.subr.mxu0 0.0
          %1141 = vmatpush1.msra.mxu0 0.0
          %1142 = vmatprep.subr.mxu0 0.0
          %1143 = vmatpush1.msra.mxu0 0.0
          %1144 = vmatprep.subr.mxu0 0.0
          %1145 = vmatpush1.msra.mxu0 0.0
          %1146 = vmatprep.mubr.f32.mxu0 0.0
          %1147 = vmatmul.mubr.f32.gmra.mrb[0].mxu0 %v1058
          %v1148 = vpop.f32.mrb[0].mxu0
          %v1149 = vadd.f32 %v1080, %v1148
          %v1150 = vpop.f32.mrb[0].mxu0
          %1151 = vdwg.mxu0
          %vm1152 = vcmask 9216
          %1153 = vst.msk [vmem:[#allocation12] sm:$0x3] %vm1152, %v1149
        $region68: #{simple_cnn_forward.5} parent=39 // pred_fallthru
          _
        // Predicated region
        $region69: #{simple_cnn_forward.5} parent=39 // pred_check
          %p1154 = pneg %p152
        $region70: #{simple_cnn_forward.5} parent=39 // pred_check_branch
          %1156 = sbr.rel (%p1154) target = $region72
        $region71: #{simple_cnn_forward.5} parent=39 // pred_region
          %s1158 = ssub.s32 32, 32
          %1159 = vsyncadd [#allocation5], %s1158
          %s1161 = sshll.u32 [#allocation12], 4
          %s1162 = int_to_ptr.vmem [resolvable:$true] %s1161
          %1164 = dma.vmem_to_hbm [thread:$0]  %s1162, 32, %s5, [#allocation5]
        $region72: #{simple_cnn_forward.5} parent=39 // pred_fallthru
          _
        // Predicated region
        $region73: #{simple_cnn_forward.5} parent=39 // pred_check
          %p1165 = pneg %p152
        $region74: #{simple_cnn_forward.5} parent=39 // pred_check_branch
          %1167 = sbr.rel (%p1165) target = $region76
        $region75: #{simple_cnn_forward.5} parent=39 // pred_region
          %1168 = dma.done [#allocation5], 32
        $region76: #{simple_cnn_forward.5} parent=39 // pred_fallthru
          _
      $region40: #{simple_cnn_forward.5} parent=5 // pred_fallthru
        _
      %p1169 = scmp.le.s32.totalorder 2, %s19
      // Predicated region
      $region77: #{simple_cnn_forward.5} parent=5 // pred_check
        %p1170 = pneg %p1169
      $region78: #{simple_cnn_forward.5} parent=5 // pred_check_branch
        %1172 = sbr.rel (%p1170) target = $region80
      $region79: #{simple_cnn_forward.5} parent=5 // pred_region
        %s1173 = ssub.s32 %s19, 2
      $region80: #{simple_cnn_forward.5} parent=5 // pred_fallthru
        _
    $region6: #{simple_cnn_forward.5} parent=1 // loop_footer
      %s23 = sadd.s32 1, %s19
    $region7: #{simple_cnn_forward.5} parent=1 // loop_footer_branch
      %18 = sbr.rel target = $region3
    $region8: #{simple_cnn_forward.5} parent=1 // loop_exit
      _
    %1174 = vsyncpa [#allocation4], 1
    %s1175 = scalar_lea.sflag [#allocation4], 1
    %1176 = vsyncpa %s1175, 1
    %1177 = vsyncpa [#allocation7], 1
    %s1178 = scalar_lea.sflag [#allocation7], 1
    %1179 = vsyncpa %s1178, 1
    %1180 = vsyncpa [#allocation10], 1
    %1181 = vsyncpa [#allocation5], 1
    %s1182 = scalar_lea.sflag [#allocation5], 1
    %1183 = vsyncpa %s1182, 1

// kernel: simple_cnn_forward.3
$region0: #{simple_cnn_forward.3}
  #allocation0 [shape = 'u32[]', space=smem, size = 0x4, offset = 0x4, fixed_abs, tag = 'smem constant byte address 0x4 - core index']
  #allocation1 [shape = 'u32[144,128]{1,0:T(1,128)}', space=vmem, size = 0x12000, scoped, tag = 'internal scratch']
  %s0 = inlined_call_operand.hbm [shape: f32[2,34,34,3], index: 0, kind: input, shape index: {}]
  %s1 = inlined_call_operand.hbm [shape: bf16[27,16], index: 1, kind: input, shape index: {}]
  %s2 = inlined_call_operand.hbm [shape: f32[1,16], index: 2, kind: input, shape index: {}]
  %s3 = inlined_call_operand.hbm [shape: f32[2,16,256], index: 3, kind: output, shape index: {}]
  %s4 = sld [smem:[#allocation0]]
  $region57: #{simple_cnn_forward.3} parent=0
    _
  %s6 = ssub.s32 1, %s4
  %s7 = scalar_select 0, %s6, %s4
  $region1: #{simple_cnn_forward.3} parent=0
    #allocation2 [shape = 'u8[1392640]{0}', space=vmem, size = 0x154000, scoped, tag = 'input window, operand 0']
    #allocation3 [shape = 's32[2]{0}', space=sflag, size = 0x8, scoped, tag = 'scoped memory for simple_cnn_forward.3']
    #allocation4 [shape = 's32[2]{0}', space=sflag, size = 0x8, scoped, tag = 'scoped memory for simple_cnn_forward.3']
    #allocation5 [shape = 'u8[8192]{0}', space=vmem, size = 0x2000, scoped, tag = 'input window, operand 1, single buffered']
    #allocation6 [shape = 's32[1]{0}', space=sflag, size = 0x4, scoped, tag = 'scoped memory for simple_cnn_forward.3']
    #allocation7 [shape = 'u8[512]{0}', space=vmem, size = 0x400, scoped, tag = 'input window, operand 2, single buffered']
    #allocation8 [shape = 'u8[16384]{0}', space=vmem, size = 0x4000, scoped, tag = 'output window, operand 0']
    %8 = vsyncpa [#allocation3], 0
    %s9 = scalar_lea.sflag [#allocation3], 1
    %10 = vsyncpa %s9, 0
    %11 = vsyncpa [#allocation6], 0
    %12 = vsyncpa [#allocation4], 0
    %s13 = scalar_lea.sflag [#allocation4], 1
    %14 = vsyncpa %s13, 0
    loop: start=0, step=1, limit=6
    $region2: #{simple_cnn_forward.3} parent=1 // loop_pre_header
      _
    $region3: #{simple_cnn_forward.3} parent=1 // loop_header
      %s16 = sphi 0, %s20
      %p17 = scmp.ge.s32.totalorder %s16, 6
      %s23 = sphi 0, %s35
      %s24 = sphi 0, %s31
      %s25 = sphi 0, %s23
      %s26 = sphi 0, %s24
      %s27 = sphi 0, %s25
      %s28 = sphi 0, %s26
      %s38 = sphi 0, %s40
      %s41 = sphi 0, %s38
      %s42 = sphi 0, %s41
      %s58 = sphi 0, %s42
      %s62 = sphi 0, %s62
      %s64 = sphi 0, %s62
      %s65 = sphi 0, %s64
      %s79 = sphi 0, %s65
      %s83 = sphi 0, %s83
      %s85 = sphi 0, %s83
      %s86 = sphi 0, %s85
      %s100 = sphi 0, %s86
      %s108 = sphi 0, %s110
      %s111 = sphi 0, %s108
      %s112 = sphi 0, %s111
      %s128 = sphi 0, %s112
    $region4: #{simple_cnn_forward.3} parent=1 // loop_header_branch
      %19 = sbr.rel (%p17) target = $region8
    $region5: #{simple_cnn_forward.3} parent=1 // loop_body
      %s21 = ssub.s32 %s16, 1
      %s22 = ssub.s32 %s16, 2
      %s29 = sadd.s32 1, %s24
      %p30 = scmp.ge.s32.totalorder %s29, 2
      %s31 = scalar_select %p30, 0, %s29
      %s32 = sadd.s32 1, %s23
      %s33 = scalar_select %p30, %s32, %s23
      %p34 = scmp.ge.s32.totalorder %s33, 2
      %s35 = scalar_select %p34, 0, %s33
      %s36 = ssub.s32 %s23, %s35
      %p37 = scmp.eq.s32.totalorder %s36, 0
      %s39 = sadd.s32 %s38, 1
      %s40 = scalar_select %p37, %s38, %s39
      %p43 = pneg %p37
      %p44 = scmp.eq.s32.totalorder %s16, 3
      %p45 = por %p43, %p44
      %p46 = scmp.ne.s32.totalorder %s38, %s41
      %p47 = scmp.eq.s32.totalorder %s16, 0
      %p48 = por %p46, %p47
      %p49 = scmp.ne.s32.totalorder %s38, %s41
      %p50 = scmp.eq.s32.totalorder %s21, 3
      %p51 = por %p49, %p50
      %p52 = scmp.ne.s32.totalorder %s41, %s42
      %p53 = scmp.eq.s32.totalorder %s21, 0
      %p54 = por %p52, %p53
      %p55 = scmp.ne.s32.totalorder %s41, %s42
      %p56 = scmp.eq.s32.totalorder %s22, 3
      %p57 = por %p55, %p56
      %p59 = scmp.ne.s32.totalorder %s42, %s58
      %p60 = scmp.eq.s32.totalorder %s22, 0
      %p61 = por %p59, %p60
      %s63 = sadd.s32 %s62, 1
      %p66 = scmp.eq.s32.totalorder %s16, 3
      %p67 = scmp.ne.s32.totalorder %s62, %s64
      %p68 = scmp.eq.s32.totalorder %s16, 0
      %p69 = por %p67, %p68
      %p70 = scmp.ne.s32.totalorder %s62, %s64
      %p71 = scmp.eq.s32.totalorder %s21, 3
      %p72 = por %p70, %p71
      %p73 = scmp.ne.s32.totalorder %s64, %s65
      %p74 = scmp.eq.s32.totalorder %s21, 0
      %p75 = por %p73, %p74
      %p76 = scmp.ne.s32.totalorder %s64, %s65
      %p77 = scmp.eq.s32.totalorder %s22, 3
      %p78 = por %p76, %p77
      %p80 = scmp.ne.s32.totalorder %s65, %s79
      %p81 = scmp.eq.s32.totalorder %s22, 0
      %p82 = por %p80, %p81
      %s84 = sadd.s32 %s83, 1
      %p87 = scmp.eq.s32.totalorder %s16, 3
      %p88 = scmp.ne.s32.totalorder %s83, %s85
      %p89 = scmp.eq.s32.totalorder %s16, 0
      %p90 = por %p88, %p89
      %p91 = scmp.ne.s32.totalorder %s83, %s85
      %p92 = scmp.eq.s32.totalorder %s21, 3
      %p93 = por %p91, %p92
      %p94 = scmp.ne.s32.totalorder %s85, %s86
      %p95 = scmp.eq.s32.totalorder %s21, 0
      %p96 = por %p94, %p95
      %p97 = scmp.ne.s32.totalorder %s85, %s86
      %p98 = scmp.eq.s32.totalorder %s22, 3
      %p99 = por %p97, %p98
      %p101 = scmp.ne.s32.totalorder %s86, %s100
      %p102 = scmp.eq.s32.totalorder %s22, 0
      %p103 = por %p101, %p102
      %s104 = ssub.s32 %s23, %s35
      %s105 = ssub.s32 %s24, %s31
      %s106 = sor.u32 %s104, %s105
      %p107 = scmp.eq.s32.totalorder %s106, 0
      %s109 = sadd.s32 %s108, 1
      %s110 = scalar_select %p107, %s108, %s109
      %p113 = pneg %p107
      %p114 = scmp.eq.s32.totalorder %s16, 3
      %p115 = por %p113, %p114
      %p116 = scmp.ne.s32.totalorder %s108, %s111
      %p117 = scmp.eq.s32.totalorder %s16, 0
      %p118 = por %p116, %p117
      %p119 = scmp.ne.s32.totalorder %s108, %s111
      %p120 = scmp.eq.s32.totalorder %s21, 3
      %p121 = por %p119, %p120
      %p122 = scmp.ne.s32.totalorder %s111, %s112
      %p123 = scmp.eq.s32.totalorder %s21, 0
      %p124 = por %p122, %p123
      %p125 = scmp.ne.s32.totalorder %s111, %s112
      %p126 = scmp.eq.s32.totalorder %s22, 3
      %p127 = por %p125, %p126
      %p129 = scmp.ne.s32.totalorder %s112, %s128
      %p130 = scmp.eq.s32.totalorder %s22, 0
      %p131 = por %p129, %p130
      %p132 = scmp.le.s32.totalorder 1, %s16
      %p133 = scmp.lt.s32.totalorder %s16, 5
      %p134 = pnand %p132, %p133
      %p135 = pneg %p134
      // Predicated region
      $region9: #{simple_cnn_forward.3} parent=5 // pred_check
        _
      $region10: #{simple_cnn_forward.3} parent=5 // pred_check_branch
        %137 = sbr.rel (%p134) target = $region12
      $region11: #{simple_cnn_forward.3} parent=5 // pred_region
        %s138 = ssub.s32 %s16, 1
        // Predicated region
        $region13: #{simple_cnn_forward.3} parent=11 // pred_check
          %p139 = pneg %p75
        $region14: #{simple_cnn_forward.3} parent=11 // pred_check_branch
          %141 = sbr.rel (%p139) target = $region16
        $region15: #{simple_cnn_forward.3} parent=11 // pred_region
          %s143 = ssub.s32 256, 256
          %144 = vsyncadd [#allocation6], %s143
          %s145 = sshll.u32 [#allocation5], 4
          %s146 = int_to_ptr.vmem [resolvable:$true] %s145
          %151 = dma.hbm_to_vmem [thread:$0]  %s1, 256, %s146, [#allocation6], 64, 64, 4
        $region16: #{simple_cnn_forward.3} parent=11 // pred_fallthru
          _
        // Predicated region
        $region17: #{simple_cnn_forward.3} parent=11 // pred_check
          %p152 = pneg %p96
        $region18: #{simple_cnn_forward.3} parent=11 // pred_check_branch
          %154 = sbr.rel (%p152) target = $region20
        $region19: #{simple_cnn_forward.3} parent=11 // pred_region
          %s156 = ssub.s32 16, 16
          %157 = vsyncadd [#allocation6], %s156
          %s159 = sshll.u32 [#allocation7], 4
          %s160 = int_to_ptr.vmem [resolvable:$true] %s159
          %162 = dma.hbm_to_vmem [thread:$0]  %s2, 16, %s160, [#allocation6]
        $region20: #{simple_cnn_forward.3} parent=11 // pred_fallthru
          _
      $region12: #{simple_cnn_forward.3} parent=5 // pred_fallthru
        _
      %p163 = scmp.lt.s32.totalorder %s16, 4
      // Predicated region
      $region21: #{simple_cnn_forward.3} parent=5 // pred_check
        %p164 = pneg %p163
      $region22: #{simple_cnn_forward.3} parent=5 // pred_check_branch
        %166 = sbr.rel (%p164) target = $region24
      $region23: #{simple_cnn_forward.3} parent=5 // pred_region
        // Predicated region
        $region25: #{simple_cnn_forward.3} parent=23 // pred_check
          %p167 = pneg %p48
        $region26: #{simple_cnn_forward.3} parent=23 // pred_check_branch
          %169 = sbr.rel (%p167) target = $region28
        $region27: #{simple_cnn_forward.3} parent=23 // pred_region
          %s170 = sand.u32 %s38, 1
          %s171 = scalar_lea.sflag [#allocation3], %s170
          %s172 = sand.u32 %s38, 1
          %s173 = smul.addr %s172, 1360
          %s174 = scalar_lea.vmem [#allocation2], %s173
          %s176 = ssub.s32 21760, 21760
          %177 = vsyncadd %s171, %s176
          %s178 = smul.addr %s23, 170
          %s179 = smul.addr %s178, 128
          %s180 = scalar_lea.hbm %s0, %s179
          %s181 = sshll.u32 %s174, 4
          %s182 = int_to_ptr.vmem [resolvable:$true] %s181
          %187 = dma.hbm_to_vmem [thread:$0]  %s180, 21760, %s182, %s171, 128, 128, 8
        $region28: #{simple_cnn_forward.3} parent=23 // pred_fallthru
          _
      $region24: #{simple_cnn_forward.3} parent=5 // pred_fallthru
        _
      %p188 = scmp.le.s32.totalorder 1, %s16
      %p189 = scmp.lt.s32.totalorder %s16, 5
      %p190 = pnand %p188, %p189
      %p191 = pneg %p190
      // Predicated region
      $region29: #{simple_cnn_forward.3} parent=5 // pred_check
        _
      $region30: #{simple_cnn_forward.3} parent=5 // pred_check_branch
        %193 = sbr.rel (%p190) target = $region32
      $region31: #{simple_cnn_forward.3} parent=5 // pred_region
        %s194 = ssub.s32 %s16, 1
        %s195 = sand.u32 %s41, 1
        %s196 = scalar_lea.sflag [#allocation3], %s195
        %s197 = sand.u32 %s41, 1
        %s198 = smul.addr %s197, 1360
        %s199 = scalar_lea.vmem [#allocation2], %s198
        // Predicated region
        $region33: #{simple_cnn_forward.3} parent=31 // pred_check
          %p200 = pneg %p54
        $region34: #{simple_cnn_forward.3} parent=31 // pred_check_branch
          %202 = sbr.rel (%p200) target = $region36
        $region35: #{simple_cnn_forward.3} parent=31 // pred_region
          %203 = dma.done %s196, 21760
        $region36: #{simple_cnn_forward.3} parent=31 // pred_fallthru
          _
        // Predicated region
        $region37: #{simple_cnn_forward.3} parent=31 // pred_check
          %p204 = pneg %p75
        $region38: #{simple_cnn_forward.3} parent=31 // pred_check_branch
          %206 = sbr.rel (%p204) target = $region40
        $region39: #{simple_cnn_forward.3} parent=31 // pred_region
          %207 = dma.done [#allocation6], 256
        $region40: #{simple_cnn_forward.3} parent=31 // pred_fallthru
          _
        // Predicated region
        $region41: #{simple_cnn_forward.3} parent=31 // pred_check
          %p208 = pneg %p96
        $region42: #{simple_cnn_forward.3} parent=31 // pred_check_branch
          %210 = sbr.rel (%p208) target = $region44
        $region43: #{simple_cnn_forward.3} parent=31 // pred_region
          %211 = dma.done [#allocation6], 16
        $region44: #{simple_cnn_forward.3} parent=31 // pred_fallthru
          _
        %s212 = sand.u32 %s41, 1
        %s213 = scalar_lea.sflag [#allocation3], %s212
        %s214 = sand.u32 %s41, 1
        %s215 = smul.addr %s214, 1360
        %s216 = scalar_lea.vmem [#allocation2], %s215
        %p217 = pneg %p54
        %p218 = pneg %p51
        %p219 = pneg %p75
        %p220 = pneg %p72
        %p221 = pneg %p96
        %p222 = pneg %p93
        %p223 = pneg %p124
        %p224 = pneg %p121
        %s225 = sand.u32 %s111, 1
        %s226 = scalar_lea.sflag [#allocation4], %s225
        %s227 = sand.u32 %s111, 1
        %s228 = smul.addr %s227, 16
        %s229 = scalar_lea.vmem [#allocation8], %s228
        %s231 = smul.u32 %s26, 16
        %s232 = smul.u32 %s231, 40
        %s233 = scalar_lea.vmem %s199, %s232 [#allocation2]
        %v234 = vld [vmem:[%s233] sm:$0xff]
        %v235 = vld [vmem:[%s233 + $0x8] sm:$0xff]
        %v236 = vld [vmem:[%s233 + $0x10] sm:$0xff]
        %v237 = vld [vmem:[%s233 + $0x18] sm:$0xff]
        %v238 = vld [vmem:[%s233 + $0x20] sm:$0x3]
        %v239 = vld [vmem:[%s233 + $0x28] sm:$0xff]
        %v240 = vld [vmem:[%s233 + $0x30] sm:$0xff]
        %v241 = vld [vmem:[%s233 + $0x38] sm:$0xff]
        %v242 = vld [vmem:[%s233 + $0x40] sm:$0xff]
        %v243 = vld [vmem:[%s233 + $0x48] sm:$0x3]
        %v244 = vld [vmem:[%s233 + $0x50] sm:$0xff]
        %v245 = vld [vmem:[%s233 + $0x58] sm:$0xff]
        %v246 = vld [vmem:[%s233 + $0x60] sm:$0xff]
        %v247 = vld [vmem:[%s233 + $0x68] sm:$0xff]
        %v248 = vld [vmem:[%s233 + $0x70] sm:$0x3]
        %v249 = vld [vmem:[%s233 + $0x78] sm:$0xff]
        %v250 = vld [vmem:[%s233 + $0x80] sm:$0xff]
        %v251 = vld [vmem:[%s233 + $0x88] sm:$0xff]
        %v252 = vld [vmem:[%s233 + $0x90] sm:$0xff]
        %v253 = vld [vmem:[%s233 + $0x98] sm:$0x3]
        %v254 = vld [vmem:[%s233 + $0xa0] sm:$0xff]
        %v255 = vld [vmem:[%s233 + $0xa8] sm:$0xff]
        %v256 = vld [vmem:[%s233 + $0xb0] sm:$0xff]
        %v257 = vld [vmem:[%s233 + $0xb8] sm:$0xff]
        %v258 = vld [vmem:[%s233 + $0xc0] sm:$0x3]
        %v259 = vld [vmem:[%s233 + $0xc8] sm:$0xff]
        %v260 = vld [vmem:[%s233 + $0xd0] sm:$0xff]
        %v261 = vld [vmem:[%s233 + $0xd8] sm:$0xff]
        %v262 = vld [vmem:[%s233 + $0xe0] sm:$0xff]
        %v263 = vld [vmem:[%s233 + $0xe8] sm:$0x3]
        %v264 = vld [vmem:[%s233 + $0xf0] sm:$0xff]
        %v265 = vld [vmem:[%s233 + $0xf8] sm:$0xff]
        %v266 = vld [vmem:[%s233 + $0x100] sm:$0xff]
        %v267 = vld [vmem:[%s233 + $0x108] sm:$0xff]
        %v268 = vld [vmem:[%s233 + $0x110] sm:$0x3]
        %v269 = vld [vmem:[%s233 + $0x118] sm:$0xff]
        %v270 = vld [vmem:[%s233 + $0x120] sm:$0xff]
        %v271 = vld [vmem:[%s233 + $0x128] sm:$0xff]
        %v272 = vld [vmem:[%s233 + $0x130] sm:$0xff]
        %v273 = vld [vmem:[%s233 + $0x138] sm:$0x3]
        %v274 = vld [vmem:[%s233 + $0x140] sm:$0xff]
        %v275 = vld [vmem:[%s233 + $0x148] sm:$0xff]
        %v276 = vld [vmem:[%s233 + $0x150] sm:$0xff]
        %v277 = vld [vmem:[%s233 + $0x158] sm:$0xff]
        %v278 = vld [vmem:[%s233 + $0x160] sm:$0x3]
        %v279 = vld [vmem:[%s233 + $0x168] sm:$0xff]
        %v280 = vld [vmem:[%s233 + $0x170] sm:$0xff]
        %v281 = vld [vmem:[%s233 + $0x178] sm:$0xff]
        %v282 = vld [vmem:[%s233 + $0x180] sm:$0xff]
        %v283 = vld [vmem:[%s233 + $0x188] sm:$0x3]
        %v284 = vld [vmem:[%s233 + $0x190] sm:$0xff]
        %v285 = vld [vmem:[%s233 + $0x198] sm:$0xff]
        %v286 = vld [vmem:[%s233 + $0x1a0] sm:$0xff]
        %v287 = vld [vmem:[%s233 + $0x1a8] sm:$0xff]
        %v288 = vld [vmem:[%s233 + $0x1b0] sm:$0x3]
        %v289 = vld [vmem:[%s233 + $0x1b8] sm:$0xff]
        %v290 = vld [vmem:[%s233 + $0x1c0] sm:$0xff]
        %v291 = vld [vmem:[%s233 + $0x1c8] sm:$0xff]
        %v292 = vld [vmem:[%s233 + $0x1d0] sm:$0xff]
        %v293 = vld [vmem:[%s233 + $0x1d8] sm:$0x3]
        %v294 = vld [vmem:[%s233 + $0x1e0] sm:$0xff]
        %v295 = vld [vmem:[%s233 + $0x1e8] sm:$0xff]
        %v296 = vld [vmem:[%s233 + $0x1f0] sm:$0xff]
        %v297 = vld [vmem:[%s233 + $0x1f8] sm:$0xff]
        %v298 = vld [vmem:[%s233 + $0x200] sm:$0x3]
        %v299 = vld [vmem:[%s233 + $0x208] sm:$0xff]
        %v300 = vld [vmem:[%s233 + $0x210] sm:$0xff]
        %v301 = vld [vmem:[%s233 + $0x218] sm:$0xff]
        %v302 = vld [vmem:[%s233 + $0x220] sm:$0xff]
        %v303 = vld [vmem:[%s233 + $0x228] sm:$0x3]
        %v304 = vld [vmem:[%s233 + $0x230] sm:$0xff]
        %v305 = vld [vmem:[%s233 + $0x238] sm:$0xff]
        %v306 = vld [vmem:[%s233 + $0x240] sm:$0xff]
        %v307 = vld [vmem:[%s233 + $0x248] sm:$0xff]
        %v308 = vld [vmem:[%s233 + $0x250] sm:$0x3]
        %v309 = vld [vmem:[%s233 + $0x258] sm:$0xff]
        %v310 = vld [vmem:[%s233 + $0x260] sm:$0xff]
        %v311 = vld [vmem:[%s233 + $0x268] sm:$0xff]
        %v312 = vld [vmem:[%s233 + $0x270] sm:$0xff]
        %v313 = vld [vmem:[%s233 + $0x278] sm:$0x3]
        %v314 = vld [vmem:[%s233 + $0x280] sm:$0xff]
        %v315 = vld [vmem:[%s233 + $0x288] sm:$0xff]
        %v316 = vld [vmem:[%s233 + $0x290] sm:$0xff]
        %v317 = vld [vmem:[%s233 + $0x298] sm:$0xff]
        %v318 = vld [vmem:[%s233 + $0x2a0] sm:$0x3]
        %v319 = vld [vmem:[%s233 + $0x2a8] sm:$0xff]
        %v320 = vld [vmem:[%s233 + $0x2b0] sm:$0xff]
        %v321 = vld [vmem:[%s233 + $0x2b8] sm:$0xff]
        %v322 = vld [vmem:[%s233 + $0x2c0] sm:$0xff]
        %v323 = vld [vmem:[%s233 + $0x2c8] sm:$0x3]
        %vm404 = vcmask 1046528
        %v405 = vrot.slane %v234, 1
        %v406 = vrot.slane %v235, 1
        %v407 = vsel %vm404, %v405, %v406
        %v408 = vrot.slane %v236, 1
        %v409 = vsel %vm404, %v406, %v408
        %v410 = vrot.slane %v237, 1
        %v411 = vsel %vm404, %v408, %v410
        %v412 = vrot.slane %v238, 1
        %v413 = vsel %vm404, %v410, %v412
        %v414 = vrot.slane %v239, 1
        %v415 = vrot.slane %v240, 1
        %v416 = vsel %vm404, %v414, %v415
        %v417 = vrot.slane %v241, 1
        %v418 = vsel %vm404, %v415, %v417
        %v419 = vrot.slane %v242, 1
        %v420 = vsel %vm404, %v417, %v419
        %v421 = vrot.slane %v243, 1
        %v422 = vsel %vm404, %v419, %v421
        %v423 = vrot.slane %v244, 1
        %v424 = vrot.slane %v245, 1
        %v425 = vsel %vm404, %v423, %v424
        %v426 = vrot.slane %v246, 1
        %v427 = vsel %vm404, %v424, %v426
        %v428 = vrot.slane %v247, 1
        %v429 = vsel %vm404, %v426, %v428
        %v430 = vrot.slane %v248, 1
        %v431 = vsel %vm404, %v428, %v430
        %v432 = vrot.slane %v249, 1
        %v433 = vrot.slane %v250, 1
        %v434 = vsel %vm404, %v432, %v433
        %v435 = vrot.slane %v251, 1
        %v436 = vsel %vm404, %v433, %v435
        %v437 = vrot.slane %v252, 1
        %v438 = vsel %vm404, %v435, %v437
        %v439 = vrot.slane %v253, 1
        %v440 = vsel %vm404, %v437, %v439
        %v441 = vrot.slane %v254, 1
        %v442 = vrot.slane %v255, 1
        %v443 = vsel %vm404, %v441, %v442
        %v444 = vrot.slane %v256, 1
        %v445 = vsel %vm404, %v442, %v444
        %v446 = vrot.slane %v257, 1
        %v447 = vsel %vm404, %v444, %v446
        %v448 = vrot.slane %v258, 1
        %v449 = vsel %vm404, %v446, %v448
        %v450 = vrot.slane %v259, 1
        %v451 = vrot.slane %v260, 1
        %v452 = vsel %vm404, %v450, %v451
        %v453 = vrot.slane %v261, 1
        %v454 = vsel %vm404, %v451, %v453
        %v455 = vrot.slane %v262, 1
        %v456 = vsel %vm404, %v453, %v455
        %v457 = vrot.slane %v263, 1
        %v458 = vsel %vm404, %v455, %v457
        %v459 = vrot.slane %v264, 1
        %v460 = vrot.slane %v265, 1
        %v461 = vsel %vm404, %v459, %v460
        %v462 = vrot.slane %v266, 1
        %v463 = vsel %vm404, %v460, %v462
        %v464 = vrot.slane %v267, 1
        %v465 = vsel %vm404, %v462, %v464
        %v466 = vrot.slane %v268, 1
        %v467 = vsel %vm404, %v464, %v466
        %v468 = vrot.slane %v269, 1
        %v469 = vrot.slane %v270, 1
        %v470 = vsel %vm404, %v468, %v469
        %v471 = vrot.slane %v271, 1
        %v472 = vsel %vm404, %v469, %v471
        %v473 = vrot.slane %v272, 1
        %v474 = vsel %vm404, %v471, %v473
        %v475 = vrot.slane %v273, 1
        %v476 = vsel %vm404, %v473, %v475
        %v477 = vrot.slane %v274, 1
        %v478 = vrot.slane %v275, 1
        %v479 = vsel %vm404, %v477, %v478
        %v480 = vrot.slane %v276, 1
        %v481 = vsel %vm404, %v478, %v480
        %v482 = vrot.slane %v277, 1
        %v483 = vsel %vm404, %v480, %v482
        %v484 = vrot.slane %v278, 1
        %v485 = vsel %vm404, %v482, %v484
        %v486 = vrot.slane %v279, 1
        %v487 = vrot.slane %v280, 1
        %v488 = vsel %vm404, %v486, %v487
        %v489 = vrot.slane %v281, 1
        %v490 = vsel %vm404, %v487, %v489
        %v491 = vrot.slane %v282, 1
        %v492 = vsel %vm404, %v489, %v491
        %v493 = vrot.slane %v283, 1
        %v494 = vsel %vm404, %v491, %v493
        %v495 = vrot.slane %v284, 1
        %v496 = vrot.slane %v285, 1
        %v497 = vsel %vm404, %v495, %v496
        %v498 = vrot.slane %v286, 1
        %v499 = vsel %vm404, %v496, %v498
        %v500 = vrot.slane %v287, 1
        %v501 = vsel %vm404, %v498, %v500
        %v502 = vrot.slane %v288, 1
        %v503 = vsel %vm404, %v500, %v502
        %v504 = vrot.slane %v289, 1
        %v505 = vrot.slane %v290, 1
        %v506 = vsel %vm404, %v504, %v505
        %v507 = vrot.slane %v291, 1
        %v508 = vsel %vm404, %v505, %v507
        %v509 = vrot.slane %v292, 1
        %v510 = vsel %vm404, %v507, %v509
        %v511 = vrot.slane %v293, 1
        %v512 = vsel %vm404, %v509, %v511
        %v513 = vrot.slane %v294, 1
        %v514 = vrot.slane %v295, 1
        %v515 = vsel %vm404, %v513, %v514
        %v516 = vrot.slane %v296, 1
        %v517 = vsel %vm404, %v514, %v516
        %v518 = vrot.slane %v297, 1
        %v519 = vsel %vm404, %v516, %v518
        %v520 = vrot.slane %v298, 1
        %v521 = vsel %vm404, %v518, %v520
        %v522 = vrot.slane %v299, 1
        %v523 = vrot.slane %v300, 1
        %v524 = vsel %vm404, %v522, %v523
        %v525 = vrot.slane %v301, 1
        %v526 = vsel %vm404, %v523, %v525
        %v527 = vrot.slane %v302, 1
        %v528 = vsel %vm404, %v525, %v527
        %v529 = vrot.slane %v303, 1
        %v530 = vsel %vm404, %v527, %v529
        %v531 = vrot.slane %v304, 1
        %v532 = vrot.slane %v305, 1
        %v533 = vsel %vm404, %v531, %v532
        %v534 = vrot.slane %v306, 1
        %v535 = vsel %vm404, %v532, %v534
        %v536 = vrot.slane %v307, 1
        %v537 = vsel %vm404, %v534, %v536
        %v538 = vrot.slane %v308, 1
        %v539 = vsel %vm404, %v536, %v538
        %v540 = vrot.slane %v309, 1
        %v541 = vrot.slane %v310, 1
        %v542 = vsel %vm404, %v540, %v541
        %v543 = vrot.slane %v311, 1
        %v544 = vsel %vm404, %v541, %v543
        %v545 = vrot.slane %v312, 1
        %v546 = vsel %vm404, %v543, %v545
        %v547 = vrot.slane %v313, 1
        %v548 = vsel %vm404, %v545, %v547
        %vm549 = vcmask 1045504
        %v550 = vrot.slane %v234, 2
        %v551 = vrot.slane %v235, 2
        %v552 = vsel %vm549, %v550, %v551
        %v553 = vrot.slane %v236, 2
        %v554 = vsel %vm549, %v551, %v553
        %v555 = vrot.slane %v237, 2
        %v556 = vsel %vm549, %v553, %v555
        %v557 = vrot.slane %v238, 2
        %v558 = vsel %vm549, %v555, %v557
        %v559 = vrot.slane %v239, 2
        %v560 = vrot.slane %v240, 2
        %v561 = vsel %vm549, %v559, %v560
        %v562 = vrot.slane %v241, 2
        %v563 = vsel %vm549, %v560, %v562
        %v564 = vrot.slane %v242, 2
        %v565 = vsel %vm549, %v562, %v564
        %v566 = vrot.slane %v243, 2
        %v567 = vsel %vm549, %v564, %v566
        %v568 = vrot.slane %v244, 2
        %v569 = vrot.slane %v245, 2
        %v570 = vsel %vm549, %v568, %v569
        %v571 = vrot.slane %v246, 2
        %v572 = vsel %vm549, %v569, %v571
        %v573 = vrot.slane %v247, 2
        %v574 = vsel %vm549, %v571, %v573
        %v575 = vrot.slane %v248, 2
        %v576 = vsel %vm549, %v573, %v575
        %v577 = vrot.slane %v249, 2
        %v578 = vrot.slane %v250, 2
        %v579 = vsel %vm549, %v577, %v578
        %v580 = vrot.slane %v251, 2
        %v581 = vsel %vm549, %v578, %v580
        %v582 = vrot.slane %v252, 2
        %v583 = vsel %vm549, %v580, %v582
        %v584 = vrot.slane %v253, 2
        %v585 = vsel %vm549, %v582, %v584
        %v586 = vrot.slane %v254, 2
        %v587 = vrot.slane %v255, 2
        %v588 = vsel %vm549, %v586, %v587
        %v589 = vrot.slane %v256, 2
        %v590 = vsel %vm549, %v587, %v589
        %v591 = vrot.slane %v257, 2
        %v592 = vsel %vm549, %v589, %v591
        %v593 = vrot.slane %v258, 2
        %v594 = vsel %vm549, %v591, %v593
        %v595 = vrot.slane %v259, 2
        %v596 = vrot.slane %v260, 2
        %v597 = vsel %vm549, %v595, %v596
        %v598 = vrot.slane %v261, 2
        %v599 = vsel %vm549, %v596, %v598
        %v600 = vrot.slane %v262, 2
        %v601 = vsel %vm549, %v598, %v600
        %v602 = vrot.slane %v263, 2
        %v603 = vsel %vm549, %v600, %v602
        %v604 = vrot.slane %v264, 2
        %v605 = vrot.slane %v265, 2
        %v606 = vsel %vm549, %v604, %v605
        %v607 = vrot.slane %v266, 2
        %v608 = vsel %vm549, %v605, %v607
        %v609 = vrot.slane %v267, 2
        %v610 = vsel %vm549, %v607, %v609
        %v611 = vrot.slane %v268, 2
        %v612 = vsel %vm549, %v609, %v611
        %v613 = vrot.slane %v269, 2
        %v614 = vrot.slane %v270, 2
        %v615 = vsel %vm549, %v613, %v614
        %v616 = vrot.slane %v271, 2
        %v617 = vsel %vm549, %v614, %v616
        %v618 = vrot.slane %v272, 2
        %v619 = vsel %vm549, %v616, %v618
        %v620 = vrot.slane %v273, 2
        %v621 = vsel %vm549, %v618, %v620
        %v622 = vrot.slane %v274, 2
        %v623 = vrot.slane %v275, 2
        %v624 = vsel %vm549, %v622, %v623
        %v625 = vrot.slane %v276, 2
        %v626 = vsel %vm549, %v623, %v625
        %v627 = vrot.slane %v277, 2
        %v628 = vsel %vm549, %v625, %v627
        %v629 = vrot.slane %v278, 2
        %v630 = vsel %vm549, %v627, %v629
        %v631 = vrot.slane %v279, 2
        %v632 = vrot.slane %v280, 2
        %v633 = vsel %vm549, %v631, %v632
        %v634 = vrot.slane %v281, 2
        %v635 = vsel %vm549, %v632, %v634
        %v636 = vrot.slane %v282, 2
        %v637 = vsel %vm549, %v634, %v636
        %v638 = vrot.slane %v283, 2
        %v639 = vsel %vm549, %v636, %v638
        %v640 = vrot.slane %v284, 2
        %v641 = vrot.slane %v285, 2
        %v642 = vsel %vm549, %v640, %v641
        %v643 = vrot.slane %v286, 2
        %v644 = vsel %vm549, %v641, %v643
        %v645 = vrot.slane %v287, 2
        %v646 = vsel %vm549, %v643, %v645
        %v647 = vrot.slane %v288, 2
        %v648 = vsel %vm549, %v645, %v647
        %v649 = vrot.slane %v289, 2
        %v650 = vrot.slane %v290, 2
        %v651 = vsel %vm549, %v649, %v650
        %v652 = vrot.slane %v291, 2
        %v653 = vsel %vm549, %v650, %v652
        %v654 = vrot.slane %v292, 2
        %v655 = vsel %vm549, %v652, %v654
        %v656 = vrot.slane %v293, 2
        %v657 = vsel %vm549, %v654, %v656
        %v658 = vrot.slane %v294, 2
        %v659 = vrot.slane %v295, 2
        %v660 = vsel %vm549, %v658, %v659
        %v661 = vrot.slane %v296, 2
        %v662 = vsel %vm549, %v659, %v661
        %v663 = vrot.slane %v297, 2
        %v664 = vsel %vm549, %v661, %v663
        %v665 = vrot.slane %v298, 2
        %v666 = vsel %vm549, %v663, %v665
        %v667 = vrot.slane %v299, 2
        %v668 = vrot.slane %v300, 2
        %v669 = vsel %vm549, %v667, %v668
        %v670 = vrot.slane %v301, 2
        %v671 = vsel %vm549, %v668, %v670
        %v672 = vrot.slane %v302, 2
        %v673 = vsel %vm549, %v670, %v672
        %v674 = vrot.slane %v303, 2
        %v675 = vsel %vm549, %v672, %v674
        %v676 = vrot.slane %v304, 2
        %v677 = vrot.slane %v305, 2
        %v678 = vsel %vm549, %v676, %v677
        %v679 = vrot.slane %v306, 2
        %v680 = vsel %vm549, %v677, %v679
        %v681 = vrot.slane %v307, 2
        %v682 = vsel %vm549, %v679, %v681
        %v683 = vrot.slane %v308, 2
        %v684 = vsel %vm549, %v681, %v683
        %v685 = vrot.slane %v309, 2
        %v686 = vrot.slane %v310, 2
        %v687 = vsel %vm549, %v685, %v686
        %v688 = vrot.slane %v311, 2
        %v689 = vsel %vm549, %v686, %v688
        %v690 = vrot.slane %v312, 2
        %v691 = vsel %vm549, %v688, %v690
        %v692 = vrot.slane %v313, 2
        %v693 = vsel %vm549, %v690, %v692
        %v699 = vrot.slane %v314, 1
        %v700 = vrot.slane %v315, 1
        %v701 = vsel %vm404, %v699, %v700
        %v702 = vrot.slane %v316, 1
        %v703 = vsel %vm404, %v700, %v702
        %v704 = vrot.slane %v317, 1
        %v705 = vsel %vm404, %v702, %v704
        %v706 = vrot.slane %v318, 1
        %v707 = vsel %vm404, %v704, %v706
        %v708 = vrot.slane %v314, 2
        %v709 = vrot.slane %v315, 2
        %v710 = vsel %vm549, %v708, %v709
        %v711 = vrot.slane %v316, 2
        %v712 = vsel %vm549, %v709, %v711
        %v713 = vrot.slane %v317, 2
        %v714 = vsel %vm549, %v711, %v713
        %v715 = vrot.slane %v318, 2
        %v716 = vsel %vm549, %v713, %v715
        %v722 = vrot.slane %v319, 1
        %v723 = vrot.slane %v320, 1
        %v724 = vsel %vm404, %v722, %v723
        %v725 = vrot.slane %v321, 1
        %v726 = vsel %vm404, %v723, %v725
        %v727 = vrot.slane %v322, 1
        %v728 = vsel %vm404, %v725, %v727
        %v729 = vrot.slane %v323, 1
        %v730 = vsel %vm404, %v727, %v729
        %v731 = vrot.slane %v319, 2
        %v732 = vrot.slane %v320, 2
        %v733 = vsel %vm549, %v731, %v732
        %v734 = vrot.slane %v321, 2
        %v735 = vsel %vm549, %v732, %v734
        %v736 = vrot.slane %v322, 2
        %v737 = vsel %vm549, %v734, %v736
        %v738 = vrot.slane %v323, 2
        %v739 = vsel %vm549, %v736, %v738
        %740 = vrot.lane.b32.xlu0 %v407, 3
        %v741 = vpop.permute.xlu0 %740
        %742 = vrot.lane.b32.xlu0 %v409, 3
        %v743 = vpop.permute.xlu0 %742
        %744 = vrot.lane.b32.xlu0 %v411, 3
        %v745 = vpop.permute.xlu0 %744
        %746 = vrot.lane.b32.xlu0 %v413, 3
        %v747 = vpop.permute.xlu0 %746
        %748 = vrot.lane.b32.xlu0 %v416, 3
        %v749 = vpop.permute.xlu0 %748
        %750 = vrot.lane.b32.xlu0 %v418, 3
        %v751 = vpop.permute.xlu0 %750
        %752 = vrot.lane.b32.xlu0 %v420, 3
        %v753 = vpop.permute.xlu0 %752
        %754 = vrot.lane.b32.xlu0 %v422, 3
        %v755 = vpop.permute.xlu0 %754
        %756 = vrot.lane.b32.xlu0 %v425, 3
        %v757 = vpop.permute.xlu0 %756
        %758 = vrot.lane.b32.xlu0 %v427, 3
        %v759 = vpop.permute.xlu0 %758
        %760 = vrot.lane.b32.xlu0 %v429, 3
        %v761 = vpop.permute.xlu0 %760
        %762 = vrot.lane.b32.xlu0 %v431, 3
        %v763 = vpop.permute.xlu0 %762
        %764 = vrot.lane.b32.xlu0 %v434, 3
        %v765 = vpop.permute.xlu0 %764
        %766 = vrot.lane.b32.xlu0 %v436, 3
        %v767 = vpop.permute.xlu0 %766
        %768 = vrot.lane.b32.xlu0 %v438, 3
        %v769 = vpop.permute.xlu0 %768
        %770 = vrot.lane.b32.xlu0 %v440, 3
        %v771 = vpop.permute.xlu0 %770
        %772 = vrot.lane.b32.xlu0 %v443, 3
        %v773 = vpop.permute.xlu0 %772
        %774 = vrot.lane.b32.xlu0 %v445, 3
        %v775 = vpop.permute.xlu0 %774
        %776 = vrot.lane.b32.xlu0 %v447, 3
        %v777 = vpop.permute.xlu0 %776
        %778 = vrot.lane.b32.xlu0 %v449, 3
        %v779 = vpop.permute.xlu0 %778
        %780 = vrot.lane.b32.xlu0 %v452, 3
        %v781 = vpop.permute.xlu0 %780
        %782 = vrot.lane.b32.xlu0 %v454, 3
        %v783 = vpop.permute.xlu0 %782
        %784 = vrot.lane.b32.xlu0 %v456, 3
        %v785 = vpop.permute.xlu0 %784
        %786 = vrot.lane.b32.xlu0 %v458, 3
        %v787 = vpop.permute.xlu0 %786
        %788 = vrot.lane.b32.xlu0 %v461, 3
        %v789 = vpop.permute.xlu0 %788
        %790 = vrot.lane.b32.xlu0 %v463, 3
        %v791 = vpop.permute.xlu0 %790
        %792 = vrot.lane.b32.xlu0 %v465, 3
        %v793 = vpop.permute.xlu0 %792
        %794 = vrot.lane.b32.xlu0 %v467, 3
        %v795 = vpop.permute.xlu0 %794
        %796 = vrot.lane.b32.xlu0 %v470, 3
        %v797 = vpop.permute.xlu0 %796
        %798 = vrot.lane.b32.xlu0 %v472, 3
        %v799 = vpop.permute.xlu0 %798
        %800 = vrot.lane.b32.xlu0 %v474, 3
        %v801 = vpop.permute.xlu0 %800
        %802 = vrot.lane.b32.xlu0 %v476, 3
        %v803 = vpop.permute.xlu0 %802
        %804 = vrot.lane.b32.xlu0 %v479, 3
        %v805 = vpop.permute.xlu0 %804
        %806 = vrot.lane.b32.xlu0 %v481, 3
        %v807 = vpop.permute.xlu0 %806
        %808 = vrot.lane.b32.xlu0 %v483, 3
        %v809 = vpop.permute.xlu0 %808
        %810 = vrot.lane.b32.xlu0 %v485, 3
        %v811 = vpop.permute.xlu0 %810
        %812 = vrot.lane.b32.xlu0 %v488, 3
        %v813 = vpop.permute.xlu0 %812
        %814 = vrot.lane.b32.xlu0 %v490, 3
        %v815 = vpop.permute.xlu0 %814
        %816 = vrot.lane.b32.xlu0 %v492, 3
        %v817 = vpop.permute.xlu0 %816
        %818 = vrot.lane.b32.xlu0 %v494, 3
        %v819 = vpop.permute.xlu0 %818
        %820 = vrot.lane.b32.xlu0 %v497, 3
        %v821 = vpop.permute.xlu0 %820
        %822 = vrot.lane.b32.xlu0 %v499, 3
        %v823 = vpop.permute.xlu0 %822
        %824 = vrot.lane.b32.xlu0 %v501, 3
        %v825 = vpop.permute.xlu0 %824
        %826 = vrot.lane.b32.xlu0 %v503, 3
        %v827 = vpop.permute.xlu0 %826
        %828 = vrot.lane.b32.xlu0 %v506, 3
        %v829 = vpop.permute.xlu0 %828
        %830 = vrot.lane.b32.xlu0 %v508, 3
        %v831 = vpop.permute.xlu0 %830
        %832 = vrot.lane.b32.xlu0 %v510, 3
        %v833 = vpop.permute.xlu0 %832
        %834 = vrot.lane.b32.xlu0 %v512, 3
        %v835 = vpop.permute.xlu0 %834
        %836 = vrot.lane.b32.xlu0 %v515, 3
        %v837 = vpop.permute.xlu0 %836
        %838 = vrot.lane.b32.xlu0 %v517, 3
        %v839 = vpop.permute.xlu0 %838
        %840 = vrot.lane.b32.xlu0 %v519, 3
        %v841 = vpop.permute.xlu0 %840
        %842 = vrot.lane.b32.xlu0 %v521, 3
        %v843 = vpop.permute.xlu0 %842
        %844 = vrot.lane.b32.xlu0 %v524, 3
        %v845 = vpop.permute.xlu0 %844
        %846 = vrot.lane.b32.xlu0 %v526, 3
        %v847 = vpop.permute.xlu0 %846
        %848 = vrot.lane.b32.xlu0 %v528, 3
        %v849 = vpop.permute.xlu0 %848
        %850 = vrot.lane.b32.xlu0 %v530, 3
        %v851 = vpop.permute.xlu0 %850
        %852 = vrot.lane.b32.xlu0 %v533, 3
        %v853 = vpop.permute.xlu0 %852
        %854 = vrot.lane.b32.xlu0 %v535, 3
        %v855 = vpop.permute.xlu0 %854
        %856 = vrot.lane.b32.xlu0 %v537, 3
        %v857 = vpop.permute.xlu0 %856
        %858 = vrot.lane.b32.xlu0 %v539, 3
        %v859 = vpop.permute.xlu0 %858
        %860 = vrot.lane.b32.xlu0 %v542, 3
        %v861 = vpop.permute.xlu0 %860
        %862 = vrot.lane.b32.xlu0 %v544, 3
        %v863 = vpop.permute.xlu0 %862
        %864 = vrot.lane.b32.xlu0 %v546, 3
        %v865 = vpop.permute.xlu0 %864
        %866 = vrot.lane.b32.xlu0 %v548, 3
        %v867 = vpop.permute.xlu0 %866
        %932 = vrot.lane.b32.xlu0 %v552, 6
        %v933 = vpop.permute.xlu0 %932
        %934 = vrot.lane.b32.xlu0 %v554, 6
        %v935 = vpop.permute.xlu0 %934
        %936 = vrot.lane.b32.xlu0 %v556, 6
        %v937 = vpop.permute.xlu0 %936
        %938 = vrot.lane.b32.xlu0 %v558, 6
        %v939 = vpop.permute.xlu0 %938
        %940 = vrot.lane.b32.xlu0 %v561, 6
        %v941 = vpop.permute.xlu0 %940
        %942 = vrot.lane.b32.xlu0 %v563, 6
        %v943 = vpop.permute.xlu0 %942
        %944 = vrot.lane.b32.xlu0 %v565, 6
        %v945 = vpop.permute.xlu0 %944
        %946 = vrot.lane.b32.xlu0 %v567, 6
        %v947 = vpop.permute.xlu0 %946
        %948 = vrot.lane.b32.xlu0 %v570, 6
        %v949 = vpop.permute.xlu0 %948
        %950 = vrot.lane.b32.xlu0 %v572, 6
        %v951 = vpop.permute.xlu0 %950
        %952 = vrot.lane.b32.xlu0 %v574, 6
        %v953 = vpop.permute.xlu0 %952
        %954 = vrot.lane.b32.xlu0 %v576, 6
        %v955 = vpop.permute.xlu0 %954
        %956 = vrot.lane.b32.xlu0 %v579, 6
        %v957 = vpop.permute.xlu0 %956
        %958 = vrot.lane.b32.xlu0 %v581, 6
        %v959 = vpop.permute.xlu0 %958
        %960 = vrot.lane.b32.xlu0 %v583, 6
        %v961 = vpop.permute.xlu0 %960
        %962 = vrot.lane.b32.xlu0 %v585, 6
        %v963 = vpop.permute.xlu0 %962
        %964 = vrot.lane.b32.xlu0 %v588, 6
        %v965 = vpop.permute.xlu0 %964
        %966 = vrot.lane.b32.xlu0 %v590, 6
        %v967 = vpop.permute.xlu0 %966
        %968 = vrot.lane.b32.xlu0 %v592, 6
        %v969 = vpop.permute.xlu0 %968
        %970 = vrot.lane.b32.xlu0 %v594, 6
        %v971 = vpop.permute.xlu0 %970
        %972 = vrot.lane.b32.xlu0 %v597, 6
        %v973 = vpop.permute.xlu0 %972
        %974 = vrot.lane.b32.xlu0 %v599, 6
        %v975 = vpop.permute.xlu0 %974
        %976 = vrot.lane.b32.xlu0 %v601, 6
        %v977 = vpop.permute.xlu0 %976
        %978 = vrot.lane.b32.xlu0 %v603, 6
        %v979 = vpop.permute.xlu0 %978
        %980 = vrot.lane.b32.xlu0 %v606, 6
        %v981 = vpop.permute.xlu0 %980
        %982 = vrot.lane.b32.xlu0 %v608, 6
        %v983 = vpop.permute.xlu0 %982
        %984 = vrot.lane.b32.xlu0 %v610, 6
        %v985 = vpop.permute.xlu0 %984
        %986 = vrot.lane.b32.xlu0 %v612, 6
        %v987 = vpop.permute.xlu0 %986
        %988 = vrot.lane.b32.xlu0 %v615, 6
        %v989 = vpop.permute.xlu0 %988
        %990 = vrot.lane.b32.xlu0 %v617, 6
        %v991 = vpop.permute.xlu0 %990
        %992 = vrot.lane.b32.xlu0 %v619, 6
        %v993 = vpop.permute.xlu0 %992
        %994 = vrot.lane.b32.xlu0 %v621, 6
        %v995 = vpop.permute.xlu0 %994
        %996 = vrot.lane.b32.xlu0 %v624, 6
        %v997 = vpop.permute.xlu0 %996
        %998 = vrot.lane.b32.xlu0 %v626, 6
        %v999 = vpop.permute.xlu0 %998
        %1000 = vrot.lane.b32.xlu0 %v628, 6
        %v1001 = vpop.permute.xlu0 %1000
        %1002 = vrot.lane.b32.xlu0 %v630, 6
        %v1003 = vpop.permute.xlu0 %1002
        %1004 = vrot.lane.b32.xlu0 %v633, 6
        %v1005 = vpop.permute.xlu0 %1004
        %1006 = vrot.lane.b32.xlu0 %v635, 6
        %v1007 = vpop.permute.xlu0 %1006
        %1008 = vrot.lane.b32.xlu0 %v637, 6
        %v1009 = vpop.permute.xlu0 %1008
        %1010 = vrot.lane.b32.xlu0 %v639, 6
        %v1011 = vpop.permute.xlu0 %1010
        %1012 = vrot.lane.b32.xlu0 %v642, 6
        %v1013 = vpop.permute.xlu0 %1012
        %1014 = vrot.lane.b32.xlu0 %v644, 6
        %v1015 = vpop.permute.xlu0 %1014
        %1016 = vrot.lane.b32.xlu0 %v646, 6
        %v1017 = vpop.permute.xlu0 %1016
        %1018 = vrot.lane.b32.xlu0 %v648, 6
        %v1019 = vpop.permute.xlu0 %1018
        %1020 = vrot.lane.b32.xlu0 %v651, 6
        %v1021 = vpop.permute.xlu0 %1020
        %1022 = vrot.lane.b32.xlu0 %v653, 6
        %v1023 = vpop.permute.xlu0 %1022
        %1024 = vrot.lane.b32.xlu0 %v655, 6
        %v1025 = vpop.permute.xlu0 %1024
        %1026 = vrot.lane.b32.xlu0 %v657, 6
        %v1027 = vpop.permute.xlu0 %1026
        %1028 = vrot.lane.b32.xlu0 %v660, 6
        %v1029 = vpop.permute.xlu0 %1028
        %1030 = vrot.lane.b32.xlu0 %v662, 6
        %v1031 = vpop.permute.xlu0 %1030
        %1032 = vrot.lane.b32.xlu0 %v664, 6
        %v1033 = vpop.permute.xlu0 %1032
        %1034 = vrot.lane.b32.xlu0 %v666, 6
        %v1035 = vpop.permute.xlu0 %1034
        %1036 = vrot.lane.b32.xlu0 %v669, 6
        %v1037 = vpop.permute.xlu0 %1036
        %1038 = vrot.lane.b32.xlu0 %v671, 6
        %v1039 = vpop.permute.xlu0 %1038
        %1040 = vrot.lane.b32.xlu0 %v673, 6
        %v1041 = vpop.permute.xlu0 %1040
        %1042 = vrot.lane.b32.xlu0 %v675, 6
        %v1043 = vpop.permute.xlu0 %1042
        %1044 = vrot.lane.b32.xlu0 %v678, 6
        %v1045 = vpop.permute.xlu0 %1044
        %1046 = vrot.lane.b32.xlu0 %v680, 6
        %v1047 = vpop.permute.xlu0 %1046
        %1048 = vrot.lane.b32.xlu0 %v682, 6
        %v1049 = vpop.permute.xlu0 %1048
        %1050 = vrot.lane.b32.xlu0 %v684, 6
        %v1051 = vpop.permute.xlu0 %1050
        %1052 = vrot.lane.b32.xlu0 %v687, 6
        %v1053 = vpop.permute.xlu0 %1052
        %1054 = vrot.lane.b32.xlu0 %v689, 6
        %v1055 = vpop.permute.xlu0 %1054
        %1056 = vrot.lane.b32.xlu0 %v691, 6
        %v1057 = vpop.permute.xlu0 %1056
        %1058 = vrot.lane.b32.xlu0 %v693, 6
        %v1059 = vpop.permute.xlu0 %1058
        %1124 = vrot.lane.b32.xlu0 %v239, 9
        %v1125 = vpop.permute.xlu0 %1124
        %1126 = vrot.lane.b32.xlu0 %v240, 9
        %v1127 = vpop.permute.xlu0 %1126
        %1128 = vrot.lane.b32.xlu0 %v241, 9
        %v1129 = vpop.permute.xlu0 %1128
        %1130 = vrot.lane.b32.xlu0 %v242, 9
        %v1131 = vpop.permute.xlu0 %1130
        %1132 = vrot.lane.b32.xlu0 %v244, 9
        %v1133 = vpop.permute.xlu0 %1132
        %1134 = vrot.lane.b32.xlu0 %v245, 9
        %v1135 = vpop.permute.xlu0 %1134
        %1136 = vrot.lane.b32.xlu0 %v246, 9
        %v1137 = vpop.permute.xlu0 %1136
        %1138 = vrot.lane.b32.xlu0 %v247, 9
        %v1139 = vpop.permute.xlu0 %1138
        %1140 = vrot.lane.b32.xlu0 %v249, 9
        %v1141 = vpop.permute.xlu0 %1140
        %1142 = vrot.lane.b32.xlu0 %v250, 9
        %v1143 = vpop.permute.xlu0 %1142
        %1144 = vrot.lane.b32.xlu0 %v251, 9
        %v1145 = vpop.permute.xlu0 %1144
        %1146 = vrot.lane.b32.xlu0 %v252, 9
        %v1147 = vpop.permute.xlu0 %1146
        %1148 = vrot.lane.b32.xlu0 %v254, 9
        %v1149 = vpop.permute.xlu0 %1148
        %1150 = vrot.lane.b32.xlu0 %v255, 9
        %v1151 = vpop.permute.xlu0 %1150
        %1152 = vrot.lane.b32.xlu0 %v256, 9
        %v1153 = vpop.permute.xlu0 %1152
        %1154 = vrot.lane.b32.xlu0 %v257, 9
        %v1155 = vpop.permute.xlu0 %1154
        %1156 = vrot.lane.b32.xlu0 %v259, 9
        %v1157 = vpop.permute.xlu0 %1156
        %1158 = vrot.lane.b32.xlu0 %v260, 9
        %v1159 = vpop.permute.xlu0 %1158
        %1160 = vrot.lane.b32.xlu0 %v261, 9
        %v1161 = vpop.permute.xlu0 %1160
        %1162 = vrot.lane.b32.xlu0 %v262, 9
        %v1163 = vpop.permute.xlu0 %1162
        %1164 = vrot.lane.b32.xlu0 %v264, 9
        %v1165 = vpop.permute.xlu0 %1164
        %1166 = vrot.lane.b32.xlu0 %v265, 9
        %v1167 = vpop.permute.xlu0 %1166
        %1168 = vrot.lane.b32.xlu0 %v266, 9
        %v1169 = vpop.permute.xlu0 %1168
        %1170 = vrot.lane.b32.xlu0 %v267, 9
        %v1171 = vpop.permute.xlu0 %1170
        %1172 = vrot.lane.b32.xlu0 %v269, 9
        %v1173 = vpop.permute.xlu0 %1172
        %1174 = vrot.lane.b32.xlu0 %v270, 9
        %v1175 = vpop.permute.xlu0 %1174
        %1176 = vrot.lane.b32.xlu0 %v271, 9
        %v1177 = vpop.permute.xlu0 %1176
        %1178 = vrot.lane.b32.xlu0 %v272, 9
        %v1179 = vpop.permute.xlu0 %1178
        %1180 = vrot.lane.b32.xlu0 %v274, 9
        %v1181 = vpop.permute.xlu0 %1180
        %1182 = vrot.lane.b32.xlu0 %v275, 9
        %v1183 = vpop.permute.xlu0 %1182
        %1184 = vrot.lane.b32.xlu0 %v276, 9
        %v1185 = vpop.permute.xlu0 %1184
        %1186 = vrot.lane.b32.xlu0 %v277, 9
        %v1187 = vpop.permute.xlu0 %1186
        %1188 = vrot.lane.b32.xlu0 %v279, 9
        %v1189 = vpop.permute.xlu0 %1188
        %1190 = vrot.lane.b32.xlu0 %v280, 9
        %v1191 = vpop.permute.xlu0 %1190
        %1192 = vrot.lane.b32.xlu0 %v281, 9
        %v1193 = vpop.permute.xlu0 %1192
        %1194 = vrot.lane.b32.xlu0 %v282, 9
        %v1195 = vpop.permute.xlu0 %1194
        %1196 = vrot.lane.b32.xlu0 %v284, 9
        %v1197 = vpop.permute.xlu0 %1196
        %1198 = vrot.lane.b32.xlu0 %v285, 9
        %v1199 = vpop.permute.xlu0 %1198
        %1200 = vrot.lane.b32.xlu0 %v286, 9
        %v1201 = vpop.permute.xlu0 %1200
        %1202 = vrot.lane.b32.xlu0 %v287, 9
        %v1203 = vpop.permute.xlu0 %1202
        %1204 = vrot.lane.b32.xlu0 %v289, 9
        %v1205 = vpop.permute.xlu0 %1204
        %1206 = vrot.lane.b32.xlu0 %v290, 9
        %v1207 = vpop.permute.xlu0 %1206
        %1208 = vrot.lane.b32.xlu0 %v291, 9
        %v1209 = vpop.permute.xlu0 %1208
        %1210 = vrot.lane.b32.xlu0 %v292, 9
        %v1211 = vpop.permute.xlu0 %1210
        %1212 = vrot.lane.b32.xlu0 %v294, 9
        %v1213 = vpop.permute.xlu0 %1212
        %1214 = vrot.lane.b32.xlu0 %v295, 9
        %v1215 = vpop.permute.xlu0 %1214
        %1216 = vrot.lane.b32.xlu0 %v296, 9
        %v1217 = vpop.permute.xlu0 %1216
        %1218 = vrot.lane.b32.xlu0 %v297, 9
        %v1219 = vpop.permute.xlu0 %1218
        %1220 = vrot.lane.b32.xlu0 %v299, 9
        %v1221 = vpop.permute.xlu0 %1220
        %1222 = vrot.lane.b32.xlu0 %v300, 9
        %v1223 = vpop.permute.xlu0 %1222
        %1224 = vrot.lane.b32.xlu0 %v301, 9
        %v1225 = vpop.permute.xlu0 %1224
        %1226 = vrot.lane.b32.xlu0 %v302, 9
        %v1227 = vpop.permute.xlu0 %1226
        %1228 = vrot.lane.b32.xlu0 %v304, 9
        %v1229 = vpop.permute.xlu0 %1228
        %1230 = vrot.lane.b32.xlu0 %v305, 9
        %v1231 = vpop.permute.xlu0 %1230
        %1232 = vrot.lane.b32.xlu0 %v306, 9
        %v1233 = vpop.permute.xlu0 %1232
        %1234 = vrot.lane.b32.xlu0 %v307, 9
        %v1235 = vpop.permute.xlu0 %1234
        %1236 = vrot.lane.b32.xlu0 %v309, 9
        %v1237 = vpop.permute.xlu0 %1236
        %1238 = vrot.lane.b32.xlu0 %v310, 9
        %v1239 = vpop.permute.xlu0 %1238
        %1240 = vrot.lane.b32.xlu0 %v311, 9
        %v1241 = vpop.permute.xlu0 %1240
        %1242 = vrot.lane.b32.xlu0 %v312, 9
        %v1243 = vpop.permute.xlu0 %1242
        %1244 = vrot.lane.b32.xlu0 %v314, 9
        %v1245 = vpop.permute.xlu0 %1244
        %1246 = vrot.lane.b32.xlu0 %v315, 9
        %v1247 = vpop.permute.xlu0 %1246
        %1248 = vrot.lane.b32.xlu0 %v316, 9
        %v1249 = vpop.permute.xlu0 %1248
        %1250 = vrot.lane.b32.xlu0 %v317, 9
        %v1251 = vpop.permute.xlu0 %1250
        %1316 = vrot.lane.b32.xlu0 %v416, 12
        %v1317 = vpop.permute.xlu0 %1316
        %1318 = vrot.lane.b32.xlu0 %v418, 12
        %v1319 = vpop.permute.xlu0 %1318
        %1320 = vrot.lane.b32.xlu0 %v420, 12
        %v1321 = vpop.permute.xlu0 %1320
        %1322 = vrot.lane.b32.xlu0 %v422, 12
        %v1323 = vpop.permute.xlu0 %1322
        %1324 = vrot.lane.b32.xlu0 %v425, 12
        %v1325 = vpop.permute.xlu0 %1324
        %1326 = vrot.lane.b32.xlu0 %v427, 12
        %v1327 = vpop.permute.xlu0 %1326
        %1328 = vrot.lane.b32.xlu0 %v429, 12
        %v1329 = vpop.permute.xlu0 %1328
        %1330 = vrot.lane.b32.xlu0 %v431, 12
        %v1331 = vpop.permute.xlu0 %1330
        %1332 = vrot.lane.b32.xlu0 %v434, 12
        %v1333 = vpop.permute.xlu0 %1332
        %1334 = vrot.lane.b32.xlu0 %v436, 12
        %v1335 = vpop.permute.xlu0 %1334
        %1336 = vrot.lane.b32.xlu0 %v438, 12
        %v1337 = vpop.permute.xlu0 %1336
        %1338 = vrot.lane.b32.xlu0 %v440, 12
        %v1339 = vpop.permute.xlu0 %1338
        %1340 = vrot.lane.b32.xlu0 %v443, 12
        %v1341 = vpop.permute.xlu0 %1340
        %1342 = vrot.lane.b32.xlu0 %v445, 12
        %v1343 = vpop.permute.xlu0 %1342
        %1344 = vrot.lane.b32.xlu0 %v447, 12
        %v1345 = vpop.permute.xlu0 %1344
        %1346 = vrot.lane.b32.xlu0 %v449, 12
        %v1347 = vpop.permute.xlu0 %1346
        %1348 = vrot.lane.b32.xlu0 %v452, 12
        %v1349 = vpop.permute.xlu0 %1348
        %1350 = vrot.lane.b32.xlu0 %v454, 12
        %v1351 = vpop.permute.xlu0 %1350
        %1352 = vrot.lane.b32.xlu0 %v456, 12
        %v1353 = vpop.permute.xlu0 %1352
        %1354 = vrot.lane.b32.xlu0 %v458, 12
        %v1355 = vpop.permute.xlu0 %1354
        %1356 = vrot.lane.b32.xlu0 %v461, 12
        %v1357 = vpop.permute.xlu0 %1356
        %1358 = vrot.lane.b32.xlu0 %v463, 12
        %v1359 = vpop.permute.xlu0 %1358
        %1360 = vrot.lane.b32.xlu0 %v465, 12
        %v1361 = vpop.permute.xlu0 %1360
        %1362 = vrot.lane.b32.xlu0 %v467, 12
        %v1363 = vpop.permute.xlu0 %1362
        %1364 = vrot.lane.b32.xlu0 %v470, 12
        %v1365 = vpop.permute.xlu0 %1364
        %1366 = vrot.lane.b32.xlu0 %v472, 12
        %v1367 = vpop.permute.xlu0 %1366
        %1368 = vrot.lane.b32.xlu0 %v474, 12
        %v1369 = vpop.permute.xlu0 %1368
        %1370 = vrot.lane.b32.xlu0 %v476, 12
        %v1371 = vpop.permute.xlu0 %1370
        %1372 = vrot.lane.b32.xlu0 %v479, 12
        %v1373 = vpop.permute.xlu0 %1372
        %1374 = vrot.lane.b32.xlu0 %v481, 12
        %v1375 = vpop.permute.xlu0 %1374
        %1376 = vrot.lane.b32.xlu0 %v483, 12
        %v1377 = vpop.permute.xlu0 %1376
        %1378 = vrot.lane.b32.xlu0 %v485, 12
        %v1379 = vpop.permute.xlu0 %1378
        %1380 = vrot.lane.b32.xlu0 %v488, 12
        %v1381 = vpop.permute.xlu0 %1380
        %1382 = vrot.lane.b32.xlu0 %v490, 12
        %v1383 = vpop.permute.xlu0 %1382
        %1384 = vrot.lane.b32.xlu0 %v492, 12
        %v1385 = vpop.permute.xlu0 %1384
        %1386 = vrot.lane.b32.xlu0 %v494, 12
        %v1387 = vpop.permute.xlu0 %1386
        %1388 = vrot.lane.b32.xlu0 %v497, 12
        %v1389 = vpop.permute.xlu0 %1388
        %1390 = vrot.lane.b32.xlu0 %v499, 12
        %v1391 = vpop.permute.xlu0 %1390
        %1392 = vrot.lane.b32.xlu0 %v501, 12
        %v1393 = vpop.permute.xlu0 %1392
        %1394 = vrot.lane.b32.xlu0 %v503, 12
        %v1395 = vpop.permute.xlu0 %1394
        %1396 = vrot.lane.b32.xlu0 %v506, 12
        %v1397 = vpop.permute.xlu0 %1396
        %1398 = vrot.lane.b32.xlu0 %v508, 12
        %v1399 = vpop.permute.xlu0 %1398
        %1400 = vrot.lane.b32.xlu0 %v510, 12
        %v1401 = vpop.permute.xlu0 %1400
        %1402 = vrot.lane.b32.xlu0 %v512, 12
        %v1403 = vpop.permute.xlu0 %1402
        %1404 = vrot.lane.b32.xlu0 %v515, 12
        %v1405 = vpop.permute.xlu0 %1404
        %1406 = vrot.lane.b32.xlu0 %v517, 12
        %v1407 = vpop.permute.xlu0 %1406
        %1408 = vrot.lane.b32.xlu0 %v519, 12
        %v1409 = vpop.permute.xlu0 %1408
        %1410 = vrot.lane.b32.xlu0 %v521, 12
        %v1411 = vpop.permute.xlu0 %1410
        %1412 = vrot.lane.b32.xlu0 %v524, 12
        %v1413 = vpop.permute.xlu0 %1412
        %1414 = vrot.lane.b32.xlu0 %v526, 12
        %v1415 = vpop.permute.xlu0 %1414
        %1416 = vrot.lane.b32.xlu0 %v528, 12
        %v1417 = vpop.permute.xlu0 %1416
        %1418 = vrot.lane.b32.xlu0 %v530, 12
        %v1419 = vpop.permute.xlu0 %1418
        %1420 = vrot.lane.b32.xlu0 %v533, 12
        %v1421 = vpop.permute.xlu0 %1420
        %1422 = vrot.lane.b32.xlu0 %v535, 12
        %v1423 = vpop.permute.xlu0 %1422
        %1424 = vrot.lane.b32.xlu0 %v537, 12
        %v1425 = vpop.permute.xlu0 %1424
        %1426 = vrot.lane.b32.xlu0 %v539, 12
        %v1427 = vpop.permute.xlu0 %1426
        %1428 = vrot.lane.b32.xlu0 %v542, 12
        %v1429 = vpop.permute.xlu0 %1428
        %1430 = vrot.lane.b32.xlu0 %v544, 12
        %v1431 = vpop.permute.xlu0 %1430
        %1432 = vrot.lane.b32.xlu0 %v546, 12
        %v1433 = vpop.permute.xlu0 %1432
        %1434 = vrot.lane.b32.xlu0 %v548, 12
        %v1435 = vpop.permute.xlu0 %1434
        %1436 = vrot.lane.b32.xlu0 %v701, 12
        %v1437 = vpop.permute.xlu0 %1436
        %1438 = vrot.lane.b32.xlu0 %v703, 12
        %v1439 = vpop.permute.xlu0 %1438
        %1440 = vrot.lane.b32.xlu0 %v705, 12
        %v1441 = vpop.permute.xlu0 %1440
        %1442 = vrot.lane.b32.xlu0 %v707, 12
        %v1443 = vpop.permute.xlu0 %1442
        %1508 = vrot.lane.b32.xlu0 %v561, 15
        %v1509 = vpop.permute.xlu0 %1508
        %1510 = vrot.lane.b32.xlu0 %v563, 15
        %v1511 = vpop.permute.xlu0 %1510
        %1512 = vrot.lane.b32.xlu0 %v565, 15
        %v1513 = vpop.permute.xlu0 %1512
        %1514 = vrot.lane.b32.xlu0 %v567, 15
        %v1515 = vpop.permute.xlu0 %1514
        %1516 = vrot.lane.b32.xlu0 %v570, 15
        %v1517 = vpop.permute.xlu0 %1516
        %1518 = vrot.lane.b32.xlu0 %v572, 15
        %v1519 = vpop.permute.xlu0 %1518
        %1520 = vrot.lane.b32.xlu0 %v574, 15
        %v1521 = vpop.permute.xlu0 %1520
        %1522 = vrot.lane.b32.xlu0 %v576, 15
        %v1523 = vpop.permute.xlu0 %1522
        %1524 = vrot.lane.b32.xlu0 %v579, 15
        %v1525 = vpop.permute.xlu0 %1524
        %1526 = vrot.lane.b32.xlu0 %v581, 15
        %v1527 = vpop.permute.xlu0 %1526
        %1528 = vrot.lane.b32.xlu0 %v583, 15
        %v1529 = vpop.permute.xlu0 %1528
        %1530 = vrot.lane.b32.xlu0 %v585, 15
        %v1531 = vpop.permute.xlu0 %1530
        %1532 = vrot.lane.b32.xlu0 %v588, 15
        %v1533 = vpop.permute.xlu0 %1532
        %1534 = vrot.lane.b32.xlu0 %v590, 15
        %v1535 = vpop.permute.xlu0 %1534
        %1536 = vrot.lane.b32.xlu0 %v592, 15
        %v1537 = vpop.permute.xlu0 %1536
        %1538 = vrot.lane.b32.xlu0 %v594, 15
        %v1539 = vpop.permute.xlu0 %1538
        %1540 = vrot.lane.b32.xlu0 %v597, 15
        %v1541 = vpop.permute.xlu0 %1540
        %1542 = vrot.lane.b32.xlu0 %v599, 15
        %v1543 = vpop.permute.xlu0 %1542
        %1544 = vrot.lane.b32.xlu0 %v601, 15
        %v1545 = vpop.permute.xlu0 %1544
        %1546 = vrot.lane.b32.xlu0 %v603, 15
        %v1547 = vpop.permute.xlu0 %1546
        %1548 = vrot.lane.b32.xlu0 %v606, 15
        %v1549 = vpop.permute.xlu0 %1548
        %1550 = vrot.lane.b32.xlu0 %v608, 15
        %v1551 = vpop.permute.xlu0 %1550
        %1552 = vrot.lane.b32.xlu0 %v610, 15
        %v1553 = vpop.permute.xlu0 %1552
        %1554 = vrot.lane.b32.xlu0 %v612, 15
        %v1555 = vpop.permute.xlu0 %1554
        %1556 = vrot.lane.b32.xlu0 %v615, 15
        %v1557 = vpop.permute.xlu0 %1556
        %1558 = vrot.lane.b32.xlu0 %v617, 15
        %v1559 = vpop.permute.xlu0 %1558
        %1560 = vrot.lane.b32.xlu0 %v619, 15
        %v1561 = vpop.permute.xlu0 %1560
        %1562 = vrot.lane.b32.xlu0 %v621, 15
        %v1563 = vpop.permute.xlu0 %1562
        %1564 = vrot.lane.b32.xlu0 %v624, 15
        %v1565 = vpop.permute.xlu0 %1564
        %1566 = vrot.lane.b32.xlu0 %v626, 15
        %v1567 = vpop.permute.xlu0 %1566
        %1568 = vrot.lane.b32.xlu0 %v628, 15
        %v1569 = vpop.permute.xlu0 %1568
        %1570 = vrot.lane.b32.xlu0 %v630, 15
        %v1571 = vpop.permute.xlu0 %1570
        %1572 = vrot.lane.b32.xlu0 %v633, 15
        %v1573 = vpop.permute.xlu0 %1572
        %1574 = vrot.lane.b32.xlu0 %v635, 15
        %v1575 = vpop.permute.xlu0 %1574
        %1576 = vrot.lane.b32.xlu0 %v637, 15
        %v1577 = vpop.permute.xlu0 %1576
        %1578 = vrot.lane.b32.xlu0 %v639, 15
        %v1579 = vpop.permute.xlu0 %1578
        %1580 = vrot.lane.b32.xlu0 %v642, 15
        %v1581 = vpop.permute.xlu0 %1580
        %1582 = vrot.lane.b32.xlu0 %v644, 15
        %v1583 = vpop.permute.xlu0 %1582
        %1584 = vrot.lane.b32.xlu0 %v646, 15
        %v1585 = vpop.permute.xlu0 %1584
        %1586 = vrot.lane.b32.xlu0 %v648, 15
        %v1587 = vpop.permute.xlu0 %1586
        %1588 = vrot.lane.b32.xlu0 %v651, 15
        %v1589 = vpop.permute.xlu0 %1588
        %1590 = vrot.lane.b32.xlu0 %v653, 15
        %v1591 = vpop.permute.xlu0 %1590
        %1592 = vrot.lane.b32.xlu0 %v655, 15
        %v1593 = vpop.permute.xlu0 %1592
        %1594 = vrot.lane.b32.xlu0 %v657, 15
        %v1595 = vpop.permute.xlu0 %1594
        %1596 = vrot.lane.b32.xlu0 %v660, 15
        %v1597 = vpop.permute.xlu0 %1596
        %1598 = vrot.lane.b32.xlu0 %v662, 15
        %v1599 = vpop.permute.xlu0 %1598
        %1600 = vrot.lane.b32.xlu0 %v664, 15
        %v1601 = vpop.permute.xlu0 %1600
        %1602 = vrot.lane.b32.xlu0 %v666, 15
        %v1603 = vpop.permute.xlu0 %1602
        %1604 = vrot.lane.b32.xlu0 %v669, 15
        %v1605 = vpop.permute.xlu0 %1604
        %1606 = vrot.lane.b32.xlu0 %v671, 15
        %v1607 = vpop.permute.xlu0 %1606
        %1608 = vrot.lane.b32.xlu0 %v673, 15
        %v1609 = vpop.permute.xlu0 %1608
        %1610 = vrot.lane.b32.xlu0 %v675, 15
        %v1611 = vpop.permute.xlu0 %1610
        %1612 = vrot.lane.b32.xlu0 %v678, 15
        %v1613 = vpop.permute.xlu0 %1612
        %1614 = vrot.lane.b32.xlu0 %v680, 15
        %v1615 = vpop.permute.xlu0 %1614
        %1616 = vrot.lane.b32.xlu0 %v682, 15
        %v1617 = vpop.permute.xlu0 %1616
        %1618 = vrot.lane.b32.xlu0 %v684, 15
        %v1619 = vpop.permute.xlu0 %1618
        %1620 = vrot.lane.b32.xlu0 %v687, 15
        %v1621 = vpop.permute.xlu0 %1620
        %1622 = vrot.lane.b32.xlu0 %v689, 15
        %v1623 = vpop.permute.xlu0 %1622
        %1624 = vrot.lane.b32.xlu0 %v691, 15
        %v1625 = vpop.permute.xlu0 %1624
        %1626 = vrot.lane.b32.xlu0 %v693, 15
        %v1627 = vpop.permute.xlu0 %1626
        %1628 = vrot.lane.b32.xlu0 %v710, 15
        %v1629 = vpop.permute.xlu0 %1628
        %1630 = vrot.lane.b32.xlu0 %v712, 15
        %v1631 = vpop.permute.xlu0 %1630
        %1632 = vrot.lane.b32.xlu0 %v714, 15
        %v1633 = vpop.permute.xlu0 %1632
        %1634 = vrot.lane.b32.xlu0 %v716, 15
        %v1635 = vpop.permute.xlu0 %1634
        %1700 = vrot.lane.b32.xlu0 %v244, 18
        %v1701 = vpop.permute.xlu0 %1700
        %1702 = vrot.lane.b32.xlu0 %v245, 18
        %v1703 = vpop.permute.xlu0 %1702
        %1704 = vrot.lane.b32.xlu0 %v246, 18
        %v1705 = vpop.permute.xlu0 %1704
        %1706 = vrot.lane.b32.xlu0 %v247, 18
        %v1707 = vpop.permute.xlu0 %1706
        %1708 = vrot.lane.b32.xlu0 %v249, 18
        %v1709 = vpop.permute.xlu0 %1708
        %1710 = vrot.lane.b32.xlu0 %v250, 18
        %v1711 = vpop.permute.xlu0 %1710
        %1712 = vrot.lane.b32.xlu0 %v251, 18
        %v1713 = vpop.permute.xlu0 %1712
        %1714 = vrot.lane.b32.xlu0 %v252, 18
        %v1715 = vpop.permute.xlu0 %1714
        %1716 = vrot.lane.b32.xlu0 %v254, 18
        %v1717 = vpop.permute.xlu0 %1716
        %1718 = vrot.lane.b32.xlu0 %v255, 18
        %v1719 = vpop.permute.xlu0 %1718
        %1720 = vrot.lane.b32.xlu0 %v256, 18
        %v1721 = vpop.permute.xlu0 %1720
        %1722 = vrot.lane.b32.xlu0 %v257, 18
        %v1723 = vpop.permute.xlu0 %1722
        %1724 = vrot.lane.b32.xlu0 %v259, 18
        %v1725 = vpop.permute.xlu0 %1724
        %1726 = vrot.lane.b32.xlu0 %v260, 18
        %v1727 = vpop.permute.xlu0 %1726
        %1728 = vrot.lane.b32.xlu0 %v261, 18
        %v1729 = vpop.permute.xlu0 %1728
        %1730 = vrot.lane.b32.xlu0 %v262, 18
        %v1731 = vpop.permute.xlu0 %1730
        %1732 = vrot.lane.b32.xlu0 %v264, 18
        %v1733 = vpop.permute.xlu0 %1732
        %1734 = vrot.lane.b32.xlu0 %v265, 18
        %v1735 = vpop.permute.xlu0 %1734
        %1736 = vrot.lane.b32.xlu0 %v266, 18
        %v1737 = vpop.permute.xlu0 %1736
        %1738 = vrot.lane.b32.xlu0 %v267, 18
        %v1739 = vpop.permute.xlu0 %1738
        %1740 = vrot.lane.b32.xlu0 %v269, 18
        %v1741 = vpop.permute.xlu0 %1740
        %1742 = vrot.lane.b32.xlu0 %v270, 18
        %v1743 = vpop.permute.xlu0 %1742
        %1744 = vrot.lane.b32.xlu0 %v271, 18
        %v1745 = vpop.permute.xlu0 %1744
        %1746 = vrot.lane.b32.xlu0 %v272, 18
        %v1747 = vpop.permute.xlu0 %1746
        %1748 = vrot.lane.b32.xlu0 %v274, 18
        %v1749 = vpop.permute.xlu0 %1748
        %1750 = vrot.lane.b32.xlu0 %v275, 18
        %v1751 = vpop.permute.xlu0 %1750
        %1752 = vrot.lane.b32.xlu0 %v276, 18
        %v1753 = vpop.permute.xlu0 %1752
        %1754 = vrot.lane.b32.xlu0 %v277, 18
        %v1755 = vpop.permute.xlu0 %1754
        %1756 = vrot.lane.b32.xlu0 %v279, 18
        %v1757 = vpop.permute.xlu0 %1756
        %1758 = vrot.lane.b32.xlu0 %v280, 18
        %v1759 = vpop.permute.xlu0 %1758
        %1760 = vrot.lane.b32.xlu0 %v281, 18
        %v1761 = vpop.permute.xlu0 %1760
        %1762 = vrot.lane.b32.xlu0 %v282, 18
        %v1763 = vpop.permute.xlu0 %1762
        %1764 = vrot.lane.b32.xlu0 %v284, 18
        %v1765 = vpop.permute.xlu0 %1764
        %1766 = vrot.lane.b32.xlu0 %v285, 18
        %v1767 = vpop.permute.xlu0 %1766
        %1768 = vrot.lane.b32.xlu0 %v286, 18
        %v1769 = vpop.permute.xlu0 %1768
        %1770 = vrot.lane.b32.xlu0 %v287, 18
        %v1771 = vpop.permute.xlu0 %1770
        %1772 = vrot.lane.b32.xlu0 %v289, 18
        %v1773 = vpop.permute.xlu0 %1772
        %1774 = vrot.lane.b32.xlu0 %v290, 18
        %v1775 = vpop.permute.xlu0 %1774
        %1776 = vrot.lane.b32.xlu0 %v291, 18
        %v1777 = vpop.permute.xlu0 %1776
        %1778 = vrot.lane.b32.xlu0 %v292, 18
        %v1779 = vpop.permute.xlu0 %1778
        %1780 = vrot.lane.b32.xlu0 %v294, 18
        %v1781 = vpop.permute.xlu0 %1780
        %1782 = vrot.lane.b32.xlu0 %v295, 18
        %v1783 = vpop.permute.xlu0 %1782
        %1784 = vrot.lane.b32.xlu0 %v296, 18
        %v1785 = vpop.permute.xlu0 %1784
        %1786 = vrot.lane.b32.xlu0 %v297, 18
        %v1787 = vpop.permute.xlu0 %1786
        %1788 = vrot.lane.b32.xlu0 %v299, 18
        %v1789 = vpop.permute.xlu0 %1788
        %1790 = vrot.lane.b32.xlu0 %v300, 18
        %v1791 = vpop.permute.xlu0 %1790
        %1792 = vrot.lane.b32.xlu0 %v301, 18
        %v1793 = vpop.permute.xlu0 %1792
        %1794 = vrot.lane.b32.xlu0 %v302, 18
        %v1795 = vpop.permute.xlu0 %1794
        %1796 = vrot.lane.b32.xlu0 %v304, 18
        %v1797 = vpop.permute.xlu0 %1796
        %1798 = vrot.lane.b32.xlu0 %v305, 18
        %v1799 = vpop.permute.xlu0 %1798
        %1800 = vrot.lane.b32.xlu0 %v306, 18
        %v1801 = vpop.permute.xlu0 %1800
        %1802 = vrot.lane.b32.xlu0 %v307, 18
        %v1803 = vpop.permute.xlu0 %1802
        %1804 = vrot.lane.b32.xlu0 %v309, 18
        %v1805 = vpop.permute.xlu0 %1804
        %1806 = vrot.lane.b32.xlu0 %v310, 18
        %v1807 = vpop.permute.xlu0 %1806
        %1808 = vrot.lane.b32.xlu0 %v311, 18
        %v1809 = vpop.permute.xlu0 %1808
        %1810 = vrot.lane.b32.xlu0 %v312, 18
        %v1811 = vpop.permute.xlu0 %1810
        %1812 = vrot.lane.b32.xlu0 %v314, 18
        %v1813 = vpop.permute.xlu0 %1812
        %1814 = vrot.lane.b32.xlu0 %v315, 18
        %v1815 = vpop.permute.xlu0 %1814
        %1816 = vrot.lane.b32.xlu0 %v316, 18
        %v1817 = vpop.permute.xlu0 %1816
        %1818 = vrot.lane.b32.xlu0 %v317, 18
        %v1819 = vpop.permute.xlu0 %1818
        %1820 = vrot.lane.b32.xlu0 %v319, 18
        %v1821 = vpop.permute.xlu0 %1820
        %1822 = vrot.lane.b32.xlu0 %v320, 18
        %v1823 = vpop.permute.xlu0 %1822
        %1824 = vrot.lane.b32.xlu0 %v321, 18
        %v1825 = vpop.permute.xlu0 %1824
        %1826 = vrot.lane.b32.xlu0 %v322, 18
        %v1827 = vpop.permute.xlu0 %1826
        %1892 = vrot.lane.b32.xlu0 %v425, 21
        %v1893 = vpop.permute.xlu0 %1892
        %1894 = vrot.lane.b32.xlu0 %v427, 21
        %v1895 = vpop.permute.xlu0 %1894
        %1896 = vrot.lane.b32.xlu0 %v429, 21
        %v1897 = vpop.permute.xlu0 %1896
        %1898 = vrot.lane.b32.xlu0 %v431, 21
        %v1899 = vpop.permute.xlu0 %1898
        %1900 = vrot.lane.b32.xlu0 %v434, 21
        %v1901 = vpop.permute.xlu0 %1900
        %1902 = vrot.lane.b32.xlu0 %v436, 21
        %v1903 = vpop.permute.xlu0 %1902
        %1904 = vrot.lane.b32.xlu0 %v438, 21
        %v1905 = vpop.permute.xlu0 %1904
        %1906 = vrot.lane.b32.xlu0 %v440, 21
        %v1907 = vpop.permute.xlu0 %1906
        %1908 = vrot.lane.b32.xlu0 %v443, 21
        %v1909 = vpop.permute.xlu0 %1908
        %1910 = vrot.lane.b32.xlu0 %v445, 21
        %v1911 = vpop.permute.xlu0 %1910
        %1912 = vrot.lane.b32.xlu0 %v447, 21
        %v1913 = vpop.permute.xlu0 %1912
        %1914 = vrot.lane.b32.xlu0 %v449, 21
        %v1915 = vpop.permute.xlu0 %1914
        %1916 = vrot.lane.b32.xlu0 %v452, 21
        %v1917 = vpop.permute.xlu0 %1916
        %1918 = vrot.lane.b32.xlu0 %v454, 21
        %v1919 = vpop.permute.xlu0 %1918
        %1920 = vrot.lane.b32.xlu0 %v456, 21
        %v1921 = vpop.permute.xlu0 %1920
        %1922 = vrot.lane.b32.xlu0 %v458, 21
        %v1923 = vpop.permute.xlu0 %1922
        %1924 = vrot.lane.b32.xlu0 %v461, 21
        %v1925 = vpop.permute.xlu0 %1924
        %1926 = vrot.lane.b32.xlu0 %v463, 21
        %v1927 = vpop.permute.xlu0 %1926
        %1928 = vrot.lane.b32.xlu0 %v465, 21
        %v1929 = vpop.permute.xlu0 %1928
        %1930 = vrot.lane.b32.xlu0 %v467, 21
        %v1931 = vpop.permute.xlu0 %1930
        %1932 = vrot.lane.b32.xlu0 %v470, 21
        %v1933 = vpop.permute.xlu0 %1932
        %1934 = vrot.lane.b32.xlu0 %v472, 21
        %v1935 = vpop.permute.xlu0 %1934
        %1936 = vrot.lane.b32.xlu0 %v474, 21
        %v1937 = vpop.permute.xlu0 %1936
        %1938 = vrot.lane.b32.xlu0 %v476, 21
        %v1939 = vpop.permute.xlu0 %1938
        %1940 = vrot.lane.b32.xlu0 %v479, 21
        %v1941 = vpop.permute.xlu0 %1940
        %1942 = vrot.lane.b32.xlu0 %v481, 21
        %v1943 = vpop.permute.xlu0 %1942
        %1944 = vrot.lane.b32.xlu0 %v483, 21
        %v1945 = vpop.permute.xlu0 %1944
        %1946 = vrot.lane.b32.xlu0 %v485, 21
        %v1947 = vpop.permute.xlu0 %1946
        %1948 = vrot.lane.b32.xlu0 %v488, 21
        %v1949 = vpop.permute.xlu0 %1948
        %1950 = vrot.lane.b32.xlu0 %v490, 21
        %v1951 = vpop.permute.xlu0 %1950
        %1952 = vrot.lane.b32.xlu0 %v492, 21
        %v1953 = vpop.permute.xlu0 %1952
        %1954 = vrot.lane.b32.xlu0 %v494, 21
        %v1955 = vpop.permute.xlu0 %1954
        %1956 = vrot.lane.b32.xlu0 %v497, 21
        %v1957 = vpop.permute.xlu0 %1956
        %1958 = vrot.lane.b32.xlu0 %v499, 21
        %v1959 = vpop.permute.xlu0 %1958
        %1960 = vrot.lane.b32.xlu0 %v501, 21
        %v1961 = vpop.permute.xlu0 %1960
        %1962 = vrot.lane.b32.xlu0 %v503, 21
        %v1963 = vpop.permute.xlu0 %1962
        %1964 = vrot.lane.b32.xlu0 %v506, 21
        %v1965 = vpop.permute.xlu0 %1964
        %1966 = vrot.lane.b32.xlu0 %v508, 21
        %v1967 = vpop.permute.xlu0 %1966
        %1968 = vrot.lane.b32.xlu0 %v510, 21
        %v1969 = vpop.permute.xlu0 %1968
        %1970 = vrot.lane.b32.xlu0 %v512, 21
        %v1971 = vpop.permute.xlu0 %1970
        %1972 = vrot.lane.b32.xlu0 %v515, 21
        %v1973 = vpop.permute.xlu0 %1972
        %1974 = vrot.lane.b32.xlu0 %v517, 21
        %v1975 = vpop.permute.xlu0 %1974
        %1976 = vrot.lane.b32.xlu0 %v519, 21
        %v1977 = vpop.permute.xlu0 %1976
        %1978 = vrot.lane.b32.xlu0 %v521, 21
        %v1979 = vpop.permute.xlu0 %1978
        %1980 = vrot.lane.b32.xlu0 %v524, 21
        %v1981 = vpop.permute.xlu0 %1980
        %1982 = vrot.lane.b32.xlu0 %v526, 21
        %v1983 = vpop.permute.xlu0 %1982
        %1984 = vrot.lane.b32.xlu0 %v528, 21
        %v1985 = vpop.permute.xlu0 %1984
        %1986 = vrot.lane.b32.xlu0 %v530, 21
        %v1987 = vpop.permute.xlu0 %1986
        %1988 = vrot.lane.b32.xlu0 %v533, 21
        %v1989 = vpop.permute.xlu0 %1988
        %1990 = vrot.lane.b32.xlu0 %v535, 21
        %v1991 = vpop.permute.xlu0 %1990
        %1992 = vrot.lane.b32.xlu0 %v537, 21
        %v1993 = vpop.permute.xlu0 %1992
        %1994 = vrot.lane.b32.xlu0 %v539, 21
        %v1995 = vpop.permute.xlu0 %1994
        %1996 = vrot.lane.b32.xlu0 %v542, 21
        %v1997 = vpop.permute.xlu0 %1996
        %1998 = vrot.lane.b32.xlu0 %v544, 21
        %v1999 = vpop.permute.xlu0 %1998
        %2000 = vrot.lane.b32.xlu0 %v546, 21
        %v2001 = vpop.permute.xlu0 %2000
        %2002 = vrot.lane.b32.xlu0 %v548, 21
        %v2003 = vpop.permute.xlu0 %2002
        %2004 = vrot.lane.b32.xlu0 %v701, 21
        %v2005 = vpop.permute.xlu0 %2004
        %2006 = vrot.lane.b32.xlu0 %v703, 21
        %v2007 = vpop.permute.xlu0 %2006
        %2008 = vrot.lane.b32.xlu0 %v705, 21
        %v2009 = vpop.permute.xlu0 %2008
        %2010 = vrot.lane.b32.xlu0 %v707, 21
        %v2011 = vpop.permute.xlu0 %2010
        %2012 = vrot.lane.b32.xlu0 %v724, 21
        %v2013 = vpop.permute.xlu0 %2012
        %2014 = vrot.lane.b32.xlu0 %v726, 21
        %v2015 = vpop.permute.xlu0 %2014
        %2016 = vrot.lane.b32.xlu0 %v728, 21
        %v2017 = vpop.permute.xlu0 %2016
        %2018 = vrot.lane.b32.xlu0 %v730, 21
        %v2019 = vpop.permute.xlu0 %2018
        %2084 = vrot.lane.b32.xlu0 %v570, 24
        %v2085 = vpop.permute.xlu0 %2084
        %2086 = vrot.lane.b32.xlu0 %v572, 24
        %v2087 = vpop.permute.xlu0 %2086
        %2088 = vrot.lane.b32.xlu0 %v574, 24
        %v2089 = vpop.permute.xlu0 %2088
        %2090 = vrot.lane.b32.xlu0 %v576, 24
        %v2091 = vpop.permute.xlu0 %2090
        %2092 = vrot.lane.b32.xlu0 %v579, 24
        %v2093 = vpop.permute.xlu0 %2092
        %2094 = vrot.lane.b32.xlu0 %v581, 24
        %v2095 = vpop.permute.xlu0 %2094
        %2096 = vrot.lane.b32.xlu0 %v583, 24
        %v2097 = vpop.permute.xlu0 %2096
        %2098 = vrot.lane.b32.xlu0 %v585, 24
        %v2099 = vpop.permute.xlu0 %2098
        %2100 = vrot.lane.b32.xlu0 %v588, 24
        %v2101 = vpop.permute.xlu0 %2100
        %2102 = vrot.lane.b32.xlu0 %v590, 24
        %v2103 = vpop.permute.xlu0 %2102
        %2104 = vrot.lane.b32.xlu0 %v592, 24
        %v2105 = vpop.permute.xlu0 %2104
        %2106 = vrot.lane.b32.xlu0 %v594, 24
        %v2107 = vpop.permute.xlu0 %2106
        %2108 = vrot.lane.b32.xlu0 %v597, 24
        %v2109 = vpop.permute.xlu0 %2108
        %2110 = vrot.lane.b32.xlu0 %v599, 24
        %v2111 = vpop.permute.xlu0 %2110
        %2112 = vrot.lane.b32.xlu0 %v601, 24
        %v2113 = vpop.permute.xlu0 %2112
        %2114 = vrot.lane.b32.xlu0 %v603, 24
        %v2115 = vpop.permute.xlu0 %2114
        %2116 = vrot.lane.b32.xlu0 %v606, 24
        %v2117 = vpop.permute.xlu0 %2116
        %2118 = vrot.lane.b32.xlu0 %v608, 24
        %v2119 = vpop.permute.xlu0 %2118
        %2120 = vrot.lane.b32.xlu0 %v610, 24
        %v2121 = vpop.permute.xlu0 %2120
        %2122 = vrot.lane.b32.xlu0 %v612, 24
        %v2123 = vpop.permute.xlu0 %2122
        %2124 = vrot.lane.b32.xlu0 %v615, 24
        %v2125 = vpop.permute.xlu0 %2124
        %2126 = vrot.lane.b32.xlu0 %v617, 24
        %v2127 = vpop.permute.xlu0 %2126
        %2128 = vrot.lane.b32.xlu0 %v619, 24
        %v2129 = vpop.permute.xlu0 %2128
        %2130 = vrot.lane.b32.xlu0 %v621, 24
        %v2131 = vpop.permute.xlu0 %2130
        %2132 = vrot.lane.b32.xlu0 %v624, 24
        %v2133 = vpop.permute.xlu0 %2132
        %2134 = vrot.lane.b32.xlu0 %v626, 24
        %v2135 = vpop.permute.xlu0 %2134
        %2136 = vrot.lane.b32.xlu0 %v628, 24
        %v2137 = vpop.permute.xlu0 %2136
        %2138 = vrot.lane.b32.xlu0 %v630, 24
        %v2139 = vpop.permute.xlu0 %2138
        %2140 = vrot.lane.b32.xlu0 %v633, 24
        %v2141 = vpop.permute.xlu0 %2140
        %2142 = vrot.lane.b32.xlu0 %v635, 24
        %v2143 = vpop.permute.xlu0 %2142
        %2144 = vrot.lane.b32.xlu0 %v637, 24
        %v2145 = vpop.permute.xlu0 %2144
        %2146 = vrot.lane.b32.xlu0 %v639, 24
        %v2147 = vpop.permute.xlu0 %2146
        %2148 = vrot.lane.b32.xlu0 %v642, 24
        %v2149 = vpop.permute.xlu0 %2148
        %2150 = vrot.lane.b32.xlu0 %v644, 24
        %v2151 = vpop.permute.xlu0 %2150
        %2152 = vrot.lane.b32.xlu0 %v646, 24
        %v2153 = vpop.permute.xlu0 %2152
        %2154 = vrot.lane.b32.xlu0 %v648, 24
        %v2155 = vpop.permute.xlu0 %2154
        %2156 = vrot.lane.b32.xlu0 %v651, 24
        %v2157 = vpop.permute.xlu0 %2156
        %2158 = vrot.lane.b32.xlu0 %v653, 24
        %v2159 = vpop.permute.xlu0 %2158
        %2160 = vrot.lane.b32.xlu0 %v655, 24
        %v2161 = vpop.permute.xlu0 %2160
        %2162 = vrot.lane.b32.xlu0 %v657, 24
        %v2163 = vpop.permute.xlu0 %2162
        %2164 = vrot.lane.b32.xlu0 %v660, 24
        %v2165 = vpop.permute.xlu0 %2164
        %2166 = vrot.lane.b32.xlu0 %v662, 24
        %v2167 = vpop.permute.xlu0 %2166
        %2168 = vrot.lane.b32.xlu0 %v664, 24
        %v2169 = vpop.permute.xlu0 %2168
        %2170 = vrot.lane.b32.xlu0 %v666, 24
        %v2171 = vpop.permute.xlu0 %2170
        %2172 = vrot.lane.b32.xlu0 %v669, 24
        %v2173 = vpop.permute.xlu0 %2172
        %2174 = vrot.lane.b32.xlu0 %v671, 24
        %v2175 = vpop.permute.xlu0 %2174
        %2176 = vrot.lane.b32.xlu0 %v673, 24
        %v2177 = vpop.permute.xlu0 %2176
        %2178 = vrot.lane.b32.xlu0 %v675, 24
        %v2179 = vpop.permute.xlu0 %2178
        %2180 = vrot.lane.b32.xlu0 %v678, 24
        %v2181 = vpop.permute.xlu0 %2180
        %2182 = vrot.lane.b32.xlu0 %v680, 24
        %v2183 = vpop.permute.xlu0 %2182
        %2184 = vrot.lane.b32.xlu0 %v682, 24
        %v2185 = vpop.permute.xlu0 %2184
        %2186 = vrot.lane.b32.xlu0 %v684, 24
        %v2187 = vpop.permute.xlu0 %2186
        %2188 = vrot.lane.b32.xlu0 %v687, 24
        %v2189 = vpop.permute.xlu0 %2188
        %2190 = vrot.lane.b32.xlu0 %v689, 24
        %v2191 = vpop.permute.xlu0 %2190
        %2192 = vrot.lane.b32.xlu0 %v691, 24
        %v2193 = vpop.permute.xlu0 %2192
        %2194 = vrot.lane.b32.xlu0 %v693, 24
        %v2195 = vpop.permute.xlu0 %2194
        %2196 = vrot.lane.b32.xlu0 %v710, 24
        %v2197 = vpop.permute.xlu0 %2196
        %2198 = vrot.lane.b32.xlu0 %v712, 24
        %v2199 = vpop.permute.xlu0 %2198
        %2200 = vrot.lane.b32.xlu0 %v714, 24
        %v2201 = vpop.permute.xlu0 %2200
        %2202 = vrot.lane.b32.xlu0 %v716, 24
        %v2203 = vpop.permute.xlu0 %2202
        %2204 = vrot.lane.b32.xlu0 %v733, 24
        %v2205 = vpop.permute.xlu0 %2204
        %2206 = vrot.lane.b32.xlu0 %v735, 24
        %v2207 = vpop.permute.xlu0 %2206
        %2208 = vrot.lane.b32.xlu0 %v737, 24
        %v2209 = vpop.permute.xlu0 %2208
        %2210 = vrot.lane.b32.xlu0 %v739, 24
        %v2211 = vpop.permute.xlu0 %2210
        %vm2276 = vcmask 23552
        %v2277 = vsel %vm2276, %v234, %v741
        %v2278 = vsel %vm2276, %v235, %v743
        %v2279 = vsel %vm2276, %v236, %v745
        %v2280 = vsel %vm2276, %v237, %v747
        %v2281 = vsel %vm2276, %v239, %v749
        %v2282 = vsel %vm2276, %v240, %v751
        %v2283 = vsel %vm2276, %v241, %v753
        %v2284 = vsel %vm2276, %v242, %v755
        %v2285 = vsel %vm2276, %v244, %v757
        %v2286 = vsel %vm2276, %v245, %v759
        %v2287 = vsel %vm2276, %v246, %v761
        %v2288 = vsel %vm2276, %v247, %v763
        %v2289 = vsel %vm2276, %v249, %v765
        %v2290 = vsel %vm2276, %v250, %v767
        %v2291 = vsel %vm2276, %v251, %v769
        %v2292 = vsel %vm2276, %v252, %v771
        %v2293 = vsel %vm2276, %v254, %v773
        %v2294 = vsel %vm2276, %v255, %v775
        %v2295 = vsel %vm2276, %v256, %v777
        %v2296 = vsel %vm2276, %v257, %v779
        %v2297 = vsel %vm2276, %v259, %v781
        %v2298 = vsel %vm2276, %v260, %v783
        %v2299 = vsel %vm2276, %v261, %v785
        %v2300 = vsel %vm2276, %v262, %v787
        %v2301 = vsel %vm2276, %v264, %v789
        %v2302 = vsel %vm2276, %v265, %v791
        %v2303 = vsel %vm2276, %v266, %v793
        %v2304 = vsel %vm2276, %v267, %v795
        %v2305 = vsel %vm2276, %v269, %v797
        %v2306 = vsel %vm2276, %v270, %v799
        %v2307 = vsel %vm2276, %v271, %v801
        %v2308 = vsel %vm2276, %v272, %v803
        %v2309 = vsel %vm2276, %v274, %v805
        %v2310 = vsel %vm2276, %v275, %v807
        %v2311 = vsel %vm2276, %v276, %v809
        %v2312 = vsel %vm2276, %v277, %v811
        %v2313 = vsel %vm2276, %v279, %v813
        %v2314 = vsel %vm2276, %v280, %v815
        %v2315 = vsel %vm2276, %v281, %v817
        %v2316 = vsel %vm2276, %v282, %v819
        %v2317 = vsel %vm2276, %v284, %v821
        %v2318 = vsel %vm2276, %v285, %v823
        %v2319 = vsel %vm2276, %v286, %v825
        %v2320 = vsel %vm2276, %v287, %v827
        %v2321 = vsel %vm2276, %v289, %v829
        %v2322 = vsel %vm2276, %v290, %v831
        %v2323 = vsel %vm2276, %v291, %v833
        %v2324 = vsel %vm2276, %v292, %v835
        %v2325 = vsel %vm2276, %v294, %v837
        %v2326 = vsel %vm2276, %v295, %v839
        %v2327 = vsel %vm2276, %v296, %v841
        %v2328 = vsel %vm2276, %v297, %v843
        %v2329 = vsel %vm2276, %v299, %v845
        %v2330 = vsel %vm2276, %v300, %v847
        %v2331 = vsel %vm2276, %v301, %v849
        %v2332 = vsel %vm2276, %v302, %v851
        %v2333 = vsel %vm2276, %v304, %v853
        %v2334 = vsel %vm2276, %v305, %v855
        %v2335 = vsel %vm2276, %v306, %v857
        %v2336 = vsel %vm2276, %v307, %v859
        %v2337 = vsel %vm2276, %v309, %v861
        %v2338 = vsel %vm2276, %v310, %v863
        %v2339 = vsel %vm2276, %v311, %v865
        %v2340 = vsel %vm2276, %v312, %v867
        %vm2341 = vcmask 48128
        %v2342 = vsel %vm2341, %v2277, %v933
        %v2343 = vsel %vm2341, %v2278, %v935
        %v2344 = vsel %vm2341, %v2279, %v937
        %v2345 = vsel %vm2341, %v2280, %v939
        %v2346 = vsel %vm2341, %v2281, %v941
        %v2347 = vsel %vm2341, %v2282, %v943
        %v2348 = vsel %vm2341, %v2283, %v945
        %v2349 = vsel %vm2341, %v2284, %v947
        %v2350 = vsel %vm2341, %v2285, %v949
        %v2351 = vsel %vm2341, %v2286, %v951
        %v2352 = vsel %vm2341, %v2287, %v953
        %v2353 = vsel %vm2341, %v2288, %v955
        %v2354 = vsel %vm2341, %v2289, %v957
        %v2355 = vsel %vm2341, %v2290, %v959
        %v2356 = vsel %vm2341, %v2291, %v961
        %v2357 = vsel %vm2341, %v2292, %v963
        %v2358 = vsel %vm2341, %v2293, %v965
        %v2359 = vsel %vm2341, %v2294, %v967
        %v2360 = vsel %vm2341, %v2295, %v969
        %v2361 = vsel %vm2341, %v2296, %v971
        %v2362 = vsel %vm2341, %v2297, %v973
        %v2363 = vsel %vm2341, %v2298, %v975
        %v2364 = vsel %vm2341, %v2299, %v977
        %v2365 = vsel %vm2341, %v2300, %v979
        %v2366 = vsel %vm2341, %v2301, %v981
        %v2367 = vsel %vm2341, %v2302, %v983
        %v2368 = vsel %vm2341, %v2303, %v985
        %v2369 = vsel %vm2341, %v2304, %v987
        %v2370 = vsel %vm2341, %v2305, %v989
        %v2371 = vsel %vm2341, %v2306, %v991
        %v2372 = vsel %vm2341, %v2307, %v993
        %v2373 = vsel %vm2341, %v2308, %v995
        %v2374 = vsel %vm2341, %v2309, %v997
        %v2375 = vsel %vm2341, %v2310, %v999
        %v2376 = vsel %vm2341, %v2311, %v1001
        %v2377 = vsel %vm2341, %v2312, %v1003
        %v2378 = vsel %vm2341, %v2313, %v1005
        %v2379 = vsel %vm2341, %v2314, %v1007
        %v2380 = vsel %vm2341, %v2315, %v1009
        %v2381 = vsel %vm2341, %v2316, %v1011
        %v2382 = vsel %vm2341, %v2317, %v1013
        %v2383 = vsel %vm2341, %v2318, %v1015
        %v2384 = vsel %vm2341, %v2319, %v1017
        %v2385 = vsel %vm2341, %v2320, %v1019
        %v2386 = vsel %vm2341, %v2321, %v1021
        %v2387 = vsel %vm2341, %v2322, %v1023
        %v2388 = vsel %vm2341, %v2323, %v1025
        %v2389 = vsel %vm2341, %v2324, %v1027
        %v2390 = vsel %vm2341, %v2325, %v1029
        %v2391 = vsel %vm2341, %v2326, %v1031
        %v2392 = vsel %vm2341, %v2327, %v1033
        %v2393 = vsel %vm2341, %v2328, %v1035
        %v2394 = vsel %vm2341, %v2329, %v1037
        %v2395 = vsel %vm2341, %v2330, %v1039
        %v2396 = vsel %vm2341, %v2331, %v1041
        %v2397 = vsel %vm2341, %v2332, %v1043
        %v2398 = vsel %vm2341, %v2333, %v1045
        %v2399 = vsel %vm2341, %v2334, %v1047
        %v2400 = vsel %vm2341, %v2335, %v1049
        %v2401 = vsel %vm2341, %v2336, %v1051
        %v2402 = vsel %vm2341, %v2337, %v1053
        %v2403 = vsel %vm2341, %v2338, %v1055
        %v2404 = vsel %vm2341, %v2339, %v1057
        %v2405 = vsel %vm2341, %v2340, %v1059
        %vm2406 = vcmask 72704
        %v2407 = vsel %vm2406, %v2342, %v1125
        %v2408 = vsel %vm2406, %v2343, %v1127
        %v2409 = vsel %vm2406, %v2344, %v1129
        %v2410 = vsel %vm2406, %v2345, %v1131
        %v2411 = vsel %vm2406, %v2346, %v1133
        %v2412 = vsel %vm2406, %v2347, %v1135
        %v2413 = vsel %vm2406, %v2348, %v1137
        %v2414 = vsel %vm2406, %v2349, %v1139
        %v2415 = vsel %vm2406, %v2350, %v1141
        %v2416 = vsel %vm2406, %v2351, %v1143
        %v2417 = vsel %vm2406, %v2352, %v1145
        %v2418 = vsel %vm2406, %v2353, %v1147
        %v2419 = vsel %vm2406, %v2354, %v1149
        %v2420 = vsel %vm2406, %v2355, %v1151
        %v2421 = vsel %vm2406, %v2356, %v1153
        %v2422 = vsel %vm2406, %v2357, %v1155
        %v2423 = vsel %vm2406, %v2358, %v1157
        %v2424 = vsel %vm2406, %v2359, %v1159
        %v2425 = vsel %vm2406, %v2360, %v1161
        %v2426 = vsel %vm2406, %v2361, %v1163
        %v2427 = vsel %vm2406, %v2362, %v1165
        %v2428 = vsel %vm2406, %v2363, %v1167
        %v2429 = vsel %vm2406, %v2364, %v1169
        %v2430 = vsel %vm2406, %v2365, %v1171
        %v2431 = vsel %vm2406, %v2366, %v1173
        %v2432 = vsel %vm2406, %v2367, %v1175
        %v2433 = vsel %vm2406, %v2368, %v1177
        %v2434 = vsel %vm2406, %v2369, %v1179
        %v2435 = vsel %vm2406, %v2370, %v1181
        %v2436 = vsel %vm2406, %v2371, %v1183
        %v2437 = vsel %vm2406, %v2372, %v1185
        %v2438 = vsel %vm2406, %v2373, %v1187
        %v2439 = vsel %vm2406, %v2374, %v1189
        %v2440 = vsel %vm2406, %v2375, %v1191
        %v2441 = vsel %vm2406, %v2376, %v1193
        %v2442 = vsel %vm2406, %v2377, %v1195
        %v2443 = vsel %vm2406, %v2378, %v1197
        %v2444 = vsel %vm2406, %v2379, %v1199
        %v2445 = vsel %vm2406, %v2380, %v1201
        %v2446 = vsel %vm2406, %v2381, %v1203
        %v2447 = vsel %vm2406, %v2382, %v1205
        %v2448 = vsel %vm2406, %v2383, %v1207
        %v2449 = vsel %vm2406, %v2384, %v1209
        %v2450 = vsel %vm2406, %v2385, %v1211
        %v2451 = vsel %vm2406, %v2386, %v1213
        %v2452 = vsel %vm2406, %v2387, %v1215
        %v2453 = vsel %vm2406, %v2388, %v1217
        %v2454 = vsel %vm2406, %v2389, %v1219
        %v2455 = vsel %vm2406, %v2390, %v1221
        %v2456 = vsel %vm2406, %v2391, %v1223
        %v2457 = vsel %vm2406, %v2392, %v1225
        %v2458 = vsel %vm2406, %v2393, %v1227
        %v2459 = vsel %vm2406, %v2394, %v1229
        %v2460 = vsel %vm2406, %v2395, %v1231
        %v2461 = vsel %vm2406, %v2396, %v1233
        %v2462 = vsel %vm2406, %v2397, %v1235
        %v2463 = vsel %vm2406, %v2398, %v1237
        %v2464 = vsel %vm2406, %v2399, %v1239
        %v2465 = vsel %vm2406, %v2400, %v1241
        %v2466 = vsel %vm2406, %v2401, %v1243
        %v2467 = vsel %vm2406, %v2402, %v1245
        %v2468 = vsel %vm2406, %v2403, %v1247
        %v2469 = vsel %vm2406, %v2404, %v1249
        %v2470 = vsel %vm2406, %v2405, %v1251
        %vm2471 = vcmask 97280
        %v2472 = vsel %vm2471, %v2407, %v1317
        %v2473 = vsel %vm2471, %v2408, %v1319
        %v2474 = vsel %vm2471, %v2409, %v1321
        %v2475 = vsel %vm2471, %v2410, %v1323
        %v2476 = vsel %vm2471, %v2411, %v1325
        %v2477 = vsel %vm2471, %v2412, %v1327
        %v2478 = vsel %vm2471, %v2413, %v1329
        %v2479 = vsel %vm2471, %v2414, %v1331
        %v2480 = vsel %vm2471, %v2415, %v1333
        %v2481 = vsel %vm2471, %v2416, %v1335
        %v2482 = vsel %vm2471, %v2417, %v1337
        %v2483 = vsel %vm2471, %v2418, %v1339
        %v2484 = vsel %vm2471, %v2419, %v1341
        %v2485 = vsel %vm2471, %v2420, %v1343
        %v2486 = vsel %vm2471, %v2421, %v1345
        %v2487 = vsel %vm2471, %v2422, %v1347
        %v2488 = vsel %vm2471, %v2423, %v1349
        %v2489 = vsel %vm2471, %v2424, %v1351
        %v2490 = vsel %vm2471, %v2425, %v1353
        %v2491 = vsel %vm2471, %v2426, %v1355
        %v2492 = vsel %vm2471, %v2427, %v1357
        %v2493 = vsel %vm2471, %v2428, %v1359
        %v2494 = vsel %vm2471, %v2429, %v1361
        %v2495 = vsel %vm2471, %v2430, %v1363
        %v2496 = vsel %vm2471, %v2431, %v1365
        %v2497 = vsel %vm2471, %v2432, %v1367
        %v2498 = vsel %vm2471, %v2433, %v1369
        %v2499 = vsel %vm2471, %v2434, %v1371
        %v2500 = vsel %vm2471, %v2435, %v1373
        %v2501 = vsel %vm2471, %v2436, %v1375
        %v2502 = vsel %vm2471, %v2437, %v1377
        %v2503 = vsel %vm2471, %v2438, %v1379
        %v2504 = vsel %vm2471, %v2439, %v1381
        %v2505 = vsel %vm2471, %v2440, %v1383
        %v2506 = vsel %vm2471, %v2441, %v1385
        %v2507 = vsel %vm2471, %v2442, %v1387
        %v2508 = vsel %vm2471, %v2443, %v1389
        %v2509 = vsel %vm2471, %v2444, %v1391
        %v2510 = vsel %vm2471, %v2445, %v1393
        %v2511 = vsel %vm2471, %v2446, %v1395
        %v2512 = vsel %vm2471, %v2447, %v1397
        %v2513 = vsel %vm2471, %v2448, %v1399
        %v2514 = vsel %vm2471, %v2449, %v1401
        %v2515 = vsel %vm2471, %v2450, %v1403
        %v2516 = vsel %vm2471, %v2451, %v1405
        %v2517 = vsel %vm2471, %v2452, %v1407
        %v2518 = vsel %vm2471, %v2453, %v1409
        %v2519 = vsel %vm2471, %v2454, %v1411
        %v2520 = vsel %vm2471, %v2455, %v1413
        %v2521 = vsel %vm2471, %v2456, %v1415
        %v2522 = vsel %vm2471, %v2457, %v1417
        %v2523 = vsel %vm2471, %v2458, %v1419
        %v2524 = vsel %vm2471, %v2459, %v1421
        %v2525 = vsel %vm2471, %v2460, %v1423
        %v2526 = vsel %vm2471, %v2461, %v1425
        %v2527 = vsel %vm2471, %v2462, %v1427
        %v2528 = vsel %vm2471, %v2463, %v1429
        %v2529 = vsel %vm2471, %v2464, %v1431
        %v2530 = vsel %vm2471, %v2465, %v1433
        %v2531 = vsel %vm2471, %v2466, %v1435
        %v2532 = vsel %vm2471, %v2467, %v1437
        %v2533 = vsel %vm2471, %v2468, %v1439
        %v2534 = vsel %vm2471, %v2469, %v1441
        %v2535 = vsel %vm2471, %v2470, %v1443
        %vm2536 = vcmask 121856
        %v2537 = vsel %vm2536, %v2472, %v1509
        %v2538 = vsel %vm2536, %v2473, %v1511
        %v2539 = vsel %vm2536, %v2474, %v1513
        %v2540 = vsel %vm2536, %v2475, %v1515
        %v2541 = vsel %vm2536, %v2476, %v1517
        %v2542 = vsel %vm2536, %v2477, %v1519
        %v2543 = vsel %vm2536, %v2478, %v1521
        %v2544 = vsel %vm2536, %v2479, %v1523
        %v2545 = vsel %vm2536, %v2480, %v1525
        %v2546 = vsel %vm2536, %v2481, %v1527
        %v2547 = vsel %vm2536, %v2482, %v1529
        %v2548 = vsel %vm2536, %v2483, %v1531
        %v2549 = vsel %vm2536, %v2484, %v1533
        %v2550 = vsel %vm2536, %v2485, %v1535
        %v2551 = vsel %vm2536, %v2486, %v1537
        %v2552 = vsel %vm2536, %v2487, %v1539
        %v2553 = vsel %vm2536, %v2488, %v1541
        %v2554 = vsel %vm2536, %v2489, %v1543
        %v2555 = vsel %vm2536, %v2490, %v1545
        %v2556 = vsel %vm2536, %v2491, %v1547
        %v2557 = vsel %vm2536, %v2492, %v1549
        %v2558 = vsel %vm2536, %v2493, %v1551
        %v2559 = vsel %vm2536, %v2494, %v1553
        %v2560 = vsel %vm2536, %v2495, %v1555
        %v2561 = vsel %vm2536, %v2496, %v1557
        %v2562 = vsel %vm2536, %v2497, %v1559
        %v2563 = vsel %vm2536, %v2498, %v1561
        %v2564 = vsel %vm2536, %v2499, %v1563
        %v2565 = vsel %vm2536, %v2500, %v1565
        %v2566 = vsel %vm2536, %v2501, %v1567
        %v2567 = vsel %vm2536, %v2502, %v1569
        %v2568 = vsel %vm2536, %v2503, %v1571
        %v2569 = vsel %vm2536, %v2504, %v1573
        %v2570 = vsel %vm2536, %v2505, %v1575
        %v2571 = vsel %vm2536, %v2506, %v1577
        %v2572 = vsel %vm2536, %v2507, %v1579
        %v2573 = vsel %vm2536, %v2508, %v1581
        %v2574 = vsel %vm2536, %v2509, %v1583
        %v2575 = vsel %vm2536, %v2510, %v1585
        %v2576 = vsel %vm2536, %v2511, %v1587
        %v2577 = vsel %vm2536, %v2512, %v1589
        %v2578 = vsel %vm2536, %v2513, %v1591
        %v2579 = vsel %vm2536, %v2514, %v1593
        %v2580 = vsel %vm2536, %v2515, %v1595
        %v2581 = vsel %vm2536, %v2516, %v1597
        %v2582 = vsel %vm2536, %v2517, %v1599
        %v2583 = vsel %vm2536, %v2518, %v1601
        %v2584 = vsel %vm2536, %v2519, %v1603
        %v2585 = vsel %vm2536, %v2520, %v1605
        %v2586 = vsel %vm2536, %v2521, %v1607
        %v2587 = vsel %vm2536, %v2522, %v1609
        %v2588 = vsel %vm2536, %v2523, %v1611
        %v2589 = vsel %vm2536, %v2524, %v1613
        %v2590 = vsel %vm2536, %v2525, %v1615
        %v2591 = vsel %vm2536, %v2526, %v1617
        %v2592 = vsel %vm2536, %v2527, %v1619
        %v2593 = vsel %vm2536, %v2528, %v1621
        %v2594 = vsel %vm2536, %v2529, %v1623
        %v2595 = vsel %vm2536, %v2530, %v1625
        %v2596 = vsel %vm2536, %v2531, %v1627
        %v2597 = vsel %vm2536, %v2532, %v1629
        %v2598 = vsel %vm2536, %v2533, %v1631
        %v2599 = vsel %vm2536, %v2534, %v1633
        %v2600 = vsel %vm2536, %v2535, %v1635
        %vm2601 = vcmask 146432
        %v2602 = vsel %vm2601, %v2537, %v1701
        %v2603 = vsel %vm2601, %v2538, %v1703
        %v2604 = vsel %vm2601, %v2539, %v1705
        %v2605 = vsel %vm2601, %v2540, %v1707
        %v2606 = vsel %vm2601, %v2541, %v1709
        %v2607 = vsel %vm2601, %v2542, %v1711
        %v2608 = vsel %vm2601, %v2543, %v1713
        %v2609 = vsel %vm2601, %v2544, %v1715
        %v2610 = vsel %vm2601, %v2545, %v1717
        %v2611 = vsel %vm2601, %v2546, %v1719
        %v2612 = vsel %vm2601, %v2547, %v1721
        %v2613 = vsel %vm2601, %v2548, %v1723
        %v2614 = vsel %vm2601, %v2549, %v1725
        %v2615 = vsel %vm2601, %v2550, %v1727
        %v2616 = vsel %vm2601, %v2551, %v1729
        %v2617 = vsel %vm2601, %v2552, %v1731
        %v2618 = vsel %vm2601, %v2553, %v1733
        %v2619 = vsel %vm2601, %v2554, %v1735
        %v2620 = vsel %vm2601, %v2555, %v1737
        %v2621 = vsel %vm2601, %v2556, %v1739
        %v2622 = vsel %vm2601, %v2557, %v1741
        %v2623 = vsel %vm2601, %v2558, %v1743
        %v2624 = vsel %vm2601, %v2559, %v1745
        %v2625 = vsel %vm2601, %v2560, %v1747
        %v2626 = vsel %vm2601, %v2561, %v1749
        %v2627 = vsel %vm2601, %v2562, %v1751
        %v2628 = vsel %vm2601, %v2563, %v1753
        %v2629 = vsel %vm2601, %v2564, %v1755
        %v2630 = vsel %vm2601, %v2565, %v1757
        %v2631 = vsel %vm2601, %v2566, %v1759
        %v2632 = vsel %vm2601, %v2567, %v1761
        %v2633 = vsel %vm2601, %v2568, %v1763
        %v2634 = vsel %vm2601, %v2569, %v1765
        %v2635 = vsel %vm2601, %v2570, %v1767
        %v2636 = vsel %vm2601, %v2571, %v1769
        %v2637 = vsel %vm2601, %v2572, %v1771
        %v2638 = vsel %vm2601, %v2573, %v1773
        %v2639 = vsel %vm2601, %v2574, %v1775
        %v2640 = vsel %vm2601, %v2575, %v1777
        %v2641 = vsel %vm2601, %v2576, %v1779
        %v2642 = vsel %vm2601, %v2577, %v1781
        %v2643 = vsel %vm2601, %v2578, %v1783
        %v2644 = vsel %vm2601, %v2579, %v1785
        %v2645 = vsel %vm2601, %v2580, %v1787
        %v2646 = vsel %vm2601, %v2581, %v1789
        %v2647 = vsel %vm2601, %v2582, %v1791
        %v2648 = vsel %vm2601, %v2583, %v1793
        %v2649 = vsel %vm2601, %v2584, %v1795
        %v2650 = vsel %vm2601, %v2585, %v1797
        %v2651 = vsel %vm2601, %v2586, %v1799
        %v2652 = vsel %vm2601, %v2587, %v1801
        %v2653 = vsel %vm2601, %v2588, %v1803
        %v2654 = vsel %vm2601, %v2589, %v1805
        %v2655 = vsel %vm2601, %v2590, %v1807
        %v2656 = vsel %vm2601, %v2591, %v1809
        %v2657 = vsel %vm2601, %v2592, %v1811
        %v2658 = vsel %vm2601, %v2593, %v1813
        %v2659 = vsel %vm2601, %v2594, %v1815
        %v2660 = vsel %vm2601, %v2595, %v1817
        %v2661 = vsel %vm2601, %v2596, %v1819
        %v2662 = vsel %vm2601, %v2597, %v1821
        %v2663 = vsel %vm2601, %v2598, %v1823
        %v2664 = vsel %vm2601, %v2599, %v1825
        %v2665 = vsel %vm2601, %v2600, %v1827
        %vm2666 = vcmask 171008
        %v2667 = vsel %vm2666, %v2602, %v1893
        %v2668 = vsel %vm2666, %v2603, %v1895
        %v2669 = vsel %vm2666, %v2604, %v1897
        %v2670 = vsel %vm2666, %v2605, %v1899
        %v2671 = vsel %vm2666, %v2606, %v1901
        %v2672 = vsel %vm2666, %v2607, %v1903
        %v2673 = vsel %vm2666, %v2608, %v1905
        %v2674 = vsel %vm2666, %v2609, %v1907
        %v2675 = vsel %vm2666, %v2610, %v1909
        %v2676 = vsel %vm2666, %v2611, %v1911
        %v2677 = vsel %vm2666, %v2612, %v1913
        %v2678 = vsel %vm2666, %v2613, %v1915
        %v2679 = vsel %vm2666, %v2614, %v1917
        %v2680 = vsel %vm2666, %v2615, %v1919
        %v2681 = vsel %vm2666, %v2616, %v1921
        %v2682 = vsel %vm2666, %v2617, %v1923
        %v2683 = vsel %vm2666, %v2618, %v1925
        %v2684 = vsel %vm2666, %v2619, %v1927
        %v2685 = vsel %vm2666, %v2620, %v1929
        %v2686 = vsel %vm2666, %v2621, %v1931
        %v2687 = vsel %vm2666, %v2622, %v1933
        %v2688 = vsel %vm2666, %v2623, %v1935
        %v2689 = vsel %vm2666, %v2624, %v1937
        %v2690 = vsel %vm2666, %v2625, %v1939
        %v2691 = vsel %vm2666, %v2626, %v1941
        %v2692 = vsel %vm2666, %v2627, %v1943
        %v2693 = vsel %vm2666, %v2628, %v1945
        %v2694 = vsel %vm2666, %v2629, %v1947
        %v2695 = vsel %vm2666, %v2630, %v1949
        %v2696 = vsel %vm2666, %v2631, %v1951
        %v2697 = vsel %vm2666, %v2632, %v1953
        %v2698 = vsel %vm2666, %v2633, %v1955
        %v2699 = vsel %vm2666, %v2634, %v1957
        %v2700 = vsel %vm2666, %v2635, %v1959
        %v2701 = vsel %vm2666, %v2636, %v1961
        %v2702 = vsel %vm2666, %v2637, %v1963
        %v2703 = vsel %vm2666, %v2638, %v1965
        %v2704 = vsel %vm2666, %v2639, %v1967
        %v2705 = vsel %vm2666, %v2640, %v1969
        %v2706 = vsel %vm2666, %v2641, %v1971
        %v2707 = vsel %vm2666, %v2642, %v1973
        %v2708 = vsel %vm2666, %v2643, %v1975
        %v2709 = vsel %vm2666, %v2644, %v1977
        %v2710 = vsel %vm2666, %v2645, %v1979
        %v2711 = vsel %vm2666, %v2646, %v1981
        %v2712 = vsel %vm2666, %v2647, %v1983
        %v2713 = vsel %vm2666, %v2648, %v1985
        %v2714 = vsel %vm2666, %v2649, %v1987
        %v2715 = vsel %vm2666, %v2650, %v1989
        %v2716 = vsel %vm2666, %v2651, %v1991
        %v2717 = vsel %vm2666, %v2652, %v1993
        %v2718 = vsel %vm2666, %v2653, %v1995
        %v2719 = vsel %vm2666, %v2654, %v1997
        %v2720 = vsel %vm2666, %v2655, %v1999
        %v2721 = vsel %vm2666, %v2656, %v2001
        %v2722 = vsel %vm2666, %v2657, %v2003
        %v2723 = vsel %vm2666, %v2658, %v2005
        %v2724 = vsel %vm2666, %v2659, %v2007
        %v2725 = vsel %vm2666, %v2660, %v2009
        %v2726 = vsel %vm2666, %v2661, %v2011
        %v2727 = vsel %vm2666, %v2662, %v2013
        %v2728 = vsel %vm2666, %v2663, %v2015
        %v2729 = vsel %vm2666, %v2664, %v2017
        %v2730 = vsel %vm2666, %v2665, %v2019
        %vm2731 = vcmask 195584
        %v2732 = vsel %vm2731, %v2667, %v2085
        %v2733 = vsel %vm2731, %v2668, %v2087
        %v2734 = vsel %vm2731, %v2669, %v2089
        %v2735 = vsel %vm2731, %v2670, %v2091
        %v2736 = vsel %vm2731, %v2671, %v2093
        %v2737 = vsel %vm2731, %v2672, %v2095
        %v2738 = vsel %vm2731, %v2673, %v2097
        %v2739 = vsel %vm2731, %v2674, %v2099
        %v2740 = vsel %vm2731, %v2675, %v2101
        %v2741 = vsel %vm2731, %v2676, %v2103
        %v2742 = vsel %vm2731, %v2677, %v2105
        %v2743 = vsel %vm2731, %v2678, %v2107
        %v2744 = vsel %vm2731, %v2679, %v2109
        %v2745 = vsel %vm2731, %v2680, %v2111
        %v2746 = vsel %vm2731, %v2681, %v2113
        %v2747 = vsel %vm2731, %v2682, %v2115
        %v2748 = vsel %vm2731, %v2683, %v2117
        %v2749 = vsel %vm2731, %v2684, %v2119
        %v2750 = vsel %vm2731, %v2685, %v2121
        %v2751 = vsel %vm2731, %v2686, %v2123
        %v2752 = vsel %vm2731, %v2687, %v2125
        %v2753 = vsel %vm2731, %v2688, %v2127
        %v2754 = vsel %vm2731, %v2689, %v2129
        %v2755 = vsel %vm2731, %v2690, %v2131
        %v2756 = vsel %vm2731, %v2691, %v2133
        %v2757 = vsel %vm2731, %v2692, %v2135
        %v2758 = vsel %vm2731, %v2693, %v2137
        %v2759 = vsel %vm2731, %v2694, %v2139
        %v2760 = vsel %vm2731, %v2695, %v2141
        %v2761 = vsel %vm2731, %v2696, %v2143
        %v2762 = vsel %vm2731, %v2697, %v2145
        %v2763 = vsel %vm2731, %v2698, %v2147
        %v2764 = vsel %vm2731, %v2699, %v2149
        %v2765 = vsel %vm2731, %v2700, %v2151
        %v2766 = vsel %vm2731, %v2701, %v2153
        %v2767 = vsel %vm2731, %v2702, %v2155
        %v2768 = vsel %vm2731, %v2703, %v2157
        %v2769 = vsel %vm2731, %v2704, %v2159
        %v2770 = vsel %vm2731, %v2705, %v2161
        %v2771 = vsel %vm2731, %v2706, %v2163
        %v2772 = vsel %vm2731, %v2707, %v2165
        %v2773 = vsel %vm2731, %v2708, %v2167
        %v2774 = vsel %vm2731, %v2709, %v2169
        %v2775 = vsel %vm2731, %v2710, %v2171
        %v2776 = vsel %vm2731, %v2711, %v2173
        %v2777 = vsel %vm2731, %v2712, %v2175
        %v2778 = vsel %vm2731, %v2713, %v2177
        %v2779 = vsel %vm2731, %v2714, %v2179
        %v2780 = vsel %vm2731, %v2715, %v2181
        %v2781 = vsel %vm2731, %v2716, %v2183
        %v2782 = vsel %vm2731, %v2717, %v2185
        %v2783 = vsel %vm2731, %v2718, %v2187
        %v2784 = vsel %vm2731, %v2719, %v2189
        %v2785 = vsel %vm2731, %v2720, %v2191
        %v2786 = vsel %vm2731, %v2721, %v2193
        %v2787 = vsel %vm2731, %v2722, %v2195
        %v2788 = vsel %vm2731, %v2723, %v2197
        %v2789 = vsel %vm2731, %v2724, %v2199
        %v2790 = vsel %vm2731, %v2725, %v2201
        %v2791 = vsel %vm2731, %v2726, %v2203
        %v2792 = vsel %vm2731, %v2727, %v2205
        %v2793 = vsel %vm2731, %v2728, %v2207
        %v2794 = vsel %vm2731, %v2729, %v2209
        %v2795 = vsel %vm2731, %v2730, %v2211
        %v2796 = vpack.c.bf16 %v2733, %v2732
        %v2797 = vpack.c.bf16 %v2735, %v2734
        %v2798 = vpack.c.bf16 %v2737, %v2736
        %v2799 = vpack.c.bf16 %v2739, %v2738
        %v2800 = vpack.c.bf16 %v2741, %v2740
        %v2801 = vpack.c.bf16 %v2743, %v2742
        %v2802 = vpack.c.bf16 %v2745, %v2744
        %v2803 = vpack.c.bf16 %v2747, %v2746
        %v2804 = vpack.c.bf16 %v2749, %v2748
        %v2805 = vpack.c.bf16 %v2751, %v2750
        %v2806 = vpack.c.bf16 %v2753, %v2752
        %v2807 = vpack.c.bf16 %v2755, %v2754
        %v2808 = vpack.c.bf16 %v2757, %v2756
        %v2809 = vpack.c.bf16 %v2759, %v2758
        %v2810 = vpack.c.bf16 %v2761, %v2760
        %v2811 = vpack.c.bf16 %v2763, %v2762
        %v2812 = vpack.c.bf16 %v2765, %v2764
        %v2813 = vpack.c.bf16 %v2767, %v2766
        %v2814 = vpack.c.bf16 %v2769, %v2768
        %v2815 = vpack.c.bf16 %v2771, %v2770
        %v2816 = vpack.c.bf16 %v2773, %v2772
        %v2817 = vpack.c.bf16 %v2775, %v2774
        %v2818 = vpack.c.bf16 %v2777, %v2776
        %v2819 = vpack.c.bf16 %v2779, %v2778
        %v2820 = vpack.c.bf16 %v2781, %v2780
        %v2821 = vpack.c.bf16 %v2783, %v2782
        %v2822 = vpack.c.bf16 %v2785, %v2784
        %v2823 = vpack.c.bf16 %v2787, %v2786
        %v2824 = vpack.c.bf16 %v2789, %v2788
        %v2825 = vpack.c.bf16 %v2791, %v2790
        %v2826 = vpack.c.bf16 %v2793, %v2792
        %v2827 = vpack.c.bf16 %v2795, %v2794
        %v2828 = vld [vmem:[#allocation5] sm:$0xf]
        %v2829 = vld [vmem:[#allocation5 + $0x4] sm:$0xf]
        %v2830 = vld [vmem:[#allocation5 + $0x8] sm:$0xf]
        %v2831 = vld [vmem:[#allocation5 + $0xc] sm:$0x3]
        %v2832 = vld [vmem:[#allocation7] sm:$0x1]
        %v2834 = vlaneseq
        %v2835 = vshrl.u32 %v2834, 7
        %v2836 = vsub.s32 0, %v2835
        %v2837 = vrot.slane %v2832, %v2836
        %v2843 = vunpack.c.l.b16 %v2828
        %v2844 = vunpack.c.l.b16 %v2829
        %v2845 = vunpack.c.l.b16 %v2830
        %v2846 = vunpack.c.l.b16 %v2831
        %v2847 = vpack.c.b16 %v2844, %v2843
        %v2848 = vpack.c.b16 %v2846, %v2845
        %vm2850 = vcmask 220160
        %v2852 = vsel %vm2850, %v2796, 0
        %v2855 = vsel %vm2850, %v2797, 0
        %v2858 = vsel %vm2850, %v2798, 0
        %v2861 = vsel %vm2850, %v2799, 0
        %v2864 = vsel %vm2850, %v2800, 0
        %v2867 = vsel %vm2850, %v2801, 0
        %v2870 = vsel %vm2850, %v2802, 0
        %v2873 = vsel %vm2850, %v2803, 0
        %v2876 = vsel %vm2850, %v2804, 0
        %v2879 = vsel %vm2850, %v2805, 0
        %v2882 = vsel %vm2850, %v2806, 0
        %v2885 = vsel %vm2850, %v2807, 0
        %v2888 = vsel %vm2850, %v2808, 0
        %v2891 = vsel %vm2850, %v2809, 0
        %v2894 = vsel %vm2850, %v2810, 0
        %v2897 = vsel %vm2850, %v2811, 0
        %v2900 = vsel %vm2850, %v2812, 0
        %v2903 = vsel %vm2850, %v2813, 0
        %v2906 = vsel %vm2850, %v2814, 0
        %v2909 = vsel %vm2850, %v2815, 0
        %v2912 = vsel %vm2850, %v2816, 0
        %v2915 = vsel %vm2850, %v2817, 0
        %v2918 = vsel %vm2850, %v2818, 0
        %v2921 = vsel %vm2850, %v2819, 0
        %v2924 = vsel %vm2850, %v2820, 0
        %v2927 = vsel %vm2850, %v2821, 0
        %v2930 = vsel %vm2850, %v2822, 0
        %v2933 = vsel %vm2850, %v2823, 0
        %v2936 = vsel %vm2850, %v2824, 0
        %v2939 = vsel %vm2850, %v2825, 0
        %v2942 = vsel %vm2850, %v2826, 0
        %v2945 = vsel %vm2850, %v2827, 0
        %vm2947 = vcmask 1044480
        %v2948 = vsel %vm2947, 4294967295, 65535
        %v2949 = vsel %vm549, %v2948, 0
        %v2951 = vand.u32 %v2848, %v2949
        %2953 = vmatprep.subr.bf16.mxu0 0
        %2954 = vmatpush1.bf16.msra.mxu0 %v2847
        %2955 = vmatprep.subr.bf16.mxu0 0
        %2956 = vmatpush1.bf16.msra.mxu0 %v2951
        %2957 = vmatprep.subr.bf16.mxu0 0
        %2958 = vmatpush1.bf16.msra.mxu0 0
        %2959 = vmatprep.subr.bf16.mxu0 0
        %2960 = vmatpush1.bf16.msra.mxu0 0
        %2961 = vmatprep.subr.bf16.mxu0 0
        %2962 = vmatpush1.bf16.msra.mxu0 0
        %2963 = vmatprep.subr.bf16.mxu0 0
        %2964 = vmatpush1.bf16.msra.mxu0 0
        %2965 = vmatprep.subr.bf16.mxu0 0
        %2966 = vmatpush1.bf16.msra.mxu0 0
        %2967 = vmatprep.subr.bf16.mxu0 0
        %2968 = vmatpush1.bf16.msra.mxu0 0
        %2969 = vmatprep.subr.bf16.mxu0 0
        %2970 = vmatpush1.bf16.msra.mxu0 0
        %2971 = vmatprep.subr.bf16.mxu0 0
        %2972 = vmatpush1.bf16.msra.mxu0 0
        %2973 = vmatprep.subr.bf16.mxu0 0
        %2974 = vmatpush1.bf16.msra.mxu0 0
        %2975 = vmatprep.subr.bf16.mxu0 0
        %2976 = vmatpush1.bf16.msra.mxu0 0
        %2977 = vmatprep.subr.bf16.mxu0 0
        %2978 = vmatpush1.bf16.msra.mxu0 0
        %2979 = vmatprep.subr.bf16.mxu0 0
        %2980 = vmatpush1.bf16.msra.mxu0 0
        %2981 = vmatprep.subr.bf16.mxu0 0
        %2982 = vmatpush1.bf16.msra.mxu0 0
        %2983 = vmatprep.subr.bf16.mxu0 0
        %2984 = vmatpush1.bf16.msra.mxu0 0
        %2985 = vmatprep.mubr.bf16.mxu0 0
        %2986 = vmatmul.mubr.bf16.gmra.mrb[0].mxu0 %v2852
        %v2987 = vpop.f32.mrb[0].mxu0
        %v2988 = vadd.f32 %v2837, %v2987
        %v2989 = vpop.f32.mrb[0].mxu0
        %v2990 = vpop.f32.mrb[0].mxu0
        %v2991 = vadd.f32 %v2837, %v2990
        %v2992 = vpop.f32.mrb[0].mxu0
        %2993 = vmatprep.mubr.bf16.mxu0 0
        %2994 = vmatmul.mubr.bf16.gmra.mrb[0].mxu0 %v2855
        %v2995 = vpop.f32.mrb[0].mxu0
        %v2996 = vadd.f32 %v2837, %v2995
        %v2997 = vpop.f32.mrb[0].mxu0
        %v2998 = vpop.f32.mrb[0].mxu0
        %v2999 = vadd.f32 %v2837, %v2998
        %v3000 = vpop.f32.mrb[0].mxu0
        %3001 = vmatprep.mubr.bf16.mxu0 0
        %3002 = vmatmul.mubr.bf16.gmra.mrb[0].mxu0 %v2858
        %v3003 = vpop.f32.mrb[0].mxu0
        %v3004 = vadd.f32 %v2837, %v3003
        %v3005 = vpop.f32.mrb[0].mxu0
        %v3006 = vpop.f32.mrb[0].mxu0
        %v3007 = vadd.f32 %v2837, %v3006
        %v3008 = vpop.f32.mrb[0].mxu0
        %3009 = vmatprep.mubr.bf16.mxu0 0
        %3010 = vmatmul.mubr.bf16.gmra.mrb[0].mxu0 %v2861
        %v3011 = vpop.f32.mrb[0].mxu0
        %v3012 = vadd.f32 %v2837, %v3011
        %v3013 = vpop.f32.mrb[0].mxu0
        %v3014 = vpop.f32.mrb[0].mxu0
        %v3015 = vadd.f32 %v2837, %v3014
        %v3016 = vpop.f32.mrb[0].mxu0
        %3017 = vmatprep.mubr.bf16.mxu0 0
        %3018 = vmatmul.mubr.bf16.gmra.mrb[0].mxu0 %v2864
        %v3019 = vpop.f32.mrb[0].mxu0
        %v3020 = vadd.f32 %v2837, %v3019
        %v3021 = vpop.f32.mrb[0].mxu0
        %v3022 = vpop.f32.mrb[0].mxu0
        %v3023 = vadd.f32 %v2837, %v3022
        %v3024 = vpop.f32.mrb[0].mxu0
        %3025 = vmatprep.mubr.bf16.mxu0 0
        %3026 = vmatmul.mubr.bf16.gmra.mrb[0].mxu0 %v2867
        %v3027 = vpop.f32.mrb[0].mxu0
        %v3028 = vadd.f32 %v2837, %v3027
        %v3029 = vpop.f32.mrb[0].mxu0
        %v3030 = vpop.f32.mrb[0].mxu0
        %v3031 = vadd.f32 %v2837, %v3030
        %v3032 = vpop.f32.mrb[0].mxu0
        %3033 = vmatprep.mubr.bf16.mxu0 0
        %3034 = vmatmul.mubr.bf16.gmra.mrb[0].mxu0 %v2870
        %v3035 = vpop.f32.mrb[0].mxu0
        %v3036 = vadd.f32 %v2837, %v3035
        %v3037 = vpop.f32.mrb[0].mxu0
        %v3038 = vpop.f32.mrb[0].mxu0
        %v3039 = vadd.f32 %v2837, %v3038
        %v3040 = vpop.f32.mrb[0].mxu0
        %3041 = vmatprep.mubr.bf16.mxu0 0
        %3042 = vmatmul.mubr.bf16.gmra.mrb[0].mxu0 %v2873
        %v3043 = vpop.f32.mrb[0].mxu0
        %v3044 = vadd.f32 %v2837, %v3043
        %v3045 = vpop.f32.mrb[0].mxu0
        %v3046 = vpop.f32.mrb[0].mxu0
        %v3047 = vadd.f32 %v2837, %v3046
        %v3048 = vpop.f32.mrb[0].mxu0
        %3049 = vmatprep.mubr.bf16.mxu0 0
        %3050 = vmatmul.mubr.bf16.gmra.mrb[0].mxu0 %v2876
        %v3051 = vpop.f32.mrb[0].mxu0
        %v3052 = vadd.f32 %v2837, %v3051
        %v3053 = vpop.f32.mrb[0].mxu0
        %v3054 = vpop.f32.mrb[0].mxu0
        %v3055 = vadd.f32 %v2837, %v3054
        %v3056 = vpop.f32.mrb[0].mxu0
        %3057 = vmatprep.mubr.bf16.mxu0 0
        %3058 = vmatmul.mubr.bf16.gmra.mrb[0].mxu0 %v2879
        %v3059 = vpop.f32.mrb[0].mxu0
        %v3060 = vadd.f32 %v2837, %v3059
        %v3061 = vpop.f32.mrb[0].mxu0
        %v3062 = vpop.f32.mrb[0].mxu0
        %v3063 = vadd.f32 %v2837, %v3062
        %v3064 = vpop.f32.mrb[0].mxu0
        %3065 = vmatprep.mubr.bf16.mxu0 0
        %3066 = vmatmul.mubr.bf16.gmra.mrb[0].mxu0 %v2882
        %v3067 = vpop.f32.mrb[0].mxu0
        %v3068 = vadd.f32 %v2837, %v3067
        %v3069 = vpop.f32.mrb[0].mxu0
        %v3070 = vpop.f32.mrb[0].mxu0
        %v3071 = vadd.f32 %v2837, %v3070
        %v3072 = vpop.f32.mrb[0].mxu0
        %3073 = vmatprep.mubr.bf16.mxu0 0
        %3074 = vmatmul.mubr.bf16.gmra.mrb[0].mxu0 %v2885
        %v3075 = vpop.f32.mrb[0].mxu0
        %v3076 = vadd.f32 %v2837, %v3075
        %v3077 = vpop.f32.mrb[0].mxu0
        %v3078 = vpop.f32.mrb[0].mxu0
        %v3079 = vadd.f32 %v2837, %v3078
        %v3080 = vpop.f32.mrb[0].mxu0
        %3081 = vmatprep.mubr.bf16.mxu0 0
        %3082 = vmatmul.mubr.bf16.gmra.mrb[0].mxu0 %v2888
        %v3083 = vpop.f32.mrb[0].mxu0
        %v3084 = vadd.f32 %v2837, %v3083
        %v3085 = vpop.f32.mrb[0].mxu0
        %v3086 = vpop.f32.mrb[0].mxu0
        %v3087 = vadd.f32 %v2837, %v3086
        %v3088 = vpop.f32.mrb[0].mxu0
        %3089 = vmatprep.mubr.bf16.mxu0 0
        %3090 = vmatmul.mubr.bf16.gmra.mrb[0].mxu0 %v2891
        %v3091 = vpop.f32.mrb[0].mxu0
        %v3092 = vadd.f32 %v2837, %v3091
        %v3093 = vpop.f32.mrb[0].mxu0
        %v3094 = vpop.f32.mrb[0].mxu0
        %v3095 = vadd.f32 %v2837, %v3094
        %v3096 = vpop.f32.mrb[0].mxu0
        %3097 = vmatprep.mubr.bf16.mxu0 0
        %3098 = vmatmul.mubr.bf16.gmra.mrb[0].mxu0 %v2894
        %v3099 = vpop.f32.mrb[0].mxu0
        %v3100 = vadd.f32 %v2837, %v3099
        %v3101 = vpop.f32.mrb[0].mxu0
        %v3102 = vpop.f32.mrb[0].mxu0
        %v3103 = vadd.f32 %v2837, %v3102
        %v3104 = vpop.f32.mrb[0].mxu0
        %3105 = vmatprep.mubr.bf16.mxu0 0
        %3106 = vmatmul.mubr.bf16.gmra.mrb[0].mxu0 %v2897
        %v3107 = vpop.f32.mrb[0].mxu0
        %v3108 = vadd.f32 %v2837, %v3107
        %v3109 = vpop.f32.mrb[0].mxu0
        %v3110 = vpop.f32.mrb[0].mxu0
        %v3111 = vadd.f32 %v2837, %v3110
        %v3112 = vpop.f32.mrb[0].mxu0
        %3113 = vmatprep.mubr.bf16.mxu0 0
        %3114 = vmatmul.mubr.bf16.gmra.mrb[0].mxu0 %v2900
        %v3115 = vpop.f32.mrb[0].mxu0
        %v3116 = vadd.f32 %v2837, %v3115
        %v3117 = vpop.f32.mrb[0].mxu0
        %v3118 = vpop.f32.mrb[0].mxu0
        %v3119 = vadd.f32 %v2837, %v3118
        %v3120 = vpop.f32.mrb[0].mxu0
        %3121 = vmatprep.mubr.bf16.mxu0 0
        %3122 = vmatmul.mubr.bf16.gmra.mrb[0].mxu0 %v2903
        %v3123 = vpop.f32.mrb[0].mxu0
        %v3124 = vadd.f32 %v2837, %v3123
        %v3125 = vpop.f32.mrb[0].mxu0
        %v3126 = vpop.f32.mrb[0].mxu0
        %v3127 = vadd.f32 %v2837, %v3126
        %v3128 = vpop.f32.mrb[0].mxu0
        %3129 = vmatprep.mubr.bf16.mxu0 0
        %3130 = vmatmul.mubr.bf16.gmra.mrb[0].mxu0 %v2906
        %v3131 = vpop.f32.mrb[0].mxu0
        %v3132 = vadd.f32 %v2837, %v3131
        %v3133 = vpop.f32.mrb[0].mxu0
        %v3134 = vpop.f32.mrb[0].mxu0
        %v3135 = vadd.f32 %v2837, %v3134
        %v3136 = vpop.f32.mrb[0].mxu0
        %3137 = vmatprep.mubr.bf16.mxu0 0
        %3138 = vmatmul.mubr.bf16.gmra.mrb[0].mxu0 %v2909
        %v3139 = vpop.f32.mrb[0].mxu0
        %v3140 = vadd.f32 %v2837, %v3139
        %v3141 = vpop.f32.mrb[0].mxu0
        %v3142 = vpop.f32.mrb[0].mxu0
        %v3143 = vadd.f32 %v2837, %v3142
        %v3144 = vpop.f32.mrb[0].mxu0
        %3145 = vmatprep.mubr.bf16.mxu0 0
        %3146 = vmatmul.mubr.bf16.gmra.mrb[0].mxu0 %v2912
        %v3147 = vpop.f32.mrb[0].mxu0
        %v3148 = vadd.f32 %v2837, %v3147
        %v3149 = vpop.f32.mrb[0].mxu0
        %v3150 = vpop.f32.mrb[0].mxu0
        %v3151 = vadd.f32 %v2837, %v3150
        %v3152 = vpop.f32.mrb[0].mxu0
        %3153 = vmatprep.mubr.bf16.mxu0 0
        %3154 = vmatmul.mubr.bf16.gmra.mrb[0].mxu0 %v2915
        %v3155 = vpop.f32.mrb[0].mxu0
        %v3156 = vadd.f32 %v2837, %v3155
        %v3157 = vpop.f32.mrb[0].mxu0
        %v3158 = vpop.f32.mrb[0].mxu0
        %v3159 = vadd.f32 %v2837, %v3158
        %v3160 = vpop.f32.mrb[0].mxu0
        %3161 = vmatprep.mubr.bf16.mxu0 0
        %3162 = vmatmul.mubr.bf16.gmra.mrb[0].mxu0 %v2918
        %v3163 = vpop.f32.mrb[0].mxu0
        %v3164 = vadd.f32 %v2837, %v3163
        %v3165 = vpop.f32.mrb[0].mxu0
        %v3166 = vpop.f32.mrb[0].mxu0
        %v3167 = vadd.f32 %v2837, %v3166
        %v3168 = vpop.f32.mrb[0].mxu0
        %3169 = vmatprep.mubr.bf16.mxu0 0
        %3170 = vmatmul.mubr.bf16.gmra.mrb[0].mxu0 %v2921
        %v3171 = vpop.f32.mrb[0].mxu0
        %v3172 = vadd.f32 %v2837, %v3171
        %v3173 = vpop.f32.mrb[0].mxu0
        %v3174 = vpop.f32.mrb[0].mxu0
        %v3175 = vadd.f32 %v2837, %v3174
        %v3176 = vpop.f32.mrb[0].mxu0
        %3177 = vmatprep.mubr.bf16.mxu0 0
        %3178 = vmatmul.mubr.bf16.gmra.mrb[0].mxu0 %v2924
        %v3179 = vpop.f32.mrb[0].mxu0
        %v3180 = vadd.f32 %v2837, %v3179
        %v3181 = vpop.f32.mrb[0].mxu0
        %v3182 = vpop.f32.mrb[0].mxu0
        %v3183 = vadd.f32 %v2837, %v3182
        %v3184 = vpop.f32.mrb[0].mxu0
        %3185 = vmatprep.mubr.bf16.mxu0 0
        %3186 = vmatmul.mubr.bf16.gmra.mrb[0].mxu0 %v2927
        %v3187 = vpop.f32.mrb[0].mxu0
        %v3188 = vadd.f32 %v2837, %v3187
        %v3189 = vpop.f32.mrb[0].mxu0
        %v3190 = vpop.f32.mrb[0].mxu0
        %v3191 = vadd.f32 %v2837, %v3190
        %v3192 = vpop.f32.mrb[0].mxu0
        %3193 = vmatprep.mubr.bf16.mxu0 0
        %3194 = vmatmul.mubr.bf16.gmra.mrb[0].mxu0 %v2930
        %v3195 = vpop.f32.mrb[0].mxu0
        %v3196 = vadd.f32 %v2837, %v3195
        %v3197 = vpop.f32.mrb[0].mxu0
        %v3198 = vpop.f32.mrb[0].mxu0
        %v3199 = vadd.f32 %v2837, %v3198
        %v3200 = vpop.f32.mrb[0].mxu0
        %3201 = vmatprep.mubr.bf16.mxu0 0
        %3202 = vmatmul.mubr.bf16.gmra.mrb[0].mxu0 %v2933
        %v3203 = vpop.f32.mrb[0].mxu0
        %v3204 = vadd.f32 %v2837, %v3203
        %v3205 = vpop.f32.mrb[0].mxu0
        %v3206 = vpop.f32.mrb[0].mxu0
        %v3207 = vadd.f32 %v2837, %v3206
        %v3208 = vpop.f32.mrb[0].mxu0
        %3209 = vmatprep.mubr.bf16.mxu0 0
        %3210 = vmatmul.mubr.bf16.gmra.mrb[0].mxu0 %v2936
        %v3211 = vpop.f32.mrb[0].mxu0
        %v3212 = vadd.f32 %v2837, %v3211
        %v3213 = vpop.f32.mrb[0].mxu0
        %v3214 = vpop.f32.mrb[0].mxu0
        %v3215 = vadd.f32 %v2837, %v3214
        %v3216 = vpop.f32.mrb[0].mxu0
        %3217 = vmatprep.mubr.bf16.mxu0 0
        %3218 = vmatmul.mubr.bf16.gmra.mrb[0].mxu0 %v2939
        %v3219 = vpop.f32.mrb[0].mxu0
        %v3220 = vadd.f32 %v2837, %v3219
        %v3221 = vpop.f32.mrb[0].mxu0
        %v3222 = vpop.f32.mrb[0].mxu0
        %v3223 = vadd.f32 %v2837, %v3222
        %v3224 = vpop.f32.mrb[0].mxu0
        %3225 = vmatprep.mubr.bf16.mxu0 0
        %3226 = vmatmul.mubr.bf16.gmra.mrb[0].mxu0 %v2942
        %v3227 = vpop.f32.mrb[0].mxu0
        %v3228 = vadd.f32 %v2837, %v3227
        %v3229 = vpop.f32.mrb[0].mxu0
        %v3230 = vpop.f32.mrb[0].mxu0
        %v3231 = vadd.f32 %v2837, %v3230
        %v3232 = vpop.f32.mrb[0].mxu0
        %3233 = vmatprep.mubr.bf16.mxu0 0
        %3234 = vmatmul.mubr.bf16.gmra.mrb[0].mxu0 %v2945
        %v3235 = vpop.f32.mrb[0].mxu0
        %v3236 = vadd.f32 %v2837, %v3235
        %v3237 = vpop.f32.mrb[0].mxu0
        %v3238 = vpop.f32.mrb[0].mxu0
        %v3239 = vadd.f32 %v2837, %v3238
        %v3240 = vpop.f32.mrb[0].mxu0
        %3241 = vdwg.mxu0
        %v3242 = vmax.f32 %v2988, 0.0
        %v3243 = vmax.f32 %v2991, 0.0
        %v3244 = vmax.f32 %v2996, 0.0
        %v3245 = vmax.f32 %v2999, 0.0
        %v3246 = vmax.f32 %v3004, 0.0
        %v3247 = vmax.f32 %v3007, 0.0
        %v3248 = vmax.f32 %v3012, 0.0
        %v3249 = vmax.f32 %v3015, 0.0
        %v3250 = vmax.f32 %v3020, 0.0
        %v3251 = vmax.f32 %v3023, 0.0
        %v3252 = vmax.f32 %v3028, 0.0
        %v3253 = vmax.f32 %v3031, 0.0
        %v3254 = vmax.f32 %v3036, 0.0
        %v3255 = vmax.f32 %v3039, 0.0
        %v3256 = vmax.f32 %v3044, 0.0
        %v3257 = vmax.f32 %v3047, 0.0
        %v3258 = vmax.f32 %v3052, 0.0
        %v3259 = vmax.f32 %v3055, 0.0
        %v3260 = vmax.f32 %v3060, 0.0
        %v3261 = vmax.f32 %v3063, 0.0
        %v3262 = vmax.f32 %v3068, 0.0
        %v3263 = vmax.f32 %v3071, 0.0
        %v3264 = vmax.f32 %v3076, 0.0
        %v3265 = vmax.f32 %v3079, 0.0
        %v3266 = vmax.f32 %v3084, 0.0
        %v3267 = vmax.f32 %v3087, 0.0
        %v3268 = vmax.f32 %v3092, 0.0
        %v3269 = vmax.f32 %v3095, 0.0
        %v3270 = vmax.f32 %v3100, 0.0
        %v3271 = vmax.f32 %v3103, 0.0
        %v3272 = vmax.f32 %v3108, 0.0
        %v3273 = vmax.f32 %v3111, 0.0
        %v3274 = vmax.f32 %v3116, 0.0
        %v3275 = vmax.f32 %v3119, 0.0
        %v3276 = vmax.f32 %v3124, 0.0
        %v3277 = vmax.f32 %v3127, 0.0
        %v3278 = vmax.f32 %v3132, 0.0
        %v3279 = vmax.f32 %v3135, 0.0
        %v3280 = vmax.f32 %v3140, 0.0
        %v3281 = vmax.f32 %v3143, 0.0
        %v3282 = vmax.f32 %v3148, 0.0
        %v3283 = vmax.f32 %v3151, 0.0
        %v3284 = vmax.f32 %v3156, 0.0
        %v3285 = vmax.f32 %v3159, 0.0
        %v3286 = vmax.f32 %v3164, 0.0
        %v3287 = vmax.f32 %v3167, 0.0
        %v3288 = vmax.f32 %v3172, 0.0
        %v3289 = vmax.f32 %v3175, 0.0
        %v3290 = vmax.f32 %v3180, 0.0
        %v3291 = vmax.f32 %v3183, 0.0
        %v3292 = vmax.f32 %v3188, 0.0
        %v3293 = vmax.f32 %v3191, 0.0
        %v3294 = vmax.f32 %v3196, 0.0
        %v3295 = vmax.f32 %v3199, 0.0
        %v3296 = vmax.f32 %v3204, 0.0
        %v3297 = vmax.f32 %v3207, 0.0
        %v3298 = vmax.f32 %v3212, 0.0
        %v3299 = vmax.f32 %v3215, 0.0
        %v3300 = vmax.f32 %v3220, 0.0
        %v3301 = vmax.f32 %v3223, 0.0
        %v3302 = vmax.f32 %v3228, 0.0
        %v3303 = vmax.f32 %v3231, 0.0
        %v3304 = vmax.f32 %v3236, 0.0
        %v3305 = vmax.f32 %v3239, 0.0
        %v3306 = vmax.f32 %v3242, %v3246
        %v3307 = vmax.f32 %v3243, %v3247
        %v3308 = vmax.f32 %v3244, %v3248
        %v3309 = vmax.f32 %v3245, %v3249
        %v3310 = vmax.f32 %v3250, %v3254
        %v3311 = vmax.f32 %v3251, %v3255
        %v3312 = vmax.f32 %v3252, %v3256
        %v3313 = vmax.f32 %v3253, %v3257
        %v3314 = vmax.f32 %v3258, %v3262
        %v3315 = vmax.f32 %v3259, %v3263
        %v3316 = vmax.f32 %v3260, %v3264
        %v3317 = vmax.f32 %v3261, %v3265
        %v3318 = vmax.f32 %v3266, %v3270
        %v3319 = vmax.f32 %v3267, %v3271
        %v3320 = vmax.f32 %v3268, %v3272
        %v3321 = vmax.f32 %v3269, %v3273
        %v3322 = vmax.f32 %v3274, %v3278
        %v3323 = vmax.f32 %v3275, %v3279
        %v3324 = vmax.f32 %v3276, %v3280
        %v3325 = vmax.f32 %v3277, %v3281
        %v3326 = vmax.f32 %v3282, %v3286
        %v3327 = vmax.f32 %v3283, %v3287
        %v3328 = vmax.f32 %v3284, %v3288
        %v3329 = vmax.f32 %v3285, %v3289
        %v3330 = vmax.f32 %v3290, %v3294
        %v3331 = vmax.f32 %v3291, %v3295
        %v3332 = vmax.f32 %v3292, %v3296
        %v3333 = vmax.f32 %v3293, %v3297
        %v3334 = vmax.f32 %v3298, %v3302
        %v3335 = vmax.f32 %v3299, %v3303
        %v3336 = vmax.f32 %v3300, %v3304
        %v3337 = vmax.f32 %v3301, %v3305
        %v3370 = vcombine.high %v3306, %v3306
        %v3372 = vunpack.c.l.s4 1983009808
        %v3373 = vunpack.c.0.s8 %v3372
        %v3374 = vlaneseq
        %v3375 = vshrl.u32 %v3374, 7
        %v3376 = vsub.s32 %v3373, %v3375
        %v3377 = vrot.slane %v3306, %v3376
        %v3379 = vunpack.c.l.s4 1983009808
        %v3380 = vunpack.c.0.s8 %v3379
        %v3381 = vlaneseq
        %v3382 = vshrl.u32 %v3381, 7
        %v3383 = vsub.s32 %v3380, %v3382
        %v3384 = vrot.slane %v3370, %v3383
        %v3385 = vcombine.high %v3377, %v3377
        %v3386 = vcombine.high %v3384, %v3384
        %v3387 = vcombine.high %v3307, %v3307
        %v3389 = vunpack.c.l.s4 1983009808
        %v3390 = vunpack.c.0.s8 %v3389
        %v3391 = vlaneseq
        %v3392 = vshrl.u32 %v3391, 7
        %v3393 = vsub.s32 %v3390, %v3392
        %v3394 = vrot.slane %v3307, %v3393
        %v3396 = vunpack.c.l.s4 1983009808
        %v3397 = vunpack.c.0.s8 %v3396
        %v3398 = vlaneseq
        %v3399 = vshrl.u32 %v3398, 7
        %v3400 = vsub.s32 %v3397, %v3399
        %v3401 = vrot.slane %v3387, %v3400
        %v3402 = vcombine.high %v3394, %v3394
        %v3403 = vcombine.high %v3401, %v3401
        %v3404 = vcombine.high %v3308, %v3308
        %v3406 = vunpack.c.l.s4 1983009808
        %v3407 = vunpack.c.0.s8 %v3406
        %v3408 = vlaneseq
        %v3409 = vshrl.u32 %v3408, 7
        %v3410 = vsub.s32 %v3407, %v3409
        %v3411 = vrot.slane %v3308, %v3410
        %v3413 = vunpack.c.l.s4 1983009808
        %v3414 = vunpack.c.0.s8 %v3413
        %v3415 = vlaneseq
        %v3416 = vshrl.u32 %v3415, 7
        %v3417 = vsub.s32 %v3414, %v3416
        %v3418 = vrot.slane %v3404, %v3417
        %v3419 = vcombine.high %v3411, %v3411
        %v3420 = vcombine.high %v3418, %v3418
        %v3421 = vcombine.high %v3309, %v3309
        %v3423 = vunpack.c.l.s4 1983009808
        %v3424 = vunpack.c.0.s8 %v3423
        %v3425 = vlaneseq
        %v3426 = vshrl.u32 %v3425, 7
        %v3427 = vsub.s32 %v3424, %v3426
        %v3428 = vrot.slane %v3309, %v3427
        %v3430 = vunpack.c.l.s4 1983009808
        %v3431 = vunpack.c.0.s8 %v3430
        %v3432 = vlaneseq
        %v3433 = vshrl.u32 %v3432, 7
        %v3434 = vsub.s32 %v3431, %v3433
        %v3435 = vrot.slane %v3421, %v3434
        %v3436 = vcombine.high %v3428, %v3428
        %v3437 = vcombine.high %v3435, %v3435
        %v3438 = vcombine.high %v3310, %v3310
        %v3440 = vunpack.c.l.s4 1983009808
        %v3441 = vunpack.c.0.s8 %v3440
        %v3442 = vlaneseq
        %v3443 = vshrl.u32 %v3442, 7
        %v3444 = vsub.s32 %v3441, %v3443
        %v3445 = vrot.slane %v3310, %v3444
        %v3447 = vunpack.c.l.s4 1983009808
        %v3448 = vunpack.c.0.s8 %v3447
        %v3449 = vlaneseq
        %v3450 = vshrl.u32 %v3449, 7
        %v3451 = vsub.s32 %v3448, %v3450
        %v3452 = vrot.slane %v3438, %v3451
        %v3453 = vcombine.high %v3445, %v3445
        %v3454 = vcombine.high %v3452, %v3452
        %v3455 = vcombine.high %v3311, %v3311
        %v3457 = vunpack.c.l.s4 1983009808
        %v3458 = vunpack.c.0.s8 %v3457
        %v3459 = vlaneseq
        %v3460 = vshrl.u32 %v3459, 7
        %v3461 = vsub.s32 %v3458, %v3460
        %v3462 = vrot.slane %v3311, %v3461
        %v3464 = vunpack.c.l.s4 1983009808
        %v3465 = vunpack.c.0.s8 %v3464
        %v3466 = vlaneseq
        %v3467 = vshrl.u32 %v3466, 7
        %v3468 = vsub.s32 %v3465, %v3467
        %v3469 = vrot.slane %v3455, %v3468
        %v3470 = vcombine.high %v3462, %v3462
        %v3471 = vcombine.high %v3469, %v3469
        %v3472 = vcombine.high %v3312, %v3312
        %v3474 = vunpack.c.l.s4 1983009808
        %v3475 = vunpack.c.0.s8 %v3474
        %v3476 = vlaneseq
        %v3477 = vshrl.u32 %v3476, 7
        %v3478 = vsub.s32 %v3475, %v3477
        %v3479 = vrot.slane %v3312, %v3478
        %v3481 = vunpack.c.l.s4 1983009808
        %v3482 = vunpack.c.0.s8 %v3481
        %v3483 = vlaneseq
        %v3484 = vshrl.u32 %v3483, 7
        %v3485 = vsub.s32 %v3482, %v3484
        %v3486 = vrot.slane %v3472, %v3485
        %v3487 = vcombine.high %v3479, %v3479
        %v3488 = vcombine.high %v3486, %v3486
        %v3489 = vcombine.high %v3313, %v3313
        %v3491 = vunpack.c.l.s4 1983009808
        %v3492 = vunpack.c.0.s8 %v3491
        %v3493 = vlaneseq
        %v3494 = vshrl.u32 %v3493, 7
        %v3495 = vsub.s32 %v3492, %v3494
        %v3496 = vrot.slane %v3313, %v3495
        %v3498 = vunpack.c.l.s4 1983009808
        %v3499 = vunpack.c.0.s8 %v3498
        %v3500 = vlaneseq
        %v3501 = vshrl.u32 %v3500, 7
        %v3502 = vsub.s32 %v3499, %v3501
        %v3503 = vrot.slane %v3489, %v3502
        %v3504 = vcombine.high %v3496, %v3496
        %v3505 = vcombine.high %v3503, %v3503
        %v3506 = vcombine.high %v3314, %v3314
        %v3508 = vunpack.c.l.s4 1983009808
        %v3509 = vunpack.c.0.s8 %v3508
        %v3510 = vlaneseq
        %v3511 = vshrl.u32 %v3510, 7
        %v3512 = vsub.s32 %v3509, %v3511
        %v3513 = vrot.slane %v3314, %v3512
        %v3515 = vunpack.c.l.s4 1983009808
        %v3516 = vunpack.c.0.s8 %v3515
        %v3517 = vlaneseq
        %v3518 = vshrl.u32 %v3517, 7
        %v3519 = vsub.s32 %v3516, %v3518
        %v3520 = vrot.slane %v3506, %v3519
        %v3521 = vcombine.high %v3513, %v3513
        %v3522 = vcombine.high %v3520, %v3520
        %v3523 = vcombine.high %v3315, %v3315
        %v3525 = vunpack.c.l.s4 1983009808
        %v3526 = vunpack.c.0.s8 %v3525
        %v3527 = vlaneseq
        %v3528 = vshrl.u32 %v3527, 7
        %v3529 = vsub.s32 %v3526, %v3528
        %v3530 = vrot.slane %v3315, %v3529
        %v3532 = vunpack.c.l.s4 1983009808
        %v3533 = vunpack.c.0.s8 %v3532
        %v3534 = vlaneseq
        %v3535 = vshrl.u32 %v3534, 7
        %v3536 = vsub.s32 %v3533, %v3535
        %v3537 = vrot.slane %v3523, %v3536
        %v3538 = vcombine.high %v3530, %v3530
        %v3539 = vcombine.high %v3537, %v3537
        %v3540 = vcombine.high %v3316, %v3316
        %v3542 = vunpack.c.l.s4 1983009808
        %v3543 = vunpack.c.0.s8 %v3542
        %v3544 = vlaneseq
        %v3545 = vshrl.u32 %v3544, 7
        %v3546 = vsub.s32 %v3543, %v3545
        %v3547 = vrot.slane %v3316, %v3546
        %v3549 = vunpack.c.l.s4 1983009808
        %v3550 = vunpack.c.0.s8 %v3549
        %v3551 = vlaneseq
        %v3552 = vshrl.u32 %v3551, 7
        %v3553 = vsub.s32 %v3550, %v3552
        %v3554 = vrot.slane %v3540, %v3553
        %v3555 = vcombine.high %v3547, %v3547
        %v3556 = vcombine.high %v3554, %v3554
        %v3557 = vcombine.high %v3317, %v3317
        %v3559 = vunpack.c.l.s4 1983009808
        %v3560 = vunpack.c.0.s8 %v3559
        %v3561 = vlaneseq
        %v3562 = vshrl.u32 %v3561, 7
        %v3563 = vsub.s32 %v3560, %v3562
        %v3564 = vrot.slane %v3317, %v3563
        %v3566 = vunpack.c.l.s4 1983009808
        %v3567 = vunpack.c.0.s8 %v3566
        %v3568 = vlaneseq
        %v3569 = vshrl.u32 %v3568, 7
        %v3570 = vsub.s32 %v3567, %v3569
        %v3571 = vrot.slane %v3557, %v3570
        %v3572 = vcombine.high %v3564, %v3564
        %v3573 = vcombine.high %v3571, %v3571
        %v3574 = vcombine.high %v3318, %v3318
        %v3576 = vunpack.c.l.s4 1983009808
        %v3577 = vunpack.c.0.s8 %v3576
        %v3578 = vlaneseq
        %v3579 = vshrl.u32 %v3578, 7
        %v3580 = vsub.s32 %v3577, %v3579
        %v3581 = vrot.slane %v3318, %v3580
        %v3583 = vunpack.c.l.s4 1983009808
        %v3584 = vunpack.c.0.s8 %v3583
        %v3585 = vlaneseq
        %v3586 = vshrl.u32 %v3585, 7
        %v3587 = vsub.s32 %v3584, %v3586
        %v3588 = vrot.slane %v3574, %v3587
        %v3589 = vcombine.high %v3581, %v3581
        %v3590 = vcombine.high %v3588, %v3588
        %v3591 = vcombine.high %v3319, %v3319
        %v3593 = vunpack.c.l.s4 1983009808
        %v3594 = vunpack.c.0.s8 %v3593
        %v3595 = vlaneseq
        %v3596 = vshrl.u32 %v3595, 7
        %v3597 = vsub.s32 %v3594, %v3596
        %v3598 = vrot.slane %v3319, %v3597
        %v3600 = vunpack.c.l.s4 1983009808
        %v3601 = vunpack.c.0.s8 %v3600
        %v3602 = vlaneseq
        %v3603 = vshrl.u32 %v3602, 7
        %v3604 = vsub.s32 %v3601, %v3603
        %v3605 = vrot.slane %v3591, %v3604
        %v3606 = vcombine.high %v3598, %v3598
        %v3607 = vcombine.high %v3605, %v3605
        %v3608 = vcombine.high %v3320, %v3320
        %v3610 = vunpack.c.l.s4 1983009808
        %v3611 = vunpack.c.0.s8 %v3610
        %v3612 = vlaneseq
        %v3613 = vshrl.u32 %v3612, 7
        %v3614 = vsub.s32 %v3611, %v3613
        %v3615 = vrot.slane %v3320, %v3614
        %v3617 = vunpack.c.l.s4 1983009808
        %v3618 = vunpack.c.0.s8 %v3617
        %v3619 = vlaneseq
        %v3620 = vshrl.u32 %v3619, 7
        %v3621 = vsub.s32 %v3618, %v3620
        %v3622 = vrot.slane %v3608, %v3621
        %v3623 = vcombine.high %v3615, %v3615
        %v3624 = vcombine.high %v3622, %v3622
        %v3625 = vcombine.high %v3321, %v3321
        %v3627 = vunpack.c.l.s4 1983009808
        %v3628 = vunpack.c.0.s8 %v3627
        %v3629 = vlaneseq
        %v3630 = vshrl.u32 %v3629, 7
        %v3631 = vsub.s32 %v3628, %v3630
        %v3632 = vrot.slane %v3321, %v3631
        %v3634 = vunpack.c.l.s4 1983009808
        %v3635 = vunpack.c.0.s8 %v3634
        %v3636 = vlaneseq
        %v3637 = vshrl.u32 %v3636, 7
        %v3638 = vsub.s32 %v3635, %v3637
        %v3639 = vrot.slane %v3625, %v3638
        %v3640 = vcombine.high %v3632, %v3632
        %v3641 = vcombine.high %v3639, %v3639
        %v3642 = vcombine.high %v3322, %v3322
        %v3644 = vunpack.c.l.s4 1983009808
        %v3645 = vunpack.c.0.s8 %v3644
        %v3646 = vlaneseq
        %v3647 = vshrl.u32 %v3646, 7
        %v3648 = vsub.s32 %v3645, %v3647
        %v3649 = vrot.slane %v3322, %v3648
        %v3651 = vunpack.c.l.s4 1983009808
        %v3652 = vunpack.c.0.s8 %v3651
        %v3653 = vlaneseq
        %v3654 = vshrl.u32 %v3653, 7
        %v3655 = vsub.s32 %v3652, %v3654
        %v3656 = vrot.slane %v3642, %v3655
        %v3657 = vcombine.high %v3649, %v3649
        %v3658 = vcombine.high %v3656, %v3656
        %v3659 = vcombine.high %v3323, %v3323
        %v3661 = vunpack.c.l.s4 1983009808
        %v3662 = vunpack.c.0.s8 %v3661
        %v3663 = vlaneseq
        %v3664 = vshrl.u32 %v3663, 7
        %v3665 = vsub.s32 %v3662, %v3664
        %v3666 = vrot.slane %v3323, %v3665
        %v3668 = vunpack.c.l.s4 1983009808
        %v3669 = vunpack.c.0.s8 %v3668
        %v3670 = vlaneseq
        %v3671 = vshrl.u32 %v3670, 7
        %v3672 = vsub.s32 %v3669, %v3671
        %v3673 = vrot.slane %v3659, %v3672
        %v3674 = vcombine.high %v3666, %v3666
        %v3675 = vcombine.high %v3673, %v3673
        %v3676 = vcombine.high %v3324, %v3324
        %v3678 = vunpack.c.l.s4 1983009808
        %v3679 = vunpack.c.0.s8 %v3678
        %v3680 = vlaneseq
        %v3681 = vshrl.u32 %v3680, 7
        %v3682 = vsub.s32 %v3679, %v3681
        %v3683 = vrot.slane %v3324, %v3682
        %v3685 = vunpack.c.l.s4 1983009808
        %v3686 = vunpack.c.0.s8 %v3685
        %v3687 = vlaneseq
        %v3688 = vshrl.u32 %v3687, 7
        %v3689 = vsub.s32 %v3686, %v3688
        %v3690 = vrot.slane %v3676, %v3689
        %v3691 = vcombine.high %v3683, %v3683
        %v3692 = vcombine.high %v3690, %v3690
        %v3693 = vcombine.high %v3325, %v3325
        %v3695 = vunpack.c.l.s4 1983009808
        %v3696 = vunpack.c.0.s8 %v3695
        %v3697 = vlaneseq
        %v3698 = vshrl.u32 %v3697, 7
        %v3699 = vsub.s32 %v3696, %v3698
        %v3700 = vrot.slane %v3325, %v3699
        %v3702 = vunpack.c.l.s4 1983009808
        %v3703 = vunpack.c.0.s8 %v3702
        %v3704 = vlaneseq
        %v3705 = vshrl.u32 %v3704, 7
        %v3706 = vsub.s32 %v3703, %v3705
        %v3707 = vrot.slane %v3693, %v3706
        %v3708 = vcombine.high %v3700, %v3700
        %v3709 = vcombine.high %v3707, %v3707
        %v3710 = vcombine.high %v3326, %v3326
        %v3712 = vunpack.c.l.s4 1983009808
        %v3713 = vunpack.c.0.s8 %v3712
        %v3714 = vlaneseq
        %v3715 = vshrl.u32 %v3714, 7
        %v3716 = vsub.s32 %v3713, %v3715
        %v3717 = vrot.slane %v3326, %v3716
        %v3719 = vunpack.c.l.s4 1983009808
        %v3720 = vunpack.c.0.s8 %v3719
        %v3721 = vlaneseq
        %v3722 = vshrl.u32 %v3721, 7
        %v3723 = vsub.s32 %v3720, %v3722
        %v3724 = vrot.slane %v3710, %v3723
        %v3725 = vcombine.high %v3717, %v3717
        %v3726 = vcombine.high %v3724, %v3724
        %v3727 = vcombine.high %v3327, %v3327
        %v3729 = vunpack.c.l.s4 1983009808
        %v3730 = vunpack.c.0.s8 %v3729
        %v3731 = vlaneseq
        %v3732 = vshrl.u32 %v3731, 7
        %v3733 = vsub.s32 %v3730, %v3732
        %v3734 = vrot.slane %v3327, %v3733
        %v3736 = vunpack.c.l.s4 1983009808
        %v3737 = vunpack.c.0.s8 %v3736
        %v3738 = vlaneseq
        %v3739 = vshrl.u32 %v3738, 7
        %v3740 = vsub.s32 %v3737, %v3739
        %v3741 = vrot.slane %v3727, %v3740
        %v3742 = vcombine.high %v3734, %v3734
        %v3743 = vcombine.high %v3741, %v3741
        %v3744 = vcombine.high %v3328, %v3328
        %v3746 = vunpack.c.l.s4 1983009808
        %v3747 = vunpack.c.0.s8 %v3746
        %v3748 = vlaneseq
        %v3749 = vshrl.u32 %v3748, 7
        %v3750 = vsub.s32 %v3747, %v3749
        %v3751 = vrot.slane %v3328, %v3750
        %v3753 = vunpack.c.l.s4 1983009808
        %v3754 = vunpack.c.0.s8 %v3753
        %v3755 = vlaneseq
        %v3756 = vshrl.u32 %v3755, 7
        %v3757 = vsub.s32 %v3754, %v3756
        %v3758 = vrot.slane %v3744, %v3757
        %v3759 = vcombine.high %v3751, %v3751
        %v3760 = vcombine.high %v3758, %v3758
        %v3761 = vcombine.high %v3329, %v3329
        %v3763 = vunpack.c.l.s4 1983009808
        %v3764 = vunpack.c.0.s8 %v3763
        %v3765 = vlaneseq
        %v3766 = vshrl.u32 %v3765, 7
        %v3767 = vsub.s32 %v3764, %v3766
        %v3768 = vrot.slane %v3329, %v3767
        %v3770 = vunpack.c.l.s4 1983009808
        %v3771 = vunpack.c.0.s8 %v3770
        %v3772 = vlaneseq
        %v3773 = vshrl.u32 %v3772, 7
        %v3774 = vsub.s32 %v3771, %v3773
        %v3775 = vrot.slane %v3761, %v3774
        %v3776 = vcombine.high %v3768, %v3768
        %v3777 = vcombine.high %v3775, %v3775
        %v3778 = vcombine.high %v3330, %v3330
        %v3780 = vunpack.c.l.s4 1983009808
        %v3781 = vunpack.c.0.s8 %v3780
        %v3782 = vlaneseq
        %v3783 = vshrl.u32 %v3782, 7
        %v3784 = vsub.s32 %v3781, %v3783
        %v3785 = vrot.slane %v3330, %v3784
        %v3787 = vunpack.c.l.s4 1983009808
        %v3788 = vunpack.c.0.s8 %v3787
        %v3789 = vlaneseq
        %v3790 = vshrl.u32 %v3789, 7
        %v3791 = vsub.s32 %v3788, %v3790
        %v3792 = vrot.slane %v3778, %v3791
        %v3793 = vcombine.high %v3785, %v3785
        %v3794 = vcombine.high %v3792, %v3792
        %v3795 = vcombine.high %v3331, %v3331
        %v3797 = vunpack.c.l.s4 1983009808
        %v3798 = vunpack.c.0.s8 %v3797
        %v3799 = vlaneseq
        %v3800 = vshrl.u32 %v3799, 7
        %v3801 = vsub.s32 %v3798, %v3800
        %v3802 = vrot.slane %v3331, %v3801
        %v3804 = vunpack.c.l.s4 1983009808
        %v3805 = vunpack.c.0.s8 %v3804
        %v3806 = vlaneseq
        %v3807 = vshrl.u32 %v3806, 7
        %v3808 = vsub.s32 %v3805, %v3807
        %v3809 = vrot.slane %v3795, %v3808
        %v3810 = vcombine.high %v3802, %v3802
        %v3811 = vcombine.high %v3809, %v3809
        %v3812 = vcombine.high %v3332, %v3332
        %v3814 = vunpack.c.l.s4 1983009808
        %v3815 = vunpack.c.0.s8 %v3814
        %v3816 = vlaneseq
        %v3817 = vshrl.u32 %v3816, 7
        %v3818 = vsub.s32 %v3815, %v3817
        %v3819 = vrot.slane %v3332, %v3818
        %v3821 = vunpack.c.l.s4 1983009808
        %v3822 = vunpack.c.0.s8 %v3821
        %v3823 = vlaneseq
        %v3824 = vshrl.u32 %v3823, 7
        %v3825 = vsub.s32 %v3822, %v3824
        %v3826 = vrot.slane %v3812, %v3825
        %v3827 = vcombine.high %v3819, %v3819
        %v3828 = vcombine.high %v3826, %v3826
        %v3829 = vcombine.high %v3333, %v3333
        %v3831 = vunpack.c.l.s4 1983009808
        %v3832 = vunpack.c.0.s8 %v3831
        %v3833 = vlaneseq
        %v3834 = vshrl.u32 %v3833, 7
        %v3835 = vsub.s32 %v3832, %v3834
        %v3836 = vrot.slane %v3333, %v3835
        %v3838 = vunpack.c.l.s4 1983009808
        %v3839 = vunpack.c.0.s8 %v3838
        %v3840 = vlaneseq
        %v3841 = vshrl.u32 %v3840, 7
        %v3842 = vsub.s32 %v3839, %v3841
        %v3843 = vrot.slane %v3829, %v3842
        %v3844 = vcombine.high %v3836, %v3836
        %v3845 = vcombine.high %v3843, %v3843
        %v3846 = vcombine.high %v3334, %v3334
        %v3848 = vunpack.c.l.s4 1983009808
        %v3849 = vunpack.c.0.s8 %v3848
        %v3850 = vlaneseq
        %v3851 = vshrl.u32 %v3850, 7
        %v3852 = vsub.s32 %v3849, %v3851
        %v3853 = vrot.slane %v3334, %v3852
        %v3855 = vunpack.c.l.s4 1983009808
        %v3856 = vunpack.c.0.s8 %v3855
        %v3857 = vlaneseq
        %v3858 = vshrl.u32 %v3857, 7
        %v3859 = vsub.s32 %v3856, %v3858
        %v3860 = vrot.slane %v3846, %v3859
        %v3861 = vcombine.high %v3853, %v3853
        %v3862 = vcombine.high %v3860, %v3860
        %v3863 = vcombine.high %v3335, %v3335
        %v3865 = vunpack.c.l.s4 1983009808
        %v3866 = vunpack.c.0.s8 %v3865
        %v3867 = vlaneseq
        %v3868 = vshrl.u32 %v3867, 7
        %v3869 = vsub.s32 %v3866, %v3868
        %v3870 = vrot.slane %v3335, %v3869
        %v3872 = vunpack.c.l.s4 1983009808
        %v3873 = vunpack.c.0.s8 %v3872
        %v3874 = vlaneseq
        %v3875 = vshrl.u32 %v3874, 7
        %v3876 = vsub.s32 %v3873, %v3875
        %v3877 = vrot.slane %v3863, %v3876
        %v3878 = vcombine.high %v3870, %v3870
        %v3879 = vcombine.high %v3877, %v3877
        %v3880 = vcombine.high %v3336, %v3336
        %v3882 = vunpack.c.l.s4 1983009808
        %v3883 = vunpack.c.0.s8 %v3882
        %v3884 = vlaneseq
        %v3885 = vshrl.u32 %v3884, 7
        %v3886 = vsub.s32 %v3883, %v3885
        %v3887 = vrot.slane %v3336, %v3886
        %v3889 = vunpack.c.l.s4 1983009808
        %v3890 = vunpack.c.0.s8 %v3889
        %v3891 = vlaneseq
        %v3892 = vshrl.u32 %v3891, 7
        %v3893 = vsub.s32 %v3890, %v3892
        %v3894 = vrot.slane %v3880, %v3893
        %v3895 = vcombine.high %v3887, %v3887
        %v3896 = vcombine.high %v3894, %v3894
        %v3897 = vcombine.high %v3337, %v3337
        %v3899 = vunpack.c.l.s4 1983009808
        %v3900 = vunpack.c.0.s8 %v3899
        %v3901 = vlaneseq
        %v3902 = vshrl.u32 %v3901, 7
        %v3903 = vsub.s32 %v3900, %v3902
        %v3904 = vrot.slane %v3337, %v3903
        %v3906 = vunpack.c.l.s4 1983009808
        %v3907 = vunpack.c.0.s8 %v3906
        %v3908 = vlaneseq
        %v3909 = vshrl.u32 %v3908, 7
        %v3910 = vsub.s32 %v3907, %v3909
        %v3911 = vrot.slane %v3897, %v3910
        %v3912 = vcombine.high %v3904, %v3904
        %v3913 = vcombine.high %v3911, %v3911
        %v4042 = vrot.slane %v3377, 7
        %v4043 = vrot.slane %v4042, 2
        %v4044 = vrot.slane %v3385, 7
        %v4045 = vrot.slane %v4044, 2
        %v4046 = vrot.slane %v3384, 7
        %v4047 = vrot.slane %v4046, 2
        %v4048 = vrot.slane %v3386, 7
        %v4049 = vrot.slane %v4048, 2
        %v4050 = vrot.slane %v3394, 7
        %v4051 = vrot.slane %v4050, 2
        %v4052 = vrot.slane %v3402, 7
        %v4053 = vrot.slane %v4052, 2
        %v4054 = vrot.slane %v3401, 7
        %v4055 = vrot.slane %v4054, 2
        %v4056 = vrot.slane %v3403, 7
        %v4057 = vrot.slane %v4056, 2
        %v4058 = vrot.slane %v3411, 7
        %v4059 = vrot.slane %v4058, 2
        %v4060 = vrot.slane %v3419, 7
        %v4061 = vrot.slane %v4060, 2
        %v4062 = vrot.slane %v3418, 7
        %v4063 = vrot.slane %v4062, 2
        %v4064 = vrot.slane %v3420, 7
        %v4065 = vrot.slane %v4064, 2
        %v4066 = vrot.slane %v3428, 7
        %v4067 = vrot.slane %v4066, 2
        %v4068 = vrot.slane %v3436, 7
        %v4069 = vrot.slane %v4068, 2
        %v4070 = vrot.slane %v3435, 7
        %v4071 = vrot.slane %v4070, 2
        %v4072 = vrot.slane %v3437, 7
        %v4073 = vrot.slane %v4072, 2
        %v4074 = vrot.slane %v3445, 7
        %v4075 = vrot.slane %v4074, 2
        %v4076 = vrot.slane %v3453, 7
        %v4077 = vrot.slane %v4076, 2
        %v4078 = vrot.slane %v3452, 7
        %v4079 = vrot.slane %v4078, 2
        %v4080 = vrot.slane %v3454, 7
        %v4081 = vrot.slane %v4080, 2
        %v4082 = vrot.slane %v3462, 7
        %v4083 = vrot.slane %v4082, 2
        %v4084 = vrot.slane %v3470, 7
        %v4085 = vrot.slane %v4084, 2
        %v4086 = vrot.slane %v3469, 7
        %v4087 = vrot.slane %v4086, 2
        %v4088 = vrot.slane %v3471, 7
        %v4089 = vrot.slane %v4088, 2
        %v4090 = vrot.slane %v3479, 7
        %v4091 = vrot.slane %v4090, 2
        %v4092 = vrot.slane %v3487, 7
        %v4093 = vrot.slane %v4092, 2
        %v4094 = vrot.slane %v3486, 7
        %v4095 = vrot.slane %v4094, 2
        %v4096 = vrot.slane %v3488, 7
        %v4097 = vrot.slane %v4096, 2
        %v4098 = vrot.slane %v3496, 7
        %v4099 = vrot.slane %v4098, 2
        %v4100 = vrot.slane %v3504, 7
        %v4101 = vrot.slane %v4100, 2
        %v4102 = vrot.slane %v3503, 7
        %v4103 = vrot.slane %v4102, 2
        %v4104 = vrot.slane %v3505, 7
        %v4105 = vrot.slane %v4104, 2
        %v4106 = vrot.slane %v3513, 7
        %v4107 = vrot.slane %v4106, 2
        %v4108 = vrot.slane %v3521, 7
        %v4109 = vrot.slane %v4108, 2
        %v4110 = vrot.slane %v3520, 7
        %v4111 = vrot.slane %v4110, 2
        %v4112 = vrot.slane %v3522, 7
        %v4113 = vrot.slane %v4112, 2
        %v4114 = vrot.slane %v3530, 7
        %v4115 = vrot.slane %v4114, 2
        %v4116 = vrot.slane %v3538, 7
        %v4117 = vrot.slane %v4116, 2
        %v4118 = vrot.slane %v3537, 7
        %v4119 = vrot.slane %v4118, 2
        %v4120 = vrot.slane %v3539, 7
        %v4121 = vrot.slane %v4120, 2
        %v4122 = vrot.slane %v3547, 7
        %v4123 = vrot.slane %v4122, 2
        %v4124 = vrot.slane %v3555, 7
        %v4125 = vrot.slane %v4124, 2
        %v4126 = vrot.slane %v3554, 7
        %v4127 = vrot.slane %v4126, 2
        %v4128 = vrot.slane %v3556, 7
        %v4129 = vrot.slane %v4128, 2
        %v4130 = vrot.slane %v3564, 7
        %v4131 = vrot.slane %v4130, 2
        %v4132 = vrot.slane %v3572, 7
        %v4133 = vrot.slane %v4132, 2
        %v4134 = vrot.slane %v3571, 7
        %v4135 = vrot.slane %v4134, 2
        %v4136 = vrot.slane %v3573, 7
        %v4137 = vrot.slane %v4136, 2
        %v4138 = vrot.slane %v3581, 7
        %v4139 = vrot.slane %v4138, 2
        %v4140 = vrot.slane %v3589, 7
        %v4141 = vrot.slane %v4140, 2
        %v4142 = vrot.slane %v3588, 7
        %v4143 = vrot.slane %v4142, 2
        %v4144 = vrot.slane %v3590, 7
        %v4145 = vrot.slane %v4144, 2
        %v4146 = vrot.slane %v3598, 7
        %v4147 = vrot.slane %v4146, 2
        %v4148 = vrot.slane %v3606, 7
        %v4149 = vrot.slane %v4148, 2
        %v4150 = vrot.slane %v3605, 7
        %v4151 = vrot.slane %v4150, 2
        %v4152 = vrot.slane %v3607, 7
        %v4153 = vrot.slane %v4152, 2
        %v4154 = vrot.slane %v3615, 7
        %v4155 = vrot.slane %v4154, 2
        %v4156 = vrot.slane %v3623, 7
        %v4157 = vrot.slane %v4156, 2
        %v4158 = vrot.slane %v3622, 7
        %v4159 = vrot.slane %v4158, 2
        %v4160 = vrot.slane %v3624, 7
        %v4161 = vrot.slane %v4160, 2
        %v4162 = vrot.slane %v3632, 7
        %v4163 = vrot.slane %v4162, 2
        %v4164 = vrot.slane %v3640, 7
        %v4165 = vrot.slane %v4164, 2
        %v4166 = vrot.slane %v3639, 7
        %v4167 = vrot.slane %v4166, 2
        %v4168 = vrot.slane %v3641, 7
        %v4169 = vrot.slane %v4168, 2
        %v4170 = vrot.slane %v3649, 7
        %v4171 = vrot.slane %v4170, 2
        %v4172 = vrot.slane %v3657, 7
        %v4173 = vrot.slane %v4172, 2
        %v4174 = vrot.slane %v3656, 7
        %v4175 = vrot.slane %v4174, 2
        %v4176 = vrot.slane %v3658, 7
        %v4177 = vrot.slane %v4176, 2
        %v4178 = vrot.slane %v3666, 7
        %v4179 = vrot.slane %v4178, 2
        %v4180 = vrot.slane %v3674, 7
        %v4181 = vrot.slane %v4180, 2
        %v4182 = vrot.slane %v3673, 7
        %v4183 = vrot.slane %v4182, 2
        %v4184 = vrot.slane %v3675, 7
        %v4185 = vrot.slane %v4184, 2
        %v4186 = vrot.slane %v3683, 7
        %v4187 = vrot.slane %v4186, 2
        %v4188 = vrot.slane %v3691, 7
        %v4189 = vrot.slane %v4188, 2
        %v4190 = vrot.slane %v3690, 7
        %v4191 = vrot.slane %v4190, 2
        %v4192 = vrot.slane %v3692, 7
        %v4193 = vrot.slane %v4192, 2
        %v4194 = vrot.slane %v3700, 7
        %v4195 = vrot.slane %v4194, 2
        %v4196 = vrot.slane %v3708, 7
        %v4197 = vrot.slane %v4196, 2
        %v4198 = vrot.slane %v3707, 7
        %v4199 = vrot.slane %v4198, 2
        %v4200 = vrot.slane %v3709, 7
        %v4201 = vrot.slane %v4200, 2
        %v4202 = vrot.slane %v3717, 7
        %v4203 = vrot.slane %v4202, 2
        %v4204 = vrot.slane %v3725, 7
        %v4205 = vrot.slane %v4204, 2
        %v4206 = vrot.slane %v3724, 7
        %v4207 = vrot.slane %v4206, 2
        %v4208 = vrot.slane %v3726, 7
        %v4209 = vrot.slane %v4208, 2
        %v4210 = vrot.slane %v3734, 7
        %v4211 = vrot.slane %v4210, 2
        %v4212 = vrot.slane %v3742, 7
        %v4213 = vrot.slane %v4212, 2
        %v4214 = vrot.slane %v3741, 7
        %v4215 = vrot.slane %v4214, 2
        %v4216 = vrot.slane %v3743, 7
        %v4217 = vrot.slane %v4216, 2
        %v4218 = vrot.slane %v3751, 7
        %v4219 = vrot.slane %v4218, 2
        %v4220 = vrot.slane %v3759, 7
        %v4221 = vrot.slane %v4220, 2
        %v4222 = vrot.slane %v3758, 7
        %v4223 = vrot.slane %v4222, 2
        %v4224 = vrot.slane %v3760, 7
        %v4225 = vrot.slane %v4224, 2
        %v4226 = vrot.slane %v3768, 7
        %v4227 = vrot.slane %v4226, 2
        %v4228 = vrot.slane %v3776, 7
        %v4229 = vrot.slane %v4228, 2
        %v4230 = vrot.slane %v3775, 7
        %v4231 = vrot.slane %v4230, 2
        %v4232 = vrot.slane %v3777, 7
        %v4233 = vrot.slane %v4232, 2
        %v4234 = vrot.slane %v3785, 7
        %v4235 = vrot.slane %v4234, 2
        %v4236 = vrot.slane %v3793, 7
        %v4237 = vrot.slane %v4236, 2
        %v4238 = vrot.slane %v3792, 7
        %v4239 = vrot.slane %v4238, 2
        %v4240 = vrot.slane %v3794, 7
        %v4241 = vrot.slane %v4240, 2
        %v4242 = vrot.slane %v3802, 7
        %v4243 = vrot.slane %v4242, 2
        %v4244 = vrot.slane %v3810, 7
        %v4245 = vrot.slane %v4244, 2
        %v4246 = vrot.slane %v3809, 7
        %v4247 = vrot.slane %v4246, 2
        %v4248 = vrot.slane %v3811, 7
        %v4249 = vrot.slane %v4248, 2
        %v4250 = vrot.slane %v3819, 7
        %v4251 = vrot.slane %v4250, 2
        %v4252 = vrot.slane %v3827, 7
        %v4253 = vrot.slane %v4252, 2
        %v4254 = vrot.slane %v3826, 7
        %v4255 = vrot.slane %v4254, 2
        %v4256 = vrot.slane %v3828, 7
        %v4257 = vrot.slane %v4256, 2
        %v4258 = vrot.slane %v3836, 7
        %v4259 = vrot.slane %v4258, 2
        %v4260 = vrot.slane %v3844, 7
        %v4261 = vrot.slane %v4260, 2
        %v4262 = vrot.slane %v3843, 7
        %v4263 = vrot.slane %v4262, 2
        %v4264 = vrot.slane %v3845, 7
        %v4265 = vrot.slane %v4264, 2
        %v4266 = vrot.slane %v3853, 7
        %v4267 = vrot.slane %v4266, 2
        %v4268 = vrot.slane %v3861, 7
        %v4269 = vrot.slane %v4268, 2
        %v4270 = vrot.slane %v3860, 7
        %v4271 = vrot.slane %v4270, 2
        %v4272 = vrot.slane %v3862, 7
        %v4273 = vrot.slane %v4272, 2
        %v4274 = vrot.slane %v3870, 7
        %v4275 = vrot.slane %v4274, 2
        %v4276 = vrot.slane %v3878, 7
        %v4277 = vrot.slane %v4276, 2
        %v4278 = vrot.slane %v3877, 7
        %v4279 = vrot.slane %v4278, 2
        %v4280 = vrot.slane %v3879, 7
        %v4281 = vrot.slane %v4280, 2
        %v4282 = vrot.slane %v3887, 7
        %v4283 = vrot.slane %v4282, 2
        %v4284 = vrot.slane %v3895, 7
        %v4285 = vrot.slane %v4284, 2
        %v4286 = vrot.slane %v3894, 7
        %v4287 = vrot.slane %v4286, 2
        %v4288 = vrot.slane %v3896, 7
        %v4289 = vrot.slane %v4288, 2
        %v4290 = vrot.slane %v3904, 7
        %v4291 = vrot.slane %v4290, 2
        %v4292 = vrot.slane %v3912, 7
        %v4293 = vrot.slane %v4292, 2
        %v4294 = vrot.slane %v3911, 7
        %v4295 = vrot.slane %v4294, 2
        %v4296 = vrot.slane %v3913, 7
        %v4297 = vrot.slane %v4296, 2
        %v4426 = vmax.f32 %v3377, %v4043
        %v4427 = vmax.f32 %v3385, %v4045
        %v4428 = vmax.f32 %v3384, %v4047
        %v4429 = vmax.f32 %v3386, %v4049
        %v4430 = vmax.f32 %v3394, %v4051
        %v4431 = vmax.f32 %v3402, %v4053
        %v4432 = vmax.f32 %v3401, %v4055
        %v4433 = vmax.f32 %v3403, %v4057
        %v4434 = vmax.f32 %v3411, %v4059
        %v4435 = vmax.f32 %v3419, %v4061
        %v4436 = vmax.f32 %v3418, %v4063
        %v4437 = vmax.f32 %v3420, %v4065
        %v4438 = vmax.f32 %v3428, %v4067
        %v4439 = vmax.f32 %v3436, %v4069
        %v4440 = vmax.f32 %v3435, %v4071
        %v4441 = vmax.f32 %v3437, %v4073
        %v4442 = vmax.f32 %v3445, %v4075
        %v4443 = vmax.f32 %v3453, %v4077
        %v4444 = vmax.f32 %v3452, %v4079
        %v4445 = vmax.f32 %v3454, %v4081
        %v4446 = vmax.f32 %v3462, %v4083
        %v4447 = vmax.f32 %v3470, %v4085
        %v4448 = vmax.f32 %v3469, %v4087
        %v4449 = vmax.f32 %v3471, %v4089
        %v4450 = vmax.f32 %v3479, %v4091
        %v4451 = vmax.f32 %v3487, %v4093
        %v4452 = vmax.f32 %v3486, %v4095
        %v4453 = vmax.f32 %v3488, %v4097
        %v4454 = vmax.f32 %v3496, %v4099
        %v4455 = vmax.f32 %v3504, %v4101
        %v4456 = vmax.f32 %v3503, %v4103
        %v4457 = vmax.f32 %v3505, %v4105
        %v4458 = vmax.f32 %v3513, %v4107
        %v4459 = vmax.f32 %v3521, %v4109
        %v4460 = vmax.f32 %v3520, %v4111
        %v4461 = vmax.f32 %v3522, %v4113
        %v4462 = vmax.f32 %v3530, %v4115
        %v4463 = vmax.f32 %v3538, %v4117
        %v4464 = vmax.f32 %v3537, %v4119
        %v4465 = vmax.f32 %v3539, %v4121
        %v4466 = vmax.f32 %v3547, %v4123
        %v4467 = vmax.f32 %v3555, %v4125
        %v4468 = vmax.f32 %v3554, %v4127
        %v4469 = vmax.f32 %v3556, %v4129
        %v4470 = vmax.f32 %v3564, %v4131
        %v4471 = vmax.f32 %v3572, %v4133
        %v4472 = vmax.f32 %v3571, %v4135
        %v4473 = vmax.f32 %v3573, %v4137
        %v4474 = vmax.f32 %v3581, %v4139
        %v4475 = vmax.f32 %v3589, %v4141
        %v4476 = vmax.f32 %v3588, %v4143
        %v4477 = vmax.f32 %v3590, %v4145
        %v4478 = vmax.f32 %v3598, %v4147
        %v4479 = vmax.f32 %v3606, %v4149
        %v4480 = vmax.f32 %v3605, %v4151
        %v4481 = vmax.f32 %v3607, %v4153
        %v4482 = vmax.f32 %v3615, %v4155
        %v4483 = vmax.f32 %v3623, %v4157
        %v4484 = vmax.f32 %v3622, %v4159
        %v4485 = vmax.f32 %v3624, %v4161
        %v4486 = vmax.f32 %v3632, %v4163
        %v4487 = vmax.f32 %v3640, %v4165
        %v4488 = vmax.f32 %v3639, %v4167
        %v4489 = vmax.f32 %v3641, %v4169
        %v4490 = vmax.f32 %v3649, %v4171
        %v4491 = vmax.f32 %v3657, %v4173
        %v4492 = vmax.f32 %v3656, %v4175
        %v4493 = vmax.f32 %v3658, %v4177
        %v4494 = vmax.f32 %v3666, %v4179
        %v4495 = vmax.f32 %v3674, %v4181
        %v4496 = vmax.f32 %v3673, %v4183
        %v4497 = vmax.f32 %v3675, %v4185
        %v4498 = vmax.f32 %v3683, %v4187
        %v4499 = vmax.f32 %v3691, %v4189
        %v4500 = vmax.f32 %v3690, %v4191
        %v4501 = vmax.f32 %v3692, %v4193
        %v4502 = vmax.f32 %v3700, %v4195
        %v4503 = vmax.f32 %v3708, %v4197
        %v4504 = vmax.f32 %v3707, %v4199
        %v4505 = vmax.f32 %v3709, %v4201
        %v4506 = vmax.f32 %v3717, %v4203
        %v4507 = vmax.f32 %v3725, %v4205
        %v4508 = vmax.f32 %v3724, %v4207
        %v4509 = vmax.f32 %v3726, %v4209
        %v4510 = vmax.f32 %v3734, %v4211
        %v4511 = vmax.f32 %v3742, %v4213
        %v4512 = vmax.f32 %v3741, %v4215
        %v4513 = vmax.f32 %v3743, %v4217
        %v4514 = vmax.f32 %v3751, %v4219
        %v4515 = vmax.f32 %v3759, %v4221
        %v4516 = vmax.f32 %v3758, %v4223
        %v4517 = vmax.f32 %v3760, %v4225
        %v4518 = vmax.f32 %v3768, %v4227
        %v4519 = vmax.f32 %v3776, %v4229
        %v4520 = vmax.f32 %v3775, %v4231
        %v4521 = vmax.f32 %v3777, %v4233
        %v4522 = vmax.f32 %v3785, %v4235
        %v4523 = vmax.f32 %v3793, %v4237
        %v4524 = vmax.f32 %v3792, %v4239
        %v4525 = vmax.f32 %v3794, %v4241
        %v4526 = vmax.f32 %v3802, %v4243
        %v4527 = vmax.f32 %v3810, %v4245
        %v4528 = vmax.f32 %v3809, %v4247
        %v4529 = vmax.f32 %v3811, %v4249
        %v4530 = vmax.f32 %v3819, %v4251
        %v4531 = vmax.f32 %v3827, %v4253
        %v4532 = vmax.f32 %v3826, %v4255
        %v4533 = vmax.f32 %v3828, %v4257
        %v4534 = vmax.f32 %v3836, %v4259
        %v4535 = vmax.f32 %v3844, %v4261
        %v4536 = vmax.f32 %v3843, %v4263
        %v4537 = vmax.f32 %v3845, %v4265
        %v4538 = vmax.f32 %v3853, %v4267
        %v4539 = vmax.f32 %v3861, %v4269
        %v4540 = vmax.f32 %v3860, %v4271
        %v4541 = vmax.f32 %v3862, %v4273
        %v4542 = vmax.f32 %v3870, %v4275
        %v4543 = vmax.f32 %v3878, %v4277
        %v4544 = vmax.f32 %v3877, %v4279
        %v4545 = vmax.f32 %v3879, %v4281
        %v4546 = vmax.f32 %v3887, %v4283
        %v4547 = vmax.f32 %v3895, %v4285
        %v4548 = vmax.f32 %v3894, %v4287
        %v4549 = vmax.f32 %v3896, %v4289
        %v4550 = vmax.f32 %v3904, %v4291
        %v4551 = vmax.f32 %v3912, %v4293
        %v4552 = vmax.f32 %v3911, %v4295
        %v4553 = vmax.f32 %v3913, %v4297
        %vm4682 = vcmask 1044484
        %v4683 = vsel %vm4682, %v4426, %v4426
        %vm4684 = vcmask 1046534
        %v4685 = vsel %vm4684, %v4426, %v4683
        %v4686 = vrot.slane %v4427, 7
        %vm4687 = vcmask 1041409
        %v4688 = vsel %vm4687, %v4686, %v4685
        %vm4689 = vcmask 1043459
        %v4690 = vsel %vm4689, %v4686, %v4688
        %vm4691 = vcmask 1045509
        %v4692 = vsel %vm4691, %v4686, %v4690
        %vm4693 = vcmask 1047559
        %v4694 = vsel %vm4693, %v4686, %v4692
        %v4695 = vsel %vm4682, %v4428, %v4428
        %v4696 = vsel %vm4684, %v4428, %v4695
        %v4697 = vrot.slane %v4429, 7
        %v4698 = vsel %vm4687, %v4697, %v4696
        %v4699 = vsel %vm4689, %v4697, %v4698
        %v4700 = vsel %vm4691, %v4697, %v4699
        %v4701 = vsel %vm4693, %v4697, %v4700
        %v4702 = vsel %vm4682, %v4430, %v4430
        %v4703 = vsel %vm4684, %v4430, %v4702
        %v4704 = vrot.slane %v4431, 7
        %v4705 = vsel %vm4687, %v4704, %v4703
        %v4706 = vsel %vm4689, %v4704, %v4705
        %v4707 = vsel %vm4691, %v4704, %v4706
        %v4708 = vsel %vm4693, %v4704, %v4707
        %v4709 = vsel %vm4682, %v4432, %v4432
        %v4710 = vsel %vm4684, %v4432, %v4709
        %v4711 = vrot.slane %v4433, 7
        %v4712 = vsel %vm4687, %v4711, %v4710
        %v4713 = vsel %vm4689, %v4711, %v4712
        %v4714 = vsel %vm4691, %v4711, %v4713
        %v4715 = vsel %vm4693, %v4711, %v4714
        %v4716 = vsel %vm4682, %v4434, %v4434
        %v4717 = vsel %vm4684, %v4434, %v4716
        %v4718 = vrot.slane %v4435, 7
        %v4719 = vsel %vm4687, %v4718, %v4717
        %v4720 = vsel %vm4689, %v4718, %v4719
        %v4721 = vsel %vm4691, %v4718, %v4720
        %v4722 = vsel %vm4693, %v4718, %v4721
        %v4723 = vsel %vm4682, %v4436, %v4436
        %v4724 = vsel %vm4684, %v4436, %v4723
        %v4725 = vrot.slane %v4437, 7
        %v4726 = vsel %vm4687, %v4725, %v4724
        %v4727 = vsel %vm4689, %v4725, %v4726
        %v4728 = vsel %vm4691, %v4725, %v4727
        %v4729 = vsel %vm4693, %v4725, %v4728
        %v4730 = vsel %vm4682, %v4438, %v4438
        %v4731 = vsel %vm4684, %v4438, %v4730
        %v4732 = vrot.slane %v4439, 7
        %v4733 = vsel %vm4687, %v4732, %v4731
        %v4734 = vsel %vm4689, %v4732, %v4733
        %v4735 = vsel %vm4691, %v4732, %v4734
        %v4736 = vsel %vm4693, %v4732, %v4735
        %v4737 = vsel %vm4682, %v4440, %v4440
        %v4738 = vsel %vm4684, %v4440, %v4737
        %v4739 = vrot.slane %v4441, 7
        %v4740 = vsel %vm4687, %v4739, %v4738
        %v4741 = vsel %vm4689, %v4739, %v4740
        %v4742 = vsel %vm4691, %v4739, %v4741
        %v4743 = vsel %vm4693, %v4739, %v4742
        %v4744 = vsel %vm4682, %v4442, %v4442
        %v4745 = vsel %vm4684, %v4442, %v4744
        %v4746 = vrot.slane %v4443, 7
        %v4747 = vsel %vm4687, %v4746, %v4745
        %v4748 = vsel %vm4689, %v4746, %v4747
        %v4749 = vsel %vm4691, %v4746, %v4748
        %v4750 = vsel %vm4693, %v4746, %v4749
        %v4751 = vsel %vm4682, %v4444, %v4444
        %v4752 = vsel %vm4684, %v4444, %v4751
        %v4753 = vrot.slane %v4445, 7
        %v4754 = vsel %vm4687, %v4753, %v4752
        %v4755 = vsel %vm4689, %v4753, %v4754
        %v4756 = vsel %vm4691, %v4753, %v4755
        %v4757 = vsel %vm4693, %v4753, %v4756
        %v4758 = vsel %vm4682, %v4446, %v4446
        %v4759 = vsel %vm4684, %v4446, %v4758
        %v4760 = vrot.slane %v4447, 7
        %v4761 = vsel %vm4687, %v4760, %v4759
        %v4762 = vsel %vm4689, %v4760, %v4761
        %v4763 = vsel %vm4691, %v4760, %v4762
        %v4764 = vsel %vm4693, %v4760, %v4763
        %v4765 = vsel %vm4682, %v4448, %v4448
        %v4766 = vsel %vm4684, %v4448, %v4765
        %v4767 = vrot.slane %v4449, 7
        %v4768 = vsel %vm4687, %v4767, %v4766
        %v4769 = vsel %vm4689, %v4767, %v4768
        %v4770 = vsel %vm4691, %v4767, %v4769
        %v4771 = vsel %vm4693, %v4767, %v4770
        %v4772 = vsel %vm4682, %v4450, %v4450
        %v4773 = vsel %vm4684, %v4450, %v4772
        %v4774 = vrot.slane %v4451, 7
        %v4775 = vsel %vm4687, %v4774, %v4773
        %v4776 = vsel %vm4689, %v4774, %v4775
        %v4777 = vsel %vm4691, %v4774, %v4776
        %v4778 = vsel %vm4693, %v4774, %v4777
        %v4779 = vsel %vm4682, %v4452, %v4452
        %v4780 = vsel %vm4684, %v4452, %v4779
        %v4781 = vrot.slane %v4453, 7
        %v4782 = vsel %vm4687, %v4781, %v4780
        %v4783 = vsel %vm4689, %v4781, %v4782
        %v4784 = vsel %vm4691, %v4781, %v4783
        %v4785 = vsel %vm4693, %v4781, %v4784
        %v4786 = vsel %vm4682, %v4454, %v4454
        %v4787 = vsel %vm4684, %v4454, %v4786
        %v4788 = vrot.slane %v4455, 7
        %v4789 = vsel %vm4687, %v4788, %v4787
        %v4790 = vsel %vm4689, %v4788, %v4789
        %v4791 = vsel %vm4691, %v4788, %v4790
        %v4792 = vsel %vm4693, %v4788, %v4791
        %v4793 = vsel %vm4682, %v4456, %v4456
        %v4794 = vsel %vm4684, %v4456, %v4793
        %v4795 = vrot.slane %v4457, 7
        %v4796 = vsel %vm4687, %v4795, %v4794
        %v4797 = vsel %vm4689, %v4795, %v4796
        %v4798 = vsel %vm4691, %v4795, %v4797
        %v4799 = vsel %vm4693, %v4795, %v4798
        %v4800 = vsel %vm4682, %v4458, %v4458
        %v4801 = vsel %vm4684, %v4458, %v4800
        %v4802 = vrot.slane %v4459, 7
        %v4803 = vsel %vm4687, %v4802, %v4801
        %v4804 = vsel %vm4689, %v4802, %v4803
        %v4805 = vsel %vm4691, %v4802, %v4804
        %v4806 = vsel %vm4693, %v4802, %v4805
        %v4807 = vsel %vm4682, %v4460, %v4460
        %v4808 = vsel %vm4684, %v4460, %v4807
        %v4809 = vrot.slane %v4461, 7
        %v4810 = vsel %vm4687, %v4809, %v4808
        %v4811 = vsel %vm4689, %v4809, %v4810
        %v4812 = vsel %vm4691, %v4809, %v4811
        %v4813 = vsel %vm4693, %v4809, %v4812
        %v4814 = vsel %vm4682, %v4462, %v4462
        %v4815 = vsel %vm4684, %v4462, %v4814
        %v4816 = vrot.slane %v4463, 7
        %v4817 = vsel %vm4687, %v4816, %v4815
        %v4818 = vsel %vm4689, %v4816, %v4817
        %v4819 = vsel %vm4691, %v4816, %v4818
        %v4820 = vsel %vm4693, %v4816, %v4819
        %v4821 = vsel %vm4682, %v4464, %v4464
        %v4822 = vsel %vm4684, %v4464, %v4821
        %v4823 = vrot.slane %v4465, 7
        %v4824 = vsel %vm4687, %v4823, %v4822
        %v4825 = vsel %vm4689, %v4823, %v4824
        %v4826 = vsel %vm4691, %v4823, %v4825
        %v4827 = vsel %vm4693, %v4823, %v4826
        %v4828 = vsel %vm4682, %v4466, %v4466
        %v4829 = vsel %vm4684, %v4466, %v4828
        %v4830 = vrot.slane %v4467, 7
        %v4831 = vsel %vm4687, %v4830, %v4829
        %v4832 = vsel %vm4689, %v4830, %v4831
        %v4833 = vsel %vm4691, %v4830, %v4832
        %v4834 = vsel %vm4693, %v4830, %v4833
        %v4835 = vsel %vm4682, %v4468, %v4468
        %v4836 = vsel %vm4684, %v4468, %v4835
        %v4837 = vrot.slane %v4469, 7
        %v4838 = vsel %vm4687, %v4837, %v4836
        %v4839 = vsel %vm4689, %v4837, %v4838
        %v4840 = vsel %vm4691, %v4837, %v4839
        %v4841 = vsel %vm4693, %v4837, %v4840
        %v4842 = vsel %vm4682, %v4470, %v4470
        %v4843 = vsel %vm4684, %v4470, %v4842
        %v4844 = vrot.slane %v4471, 7
        %v4845 = vsel %vm4687, %v4844, %v4843
        %v4846 = vsel %vm4689, %v4844, %v4845
        %v4847 = vsel %vm4691, %v4844, %v4846
        %v4848 = vsel %vm4693, %v4844, %v4847
        %v4849 = vsel %vm4682, %v4472, %v4472
        %v4850 = vsel %vm4684, %v4472, %v4849
        %v4851 = vrot.slane %v4473, 7
        %v4852 = vsel %vm4687, %v4851, %v4850
        %v4853 = vsel %vm4689, %v4851, %v4852
        %v4854 = vsel %vm4691, %v4851, %v4853
        %v4855 = vsel %vm4693, %v4851, %v4854
        %v4856 = vsel %vm4682, %v4474, %v4474
        %v4857 = vsel %vm4684, %v4474, %v4856
        %v4858 = vrot.slane %v4475, 7
        %v4859 = vsel %vm4687, %v4858, %v4857
        %v4860 = vsel %vm4689, %v4858, %v4859
        %v4861 = vsel %vm4691, %v4858, %v4860
        %v4862 = vsel %vm4693, %v4858, %v4861
        %v4863 = vsel %vm4682, %v4476, %v4476
        %v4864 = vsel %vm4684, %v4476, %v4863
        %v4865 = vrot.slane %v4477, 7
        %v4866 = vsel %vm4687, %v4865, %v4864
        %v4867 = vsel %vm4689, %v4865, %v4866
        %v4868 = vsel %vm4691, %v4865, %v4867
        %v4869 = vsel %vm4693, %v4865, %v4868
        %v4870 = vsel %vm4682, %v4478, %v4478
        %v4871 = vsel %vm4684, %v4478, %v4870
        %v4872 = vrot.slane %v4479, 7
        %v4873 = vsel %vm4687, %v4872, %v4871
        %v4874 = vsel %vm4689, %v4872, %v4873
        %v4875 = vsel %vm4691, %v4872, %v4874
        %v4876 = vsel %vm4693, %v4872, %v4875
        %v4877 = vsel %vm4682, %v4480, %v4480
        %v4878 = vsel %vm4684, %v4480, %v4877
        %v4879 = vrot.slane %v4481, 7
        %v4880 = vsel %vm4687, %v4879, %v4878
        %v4881 = vsel %vm4689, %v4879, %v4880
        %v4882 = vsel %vm4691, %v4879, %v4881
        %v4883 = vsel %vm4693, %v4879, %v4882
        %v4884 = vsel %vm4682, %v4482, %v4482
        %v4885 = vsel %vm4684, %v4482, %v4884
        %v4886 = vrot.slane %v4483, 7
        %v4887 = vsel %vm4687, %v4886, %v4885
        %v4888 = vsel %vm4689, %v4886, %v4887
        %v4889 = vsel %vm4691, %v4886, %v4888
        %v4890 = vsel %vm4693, %v4886, %v4889
        %v4891 = vsel %vm4682, %v4484, %v4484
        %v4892 = vsel %vm4684, %v4484, %v4891
        %v4893 = vrot.slane %v4485, 7
        %v4894 = vsel %vm4687, %v4893, %v4892
        %v4895 = vsel %vm4689, %v4893, %v4894
        %v4896 = vsel %vm4691, %v4893, %v4895
        %v4897 = vsel %vm4693, %v4893, %v4896
        %v4898 = vsel %vm4682, %v4486, %v4486
        %v4899 = vsel %vm4684, %v4486, %v4898
        %v4900 = vrot.slane %v4487, 7
        %v4901 = vsel %vm4687, %v4900, %v4899
        %v4902 = vsel %vm4689, %v4900, %v4901
        %v4903 = vsel %vm4691, %v4900, %v4902
        %v4904 = vsel %vm4693, %v4900, %v4903
        %v4905 = vsel %vm4682, %v4488, %v4488
        %v4906 = vsel %vm4684, %v4488, %v4905
        %v4907 = vrot.slane %v4489, 7
        %v4908 = vsel %vm4687, %v4907, %v4906
        %v4909 = vsel %vm4689, %v4907, %v4908
        %v4910 = vsel %vm4691, %v4907, %v4909
        %v4911 = vsel %vm4693, %v4907, %v4910
        %v4912 = vsel %vm4682, %v4490, %v4490
        %v4913 = vsel %vm4684, %v4490, %v4912
        %v4914 = vrot.slane %v4491, 7
        %v4915 = vsel %vm4687, %v4914, %v4913
        %v4916 = vsel %vm4689, %v4914, %v4915
        %v4917 = vsel %vm4691, %v4914, %v4916
        %v4918 = vsel %vm4693, %v4914, %v4917
        %v4919 = vsel %vm4682, %v4492, %v4492
        %v4920 = vsel %vm4684, %v4492, %v4919
        %v4921 = vrot.slane %v4493, 7
        %v4922 = vsel %vm4687, %v4921, %v4920
        %v4923 = vsel %vm4689, %v4921, %v4922
        %v4924 = vsel %vm4691, %v4921, %v4923
        %v4925 = vsel %vm4693, %v4921, %v4924
        %v4926 = vsel %vm4682, %v4494, %v4494
        %v4927 = vsel %vm4684, %v4494, %v4926
        %v4928 = vrot.slane %v4495, 7
        %v4929 = vsel %vm4687, %v4928, %v4927
        %v4930 = vsel %vm4689, %v4928, %v4929
        %v4931 = vsel %vm4691, %v4928, %v4930
        %v4932 = vsel %vm4693, %v4928, %v4931
        %v4933 = vsel %vm4682, %v4496, %v4496
        %v4934 = vsel %vm4684, %v4496, %v4933
        %v4935 = vrot.slane %v4497, 7
        %v4936 = vsel %vm4687, %v4935, %v4934
        %v4937 = vsel %vm4689, %v4935, %v4936
        %v4938 = vsel %vm4691, %v4935, %v4937
        %v4939 = vsel %vm4693, %v4935, %v4938
        %v4940 = vsel %vm4682, %v4498, %v4498
        %v4941 = vsel %vm4684, %v4498, %v4940
        %v4942 = vrot.slane %v4499, 7
        %v4943 = vsel %vm4687, %v4942, %v4941
        %v4944 = vsel %vm4689, %v4942, %v4943
        %v4945 = vsel %vm4691, %v4942, %v4944
        %v4946 = vsel %vm4693, %v4942, %v4945
        %v4947 = vsel %vm4682, %v4500, %v4500
        %v4948 = vsel %vm4684, %v4500, %v4947
        %v4949 = vrot.slane %v4501, 7
        %v4950 = vsel %vm4687, %v4949, %v4948
        %v4951 = vsel %vm4689, %v4949, %v4950
        %v4952 = vsel %vm4691, %v4949, %v4951
        %v4953 = vsel %vm4693, %v4949, %v4952
        %v4954 = vsel %vm4682, %v4502, %v4502
        %v4955 = vsel %vm4684, %v4502, %v4954
        %v4956 = vrot.slane %v4503, 7
        %v4957 = vsel %vm4687, %v4956, %v4955
        %v4958 = vsel %vm4689, %v4956, %v4957
        %v4959 = vsel %vm4691, %v4956, %v4958
        %v4960 = vsel %vm4693, %v4956, %v4959
        %v4961 = vsel %vm4682, %v4504, %v4504
        %v4962 = vsel %vm4684, %v4504, %v4961
        %v4963 = vrot.slane %v4505, 7
        %v4964 = vsel %vm4687, %v4963, %v4962
        %v4965 = vsel %vm4689, %v4963, %v4964
        %v4966 = vsel %vm4691, %v4963, %v4965
        %v4967 = vsel %vm4693, %v4963, %v4966
        %v4968 = vsel %vm4682, %v4506, %v4506
        %v4969 = vsel %vm4684, %v4506, %v4968
        %v4970 = vrot.slane %v4507, 7
        %v4971 = vsel %vm4687, %v4970, %v4969
        %v4972 = vsel %vm4689, %v4970, %v4971
        %v4973 = vsel %vm4691, %v4970, %v4972
        %v4974 = vsel %vm4693, %v4970, %v4973
        %v4975 = vsel %vm4682, %v4508, %v4508
        %v4976 = vsel %vm4684, %v4508, %v4975
        %v4977 = vrot.slane %v4509, 7
        %v4978 = vsel %vm4687, %v4977, %v4976
        %v4979 = vsel %vm4689, %v4977, %v4978
        %v4980 = vsel %vm4691, %v4977, %v4979
        %v4981 = vsel %vm4693, %v4977, %v4980
        %v4982 = vsel %vm4682, %v4510, %v4510
        %v4983 = vsel %vm4684, %v4510, %v4982
        %v4984 = vrot.slane %v4511, 7
        %v4985 = vsel %vm4687, %v4984, %v4983
        %v4986 = vsel %vm4689, %v4984, %v4985
        %v4987 = vsel %vm4691, %v4984, %v4986
        %v4988 = vsel %vm4693, %v4984, %v4987
        %v4989 = vsel %vm4682, %v4512, %v4512
        %v4990 = vsel %vm4684, %v4512, %v4989
        %v4991 = vrot.slane %v4513, 7
        %v4992 = vsel %vm4687, %v4991, %v4990
        %v4993 = vsel %vm4689, %v4991, %v4992
        %v4994 = vsel %vm4691, %v4991, %v4993
        %v4995 = vsel %vm4693, %v4991, %v4994
        %v4996 = vsel %vm4682, %v4514, %v4514
        %v4997 = vsel %vm4684, %v4514, %v4996
        %v4998 = vrot.slane %v4515, 7
        %v4999 = vsel %vm4687, %v4998, %v4997
        %v5000 = vsel %vm4689, %v4998, %v4999
        %v5001 = vsel %vm4691, %v4998, %v5000
        %v5002 = vsel %vm4693, %v4998, %v5001
        %v5003 = vsel %vm4682, %v4516, %v4516
        %v5004 = vsel %vm4684, %v4516, %v5003
        %v5005 = vrot.slane %v4517, 7
        %v5006 = vsel %vm4687, %v5005, %v5004
        %v5007 = vsel %vm4689, %v5005, %v5006
        %v5008 = vsel %vm4691, %v5005, %v5007
        %v5009 = vsel %vm4693, %v5005, %v5008
        %v5010 = vsel %vm4682, %v4518, %v4518
        %v5011 = vsel %vm4684, %v4518, %v5010
        %v5012 = vrot.slane %v4519, 7
        %v5013 = vsel %vm4687, %v5012, %v5011
        %v5014 = vsel %vm4689, %v5012, %v5013
        %v5015 = vsel %vm4691, %v5012, %v5014
        %v5016 = vsel %vm4693, %v5012, %v5015
        %v5017 = vsel %vm4682, %v4520, %v4520
        %v5018 = vsel %vm4684, %v4520, %v5017
        %v5019 = vrot.slane %v4521, 7
        %v5020 = vsel %vm4687, %v5019, %v5018
        %v5021 = vsel %vm4689, %v5019, %v5020
        %v5022 = vsel %vm4691, %v5019, %v5021
        %v5023 = vsel %vm4693, %v5019, %v5022
        %v5024 = vsel %vm4682, %v4522, %v4522
        %v5025 = vsel %vm4684, %v4522, %v5024
        %v5026 = vrot.slane %v4523, 7
        %v5027 = vsel %vm4687, %v5026, %v5025
        %v5028 = vsel %vm4689, %v5026, %v5027
        %v5029 = vsel %vm4691, %v5026, %v5028
        %v5030 = vsel %vm4693, %v5026, %v5029
        %v5031 = vsel %vm4682, %v4524, %v4524
        %v5032 = vsel %vm4684, %v4524, %v5031
        %v5033 = vrot.slane %v4525, 7
        %v5034 = vsel %vm4687, %v5033, %v5032
        %v5035 = vsel %vm4689, %v5033, %v5034
        %v5036 = vsel %vm4691, %v5033, %v5035
        %v5037 = vsel %vm4693, %v5033, %v5036
        %v5038 = vsel %vm4682, %v4526, %v4526
        %v5039 = vsel %vm4684, %v4526, %v5038
        %v5040 = vrot.slane %v4527, 7
        %v5041 = vsel %vm4687, %v5040, %v5039
        %v5042 = vsel %vm4689, %v5040, %v5041
        %v5043 = vsel %vm4691, %v5040, %v5042
        %v5044 = vsel %vm4693, %v5040, %v5043
        %v5045 = vsel %vm4682, %v4528, %v4528
        %v5046 = vsel %vm4684, %v4528, %v5045
        %v5047 = vrot.slane %v4529, 7
        %v5048 = vsel %vm4687, %v5047, %v5046
        %v5049 = vsel %vm4689, %v5047, %v5048
        %v5050 = vsel %vm4691, %v5047, %v5049
        %v5051 = vsel %vm4693, %v5047, %v5050
        %v5052 = vsel %vm4682, %v4530, %v4530
        %v5053 = vsel %vm4684, %v4530, %v5052
        %v5054 = vrot.slane %v4531, 7
        %v5055 = vsel %vm4687, %v5054, %v5053
        %v5056 = vsel %vm4689, %v5054, %v5055
        %v5057 = vsel %vm4691, %v5054, %v5056
        %v5058 = vsel %vm4693, %v5054, %v5057
        %v5059 = vsel %vm4682, %v4532, %v4532
        %v5060 = vsel %vm4684, %v4532, %v5059
        %v5061 = vrot.slane %v4533, 7
        %v5062 = vsel %vm4687, %v5061, %v5060
        %v5063 = vsel %vm4689, %v5061, %v5062
        %v5064 = vsel %vm4691, %v5061, %v5063
        %v5065 = vsel %vm4693, %v5061, %v5064
        %v5066 = vsel %vm4682, %v4534, %v4534
        %v5067 = vsel %vm4684, %v4534, %v5066
        %v5068 = vrot.slane %v4535, 7
        %v5069 = vsel %vm4687, %v5068, %v5067
        %v5070 = vsel %vm4689, %v5068, %v5069
        %v5071 = vsel %vm4691, %v5068, %v5070
        %v5072 = vsel %vm4693, %v5068, %v5071
        %v5073 = vsel %vm4682, %v4536, %v4536
        %v5074 = vsel %vm4684, %v4536, %v5073
        %v5075 = vrot.slane %v4537, 7
        %v5076 = vsel %vm4687, %v5075, %v5074
        %v5077 = vsel %vm4689, %v5075, %v5076
        %v5078 = vsel %vm4691, %v5075, %v5077
        %v5079 = vsel %vm4693, %v5075, %v5078
        %v5080 = vsel %vm4682, %v4538, %v4538
        %v5081 = vsel %vm4684, %v4538, %v5080
        %v5082 = vrot.slane %v4539, 7
        %v5083 = vsel %vm4687, %v5082, %v5081
        %v5084 = vsel %vm4689, %v5082, %v5083
        %v5085 = vsel %vm4691, %v5082, %v5084
        %v5086 = vsel %vm4693, %v5082, %v5085
        %v5087 = vsel %vm4682, %v4540, %v4540
        %v5088 = vsel %vm4684, %v4540, %v5087
        %v5089 = vrot.slane %v4541, 7
        %v5090 = vsel %vm4687, %v5089, %v5088
        %v5091 = vsel %vm4689, %v5089, %v5090
        %v5092 = vsel %vm4691, %v5089, %v5091
        %v5093 = vsel %vm4693, %v5089, %v5092
        %v5094 = vsel %vm4682, %v4542, %v4542
        %v5095 = vsel %vm4684, %v4542, %v5094
        %v5096 = vrot.slane %v4543, 7
        %v5097 = vsel %vm4687, %v5096, %v5095
        %v5098 = vsel %vm4689, %v5096, %v5097
        %v5099 = vsel %vm4691, %v5096, %v5098
        %v5100 = vsel %vm4693, %v5096, %v5099
        %v5101 = vsel %vm4682, %v4544, %v4544
        %v5102 = vsel %vm4684, %v4544, %v5101
        %v5103 = vrot.slane %v4545, 7
        %v5104 = vsel %vm4687, %v5103, %v5102
        %v5105 = vsel %vm4689, %v5103, %v5104
        %v5106 = vsel %vm4691, %v5103, %v5105
        %v5107 = vsel %vm4693, %v5103, %v5106
        %v5108 = vsel %vm4682, %v4546, %v4546
        %v5109 = vsel %vm4684, %v4546, %v5108
        %v5110 = vrot.slane %v4547, 7
        %v5111 = vsel %vm4687, %v5110, %v5109
        %v5112 = vsel %vm4689, %v5110, %v5111
        %v5113 = vsel %vm4691, %v5110, %v5112
        %v5114 = vsel %vm4693, %v5110, %v5113
        %v5115 = vsel %vm4682, %v4548, %v4548
        %v5116 = vsel %vm4684, %v4548, %v5115
        %v5117 = vrot.slane %v4549, 7
        %v5118 = vsel %vm4687, %v5117, %v5116
        %v5119 = vsel %vm4689, %v5117, %v5118
        %v5120 = vsel %vm4691, %v5117, %v5119
        %v5121 = vsel %vm4693, %v5117, %v5120
        %v5122 = vsel %vm4682, %v4550, %v4550
        %v5123 = vsel %vm4684, %v4550, %v5122
        %v5124 = vrot.slane %v4551, 7
        %v5125 = vsel %vm4687, %v5124, %v5123
        %v5126 = vsel %vm4689, %v5124, %v5125
        %v5127 = vsel %vm4691, %v5124, %v5126
        %v5128 = vsel %vm4693, %v5124, %v5127
        %v5129 = vsel %vm4682, %v4552, %v4552
        %v5130 = vsel %vm4684, %v4552, %v5129
        %v5131 = vrot.slane %v4553, 7
        %v5132 = vsel %vm4687, %v5131, %v5130
        %v5133 = vsel %vm4689, %v5131, %v5132
        %v5134 = vsel %vm4691, %v5131, %v5133
        %v5135 = vsel %vm4693, %v5131, %v5134
        %v5200 = vcombine.low %v4694, %v4750
        %v5202 = vunpack.c.l.s4 1934713408
        %v5203 = vunpack.c.0.s8 %v5202
        %v5204 = vlaneseq
        %v5205 = vshrl.u32 %v5204, 7
        %v5206 = vsub.s32 %v5203, %v5205
        %v5207 = vrot.slane %v5200, %v5206
        %v5208 = vcombine.high %v5207, 0.0
        %v5209 = vcombine.low %v4806, %v4862
        %v5211 = vunpack.c.l.s4 1934713408
        %v5212 = vunpack.c.0.s8 %v5211
        %v5213 = vlaneseq
        %v5214 = vshrl.u32 %v5213, 7
        %v5215 = vsub.s32 %v5212, %v5214
        %v5216 = vrot.slane %v5209, %v5215
        %v5217 = vcombine.high %v5216, 0.0
        %v5218 = vcombine.low %v4918, %v4974
        %v5220 = vunpack.c.l.s4 1934713408
        %v5221 = vunpack.c.0.s8 %v5220
        %v5222 = vlaneseq
        %v5223 = vshrl.u32 %v5222, 7
        %v5224 = vsub.s32 %v5221, %v5223
        %v5225 = vrot.slane %v5218, %v5224
        %v5226 = vcombine.high %v5225, 0.0
        %v5227 = vcombine.low %v5030, %v5086
        %v5229 = vunpack.c.l.s4 1934713408
        %v5230 = vunpack.c.0.s8 %v5229
        %v5231 = vlaneseq
        %v5232 = vshrl.u32 %v5231, 7
        %v5233 = vsub.s32 %v5230, %v5232
        %v5234 = vrot.slane %v5227, %v5233
        %v5235 = vcombine.high %v5234, 0.0
        %v5236 = vcombine.low %v4701, %v4757
        %v5238 = vunpack.c.l.s4 1934713408
        %v5239 = vunpack.c.0.s8 %v5238
        %v5240 = vlaneseq
        %v5241 = vshrl.u32 %v5240, 7
        %v5242 = vsub.s32 %v5239, %v5241
        %v5243 = vrot.slane %v5236, %v5242
        %v5244 = vcombine.high %v5243, 0.0
        %v5245 = vcombine.low %v4813, %v4869
        %v5247 = vunpack.c.l.s4 1934713408
        %v5248 = vunpack.c.0.s8 %v5247
        %v5249 = vlaneseq
        %v5250 = vshrl.u32 %v5249, 7
        %v5251 = vsub.s32 %v5248, %v5250
        %v5252 = vrot.slane %v5245, %v5251
        %v5253 = vcombine.high %v5252, 0.0
        %v5254 = vcombine.low %v4925, %v4981
        %v5256 = vunpack.c.l.s4 1934713408
        %v5257 = vunpack.c.0.s8 %v5256
        %v5258 = vlaneseq
        %v5259 = vshrl.u32 %v5258, 7
        %v5260 = vsub.s32 %v5257, %v5259
        %v5261 = vrot.slane %v5254, %v5260
        %v5262 = vcombine.high %v5261, 0.0
        %v5263 = vcombine.low %v5037, %v5093
        %v5265 = vunpack.c.l.s4 1934713408
        %v5266 = vunpack.c.0.s8 %v5265
        %v5267 = vlaneseq
        %v5268 = vshrl.u32 %v5267, 7
        %v5269 = vsub.s32 %v5266, %v5268
        %v5270 = vrot.slane %v5263, %v5269
        %v5271 = vcombine.high %v5270, 0.0
        %v5272 = vcombine.low %v4708, %v4764
        %v5274 = vunpack.c.l.s4 1934713408
        %v5275 = vunpack.c.0.s8 %v5274
        %v5276 = vlaneseq
        %v5277 = vshrl.u32 %v5276, 7
        %v5278 = vsub.s32 %v5275, %v5277
        %v5279 = vrot.slane %v5272, %v5278
        %v5280 = vcombine.high %v5279, 0.0
        %v5281 = vcombine.low %v4820, %v4876
        %v5283 = vunpack.c.l.s4 1934713408
        %v5284 = vunpack.c.0.s8 %v5283
        %v5285 = vlaneseq
        %v5286 = vshrl.u32 %v5285, 7
        %v5287 = vsub.s32 %v5284, %v5286
        %v5288 = vrot.slane %v5281, %v5287
        %v5289 = vcombine.high %v5288, 0.0
        %v5290 = vcombine.low %v4932, %v4988
        %v5292 = vunpack.c.l.s4 1934713408
        %v5293 = vunpack.c.0.s8 %v5292
        %v5294 = vlaneseq
        %v5295 = vshrl.u32 %v5294, 7
        %v5296 = vsub.s32 %v5293, %v5295
        %v5297 = vrot.slane %v5290, %v5296
        %v5298 = vcombine.high %v5297, 0.0
        %v5299 = vcombine.low %v5044, %v5100
        %v5301 = vunpack.c.l.s4 1934713408
        %v5302 = vunpack.c.0.s8 %v5301
        %v5303 = vlaneseq
        %v5304 = vshrl.u32 %v5303, 7
        %v5305 = vsub.s32 %v5302, %v5304
        %v5306 = vrot.slane %v5299, %v5305
        %v5307 = vcombine.high %v5306, 0.0
        %v5308 = vcombine.low %v4715, %v4771
        %v5310 = vunpack.c.l.s4 1934713408
        %v5311 = vunpack.c.0.s8 %v5310
        %v5312 = vlaneseq
        %v5313 = vshrl.u32 %v5312, 7
        %v5314 = vsub.s32 %v5311, %v5313
        %v5315 = vrot.slane %v5308, %v5314
        %v5316 = vcombine.high %v5315, 0.0
        %v5317 = vcombine.low %v4827, %v4883
        %v5319 = vunpack.c.l.s4 1934713408
        %v5320 = vunpack.c.0.s8 %v5319
        %v5321 = vlaneseq
        %v5322 = vshrl.u32 %v5321, 7
        %v5323 = vsub.s32 %v5320, %v5322
        %v5324 = vrot.slane %v5317, %v5323
        %v5325 = vcombine.high %v5324, 0.0
        %v5326 = vcombine.low %v4939, %v4995
        %v5328 = vunpack.c.l.s4 1934713408
        %v5329 = vunpack.c.0.s8 %v5328
        %v5330 = vlaneseq
        %v5331 = vshrl.u32 %v5330, 7
        %v5332 = vsub.s32 %v5329, %v5331
        %v5333 = vrot.slane %v5326, %v5332
        %v5334 = vcombine.high %v5333, 0.0
        %v5335 = vcombine.low %v5051, %v5107
        %v5337 = vunpack.c.l.s4 1934713408
        %v5338 = vunpack.c.0.s8 %v5337
        %v5339 = vlaneseq
        %v5340 = vshrl.u32 %v5339, 7
        %v5341 = vsub.s32 %v5338, %v5340
        %v5342 = vrot.slane %v5335, %v5341
        %v5343 = vcombine.high %v5342, 0.0
        %v5344 = vcombine.low %v4722, %v4778
        %v5346 = vunpack.c.l.s4 1934713408
        %v5347 = vunpack.c.0.s8 %v5346
        %v5348 = vlaneseq
        %v5349 = vshrl.u32 %v5348, 7
        %v5350 = vsub.s32 %v5347, %v5349
        %v5351 = vrot.slane %v5344, %v5350
        %v5352 = vcombine.high %v5351, 0.0
        %v5353 = vcombine.low %v4834, %v4890
        %v5355 = vunpack.c.l.s4 1934713408
        %v5356 = vunpack.c.0.s8 %v5355
        %v5357 = vlaneseq
        %v5358 = vshrl.u32 %v5357, 7
        %v5359 = vsub.s32 %v5356, %v5358
        %v5360 = vrot.slane %v5353, %v5359
        %v5361 = vcombine.high %v5360, 0.0
        %v5362 = vcombine.low %v4946, %v5002
        %v5364 = vunpack.c.l.s4 1934713408
        %v5365 = vunpack.c.0.s8 %v5364
        %v5366 = vlaneseq
        %v5367 = vshrl.u32 %v5366, 7
        %v5368 = vsub.s32 %v5365, %v5367
        %v5369 = vrot.slane %v5362, %v5368
        %v5370 = vcombine.high %v5369, 0.0
        %v5371 = vcombine.low %v5058, %v5114
        %v5373 = vunpack.c.l.s4 1934713408
        %v5374 = vunpack.c.0.s8 %v5373
        %v5375 = vlaneseq
        %v5376 = vshrl.u32 %v5375, 7
        %v5377 = vsub.s32 %v5374, %v5376
        %v5378 = vrot.slane %v5371, %v5377
        %v5379 = vcombine.high %v5378, 0.0
        %v5380 = vcombine.low %v4729, %v4785
        %v5382 = vunpack.c.l.s4 1934713408
        %v5383 = vunpack.c.0.s8 %v5382
        %v5384 = vlaneseq
        %v5385 = vshrl.u32 %v5384, 7
        %v5386 = vsub.s32 %v5383, %v5385
        %v5387 = vrot.slane %v5380, %v5386
        %v5388 = vcombine.high %v5387, 0.0
        %v5389 = vcombine.low %v4841, %v4897
        %v5391 = vunpack.c.l.s4 1934713408
        %v5392 = vunpack.c.0.s8 %v5391
        %v5393 = vlaneseq
        %v5394 = vshrl.u32 %v5393, 7
        %v5395 = vsub.s32 %v5392, %v5394
        %v5396 = vrot.slane %v5389, %v5395
        %v5397 = vcombine.high %v5396, 0.0
        %v5398 = vcombine.low %v4953, %v5009
        %v5400 = vunpack.c.l.s4 1934713408
        %v5401 = vunpack.c.0.s8 %v5400
        %v5402 = vlaneseq
        %v5403 = vshrl.u32 %v5402, 7
        %v5404 = vsub.s32 %v5401, %v5403
        %v5405 = vrot.slane %v5398, %v5404
        %v5406 = vcombine.high %v5405, 0.0
        %v5407 = vcombine.low %v5065, %v5121
        %v5409 = vunpack.c.l.s4 1934713408
        %v5410 = vunpack.c.0.s8 %v5409
        %v5411 = vlaneseq
        %v5412 = vshrl.u32 %v5411, 7
        %v5413 = vsub.s32 %v5410, %v5412
        %v5414 = vrot.slane %v5407, %v5413
        %v5415 = vcombine.high %v5414, 0.0
        %v5416 = vcombine.low %v4736, %v4792
        %v5418 = vunpack.c.l.s4 1934713408
        %v5419 = vunpack.c.0.s8 %v5418
        %v5420 = vlaneseq
        %v5421 = vshrl.u32 %v5420, 7
        %v5422 = vsub.s32 %v5419, %v5421
        %v5423 = vrot.slane %v5416, %v5422
        %v5424 = vcombine.high %v5423, 0.0
        %v5425 = vcombine.low %v4848, %v4904
        %v5427 = vunpack.c.l.s4 1934713408
        %v5428 = vunpack.c.0.s8 %v5427
        %v5429 = vlaneseq
        %v5430 = vshrl.u32 %v5429, 7
        %v5431 = vsub.s32 %v5428, %v5430
        %v5432 = vrot.slane %v5425, %v5431
        %v5433 = vcombine.high %v5432, 0.0
        %v5434 = vcombine.low %v4960, %v5016
        %v5436 = vunpack.c.l.s4 1934713408
        %v5437 = vunpack.c.0.s8 %v5436
        %v5438 = vlaneseq
        %v5439 = vshrl.u32 %v5438, 7
        %v5440 = vsub.s32 %v5437, %v5439
        %v5441 = vrot.slane %v5434, %v5440
        %v5442 = vcombine.high %v5441, 0.0
        %v5443 = vcombine.low %v5072, %v5128
        %v5445 = vunpack.c.l.s4 1934713408
        %v5446 = vunpack.c.0.s8 %v5445
        %v5447 = vlaneseq
        %v5448 = vshrl.u32 %v5447, 7
        %v5449 = vsub.s32 %v5446, %v5448
        %v5450 = vrot.slane %v5443, %v5449
        %v5451 = vcombine.high %v5450, 0.0
        %v5452 = vcombine.low %v4743, %v4799
        %v5454 = vunpack.c.l.s4 1934713408
        %v5455 = vunpack.c.0.s8 %v5454
        %v5456 = vlaneseq
        %v5457 = vshrl.u32 %v5456, 7
        %v5458 = vsub.s32 %v5455, %v5457
        %v5459 = vrot.slane %v5452, %v5458
        %v5460 = vcombine.high %v5459, 0.0
        %v5461 = vcombine.low %v4855, %v4911
        %v5463 = vunpack.c.l.s4 1934713408
        %v5464 = vunpack.c.0.s8 %v5463
        %v5465 = vlaneseq
        %v5466 = vshrl.u32 %v5465, 7
        %v5467 = vsub.s32 %v5464, %v5466
        %v5468 = vrot.slane %v5461, %v5467
        %v5469 = vcombine.high %v5468, 0.0
        %v5470 = vcombine.low %v4967, %v5023
        %v5472 = vunpack.c.l.s4 1934713408
        %v5473 = vunpack.c.0.s8 %v5472
        %v5474 = vlaneseq
        %v5475 = vshrl.u32 %v5474, 7
        %v5476 = vsub.s32 %v5473, %v5475
        %v5477 = vrot.slane %v5470, %v5476
        %v5478 = vcombine.high %v5477, 0.0
        %v5479 = vcombine.low %v5079, %v5135
        %v5481 = vunpack.c.l.s4 1934713408
        %v5482 = vunpack.c.0.s8 %v5481
        %v5483 = vlaneseq
        %v5484 = vshrl.u32 %v5483, 7
        %v5485 = vsub.s32 %v5482, %v5484
        %v5486 = vrot.slane %v5479, %v5485
        %v5487 = vcombine.high %v5486, 0.0
        %v5492 = vcombine.low %v5207, %v5216
        %v5493 = vcombine.low %v5225, %v5234
        %v5495 = vunpack.c.l.s4 1983009808
        %v5496 = vunpack.c.0.s8 %v5495
        %v5497 = vlaneseq
        %v5498 = vshrl.u32 %v5497, 7
        %v5499 = vsub.s32 %v5496, %v5498
        %v5500 = vrot.slane %v5492, %v5499
        %v5502 = vunpack.c.l.s4 1983009808
        %v5503 = vunpack.c.0.s8 %v5502
        %v5504 = vlaneseq
        %v5505 = vshrl.u32 %v5504, 7
        %v5506 = vsub.s32 %v5503, %v5505
        %v5507 = vrot.slane %v5493, %v5506
        %v5508 = vcombine.low %v5500, %v5507
        %v5514 = vcombine.low %v5208, %v5217
        %v5515 = vcombine.low %v5226, %v5235
        %v5517 = vunpack.c.l.s4 1983009808
        %v5518 = vunpack.c.0.s8 %v5517
        %v5519 = vlaneseq
        %v5520 = vshrl.u32 %v5519, 7
        %v5521 = vsub.s32 %v5518, %v5520
        %v5522 = vrot.slane %v5514, %v5521
        %v5524 = vunpack.c.l.s4 1983009808
        %v5525 = vunpack.c.0.s8 %v5524
        %v5526 = vlaneseq
        %v5527 = vshrl.u32 %v5526, 7
        %v5528 = vsub.s32 %v5525, %v5527
        %v5529 = vrot.slane %v5515, %v5528
        %v5530 = vcombine.low %v5522, %v5529
        %5531 = vrot.lane.b32.xlu0 %v5530, 16
        %v5532 = vpop.permute.xlu0 %5531
        %v5538 = vcombine.low %v5243, %v5252
        %v5539 = vcombine.low %v5261, %v5270
        %v5541 = vunpack.c.l.s4 1983009808
        %v5542 = vunpack.c.0.s8 %v5541
        %v5543 = vlaneseq
        %v5544 = vshrl.u32 %v5543, 7
        %v5545 = vsub.s32 %v5542, %v5544
        %v5546 = vrot.slane %v5538, %v5545
        %v5548 = vunpack.c.l.s4 1983009808
        %v5549 = vunpack.c.0.s8 %v5548
        %v5550 = vlaneseq
        %v5551 = vshrl.u32 %v5550, 7
        %v5552 = vsub.s32 %v5549, %v5551
        %v5553 = vrot.slane %v5539, %v5552
        %v5554 = vcombine.low %v5546, %v5553
        %5555 = vrot.lane.b32.xlu0 %v5554, 32
        %v5556 = vpop.permute.xlu0 %5555
        %v5562 = vcombine.low %v5244, %v5253
        %v5563 = vcombine.low %v5262, %v5271
        %v5565 = vunpack.c.l.s4 1983009808
        %v5566 = vunpack.c.0.s8 %v5565
        %v5567 = vlaneseq
        %v5568 = vshrl.u32 %v5567, 7
        %v5569 = vsub.s32 %v5566, %v5568
        %v5570 = vrot.slane %v5562, %v5569
        %v5572 = vunpack.c.l.s4 1983009808
        %v5573 = vunpack.c.0.s8 %v5572
        %v5574 = vlaneseq
        %v5575 = vshrl.u32 %v5574, 7
        %v5576 = vsub.s32 %v5573, %v5575
        %v5577 = vrot.slane %v5563, %v5576
        %v5578 = vcombine.low %v5570, %v5577
        %5579 = vrot.lane.b32.xlu0 %v5578, 48
        %v5580 = vpop.permute.xlu0 %5579
        %v5586 = vcombine.low %v5279, %v5288
        %v5587 = vcombine.low %v5297, %v5306
        %v5589 = vunpack.c.l.s4 1983009808
        %v5590 = vunpack.c.0.s8 %v5589
        %v5591 = vlaneseq
        %v5592 = vshrl.u32 %v5591, 7
        %v5593 = vsub.s32 %v5590, %v5592
        %v5594 = vrot.slane %v5586, %v5593
        %v5596 = vunpack.c.l.s4 1983009808
        %v5597 = vunpack.c.0.s8 %v5596
        %v5598 = vlaneseq
        %v5599 = vshrl.u32 %v5598, 7
        %v5600 = vsub.s32 %v5597, %v5599
        %v5601 = vrot.slane %v5587, %v5600
        %v5602 = vcombine.low %v5594, %v5601
        %5603 = vrot.lane.b32.xlu0 %v5602, 64
        %v5604 = vpop.permute.xlu0 %5603
        %v5610 = vcombine.low %v5280, %v5289
        %v5611 = vcombine.low %v5298, %v5307
        %v5613 = vunpack.c.l.s4 1983009808
        %v5614 = vunpack.c.0.s8 %v5613
        %v5615 = vlaneseq
        %v5616 = vshrl.u32 %v5615, 7
        %v5617 = vsub.s32 %v5614, %v5616
        %v5618 = vrot.slane %v5610, %v5617
        %v5620 = vunpack.c.l.s4 1983009808
        %v5621 = vunpack.c.0.s8 %v5620
        %v5622 = vlaneseq
        %v5623 = vshrl.u32 %v5622, 7
        %v5624 = vsub.s32 %v5621, %v5623
        %v5625 = vrot.slane %v5611, %v5624
        %v5626 = vcombine.low %v5618, %v5625
        %5627 = vrot.lane.b32.xlu0 %v5626, 80
        %v5628 = vpop.permute.xlu0 %5627
        %v5634 = vcombine.low %v5315, %v5324
        %v5635 = vcombine.low %v5333, %v5342
        %v5637 = vunpack.c.l.s4 1983009808
        %v5638 = vunpack.c.0.s8 %v5637
        %v5639 = vlaneseq
        %v5640 = vshrl.u32 %v5639, 7
        %v5641 = vsub.s32 %v5638, %v5640
        %v5642 = vrot.slane %v5634, %v5641
        %v5644 = vunpack.c.l.s4 1983009808
        %v5645 = vunpack.c.0.s8 %v5644
        %v5646 = vlaneseq
        %v5647 = vshrl.u32 %v5646, 7
        %v5648 = vsub.s32 %v5645, %v5647
        %v5649 = vrot.slane %v5635, %v5648
        %v5650 = vcombine.low %v5642, %v5649
        %5651 = vrot.lane.b32.xlu0 %v5650, 96
        %v5652 = vpop.permute.xlu0 %5651
        %v5658 = vcombine.low %v5316, %v5325
        %v5659 = vcombine.low %v5334, %v5343
        %v5661 = vunpack.c.l.s4 1983009808
        %v5662 = vunpack.c.0.s8 %v5661
        %v5663 = vlaneseq
        %v5664 = vshrl.u32 %v5663, 7
        %v5665 = vsub.s32 %v5662, %v5664
        %v5666 = vrot.slane %v5658, %v5665
        %v5668 = vunpack.c.l.s4 1983009808
        %v5669 = vunpack.c.0.s8 %v5668
        %v5670 = vlaneseq
        %v5671 = vshrl.u32 %v5670, 7
        %v5672 = vsub.s32 %v5669, %v5671
        %v5673 = vrot.slane %v5659, %v5672
        %v5674 = vcombine.low %v5666, %v5673
        %5675 = vrot.lane.b32.xlu0 %v5674, 112
        %v5676 = vpop.permute.xlu0 %5675
        %v5682 = vcombine.low %v5351, %v5360
        %v5683 = vcombine.low %v5369, %v5378
        %v5685 = vunpack.c.l.s4 1983009808
        %v5686 = vunpack.c.0.s8 %v5685
        %v5687 = vlaneseq
        %v5688 = vshrl.u32 %v5687, 7
        %v5689 = vsub.s32 %v5686, %v5688
        %v5690 = vrot.slane %v5682, %v5689
        %v5692 = vunpack.c.l.s4 1983009808
        %v5693 = vunpack.c.0.s8 %v5692
        %v5694 = vlaneseq
        %v5695 = vshrl.u32 %v5694, 7
        %v5696 = vsub.s32 %v5693, %v5695
        %v5697 = vrot.slane %v5683, %v5696
        %v5698 = vcombine.low %v5690, %v5697
        %v5704 = vcombine.low %v5352, %v5361
        %v5705 = vcombine.low %v5370, %v5379
        %v5707 = vunpack.c.l.s4 1983009808
        %v5708 = vunpack.c.0.s8 %v5707
        %v5709 = vlaneseq
        %v5710 = vshrl.u32 %v5709, 7
        %v5711 = vsub.s32 %v5708, %v5710
        %v5712 = vrot.slane %v5704, %v5711
        %v5714 = vunpack.c.l.s4 1983009808
        %v5715 = vunpack.c.0.s8 %v5714
        %v5716 = vlaneseq
        %v5717 = vshrl.u32 %v5716, 7
        %v5718 = vsub.s32 %v5715, %v5717
        %v5719 = vrot.slane %v5705, %v5718
        %v5720 = vcombine.low %v5712, %v5719
        %5721 = vrot.lane.b32.xlu0 %v5720, 16
        %v5722 = vpop.permute.xlu0 %5721
        %v5728 = vcombine.low %v5387, %v5396
        %v5729 = vcombine.low %v5405, %v5414
        %v5731 = vunpack.c.l.s4 1983009808
        %v5732 = vunpack.c.0.s8 %v5731
        %v5733 = vlaneseq
        %v5734 = vshrl.u32 %v5733, 7
        %v5735 = vsub.s32 %v5732, %v5734
        %v5736 = vrot.slane %v5728, %v5735
        %v5738 = vunpack.c.l.s4 1983009808
        %v5739 = vunpack.c.0.s8 %v5738
        %v5740 = vlaneseq
        %v5741 = vshrl.u32 %v5740, 7
        %v5742 = vsub.s32 %v5739, %v5741
        %v5743 = vrot.slane %v5729, %v5742
        %v5744 = vcombine.low %v5736, %v5743
        %5745 = vrot.lane.b32.xlu0 %v5744, 32
        %v5746 = vpop.permute.xlu0 %5745
        %v5752 = vcombine.low %v5388, %v5397
        %v5753 = vcombine.low %v5406, %v5415
        %v5755 = vunpack.c.l.s4 1983009808
        %v5756 = vunpack.c.0.s8 %v5755
        %v5757 = vlaneseq
        %v5758 = vshrl.u32 %v5757, 7
        %v5759 = vsub.s32 %v5756, %v5758
        %v5760 = vrot.slane %v5752, %v5759
        %v5762 = vunpack.c.l.s4 1983009808
        %v5763 = vunpack.c.0.s8 %v5762
        %v5764 = vlaneseq
        %v5765 = vshrl.u32 %v5764, 7
        %v5766 = vsub.s32 %v5763, %v5765
        %v5767 = vrot.slane %v5753, %v5766
        %v5768 = vcombine.low %v5760, %v5767
        %5769 = vrot.lane.b32.xlu0 %v5768, 48
        %v5770 = vpop.permute.xlu0 %5769
        %v5776 = vcombine.low %v5423, %v5432
        %v5777 = vcombine.low %v5441, %v5450
        %v5779 = vunpack.c.l.s4 1983009808
        %v5780 = vunpack.c.0.s8 %v5779
        %v5781 = vlaneseq
        %v5782 = vshrl.u32 %v5781, 7
        %v5783 = vsub.s32 %v5780, %v5782
        %v5784 = vrot.slane %v5776, %v5783
        %v5786 = vunpack.c.l.s4 1983009808
        %v5787 = vunpack.c.0.s8 %v5786
        %v5788 = vlaneseq
        %v5789 = vshrl.u32 %v5788, 7
        %v5790 = vsub.s32 %v5787, %v5789
        %v5791 = vrot.slane %v5777, %v5790
        %v5792 = vcombine.low %v5784, %v5791
        %5793 = vrot.lane.b32.xlu0 %v5792, 64
        %v5794 = vpop.permute.xlu0 %5793
        %v5800 = vcombine.low %v5424, %v5433
        %v5801 = vcombine.low %v5442, %v5451
        %v5803 = vunpack.c.l.s4 1983009808
        %v5804 = vunpack.c.0.s8 %v5803
        %v5805 = vlaneseq
        %v5806 = vshrl.u32 %v5805, 7
        %v5807 = vsub.s32 %v5804, %v5806
        %v5808 = vrot.slane %v5800, %v5807
        %v5810 = vunpack.c.l.s4 1983009808
        %v5811 = vunpack.c.0.s8 %v5810
        %v5812 = vlaneseq
        %v5813 = vshrl.u32 %v5812, 7
        %v5814 = vsub.s32 %v5811, %v5813
        %v5815 = vrot.slane %v5801, %v5814
        %v5816 = vcombine.low %v5808, %v5815
        %5817 = vrot.lane.b32.xlu0 %v5816, 80
        %v5818 = vpop.permute.xlu0 %5817
        %v5824 = vcombine.low %v5459, %v5468
        %v5825 = vcombine.low %v5477, %v5486
        %v5827 = vunpack.c.l.s4 1983009808
        %v5828 = vunpack.c.0.s8 %v5827
        %v5829 = vlaneseq
        %v5830 = vshrl.u32 %v5829, 7
        %v5831 = vsub.s32 %v5828, %v5830
        %v5832 = vrot.slane %v5824, %v5831
        %v5834 = vunpack.c.l.s4 1983009808
        %v5835 = vunpack.c.0.s8 %v5834
        %v5836 = vlaneseq
        %v5837 = vshrl.u32 %v5836, 7
        %v5838 = vsub.s32 %v5835, %v5837
        %v5839 = vrot.slane %v5825, %v5838
        %v5840 = vcombine.low %v5832, %v5839
        %5841 = vrot.lane.b32.xlu0 %v5840, 96
        %v5842 = vpop.permute.xlu0 %5841
        %v5848 = vcombine.low %v5460, %v5469
        %v5849 = vcombine.low %v5478, %v5487
        %v5851 = vunpack.c.l.s4 1983009808
        %v5852 = vunpack.c.0.s8 %v5851
        %v5853 = vlaneseq
        %v5854 = vshrl.u32 %v5853, 7
        %v5855 = vsub.s32 %v5852, %v5854
        %v5856 = vrot.slane %v5848, %v5855
        %v5858 = vunpack.c.l.s4 1983009808
        %v5859 = vunpack.c.0.s8 %v5858
        %v5860 = vlaneseq
        %v5861 = vshrl.u32 %v5860, 7
        %v5862 = vsub.s32 %v5859, %v5861
        %v5863 = vrot.slane %v5849, %v5862
        %v5864 = vcombine.low %v5856, %v5863
        %5865 = vrot.lane.b32.xlu0 %v5864, 112
        %v5866 = vpop.permute.xlu0 %5865
        %vm5868 = vcmask 130048
        %v5869 = vsel %vm5868, %v5508, %v5532
        %vm5870 = vcmask 261120
        %v5871 = vsel %vm5870, %v5869, %v5556
        %vm5872 = vcmask 392192
        %v5873 = vsel %vm5872, %v5871, %v5580
        %vm5874 = vcmask 523264
        %v5875 = vsel %vm5874, %v5873, %v5604
        %vm5876 = vcmask 654336
        %v5877 = vsel %vm5876, %v5875, %v5628
        %vm5878 = vcmask 785408
        %v5879 = vsel %vm5878, %v5877, %v5652
        %vm5880 = vcmask 916480
        %v5881 = vsel %vm5880, %v5879, %v5676
        %v5882 = vsel %vm5868, %v5698, %v5722
        %v5883 = vsel %vm5870, %v5882, %v5746
        %v5884 = vsel %vm5872, %v5883, %v5770
        %v5885 = vsel %vm5874, %v5884, %v5794
        %v5886 = vsel %vm5876, %v5885, %v5818
        %v5887 = vsel %vm5878, %v5886, %v5842
        %v5888 = vsel %vm5880, %v5887, %v5866
        %5889 = vst [vmem:[%s229] sm:$0xff] %v5881
        %5890 = vst [vmem:[%s229 + $0x8] sm:$0xff] %v5888
        %s5891 = sand.u32 %s111, 1
        %s5892 = scalar_lea.sflag [#allocation4], %s5891
        %s5893 = sand.u32 %s111, 1
        %s5894 = smul.addr %s5893, 16
        %s5895 = scalar_lea.vmem [#allocation8], %s5894
        // Predicated region
        $region45: #{simple_cnn_forward.3} parent=31 // pred_check
          %p5896 = pneg %p121
        $region46: #{simple_cnn_forward.3} parent=31 // pred_check_branch
          %5898 = sbr.rel (%p5896) target = $region48
        $region47: #{simple_cnn_forward.3} parent=31 // pred_region
          %s5900 = ssub.s32 256, 256
          %5901 = vsyncadd %s5892, %s5900
          %s5902 = smul.addr %s26, 2
          %s5903 = smul.addr %s25, 4
          %s5904 = sadd.s32 %s5902, %s5903
          %s5905 = smul.addr %s5904, 128
          %s5906 = scalar_lea.hbm %s3, %s5905
          %s5908 = sshll.u32 %s5895, 4
          %s5909 = int_to_ptr.vmem [resolvable:$true] %s5908
          %5911 = dma.vmem_to_hbm [thread:$0]  %s5909, 256, %s5906, %s5892
        $region48: #{simple_cnn_forward.3} parent=31 // pred_fallthru
          _
      $region32: #{simple_cnn_forward.3} parent=5 // pred_fallthru
        _
      %p5912 = scmp.le.s32.totalorder 2, %s16
      // Predicated region
      $region49: #{simple_cnn_forward.3} parent=5 // pred_check
        %p5913 = pneg %p5912
      $region50: #{simple_cnn_forward.3} parent=5 // pred_check_branch
        %5915 = sbr.rel (%p5913) target = $region52
      $region51: #{simple_cnn_forward.3} parent=5 // pred_region
        %s5916 = ssub.s32 %s16, 2
        // Predicated region
        $region53: #{simple_cnn_forward.3} parent=51 // pred_check
          %p5917 = pneg %p127
        $region54: #{simple_cnn_forward.3} parent=51 // pred_check_branch
          %5919 = sbr.rel (%p5917) target = $region56
        $region55: #{simple_cnn_forward.3} parent=51 // pred_region
          %s5920 = sand.u32 %s112, 1
          %s5921 = scalar_lea.sflag [#allocation4], %s5920
          %s5922 = sand.u32 %s112, 1
          %s5923 = smul.addr %s5922, 16
          %s5924 = scalar_lea.vmem [#allocation8], %s5923
          %5925 = dma.done %s5921, 256
        $region56: #{simple_cnn_forward.3} parent=51 // pred_fallthru
          _
      $region52: #{simple_cnn_forward.3} parent=5 // pred_fallthru
        _
    $region6: #{simple_cnn_forward.3} parent=1 // loop_footer
      %s20 = sadd.s32 1, %s16
    $region7: #{simple_cnn_forward.3} parent=1 // loop_footer_branch
      %15 = sbr.rel target = $region3
    $region8: #{simple_cnn_forward.3} parent=1 // loop_exit
      _
    %5926 = vsyncpa [#allocation3], 1
    %s5927 = scalar_lea.sflag [#allocation3], 1
    %5928 = vsyncpa %s5927, 1
    %5929 = vsyncpa [#allocation6], 1
    %5930 = vsyncpa [#allocation4], 1
    %s5931 = scalar_lea.sflag [#allocation4], 1
    %5932 = vsyncpa %s5931, 1

// kernel: simple_cnn_forward.4
$region0: #{simple_cnn_forward.4}
  #allocation0 [shape = 'u32[]', space=smem, size = 0x4, offset = 0x4, fixed_abs, tag = 'smem constant byte address 0x4 - core index']
  #allocation1 [shape = 'u32[144,128]{1,0:T(1,128)}', space=vmem, size = 0x12000, scoped, tag = 'internal scratch']
  %s0 = inlined_call_operand.hbm [shape: f32[2,18,18,16], index: 0, kind: input, shape index: {}]
  %s1 = inlined_call_operand.hbm [shape: bf16[144,32], index: 1, kind: input, shape index: {}]
  %s2 = inlined_call_operand.hbm [shape: f32[1,32], index: 2, kind: input, shape index: {}]
  %s3 = inlined_call_operand.hbm [shape: f32[2,8,256], index: 3, kind: output, shape index: {}]
  %s4 = sld [smem:[#allocation0]]
  $region57: #{simple_cnn_forward.4} parent=0
    _
  %s6 = ssub.s32 1, %s4
  %s7 = scalar_select 0, %s6, %s4
  $region1: #{simple_cnn_forward.4} parent=0
    #allocation2 [shape = 'u8[442368]{0}', space=vmem, size = 0x6c000, scoped, tag = 'input window, operand 0']
    #allocation3 [shape = 's32[2]{0}', space=sflag, size = 0x8, scoped, tag = 'scoped memory for simple_cnn_forward.4']
    #allocation4 [shape = 's32[2]{0}', space=sflag, size = 0x8, scoped, tag = 'scoped memory for simple_cnn_forward.4']
    #allocation5 [shape = 'u8[36864]{0}', space=vmem, size = 0x9000, scoped, tag = 'input window, operand 1, single buffered']
    #allocation6 [shape = 's32[1]{0}', space=sflag, size = 0x4, scoped, tag = 'scoped memory for simple_cnn_forward.4']
    #allocation7 [shape = 'u8[512]{0}', space=vmem, size = 0x400, scoped, tag = 'input window, operand 2, single buffered']
    #allocation8 [shape = 'u8[16384]{0}', space=vmem, size = 0x4000, scoped, tag = 'output window, operand 0']
    %8 = vsyncpa [#allocation3], 0
    %s9 = scalar_lea.sflag [#allocation3], 1
    %10 = vsyncpa %s9, 0
    %11 = vsyncpa [#allocation6], 0
    %12 = vsyncpa [#allocation4], 0
    %s13 = scalar_lea.sflag [#allocation4], 1
    %14 = vsyncpa %s13, 0
    loop: start=0, step=1, limit=4
    $region2: #{simple_cnn_forward.4} parent=1 // loop_pre_header
      _
    $region3: #{simple_cnn_forward.4} parent=1 // loop_header
      %s16 = sphi 0, %s20
      %p17 = scmp.ge.s32.totalorder %s16, 4
      %s23 = sphi 0, %s35
      %s24 = sphi 0, %s31
      %s25 = sphi 0, %s23
      %s26 = sphi 0, %s24
      %s27 = sphi 0, %s25
      %s28 = sphi 0, %s26
      %s38 = sphi 0, %s40
      %s41 = sphi 0, %s38
      %s42 = sphi 0, %s41
      %s58 = sphi 0, %s42
      %s62 = sphi 0, %s62
      %s64 = sphi 0, %s62
      %s65 = sphi 0, %s64
      %s79 = sphi 0, %s65
      %s83 = sphi 0, %s83
      %s85 = sphi 0, %s83
      %s86 = sphi 0, %s85
      %s100 = sphi 0, %s86
      %s108 = sphi 0, %s110
      %s111 = sphi 0, %s108
      %s112 = sphi 0, %s111
      %s128 = sphi 0, %s112
    $region4: #{simple_cnn_forward.4} parent=1 // loop_header_branch
      %19 = sbr.rel (%p17) target = $region8
    $region5: #{simple_cnn_forward.4} parent=1 // loop_body
      %s21 = ssub.s32 %s16, 1
      %s22 = ssub.s32 %s16, 2
      %s29 = sadd.s32 1, %s24
      %p30 = scmp.ge.s32.totalorder %s29, 1
      %s31 = scalar_select %p30, 0, %s29
      %s32 = sadd.s32 1, %s23
      %s33 = scalar_select %p30, %s32, %s23
      %p34 = scmp.ge.s32.totalorder %s33, 2
      %s35 = scalar_select %p34, 0, %s33
      %s36 = ssub.s32 %s23, %s35
      %p37 = scmp.eq.s32.totalorder %s36, 0
      %s39 = sadd.s32 %s38, 1
      %s40 = scalar_select %p37, %s38, %s39
      %p43 = pneg %p37
      %p44 = scmp.eq.s32.totalorder %s16, 1
      %p45 = por %p43, %p44
      %p46 = scmp.ne.s32.totalorder %s38, %s41
      %p47 = scmp.eq.s32.totalorder %s16, 0
      %p48 = por %p46, %p47
      %p49 = scmp.ne.s32.totalorder %s38, %s41
      %p50 = scmp.eq.s32.totalorder %s21, 1
      %p51 = por %p49, %p50
      %p52 = scmp.ne.s32.totalorder %s41, %s42
      %p53 = scmp.eq.s32.totalorder %s21, 0
      %p54 = por %p52, %p53
      %p55 = scmp.ne.s32.totalorder %s41, %s42
      %p56 = scmp.eq.s32.totalorder %s22, 1
      %p57 = por %p55, %p56
      %p59 = scmp.ne.s32.totalorder %s42, %s58
      %p60 = scmp.eq.s32.totalorder %s22, 0
      %p61 = por %p59, %p60
      %s63 = sadd.s32 %s62, 1
      %p66 = scmp.eq.s32.totalorder %s16, 1
      %p67 = scmp.ne.s32.totalorder %s62, %s64
      %p68 = scmp.eq.s32.totalorder %s16, 0
      %p69 = por %p67, %p68
      %p70 = scmp.ne.s32.totalorder %s62, %s64
      %p71 = scmp.eq.s32.totalorder %s21, 1
      %p72 = por %p70, %p71
      %p73 = scmp.ne.s32.totalorder %s64, %s65
      %p74 = scmp.eq.s32.totalorder %s21, 0
      %p75 = por %p73, %p74
      %p76 = scmp.ne.s32.totalorder %s64, %s65
      %p77 = scmp.eq.s32.totalorder %s22, 1
      %p78 = por %p76, %p77
      %p80 = scmp.ne.s32.totalorder %s65, %s79
      %p81 = scmp.eq.s32.totalorder %s22, 0
      %p82 = por %p80, %p81
      %s84 = sadd.s32 %s83, 1
      %p87 = scmp.eq.s32.totalorder %s16, 1
      %p88 = scmp.ne.s32.totalorder %s83, %s85
      %p89 = scmp.eq.s32.totalorder %s16, 0
      %p90 = por %p88, %p89
      %p91 = scmp.ne.s32.totalorder %s83, %s85
      %p92 = scmp.eq.s32.totalorder %s21, 1
      %p93 = por %p91, %p92
      %p94 = scmp.ne.s32.totalorder %s85, %s86
      %p95 = scmp.eq.s32.totalorder %s21, 0
      %p96 = por %p94, %p95
      %p97 = scmp.ne.s32.totalorder %s85, %s86
      %p98 = scmp.eq.s32.totalorder %s22, 1
      %p99 = por %p97, %p98
      %p101 = scmp.ne.s32.totalorder %s86, %s100
      %p102 = scmp.eq.s32.totalorder %s22, 0
      %p103 = por %p101, %p102
      %s104 = ssub.s32 %s23, %s35
      %s105 = ssub.s32 %s24, %s31
      %s106 = sor.u32 %s104, %s105
      %p107 = scmp.eq.s32.totalorder %s106, 0
      %s109 = sadd.s32 %s108, 1
      %s110 = scalar_select %p107, %s108, %s109
      %p113 = pneg %p107
      %p114 = scmp.eq.s32.totalorder %s16, 1
      %p115 = por %p113, %p114
      %p116 = scmp.ne.s32.totalorder %s108, %s111
      %p117 = scmp.eq.s32.totalorder %s16, 0
      %p118 = por %p116, %p117
      %p119 = scmp.ne.s32.totalorder %s108, %s111
      %p120 = scmp.eq.s32.totalorder %s21, 1
      %p121 = por %p119, %p120
      %p122 = scmp.ne.s32.totalorder %s111, %s112
      %p123 = scmp.eq.s32.totalorder %s21, 0
      %p124 = por %p122, %p123
      %p125 = scmp.ne.s32.totalorder %s111, %s112
      %p126 = scmp.eq.s32.totalorder %s22, 1
      %p127 = por %p125, %p126
      %p129 = scmp.ne.s32.totalorder %s112, %s128
      %p130 = scmp.eq.s32.totalorder %s22, 0
      %p131 = por %p129, %p130
      %p132 = scmp.le.s32.totalorder 1, %s16
      %p133 = scmp.lt.s32.totalorder %s16, 3
      %p134 = pnand %p132, %p133
      %p135 = pneg %p134
      // Predicated region
      $region9: #{simple_cnn_forward.4} parent=5 // pred_check
        _
      $region10: #{simple_cnn_forward.4} parent=5 // pred_check_branch
        %137 = sbr.rel (%p134) target = $region12
      $region11: #{simple_cnn_forward.4} parent=5 // pred_region
        %s138 = ssub.s32 %s16, 1
        // Predicated region
        $region13: #{simple_cnn_forward.4} parent=11 // pred_check
          %p139 = pneg %p75
        $region14: #{simple_cnn_forward.4} parent=11 // pred_check_branch
          %141 = sbr.rel (%p139) target = $region16
        $region15: #{simple_cnn_forward.4} parent=11 // pred_region
          %s143 = ssub.s32 1152, 1152
          %144 = vsyncadd [#allocation6], %s143
          %s145 = sshll.u32 [#allocation5], 4
          %s146 = int_to_ptr.vmem [resolvable:$true] %s145
          %151 = dma.hbm_to_vmem [thread:$0]  %s1, 1152, %s146, [#allocation6], 64, 64, 4
        $region16: #{simple_cnn_forward.4} parent=11 // pred_fallthru
          _
        // Predicated region
        $region17: #{simple_cnn_forward.4} parent=11 // pred_check
          %p152 = pneg %p96
        $region18: #{simple_cnn_forward.4} parent=11 // pred_check_branch
          %154 = sbr.rel (%p152) target = $region20
        $region19: #{simple_cnn_forward.4} parent=11 // pred_region
          %s156 = ssub.s32 16, 16
          %157 = vsyncadd [#allocation6], %s156
          %s159 = sshll.u32 [#allocation7], 4
          %s160 = int_to_ptr.vmem [resolvable:$true] %s159
          %162 = dma.hbm_to_vmem [thread:$0]  %s2, 16, %s160, [#allocation6]
        $region20: #{simple_cnn_forward.4} parent=11 // pred_fallthru
          _
      $region12: #{simple_cnn_forward.4} parent=5 // pred_fallthru
        _
      %p163 = scmp.lt.s32.totalorder %s16, 2
      // Predicated region
      $region21: #{simple_cnn_forward.4} parent=5 // pred_check
        %p164 = pneg %p163
      $region22: #{simple_cnn_forward.4} parent=5 // pred_check_branch
        %166 = sbr.rel (%p164) target = $region24
      $region23: #{simple_cnn_forward.4} parent=5 // pred_region
        // Predicated region
        $region25: #{simple_cnn_forward.4} parent=23 // pred_check
          %p167 = pneg %p48
        $region26: #{simple_cnn_forward.4} parent=23 // pred_check_branch
          %169 = sbr.rel (%p167) target = $region28
        $region27: #{simple_cnn_forward.4} parent=23 // pred_region
          %s170 = sand.u32 %s38, 1
          %s171 = scalar_lea.sflag [#allocation3], %s170
          %s172 = sand.u32 %s38, 1
          %s173 = smul.addr %s172, 432
          %s174 = scalar_lea.vmem [#allocation2], %s173
          %s176 = ssub.s32 6912, 6912
          %177 = vsyncadd %s171, %s176
          %s178 = smul.addr %s23, 54
          %s179 = smul.addr %s178, 128
          %s180 = scalar_lea.hbm %s0, %s179
          %s181 = sshll.u32 %s174, 4
          %s182 = int_to_ptr.vmem [resolvable:$true] %s181
          %187 = dma.hbm_to_vmem [thread:$0]  %s180, 6912, %s182, %s171, 128, 128, 8
        $region28: #{simple_cnn_forward.4} parent=23 // pred_fallthru
          _
      $region24: #{simple_cnn_forward.4} parent=5 // pred_fallthru
        _
      %p188 = scmp.le.s32.totalorder 1, %s16
      %p189 = scmp.lt.s32.totalorder %s16, 3
      %p190 = pnand %p188, %p189
      %p191 = pneg %p190
      // Predicated region
      $region29: #{simple_cnn_forward.4} parent=5 // pred_check
        _
      $region30: #{simple_cnn_forward.4} parent=5 // pred_check_branch
        %193 = sbr.rel (%p190) target = $region32
      $region31: #{simple_cnn_forward.4} parent=5 // pred_region
        %s194 = ssub.s32 %s16, 1
        %s195 = sand.u32 %s41, 1
        %s196 = scalar_lea.sflag [#allocation3], %s195
        %s197 = sand.u32 %s41, 1
        %s198 = smul.addr %s197, 432
        %s199 = scalar_lea.vmem [#allocation2], %s198
        // Predicated region
        $region33: #{simple_cnn_forward.4} parent=31 // pred_check
          %p200 = pneg %p54
        $region34: #{simple_cnn_forward.4} parent=31 // pred_check_branch
          %202 = sbr.rel (%p200) target = $region36
        $region35: #{simple_cnn_forward.4} parent=31 // pred_region
          %203 = dma.done %s196, 6912
        $region36: #{simple_cnn_forward.4} parent=31 // pred_fallthru
          _
        // Predicated region
        $region37: #{simple_cnn_forward.4} parent=31 // pred_check
          %p204 = pneg %p75
        $region38: #{simple_cnn_forward.4} parent=31 // pred_check_branch
          %206 = sbr.rel (%p204) target = $region40
        $region39: #{simple_cnn_forward.4} parent=31 // pred_region
          %207 = dma.done [#allocation6], 1152
        $region40: #{simple_cnn_forward.4} parent=31 // pred_fallthru
          _
        // Predicated region
        $region41: #{simple_cnn_forward.4} parent=31 // pred_check
          %p208 = pneg %p96
        $region42: #{simple_cnn_forward.4} parent=31 // pred_check_branch
          %210 = sbr.rel (%p208) target = $region44
        $region43: #{simple_cnn_forward.4} parent=31 // pred_region
          %211 = dma.done [#allocation6], 16
        $region44: #{simple_cnn_forward.4} parent=31 // pred_fallthru
          _
        %s212 = sand.u32 %s41, 1
        %s213 = scalar_lea.sflag [#allocation3], %s212
        %s214 = sand.u32 %s41, 1
        %s215 = smul.addr %s214, 432
        %s216 = scalar_lea.vmem [#allocation2], %s215
        %p217 = pneg %p54
        %p218 = pneg %p51
        %p219 = pneg %p75
        %p220 = pneg %p72
        %p221 = pneg %p96
        %p222 = pneg %p93
        %p223 = pneg %p124
        %p224 = pneg %p121
        %s225 = sand.u32 %s111, 1
        %s226 = scalar_lea.sflag [#allocation4], %s225
        %s227 = sand.u32 %s111, 1
        %s228 = smul.addr %s227, 16
        %s229 = scalar_lea.vmem [#allocation8], %s228
        %s231 = smul.u32 %s26, 16
        %s232 = smul.u32 %s231, 24
        %s233 = scalar_lea.vmem %s199, %s232 [#allocation2]
        %v234 = vld [vmem:[%s233] sm:$0xff]
        %v235 = vld [vmem:[%s233 + $0x8] sm:$0xff]
        %v236 = vld [vmem:[%s233 + $0x10] sm:$0x3]
        %v237 = vld [vmem:[%s233 + $0x18] sm:$0xff]
        %v238 = vld [vmem:[%s233 + $0x20] sm:$0xff]
        %v239 = vld [vmem:[%s233 + $0x28] sm:$0x3]
        %v240 = vld [vmem:[%s233 + $0x30] sm:$0xff]
        %v241 = vld [vmem:[%s233 + $0x38] sm:$0xff]
        %v242 = vld [vmem:[%s233 + $0x40] sm:$0x3]
        %v243 = vld [vmem:[%s233 + $0x48] sm:$0xff]
        %v244 = vld [vmem:[%s233 + $0x50] sm:$0xff]
        %v245 = vld [vmem:[%s233 + $0x58] sm:$0x3]
        %v246 = vld [vmem:[%s233 + $0x60] sm:$0xff]
        %v247 = vld [vmem:[%s233 + $0x68] sm:$0xff]
        %v248 = vld [vmem:[%s233 + $0x70] sm:$0x3]
        %v249 = vld [vmem:[%s233 + $0x78] sm:$0xff]
        %v250 = vld [vmem:[%s233 + $0x80] sm:$0xff]
        %v251 = vld [vmem:[%s233 + $0x88] sm:$0x3]
        %v252 = vld [vmem:[%s233 + $0x90] sm:$0xff]
        %v253 = vld [vmem:[%s233 + $0x98] sm:$0xff]
        %v254 = vld [vmem:[%s233 + $0xa0] sm:$0x3]
        %v255 = vld [vmem:[%s233 + $0xa8] sm:$0xff]
        %v256 = vld [vmem:[%s233 + $0xb0] sm:$0xff]
        %v257 = vld [vmem:[%s233 + $0xb8] sm:$0x3]
        %v258 = vld [vmem:[%s233 + $0xc0] sm:$0xff]
        %v259 = vld [vmem:[%s233 + $0xc8] sm:$0xff]
        %v260 = vld [vmem:[%s233 + $0xd0] sm:$0x3]
        %v261 = vld [vmem:[%s233 + $0xd8] sm:$0xff]
        %v262 = vld [vmem:[%s233 + $0xe0] sm:$0xff]
        %v263 = vld [vmem:[%s233 + $0xe8] sm:$0x3]
        %v264 = vld [vmem:[%s233 + $0xf0] sm:$0xff]
        %v265 = vld [vmem:[%s233 + $0xf8] sm:$0xff]
        %v266 = vld [vmem:[%s233 + $0x100] sm:$0x3]
        %v267 = vld [vmem:[%s233 + $0x108] sm:$0xff]
        %v268 = vld [vmem:[%s233 + $0x110] sm:$0xff]
        %v269 = vld [vmem:[%s233 + $0x118] sm:$0x3]
        %v270 = vld [vmem:[%s233 + $0x120] sm:$0xff]
        %v271 = vld [vmem:[%s233 + $0x128] sm:$0xff]
        %v272 = vld [vmem:[%s233 + $0x130] sm:$0x3]
        %v273 = vld [vmem:[%s233 + $0x138] sm:$0xff]
        %v274 = vld [vmem:[%s233 + $0x140] sm:$0xff]
        %v275 = vld [vmem:[%s233 + $0x148] sm:$0x3]
        %v276 = vld [vmem:[%s233 + $0x150] sm:$0xff]
        %v277 = vld [vmem:[%s233 + $0x158] sm:$0xff]
        %v278 = vld [vmem:[%s233 + $0x160] sm:$0x3]
        %v279 = vld [vmem:[%s233 + $0x168] sm:$0xff]
        %v280 = vld [vmem:[%s233 + $0x170] sm:$0xff]
        %v281 = vld [vmem:[%s233 + $0x178] sm:$0x3]
        %v282 = vld [vmem:[%s233 + $0x180] sm:$0xff]
        %v283 = vld [vmem:[%s233 + $0x188] sm:$0xff]
        %v284 = vld [vmem:[%s233 + $0x190] sm:$0x3]
        %v285 = vld [vmem:[%s233 + $0x198] sm:$0xff]
        %v286 = vld [vmem:[%s233 + $0x1a0] sm:$0xff]
        %v287 = vld [vmem:[%s233 + $0x1a8] sm:$0x3]
        %vm336 = vcmask 1046528
        %v337 = vrot.slane %v234, 1
        %v338 = vrot.slane %v235, 1
        %v339 = vsel %vm336, %v337, %v338
        %v340 = vrot.slane %v236, 1
        %v341 = vsel %vm336, %v338, %v340
        %v342 = vrot.slane %v237, 1
        %v343 = vrot.slane %v238, 1
        %v344 = vsel %vm336, %v342, %v343
        %v345 = vrot.slane %v239, 1
        %v346 = vsel %vm336, %v343, %v345
        %v347 = vrot.slane %v240, 1
        %v348 = vrot.slane %v241, 1
        %v349 = vsel %vm336, %v347, %v348
        %v350 = vrot.slane %v242, 1
        %v351 = vsel %vm336, %v348, %v350
        %v352 = vrot.slane %v243, 1
        %v353 = vrot.slane %v244, 1
        %v354 = vsel %vm336, %v352, %v353
        %v355 = vrot.slane %v245, 1
        %v356 = vsel %vm336, %v353, %v355
        %v357 = vrot.slane %v246, 1
        %v358 = vrot.slane %v247, 1
        %v359 = vsel %vm336, %v357, %v358
        %v360 = vrot.slane %v248, 1
        %v361 = vsel %vm336, %v358, %v360
        %v362 = vrot.slane %v249, 1
        %v363 = vrot.slane %v250, 1
        %v364 = vsel %vm336, %v362, %v363
        %v365 = vrot.slane %v251, 1
        %v366 = vsel %vm336, %v363, %v365
        %v367 = vrot.slane %v252, 1
        %v368 = vrot.slane %v253, 1
        %v369 = vsel %vm336, %v367, %v368
        %v370 = vrot.slane %v254, 1
        %v371 = vsel %vm336, %v368, %v370
        %v372 = vrot.slane %v255, 1
        %v373 = vrot.slane %v256, 1
        %v374 = vsel %vm336, %v372, %v373
        %v375 = vrot.slane %v257, 1
        %v376 = vsel %vm336, %v373, %v375
        %v377 = vrot.slane %v258, 1
        %v378 = vrot.slane %v259, 1
        %v379 = vsel %vm336, %v377, %v378
        %v380 = vrot.slane %v260, 1
        %v381 = vsel %vm336, %v378, %v380
        %v382 = vrot.slane %v261, 1
        %v383 = vrot.slane %v262, 1
        %v384 = vsel %vm336, %v382, %v383
        %v385 = vrot.slane %v263, 1
        %v386 = vsel %vm336, %v383, %v385
        %v387 = vrot.slane %v264, 1
        %v388 = vrot.slane %v265, 1
        %v389 = vsel %vm336, %v387, %v388
        %v390 = vrot.slane %v266, 1
        %v391 = vsel %vm336, %v388, %v390
        %v392 = vrot.slane %v267, 1
        %v393 = vrot.slane %v268, 1
        %v394 = vsel %vm336, %v392, %v393
        %v395 = vrot.slane %v269, 1
        %v396 = vsel %vm336, %v393, %v395
        %v397 = vrot.slane %v270, 1
        %v398 = vrot.slane %v271, 1
        %v399 = vsel %vm336, %v397, %v398
        %v400 = vrot.slane %v272, 1
        %v401 = vsel %vm336, %v398, %v400
        %v402 = vrot.slane %v273, 1
        %v403 = vrot.slane %v274, 1
        %v404 = vsel %vm336, %v402, %v403
        %v405 = vrot.slane %v275, 1
        %v406 = vsel %vm336, %v403, %v405
        %v407 = vrot.slane %v276, 1
        %v408 = vrot.slane %v277, 1
        %v409 = vsel %vm336, %v407, %v408
        %v410 = vrot.slane %v278, 1
        %v411 = vsel %vm336, %v408, %v410
        %v412 = vrot.slane %v279, 1
        %v413 = vrot.slane %v280, 1
        %v414 = vsel %vm336, %v412, %v413
        %v415 = vrot.slane %v281, 1
        %v416 = vsel %vm336, %v413, %v415
        %vm417 = vcmask 1045504
        %v418 = vrot.slane %v234, 2
        %v419 = vrot.slane %v235, 2
        %v420 = vsel %vm417, %v418, %v419
        %v421 = vrot.slane %v236, 2
        %v422 = vsel %vm417, %v419, %v421
        %v423 = vrot.slane %v237, 2
        %v424 = vrot.slane %v238, 2
        %v425 = vsel %vm417, %v423, %v424
        %v426 = vrot.slane %v239, 2
        %v427 = vsel %vm417, %v424, %v426
        %v428 = vrot.slane %v240, 2
        %v429 = vrot.slane %v241, 2
        %v430 = vsel %vm417, %v428, %v429
        %v431 = vrot.slane %v242, 2
        %v432 = vsel %vm417, %v429, %v431
        %v433 = vrot.slane %v243, 2
        %v434 = vrot.slane %v244, 2
        %v435 = vsel %vm417, %v433, %v434
        %v436 = vrot.slane %v245, 2
        %v437 = vsel %vm417, %v434, %v436
        %v438 = vrot.slane %v246, 2
        %v439 = vrot.slane %v247, 2
        %v440 = vsel %vm417, %v438, %v439
        %v441 = vrot.slane %v248, 2
        %v442 = vsel %vm417, %v439, %v441
        %v443 = vrot.slane %v249, 2
        %v444 = vrot.slane %v250, 2
        %v445 = vsel %vm417, %v443, %v444
        %v446 = vrot.slane %v251, 2
        %v447 = vsel %vm417, %v444, %v446
        %v448 = vrot.slane %v252, 2
        %v449 = vrot.slane %v253, 2
        %v450 = vsel %vm417, %v448, %v449
        %v451 = vrot.slane %v254, 2
        %v452 = vsel %vm417, %v449, %v451
        %v453 = vrot.slane %v255, 2
        %v454 = vrot.slane %v256, 2
        %v455 = vsel %vm417, %v453, %v454
        %v456 = vrot.slane %v257, 2
        %v457 = vsel %vm417, %v454, %v456
        %v458 = vrot.slane %v258, 2
        %v459 = vrot.slane %v259, 2
        %v460 = vsel %vm417, %v458, %v459
        %v461 = vrot.slane %v260, 2
        %v462 = vsel %vm417, %v459, %v461
        %v463 = vrot.slane %v261, 2
        %v464 = vrot.slane %v262, 2
        %v465 = vsel %vm417, %v463, %v464
        %v466 = vrot.slane %v263, 2
        %v467 = vsel %vm417, %v464, %v466
        %v468 = vrot.slane %v264, 2
        %v469 = vrot.slane %v265, 2
        %v470 = vsel %vm417, %v468, %v469
        %v471 = vrot.slane %v266, 2
        %v472 = vsel %vm417, %v469, %v471
        %v473 = vrot.slane %v267, 2
        %v474 = vrot.slane %v268, 2
        %v475 = vsel %vm417, %v473, %v474
        %v476 = vrot.slane %v269, 2
        %v477 = vsel %vm417, %v474, %v476
        %v478 = vrot.slane %v270, 2
        %v479 = vrot.slane %v271, 2
        %v480 = vsel %vm417, %v478, %v479
        %v481 = vrot.slane %v272, 2
        %v482 = vsel %vm417, %v479, %v481
        %v483 = vrot.slane %v273, 2
        %v484 = vrot.slane %v274, 2
        %v485 = vsel %vm417, %v483, %v484
        %v486 = vrot.slane %v275, 2
        %v487 = vsel %vm417, %v484, %v486
        %v488 = vrot.slane %v276, 2
        %v489 = vrot.slane %v277, 2
        %v490 = vsel %vm417, %v488, %v489
        %v491 = vrot.slane %v278, 2
        %v492 = vsel %vm417, %v489, %v491
        %v493 = vrot.slane %v279, 2
        %v494 = vrot.slane %v280, 2
        %v495 = vsel %vm417, %v493, %v494
        %v496 = vrot.slane %v281, 2
        %v497 = vsel %vm417, %v494, %v496
        %v501 = vrot.slane %v282, 1
        %v502 = vrot.slane %v283, 1
        %v503 = vsel %vm336, %v501, %v502
        %v504 = vrot.slane %v284, 1
        %v505 = vsel %vm336, %v502, %v504
        %v506 = vrot.slane %v282, 2
        %v507 = vrot.slane %v283, 2
        %v508 = vsel %vm417, %v506, %v507
        %v509 = vrot.slane %v284, 2
        %v510 = vsel %vm417, %v507, %v509
        %v514 = vrot.slane %v285, 1
        %v515 = vrot.slane %v286, 1
        %v516 = vsel %vm336, %v514, %v515
        %v517 = vrot.slane %v287, 1
        %v518 = vsel %vm336, %v515, %v517
        %v519 = vrot.slane %v285, 2
        %v520 = vrot.slane %v286, 2
        %v521 = vsel %vm417, %v519, %v520
        %v522 = vrot.slane %v287, 2
        %v523 = vsel %vm417, %v520, %v522
        %556 = vrot.lane.b32.xlu0 %v339, 16
        %v557 = vpop.permute.xlu0 %556
        %558 = vrot.lane.b32.xlu0 %v341, 16
        %v559 = vpop.permute.xlu0 %558
        %560 = vrot.lane.b32.xlu0 %v344, 16
        %v561 = vpop.permute.xlu0 %560
        %562 = vrot.lane.b32.xlu0 %v346, 16
        %v563 = vpop.permute.xlu0 %562
        %564 = vrot.lane.b32.xlu0 %v349, 16
        %v565 = vpop.permute.xlu0 %564
        %566 = vrot.lane.b32.xlu0 %v351, 16
        %v567 = vpop.permute.xlu0 %566
        %568 = vrot.lane.b32.xlu0 %v354, 16
        %v569 = vpop.permute.xlu0 %568
        %570 = vrot.lane.b32.xlu0 %v356, 16
        %v571 = vpop.permute.xlu0 %570
        %572 = vrot.lane.b32.xlu0 %v359, 16
        %v573 = vpop.permute.xlu0 %572
        %574 = vrot.lane.b32.xlu0 %v361, 16
        %v575 = vpop.permute.xlu0 %574
        %576 = vrot.lane.b32.xlu0 %v364, 16
        %v577 = vpop.permute.xlu0 %576
        %578 = vrot.lane.b32.xlu0 %v366, 16
        %v579 = vpop.permute.xlu0 %578
        %580 = vrot.lane.b32.xlu0 %v369, 16
        %v581 = vpop.permute.xlu0 %580
        %582 = vrot.lane.b32.xlu0 %v371, 16
        %v583 = vpop.permute.xlu0 %582
        %584 = vrot.lane.b32.xlu0 %v374, 16
        %v585 = vpop.permute.xlu0 %584
        %586 = vrot.lane.b32.xlu0 %v376, 16
        %v587 = vpop.permute.xlu0 %586
        %588 = vrot.lane.b32.xlu0 %v379, 16
        %v589 = vpop.permute.xlu0 %588
        %590 = vrot.lane.b32.xlu0 %v381, 16
        %v591 = vpop.permute.xlu0 %590
        %592 = vrot.lane.b32.xlu0 %v384, 16
        %v593 = vpop.permute.xlu0 %592
        %594 = vrot.lane.b32.xlu0 %v386, 16
        %v595 = vpop.permute.xlu0 %594
        %596 = vrot.lane.b32.xlu0 %v389, 16
        %v597 = vpop.permute.xlu0 %596
        %598 = vrot.lane.b32.xlu0 %v391, 16
        %v599 = vpop.permute.xlu0 %598
        %600 = vrot.lane.b32.xlu0 %v394, 16
        %v601 = vpop.permute.xlu0 %600
        %602 = vrot.lane.b32.xlu0 %v396, 16
        %v603 = vpop.permute.xlu0 %602
        %604 = vrot.lane.b32.xlu0 %v399, 16
        %v605 = vpop.permute.xlu0 %604
        %606 = vrot.lane.b32.xlu0 %v401, 16
        %v607 = vpop.permute.xlu0 %606
        %608 = vrot.lane.b32.xlu0 %v404, 16
        %v609 = vpop.permute.xlu0 %608
        %610 = vrot.lane.b32.xlu0 %v406, 16
        %v611 = vpop.permute.xlu0 %610
        %612 = vrot.lane.b32.xlu0 %v409, 16
        %v613 = vpop.permute.xlu0 %612
        %614 = vrot.lane.b32.xlu0 %v411, 16
        %v615 = vpop.permute.xlu0 %614
        %616 = vrot.lane.b32.xlu0 %v414, 16
        %v617 = vpop.permute.xlu0 %616
        %618 = vrot.lane.b32.xlu0 %v416, 16
        %v619 = vpop.permute.xlu0 %618
        %652 = vrot.lane.b32.xlu0 %v420, 32
        %v653 = vpop.permute.xlu0 %652
        %654 = vrot.lane.b32.xlu0 %v422, 32
        %v655 = vpop.permute.xlu0 %654
        %656 = vrot.lane.b32.xlu0 %v425, 32
        %v657 = vpop.permute.xlu0 %656
        %658 = vrot.lane.b32.xlu0 %v427, 32
        %v659 = vpop.permute.xlu0 %658
        %660 = vrot.lane.b32.xlu0 %v430, 32
        %v661 = vpop.permute.xlu0 %660
        %662 = vrot.lane.b32.xlu0 %v432, 32
        %v663 = vpop.permute.xlu0 %662
        %664 = vrot.lane.b32.xlu0 %v435, 32
        %v665 = vpop.permute.xlu0 %664
        %666 = vrot.lane.b32.xlu0 %v437, 32
        %v667 = vpop.permute.xlu0 %666
        %668 = vrot.lane.b32.xlu0 %v440, 32
        %v669 = vpop.permute.xlu0 %668
        %670 = vrot.lane.b32.xlu0 %v442, 32
        %v671 = vpop.permute.xlu0 %670
        %672 = vrot.lane.b32.xlu0 %v445, 32
        %v673 = vpop.permute.xlu0 %672
        %674 = vrot.lane.b32.xlu0 %v447, 32
        %v675 = vpop.permute.xlu0 %674
        %676 = vrot.lane.b32.xlu0 %v450, 32
        %v677 = vpop.permute.xlu0 %676
        %678 = vrot.lane.b32.xlu0 %v452, 32
        %v679 = vpop.permute.xlu0 %678
        %680 = vrot.lane.b32.xlu0 %v455, 32
        %v681 = vpop.permute.xlu0 %680
        %682 = vrot.lane.b32.xlu0 %v457, 32
        %v683 = vpop.permute.xlu0 %682
        %684 = vrot.lane.b32.xlu0 %v460, 32
        %v685 = vpop.permute.xlu0 %684
        %686 = vrot.lane.b32.xlu0 %v462, 32
        %v687 = vpop.permute.xlu0 %686
        %688 = vrot.lane.b32.xlu0 %v465, 32
        %v689 = vpop.permute.xlu0 %688
        %690 = vrot.lane.b32.xlu0 %v467, 32
        %v691 = vpop.permute.xlu0 %690
        %692 = vrot.lane.b32.xlu0 %v470, 32
        %v693 = vpop.permute.xlu0 %692
        %694 = vrot.lane.b32.xlu0 %v472, 32
        %v695 = vpop.permute.xlu0 %694
        %696 = vrot.lane.b32.xlu0 %v475, 32
        %v697 = vpop.permute.xlu0 %696
        %698 = vrot.lane.b32.xlu0 %v477, 32
        %v699 = vpop.permute.xlu0 %698
        %700 = vrot.lane.b32.xlu0 %v480, 32
        %v701 = vpop.permute.xlu0 %700
        %702 = vrot.lane.b32.xlu0 %v482, 32
        %v703 = vpop.permute.xlu0 %702
        %704 = vrot.lane.b32.xlu0 %v485, 32
        %v705 = vpop.permute.xlu0 %704
        %706 = vrot.lane.b32.xlu0 %v487, 32
        %v707 = vpop.permute.xlu0 %706
        %708 = vrot.lane.b32.xlu0 %v490, 32
        %v709 = vpop.permute.xlu0 %708
        %710 = vrot.lane.b32.xlu0 %v492, 32
        %v711 = vpop.permute.xlu0 %710
        %712 = vrot.lane.b32.xlu0 %v495, 32
        %v713 = vpop.permute.xlu0 %712
        %714 = vrot.lane.b32.xlu0 %v497, 32
        %v715 = vpop.permute.xlu0 %714
        %748 = vrot.lane.b32.xlu0 %v237, 48
        %v749 = vpop.permute.xlu0 %748
        %750 = vrot.lane.b32.xlu0 %v238, 48
        %v751 = vpop.permute.xlu0 %750
        %752 = vrot.lane.b32.xlu0 %v240, 48
        %v753 = vpop.permute.xlu0 %752
        %754 = vrot.lane.b32.xlu0 %v241, 48
        %v755 = vpop.permute.xlu0 %754
        %756 = vrot.lane.b32.xlu0 %v243, 48
        %v757 = vpop.permute.xlu0 %756
        %758 = vrot.lane.b32.xlu0 %v244, 48
        %v759 = vpop.permute.xlu0 %758
        %760 = vrot.lane.b32.xlu0 %v246, 48
        %v761 = vpop.permute.xlu0 %760
        %762 = vrot.lane.b32.xlu0 %v247, 48
        %v763 = vpop.permute.xlu0 %762
        %764 = vrot.lane.b32.xlu0 %v249, 48
        %v765 = vpop.permute.xlu0 %764
        %766 = vrot.lane.b32.xlu0 %v250, 48
        %v767 = vpop.permute.xlu0 %766
        %768 = vrot.lane.b32.xlu0 %v252, 48
        %v769 = vpop.permute.xlu0 %768
        %770 = vrot.lane.b32.xlu0 %v253, 48
        %v771 = vpop.permute.xlu0 %770
        %772 = vrot.lane.b32.xlu0 %v255, 48
        %v773 = vpop.permute.xlu0 %772
        %774 = vrot.lane.b32.xlu0 %v256, 48
        %v775 = vpop.permute.xlu0 %774
        %776 = vrot.lane.b32.xlu0 %v258, 48
        %v777 = vpop.permute.xlu0 %776
        %778 = vrot.lane.b32.xlu0 %v259, 48
        %v779 = vpop.permute.xlu0 %778
        %780 = vrot.lane.b32.xlu0 %v261, 48
        %v781 = vpop.permute.xlu0 %780
        %782 = vrot.lane.b32.xlu0 %v262, 48
        %v783 = vpop.permute.xlu0 %782
        %784 = vrot.lane.b32.xlu0 %v264, 48
        %v785 = vpop.permute.xlu0 %784
        %786 = vrot.lane.b32.xlu0 %v265, 48
        %v787 = vpop.permute.xlu0 %786
        %788 = vrot.lane.b32.xlu0 %v267, 48
        %v789 = vpop.permute.xlu0 %788
        %790 = vrot.lane.b32.xlu0 %v268, 48
        %v791 = vpop.permute.xlu0 %790
        %792 = vrot.lane.b32.xlu0 %v270, 48
        %v793 = vpop.permute.xlu0 %792
        %794 = vrot.lane.b32.xlu0 %v271, 48
        %v795 = vpop.permute.xlu0 %794
        %796 = vrot.lane.b32.xlu0 %v273, 48
        %v797 = vpop.permute.xlu0 %796
        %798 = vrot.lane.b32.xlu0 %v274, 48
        %v799 = vpop.permute.xlu0 %798
        %800 = vrot.lane.b32.xlu0 %v276, 48
        %v801 = vpop.permute.xlu0 %800
        %802 = vrot.lane.b32.xlu0 %v277, 48
        %v803 = vpop.permute.xlu0 %802
        %804 = vrot.lane.b32.xlu0 %v279, 48
        %v805 = vpop.permute.xlu0 %804
        %806 = vrot.lane.b32.xlu0 %v280, 48
        %v807 = vpop.permute.xlu0 %806
        %808 = vrot.lane.b32.xlu0 %v282, 48
        %v809 = vpop.permute.xlu0 %808
        %810 = vrot.lane.b32.xlu0 %v283, 48
        %v811 = vpop.permute.xlu0 %810
        %844 = vrot.lane.b32.xlu0 %v344, 64
        %v845 = vpop.permute.xlu0 %844
        %846 = vrot.lane.b32.xlu0 %v346, 64
        %v847 = vpop.permute.xlu0 %846
        %848 = vrot.lane.b32.xlu0 %v349, 64
        %v849 = vpop.permute.xlu0 %848
        %850 = vrot.lane.b32.xlu0 %v351, 64
        %v851 = vpop.permute.xlu0 %850
        %852 = vrot.lane.b32.xlu0 %v354, 64
        %v853 = vpop.permute.xlu0 %852
        %854 = vrot.lane.b32.xlu0 %v356, 64
        %v855 = vpop.permute.xlu0 %854
        %856 = vrot.lane.b32.xlu0 %v359, 64
        %v857 = vpop.permute.xlu0 %856
        %858 = vrot.lane.b32.xlu0 %v361, 64
        %v859 = vpop.permute.xlu0 %858
        %860 = vrot.lane.b32.xlu0 %v364, 64
        %v861 = vpop.permute.xlu0 %860
        %862 = vrot.lane.b32.xlu0 %v366, 64
        %v863 = vpop.permute.xlu0 %862
        %864 = vrot.lane.b32.xlu0 %v369, 64
        %v865 = vpop.permute.xlu0 %864
        %866 = vrot.lane.b32.xlu0 %v371, 64
        %v867 = vpop.permute.xlu0 %866
        %868 = vrot.lane.b32.xlu0 %v374, 64
        %v869 = vpop.permute.xlu0 %868
        %870 = vrot.lane.b32.xlu0 %v376, 64
        %v871 = vpop.permute.xlu0 %870
        %872 = vrot.lane.b32.xlu0 %v379, 64
        %v873 = vpop.permute.xlu0 %872
        %874 = vrot.lane.b32.xlu0 %v381, 64
        %v875 = vpop.permute.xlu0 %874
        %876 = vrot.lane.b32.xlu0 %v384, 64
        %v877 = vpop.permute.xlu0 %876
        %878 = vrot.lane.b32.xlu0 %v386, 64
        %v879 = vpop.permute.xlu0 %878
        %880 = vrot.lane.b32.xlu0 %v389, 64
        %v881 = vpop.permute.xlu0 %880
        %882 = vrot.lane.b32.xlu0 %v391, 64
        %v883 = vpop.permute.xlu0 %882
        %884 = vrot.lane.b32.xlu0 %v394, 64
        %v885 = vpop.permute.xlu0 %884
        %886 = vrot.lane.b32.xlu0 %v396, 64
        %v887 = vpop.permute.xlu0 %886
        %888 = vrot.lane.b32.xlu0 %v399, 64
        %v889 = vpop.permute.xlu0 %888
        %890 = vrot.lane.b32.xlu0 %v401, 64
        %v891 = vpop.permute.xlu0 %890
        %892 = vrot.lane.b32.xlu0 %v404, 64
        %v893 = vpop.permute.xlu0 %892
        %894 = vrot.lane.b32.xlu0 %v406, 64
        %v895 = vpop.permute.xlu0 %894
        %896 = vrot.lane.b32.xlu0 %v409, 64
        %v897 = vpop.permute.xlu0 %896
        %898 = vrot.lane.b32.xlu0 %v411, 64
        %v899 = vpop.permute.xlu0 %898
        %900 = vrot.lane.b32.xlu0 %v414, 64
        %v901 = vpop.permute.xlu0 %900
        %902 = vrot.lane.b32.xlu0 %v416, 64
        %v903 = vpop.permute.xlu0 %902
        %904 = vrot.lane.b32.xlu0 %v503, 64
        %v905 = vpop.permute.xlu0 %904
        %906 = vrot.lane.b32.xlu0 %v505, 64
        %v907 = vpop.permute.xlu0 %906
        %940 = vrot.lane.b32.xlu0 %v425, 80
        %v941 = vpop.permute.xlu0 %940
        %942 = vrot.lane.b32.xlu0 %v427, 80
        %v943 = vpop.permute.xlu0 %942
        %944 = vrot.lane.b32.xlu0 %v430, 80
        %v945 = vpop.permute.xlu0 %944
        %946 = vrot.lane.b32.xlu0 %v432, 80
        %v947 = vpop.permute.xlu0 %946
        %948 = vrot.lane.b32.xlu0 %v435, 80
        %v949 = vpop.permute.xlu0 %948
        %950 = vrot.lane.b32.xlu0 %v437, 80
        %v951 = vpop.permute.xlu0 %950
        %952 = vrot.lane.b32.xlu0 %v440, 80
        %v953 = vpop.permute.xlu0 %952
        %954 = vrot.lane.b32.xlu0 %v442, 80
        %v955 = vpop.permute.xlu0 %954
        %956 = vrot.lane.b32.xlu0 %v445, 80
        %v957 = vpop.permute.xlu0 %956
        %958 = vrot.lane.b32.xlu0 %v447, 80
        %v959 = vpop.permute.xlu0 %958
        %960 = vrot.lane.b32.xlu0 %v450, 80
        %v961 = vpop.permute.xlu0 %960
        %962 = vrot.lane.b32.xlu0 %v452, 80
        %v963 = vpop.permute.xlu0 %962
        %964 = vrot.lane.b32.xlu0 %v455, 80
        %v965 = vpop.permute.xlu0 %964
        %966 = vrot.lane.b32.xlu0 %v457, 80
        %v967 = vpop.permute.xlu0 %966
        %968 = vrot.lane.b32.xlu0 %v460, 80
        %v969 = vpop.permute.xlu0 %968
        %970 = vrot.lane.b32.xlu0 %v462, 80
        %v971 = vpop.permute.xlu0 %970
        %972 = vrot.lane.b32.xlu0 %v465, 80
        %v973 = vpop.permute.xlu0 %972
        %974 = vrot.lane.b32.xlu0 %v467, 80
        %v975 = vpop.permute.xlu0 %974
        %976 = vrot.lane.b32.xlu0 %v470, 80
        %v977 = vpop.permute.xlu0 %976
        %978 = vrot.lane.b32.xlu0 %v472, 80
        %v979 = vpop.permute.xlu0 %978
        %980 = vrot.lane.b32.xlu0 %v475, 80
        %v981 = vpop.permute.xlu0 %980
        %982 = vrot.lane.b32.xlu0 %v477, 80
        %v983 = vpop.permute.xlu0 %982
        %984 = vrot.lane.b32.xlu0 %v480, 80
        %v985 = vpop.permute.xlu0 %984
        %986 = vrot.lane.b32.xlu0 %v482, 80
        %v987 = vpop.permute.xlu0 %986
        %988 = vrot.lane.b32.xlu0 %v485, 80
        %v989 = vpop.permute.xlu0 %988
        %990 = vrot.lane.b32.xlu0 %v487, 80
        %v991 = vpop.permute.xlu0 %990
        %992 = vrot.lane.b32.xlu0 %v490, 80
        %v993 = vpop.permute.xlu0 %992
        %994 = vrot.lane.b32.xlu0 %v492, 80
        %v995 = vpop.permute.xlu0 %994
        %996 = vrot.lane.b32.xlu0 %v495, 80
        %v997 = vpop.permute.xlu0 %996
        %998 = vrot.lane.b32.xlu0 %v497, 80
        %v999 = vpop.permute.xlu0 %998
        %1000 = vrot.lane.b32.xlu0 %v508, 80
        %v1001 = vpop.permute.xlu0 %1000
        %1002 = vrot.lane.b32.xlu0 %v510, 80
        %v1003 = vpop.permute.xlu0 %1002
        %1036 = vrot.lane.b32.xlu0 %v240, 96
        %v1037 = vpop.permute.xlu0 %1036
        %1038 = vrot.lane.b32.xlu0 %v241, 96
        %v1039 = vpop.permute.xlu0 %1038
        %1040 = vrot.lane.b32.xlu0 %v243, 96
        %v1041 = vpop.permute.xlu0 %1040
        %1042 = vrot.lane.b32.xlu0 %v244, 96
        %v1043 = vpop.permute.xlu0 %1042
        %1044 = vrot.lane.b32.xlu0 %v246, 96
        %v1045 = vpop.permute.xlu0 %1044
        %1046 = vrot.lane.b32.xlu0 %v247, 96
        %v1047 = vpop.permute.xlu0 %1046
        %1048 = vrot.lane.b32.xlu0 %v249, 96
        %v1049 = vpop.permute.xlu0 %1048
        %1050 = vrot.lane.b32.xlu0 %v250, 96
        %v1051 = vpop.permute.xlu0 %1050
        %1052 = vrot.lane.b32.xlu0 %v252, 96
        %v1053 = vpop.permute.xlu0 %1052
        %1054 = vrot.lane.b32.xlu0 %v253, 96
        %v1055 = vpop.permute.xlu0 %1054
        %1056 = vrot.lane.b32.xlu0 %v255, 96
        %v1057 = vpop.permute.xlu0 %1056
        %1058 = vrot.lane.b32.xlu0 %v256, 96
        %v1059 = vpop.permute.xlu0 %1058
        %1060 = vrot.lane.b32.xlu0 %v258, 96
        %v1061 = vpop.permute.xlu0 %1060
        %1062 = vrot.lane.b32.xlu0 %v259, 96
        %v1063 = vpop.permute.xlu0 %1062
        %1064 = vrot.lane.b32.xlu0 %v261, 96
        %v1065 = vpop.permute.xlu0 %1064
        %1066 = vrot.lane.b32.xlu0 %v262, 96
        %v1067 = vpop.permute.xlu0 %1066
        %1068 = vrot.lane.b32.xlu0 %v264, 96
        %v1069 = vpop.permute.xlu0 %1068
        %1070 = vrot.lane.b32.xlu0 %v265, 96
        %v1071 = vpop.permute.xlu0 %1070
        %1072 = vrot.lane.b32.xlu0 %v267, 96
        %v1073 = vpop.permute.xlu0 %1072
        %1074 = vrot.lane.b32.xlu0 %v268, 96
        %v1075 = vpop.permute.xlu0 %1074
        %1076 = vrot.lane.b32.xlu0 %v270, 96
        %v1077 = vpop.permute.xlu0 %1076
        %1078 = vrot.lane.b32.xlu0 %v271, 96
        %v1079 = vpop.permute.xlu0 %1078
        %1080 = vrot.lane.b32.xlu0 %v273, 96
        %v1081 = vpop.permute.xlu0 %1080
        %1082 = vrot.lane.b32.xlu0 %v274, 96
        %v1083 = vpop.permute.xlu0 %1082
        %1084 = vrot.lane.b32.xlu0 %v276, 96
        %v1085 = vpop.permute.xlu0 %1084
        %1086 = vrot.lane.b32.xlu0 %v277, 96
        %v1087 = vpop.permute.xlu0 %1086
        %1088 = vrot.lane.b32.xlu0 %v279, 96
        %v1089 = vpop.permute.xlu0 %1088
        %1090 = vrot.lane.b32.xlu0 %v280, 96
        %v1091 = vpop.permute.xlu0 %1090
        %1092 = vrot.lane.b32.xlu0 %v282, 96
        %v1093 = vpop.permute.xlu0 %1092
        %1094 = vrot.lane.b32.xlu0 %v283, 96
        %v1095 = vpop.permute.xlu0 %1094
        %1096 = vrot.lane.b32.xlu0 %v285, 96
        %v1097 = vpop.permute.xlu0 %1096
        %1098 = vrot.lane.b32.xlu0 %v286, 96
        %v1099 = vpop.permute.xlu0 %1098
        %1132 = vrot.lane.b32.xlu0 %v349, 112
        %v1133 = vpop.permute.xlu0 %1132
        %1134 = vrot.lane.b32.xlu0 %v351, 112
        %v1135 = vpop.permute.xlu0 %1134
        %1136 = vrot.lane.b32.xlu0 %v354, 112
        %v1137 = vpop.permute.xlu0 %1136
        %1138 = vrot.lane.b32.xlu0 %v356, 112
        %v1139 = vpop.permute.xlu0 %1138
        %1140 = vrot.lane.b32.xlu0 %v359, 112
        %v1141 = vpop.permute.xlu0 %1140
        %1142 = vrot.lane.b32.xlu0 %v361, 112
        %v1143 = vpop.permute.xlu0 %1142
        %1144 = vrot.lane.b32.xlu0 %v364, 112
        %v1145 = vpop.permute.xlu0 %1144
        %1146 = vrot.lane.b32.xlu0 %v366, 112
        %v1147 = vpop.permute.xlu0 %1146
        %1148 = vrot.lane.b32.xlu0 %v369, 112
        %v1149 = vpop.permute.xlu0 %1148
        %1150 = vrot.lane.b32.xlu0 %v371, 112
        %v1151 = vpop.permute.xlu0 %1150
        %1152 = vrot.lane.b32.xlu0 %v374, 112
        %v1153 = vpop.permute.xlu0 %1152
        %1154 = vrot.lane.b32.xlu0 %v376, 112
        %v1155 = vpop.permute.xlu0 %1154
        %1156 = vrot.lane.b32.xlu0 %v379, 112
        %v1157 = vpop.permute.xlu0 %1156
        %1158 = vrot.lane.b32.xlu0 %v381, 112
        %v1159 = vpop.permute.xlu0 %1158
        %1160 = vrot.lane.b32.xlu0 %v384, 112
        %v1161 = vpop.permute.xlu0 %1160
        %1162 = vrot.lane.b32.xlu0 %v386, 112
        %v1163 = vpop.permute.xlu0 %1162
        %1164 = vrot.lane.b32.xlu0 %v389, 112
        %v1165 = vpop.permute.xlu0 %1164
        %1166 = vrot.lane.b32.xlu0 %v391, 112
        %v1167 = vpop.permute.xlu0 %1166
        %1168 = vrot.lane.b32.xlu0 %v394, 112
        %v1169 = vpop.permute.xlu0 %1168
        %1170 = vrot.lane.b32.xlu0 %v396, 112
        %v1171 = vpop.permute.xlu0 %1170
        %1172 = vrot.lane.b32.xlu0 %v399, 112
        %v1173 = vpop.permute.xlu0 %1172
        %1174 = vrot.lane.b32.xlu0 %v401, 112
        %v1175 = vpop.permute.xlu0 %1174
        %1176 = vrot.lane.b32.xlu0 %v404, 112
        %v1177 = vpop.permute.xlu0 %1176
        %1178 = vrot.lane.b32.xlu0 %v406, 112
        %v1179 = vpop.permute.xlu0 %1178
        %1180 = vrot.lane.b32.xlu0 %v409, 112
        %v1181 = vpop.permute.xlu0 %1180
        %1182 = vrot.lane.b32.xlu0 %v411, 112
        %v1183 = vpop.permute.xlu0 %1182
        %1184 = vrot.lane.b32.xlu0 %v414, 112
        %v1185 = vpop.permute.xlu0 %1184
        %1186 = vrot.lane.b32.xlu0 %v416, 112
        %v1187 = vpop.permute.xlu0 %1186
        %1188 = vrot.lane.b32.xlu0 %v503, 112
        %v1189 = vpop.permute.xlu0 %1188
        %1190 = vrot.lane.b32.xlu0 %v505, 112
        %v1191 = vpop.permute.xlu0 %1190
        %1192 = vrot.lane.b32.xlu0 %v516, 112
        %v1193 = vpop.permute.xlu0 %1192
        %1194 = vrot.lane.b32.xlu0 %v518, 112
        %v1195 = vpop.permute.xlu0 %1194
        %vm1228 = vcmask 130048
        %v1229 = vsel %vm1228, %v234, %v557
        %v1230 = vsel %vm1228, %v235, %v559
        %v1231 = vsel %vm1228, %v237, %v561
        %v1232 = vsel %vm1228, %v238, %v563
        %v1233 = vsel %vm1228, %v240, %v565
        %v1234 = vsel %vm1228, %v241, %v567
        %v1235 = vsel %vm1228, %v243, %v569
        %v1236 = vsel %vm1228, %v244, %v571
        %v1237 = vsel %vm1228, %v246, %v573
        %v1238 = vsel %vm1228, %v247, %v575
        %v1239 = vsel %vm1228, %v249, %v577
        %v1240 = vsel %vm1228, %v250, %v579
        %v1241 = vsel %vm1228, %v252, %v581
        %v1242 = vsel %vm1228, %v253, %v583
        %v1243 = vsel %vm1228, %v255, %v585
        %v1244 = vsel %vm1228, %v256, %v587
        %v1245 = vsel %vm1228, %v258, %v589
        %v1246 = vsel %vm1228, %v259, %v591
        %v1247 = vsel %vm1228, %v261, %v593
        %v1248 = vsel %vm1228, %v262, %v595
        %v1249 = vsel %vm1228, %v264, %v597
        %v1250 = vsel %vm1228, %v265, %v599
        %v1251 = vsel %vm1228, %v267, %v601
        %v1252 = vsel %vm1228, %v268, %v603
        %v1253 = vsel %vm1228, %v270, %v605
        %v1254 = vsel %vm1228, %v271, %v607
        %v1255 = vsel %vm1228, %v273, %v609
        %v1256 = vsel %vm1228, %v274, %v611
        %v1257 = vsel %vm1228, %v276, %v613
        %v1258 = vsel %vm1228, %v277, %v615
        %v1259 = vsel %vm1228, %v279, %v617
        %v1260 = vsel %vm1228, %v280, %v619
        %vm1261 = vcmask 261120
        %v1262 = vsel %vm1261, %v1229, %v653
        %v1263 = vsel %vm1261, %v1230, %v655
        %v1264 = vsel %vm1261, %v1231, %v657
        %v1265 = vsel %vm1261, %v1232, %v659
        %v1266 = vsel %vm1261, %v1233, %v661
        %v1267 = vsel %vm1261, %v1234, %v663
        %v1268 = vsel %vm1261, %v1235, %v665
        %v1269 = vsel %vm1261, %v1236, %v667
        %v1270 = vsel %vm1261, %v1237, %v669
        %v1271 = vsel %vm1261, %v1238, %v671
        %v1272 = vsel %vm1261, %v1239, %v673
        %v1273 = vsel %vm1261, %v1240, %v675
        %v1274 = vsel %vm1261, %v1241, %v677
        %v1275 = vsel %vm1261, %v1242, %v679
        %v1276 = vsel %vm1261, %v1243, %v681
        %v1277 = vsel %vm1261, %v1244, %v683
        %v1278 = vsel %vm1261, %v1245, %v685
        %v1279 = vsel %vm1261, %v1246, %v687
        %v1280 = vsel %vm1261, %v1247, %v689
        %v1281 = vsel %vm1261, %v1248, %v691
        %v1282 = vsel %vm1261, %v1249, %v693
        %v1283 = vsel %vm1261, %v1250, %v695
        %v1284 = vsel %vm1261, %v1251, %v697
        %v1285 = vsel %vm1261, %v1252, %v699
        %v1286 = vsel %vm1261, %v1253, %v701
        %v1287 = vsel %vm1261, %v1254, %v703
        %v1288 = vsel %vm1261, %v1255, %v705
        %v1289 = vsel %vm1261, %v1256, %v707
        %v1290 = vsel %vm1261, %v1257, %v709
        %v1291 = vsel %vm1261, %v1258, %v711
        %v1292 = vsel %vm1261, %v1259, %v713
        %v1293 = vsel %vm1261, %v1260, %v715
        %vm1294 = vcmask 392192
        %v1295 = vsel %vm1294, %v1262, %v749
        %v1296 = vsel %vm1294, %v1263, %v751
        %v1297 = vsel %vm1294, %v1264, %v753
        %v1298 = vsel %vm1294, %v1265, %v755
        %v1299 = vsel %vm1294, %v1266, %v757
        %v1300 = vsel %vm1294, %v1267, %v759
        %v1301 = vsel %vm1294, %v1268, %v761
        %v1302 = vsel %vm1294, %v1269, %v763
        %v1303 = vsel %vm1294, %v1270, %v765
        %v1304 = vsel %vm1294, %v1271, %v767
        %v1305 = vsel %vm1294, %v1272, %v769
        %v1306 = vsel %vm1294, %v1273, %v771
        %v1307 = vsel %vm1294, %v1274, %v773
        %v1308 = vsel %vm1294, %v1275, %v775
        %v1309 = vsel %vm1294, %v1276, %v777
        %v1310 = vsel %vm1294, %v1277, %v779
        %v1311 = vsel %vm1294, %v1278, %v781
        %v1312 = vsel %vm1294, %v1279, %v783
        %v1313 = vsel %vm1294, %v1280, %v785
        %v1314 = vsel %vm1294, %v1281, %v787
        %v1315 = vsel %vm1294, %v1282, %v789
        %v1316 = vsel %vm1294, %v1283, %v791
        %v1317 = vsel %vm1294, %v1284, %v793
        %v1318 = vsel %vm1294, %v1285, %v795
        %v1319 = vsel %vm1294, %v1286, %v797
        %v1320 = vsel %vm1294, %v1287, %v799
        %v1321 = vsel %vm1294, %v1288, %v801
        %v1322 = vsel %vm1294, %v1289, %v803
        %v1323 = vsel %vm1294, %v1290, %v805
        %v1324 = vsel %vm1294, %v1291, %v807
        %v1325 = vsel %vm1294, %v1292, %v809
        %v1326 = vsel %vm1294, %v1293, %v811
        %vm1327 = vcmask 523264
        %v1328 = vsel %vm1327, %v1295, %v845
        %v1329 = vsel %vm1327, %v1296, %v847
        %v1330 = vsel %vm1327, %v1297, %v849
        %v1331 = vsel %vm1327, %v1298, %v851
        %v1332 = vsel %vm1327, %v1299, %v853
        %v1333 = vsel %vm1327, %v1300, %v855
        %v1334 = vsel %vm1327, %v1301, %v857
        %v1335 = vsel %vm1327, %v1302, %v859
        %v1336 = vsel %vm1327, %v1303, %v861
        %v1337 = vsel %vm1327, %v1304, %v863
        %v1338 = vsel %vm1327, %v1305, %v865
        %v1339 = vsel %vm1327, %v1306, %v867
        %v1340 = vsel %vm1327, %v1307, %v869
        %v1341 = vsel %vm1327, %v1308, %v871
        %v1342 = vsel %vm1327, %v1309, %v873
        %v1343 = vsel %vm1327, %v1310, %v875
        %v1344 = vsel %vm1327, %v1311, %v877
        %v1345 = vsel %vm1327, %v1312, %v879
        %v1346 = vsel %vm1327, %v1313, %v881
        %v1347 = vsel %vm1327, %v1314, %v883
        %v1348 = vsel %vm1327, %v1315, %v885
        %v1349 = vsel %vm1327, %v1316, %v887
        %v1350 = vsel %vm1327, %v1317, %v889
        %v1351 = vsel %vm1327, %v1318, %v891
        %v1352 = vsel %vm1327, %v1319, %v893
        %v1353 = vsel %vm1327, %v1320, %v895
        %v1354 = vsel %vm1327, %v1321, %v897
        %v1355 = vsel %vm1327, %v1322, %v899
        %v1356 = vsel %vm1327, %v1323, %v901
        %v1357 = vsel %vm1327, %v1324, %v903
        %v1358 = vsel %vm1327, %v1325, %v905
        %v1359 = vsel %vm1327, %v1326, %v907
        %vm1360 = vcmask 654336
        %v1361 = vsel %vm1360, %v1328, %v941
        %v1362 = vsel %vm1360, %v1329, %v943
        %v1363 = vsel %vm1360, %v1330, %v945
        %v1364 = vsel %vm1360, %v1331, %v947
        %v1365 = vsel %vm1360, %v1332, %v949
        %v1366 = vsel %vm1360, %v1333, %v951
        %v1367 = vsel %vm1360, %v1334, %v953
        %v1368 = vsel %vm1360, %v1335, %v955
        %v1369 = vsel %vm1360, %v1336, %v957
        %v1370 = vsel %vm1360, %v1337, %v959
        %v1371 = vsel %vm1360, %v1338, %v961
        %v1372 = vsel %vm1360, %v1339, %v963
        %v1373 = vsel %vm1360, %v1340, %v965
        %v1374 = vsel %vm1360, %v1341, %v967
        %v1375 = vsel %vm1360, %v1342, %v969
        %v1376 = vsel %vm1360, %v1343, %v971
        %v1377 = vsel %vm1360, %v1344, %v973
        %v1378 = vsel %vm1360, %v1345, %v975
        %v1379 = vsel %vm1360, %v1346, %v977
        %v1380 = vsel %vm1360, %v1347, %v979
        %v1381 = vsel %vm1360, %v1348, %v981
        %v1382 = vsel %vm1360, %v1349, %v983
        %v1383 = vsel %vm1360, %v1350, %v985
        %v1384 = vsel %vm1360, %v1351, %v987
        %v1385 = vsel %vm1360, %v1352, %v989
        %v1386 = vsel %vm1360, %v1353, %v991
        %v1387 = vsel %vm1360, %v1354, %v993
        %v1388 = vsel %vm1360, %v1355, %v995
        %v1389 = vsel %vm1360, %v1356, %v997
        %v1390 = vsel %vm1360, %v1357, %v999
        %v1391 = vsel %vm1360, %v1358, %v1001
        %v1392 = vsel %vm1360, %v1359, %v1003
        %vm1393 = vcmask 785408
        %v1394 = vsel %vm1393, %v1361, %v1037
        %v1395 = vsel %vm1393, %v1362, %v1039
        %v1396 = vsel %vm1393, %v1363, %v1041
        %v1397 = vsel %vm1393, %v1364, %v1043
        %v1398 = vsel %vm1393, %v1365, %v1045
        %v1399 = vsel %vm1393, %v1366, %v1047
        %v1400 = vsel %vm1393, %v1367, %v1049
        %v1401 = vsel %vm1393, %v1368, %v1051
        %v1402 = vsel %vm1393, %v1369, %v1053
        %v1403 = vsel %vm1393, %v1370, %v1055
        %v1404 = vsel %vm1393, %v1371, %v1057
        %v1405 = vsel %vm1393, %v1372, %v1059
        %v1406 = vsel %vm1393, %v1373, %v1061
        %v1407 = vsel %vm1393, %v1374, %v1063
        %v1408 = vsel %vm1393, %v1375, %v1065
        %v1409 = vsel %vm1393, %v1376, %v1067
        %v1410 = vsel %vm1393, %v1377, %v1069
        %v1411 = vsel %vm1393, %v1378, %v1071
        %v1412 = vsel %vm1393, %v1379, %v1073
        %v1413 = vsel %vm1393, %v1380, %v1075
        %v1414 = vsel %vm1393, %v1381, %v1077
        %v1415 = vsel %vm1393, %v1382, %v1079
        %v1416 = vsel %vm1393, %v1383, %v1081
        %v1417 = vsel %vm1393, %v1384, %v1083
        %v1418 = vsel %vm1393, %v1385, %v1085
        %v1419 = vsel %vm1393, %v1386, %v1087
        %v1420 = vsel %vm1393, %v1387, %v1089
        %v1421 = vsel %vm1393, %v1388, %v1091
        %v1422 = vsel %vm1393, %v1389, %v1093
        %v1423 = vsel %vm1393, %v1390, %v1095
        %v1424 = vsel %vm1393, %v1391, %v1097
        %v1425 = vsel %vm1393, %v1392, %v1099
        %vm1426 = vcmask 916480
        %v1427 = vsel %vm1426, %v1394, %v1133
        %v1428 = vsel %vm1426, %v1395, %v1135
        %v1429 = vsel %vm1426, %v1396, %v1137
        %v1430 = vsel %vm1426, %v1397, %v1139
        %v1431 = vsel %vm1426, %v1398, %v1141
        %v1432 = vsel %vm1426, %v1399, %v1143
        %v1433 = vsel %vm1426, %v1400, %v1145
        %v1434 = vsel %vm1426, %v1401, %v1147
        %v1435 = vsel %vm1426, %v1402, %v1149
        %v1436 = vsel %vm1426, %v1403, %v1151
        %v1437 = vsel %vm1426, %v1404, %v1153
        %v1438 = vsel %vm1426, %v1405, %v1155
        %v1439 = vsel %vm1426, %v1406, %v1157
        %v1440 = vsel %vm1426, %v1407, %v1159
        %v1441 = vsel %vm1426, %v1408, %v1161
        %v1442 = vsel %vm1426, %v1409, %v1163
        %v1443 = vsel %vm1426, %v1410, %v1165
        %v1444 = vsel %vm1426, %v1411, %v1167
        %v1445 = vsel %vm1426, %v1412, %v1169
        %v1446 = vsel %vm1426, %v1413, %v1171
        %v1447 = vsel %vm1426, %v1414, %v1173
        %v1448 = vsel %vm1426, %v1415, %v1175
        %v1449 = vsel %vm1426, %v1416, %v1177
        %v1450 = vsel %vm1426, %v1417, %v1179
        %v1451 = vsel %vm1426, %v1418, %v1181
        %v1452 = vsel %vm1426, %v1419, %v1183
        %v1453 = vsel %vm1426, %v1420, %v1185
        %v1454 = vsel %vm1426, %v1421, %v1187
        %v1455 = vsel %vm1426, %v1422, %v1189
        %v1456 = vsel %vm1426, %v1423, %v1191
        %v1457 = vsel %vm1426, %v1424, %v1193
        %v1458 = vsel %vm1426, %v1425, %v1195
        %v1459 = vpack.c.bf16 %v1428, %v1427
        %v1460 = vpack.c.bf16 %v432, %v430
        %v1461 = vpack.c.bf16 %v1430, %v1429
        %v1462 = vpack.c.bf16 %v437, %v435
        %v1463 = vpack.c.bf16 %v1432, %v1431
        %v1464 = vpack.c.bf16 %v442, %v440
        %v1465 = vpack.c.bf16 %v1434, %v1433
        %v1466 = vpack.c.bf16 %v447, %v445
        %v1467 = vpack.c.bf16 %v1436, %v1435
        %v1468 = vpack.c.bf16 %v452, %v450
        %v1469 = vpack.c.bf16 %v1438, %v1437
        %v1470 = vpack.c.bf16 %v457, %v455
        %v1471 = vpack.c.bf16 %v1440, %v1439
        %v1472 = vpack.c.bf16 %v462, %v460
        %v1473 = vpack.c.bf16 %v1442, %v1441
        %v1474 = vpack.c.bf16 %v467, %v465
        %v1475 = vpack.c.bf16 %v1444, %v1443
        %v1476 = vpack.c.bf16 %v472, %v470
        %v1477 = vpack.c.bf16 %v1446, %v1445
        %v1478 = vpack.c.bf16 %v477, %v475
        %v1479 = vpack.c.bf16 %v1448, %v1447
        %v1480 = vpack.c.bf16 %v482, %v480
        %v1481 = vpack.c.bf16 %v1450, %v1449
        %v1482 = vpack.c.bf16 %v487, %v485
        %v1483 = vpack.c.bf16 %v1452, %v1451
        %v1484 = vpack.c.bf16 %v492, %v490
        %v1485 = vpack.c.bf16 %v1454, %v1453
        %v1486 = vpack.c.bf16 %v497, %v495
        %v1487 = vpack.c.bf16 %v1456, %v1455
        %v1488 = vpack.c.bf16 %v510, %v508
        %v1489 = vpack.c.bf16 %v1458, %v1457
        %v1490 = vpack.c.bf16 %v523, %v521
        %v1491 = vld [vmem:[#allocation5] sm:$0xf]
        %v1492 = vld [vmem:[#allocation5 + $0x4] sm:$0xf]
        %v1493 = vld [vmem:[#allocation5 + $0x8] sm:$0xf]
        %v1494 = vld [vmem:[#allocation5 + $0xc] sm:$0xf]
        %v1495 = vld [vmem:[#allocation5 + $0x10] sm:$0xf]
        %v1496 = vld [vmem:[#allocation5 + $0x14] sm:$0xf]
        %v1497 = vld [vmem:[#allocation5 + $0x18] sm:$0xf]
        %v1498 = vld [vmem:[#allocation5 + $0x1c] sm:$0xf]
        %v1499 = vld [vmem:[#allocation5 + $0x20] sm:$0xf]
        %v1500 = vld [vmem:[#allocation5 + $0x24] sm:$0xf]
        %v1501 = vld [vmem:[#allocation5 + $0x28] sm:$0xf]
        %v1502 = vld [vmem:[#allocation5 + $0x2c] sm:$0xf]
        %v1503 = vld [vmem:[#allocation5 + $0x30] sm:$0xf]
        %v1504 = vld [vmem:[#allocation5 + $0x34] sm:$0xf]
        %v1505 = vld [vmem:[#allocation5 + $0x38] sm:$0xf]
        %v1506 = vld [vmem:[#allocation5 + $0x3c] sm:$0xf]
        %v1507 = vld [vmem:[#allocation5 + $0x40] sm:$0xf]
        %v1508 = vld [vmem:[#allocation5 + $0x44] sm:$0xf]
        %v1509 = vld [vmem:[#allocation7] sm:$0x1]
        %v1511 = vlaneseq
        %v1512 = vshrl.u32 %v1511, 7
        %v1513 = vsub.s32 0, %v1512
        %v1514 = vrot.slane %v1509, %v1513
        %v1534 = vunpack.c.l.b16 %v1491
        %v1535 = vunpack.c.l.b16 %v1492
        %v1536 = vunpack.c.l.b16 %v1493
        %v1537 = vunpack.c.l.b16 %v1494
        %v1538 = vunpack.c.l.b16 %v1495
        %v1539 = vunpack.c.l.b16 %v1496
        %v1540 = vunpack.c.l.b16 %v1497
        %v1541 = vunpack.c.l.b16 %v1498
        %v1542 = vunpack.c.l.b16 %v1499
        %v1543 = vunpack.c.l.b16 %v1500
        %v1544 = vunpack.c.l.b16 %v1501
        %v1545 = vunpack.c.l.b16 %v1502
        %v1546 = vunpack.c.l.b16 %v1503
        %v1547 = vunpack.c.l.b16 %v1504
        %v1548 = vunpack.c.l.b16 %v1505
        %v1549 = vunpack.c.l.b16 %v1506
        %v1550 = vunpack.c.l.b16 %v1507
        %v1551 = vunpack.c.l.b16 %v1508
        %v1552 = vpack.c.b16 %v1535, %v1534
        %v1553 = vpack.c.b16 %v1537, %v1536
        %v1554 = vpack.c.b16 %v1539, %v1538
        %v1555 = vpack.c.b16 %v1541, %v1540
        %v1556 = vpack.c.b16 %v1543, %v1542
        %v1557 = vpack.c.b16 %v1545, %v1544
        %v1558 = vpack.c.b16 %v1547, %v1546
        %v1559 = vpack.c.b16 %v1549, %v1548
        %v1560 = vpack.c.b16 %v1551, %v1550
        %v1571 = vsel %vm1228, %v1460, 0
        %v1574 = vsel %vm1228, %v1462, 0
        %v1577 = vsel %vm1228, %v1464, 0
        %v1580 = vsel %vm1228, %v1466, 0
        %v1583 = vsel %vm1228, %v1468, 0
        %v1586 = vsel %vm1228, %v1470, 0
        %v1589 = vsel %vm1228, %v1472, 0
        %v1592 = vsel %vm1228, %v1474, 0
        %v1595 = vsel %vm1228, %v1476, 0
        %v1598 = vsel %vm1228, %v1478, 0
        %v1601 = vsel %vm1228, %v1480, 0
        %v1604 = vsel %vm1228, %v1482, 0
        %v1607 = vsel %vm1228, %v1484, 0
        %v1610 = vsel %vm1228, %v1486, 0
        %v1613 = vsel %vm1228, %v1488, 0
        %v1616 = vsel %vm1228, %v1490, 0
        %1618 = vmatprep.subr.bf16.mxu0 0
        %1619 = vmatpush1.bf16.msra.mxu0 %v1552
        %1620 = vmatprep.subr.bf16.mxu0 0
        %1621 = vmatpush1.bf16.msra.mxu0 %v1553
        %1622 = vmatprep.subr.bf16.mxu0 0
        %1623 = vmatpush1.bf16.msra.mxu0 %v1554
        %1624 = vmatprep.subr.bf16.mxu0 0
        %1625 = vmatpush1.bf16.msra.mxu0 %v1555
        %1626 = vmatprep.subr.bf16.mxu0 0
        %1627 = vmatpush1.bf16.msra.mxu0 %v1556
        %1628 = vmatprep.subr.bf16.mxu0 0
        %1629 = vmatpush1.bf16.msra.mxu0 %v1557
        %1630 = vmatprep.subr.bf16.mxu0 0
        %1631 = vmatpush1.bf16.msra.mxu0 %v1558
        %1632 = vmatprep.subr.bf16.mxu0 0
        %1633 = vmatpush1.bf16.msra.mxu0 %v1559
        %1634 = vmatprep.subr.bf16.mxu0 0
        %1635 = vmatpush1.bf16.msra.mxu0 %v1560
        %1636 = vmatprep.subr.bf16.mxu0 0
        %1637 = vmatpush1.bf16.msra.mxu0 0
        %1638 = vmatprep.subr.bf16.mxu0 0
        %1639 = vmatpush1.bf16.msra.mxu0 0
        %1640 = vmatprep.subr.bf16.mxu0 0
        %1641 = vmatpush1.bf16.msra.mxu0 0
        %1642 = vmatprep.subr.bf16.mxu0 0
        %1643 = vmatpush1.bf16.msra.mxu0 0
        %1644 = vmatprep.subr.bf16.mxu0 0
        %1645 = vmatpush1.bf16.msra.mxu0 0
        %1646 = vmatprep.subr.bf16.mxu0 0
        %1647 = vmatpush1.bf16.msra.mxu0 0
        %1648 = vmatprep.subr.bf16.mxu0 0
        %1649 = vmatpush1.bf16.msra.mxu0 0
        %1650 = vmatprep.mubr.bf16.mxu0 %v1571
        %1651 = vmatmul.mubr.bf16.gmra.mrb[0].mxu0 %v1459
        %v1652 = vpop.f32.mrb[0].mxu0
        %v1653 = vadd.f32 %v1514, %v1652
        %v1654 = vpop.f32.mrb[0].mxu0
        %v1655 = vpop.f32.mrb[0].mxu0
        %v1656 = vadd.f32 %v1514, %v1655
        %v1657 = vpop.f32.mrb[0].mxu0
        %1658 = vmatprep.mubr.bf16.mxu0 %v1574
        %1659 = vmatmul.mubr.bf16.gmra.mrb[0].mxu0 %v1461
        %v1660 = vpop.f32.mrb[0].mxu0
        %v1661 = vadd.f32 %v1514, %v1660
        %v1662 = vpop.f32.mrb[0].mxu0
        %v1663 = vpop.f32.mrb[0].mxu0
        %v1664 = vadd.f32 %v1514, %v1663
        %v1665 = vpop.f32.mrb[0].mxu0
        %1666 = vmatprep.mubr.bf16.mxu0 %v1577
        %1667 = vmatmul.mubr.bf16.gmra.mrb[0].mxu0 %v1463
        %v1668 = vpop.f32.mrb[0].mxu0
        %v1669 = vadd.f32 %v1514, %v1668
        %v1670 = vpop.f32.mrb[0].mxu0
        %v1671 = vpop.f32.mrb[0].mxu0
        %v1672 = vadd.f32 %v1514, %v1671
        %v1673 = vpop.f32.mrb[0].mxu0
        %1674 = vmatprep.mubr.bf16.mxu0 %v1580
        %1675 = vmatmul.mubr.bf16.gmra.mrb[0].mxu0 %v1465
        %v1676 = vpop.f32.mrb[0].mxu0
        %v1677 = vadd.f32 %v1514, %v1676
        %v1678 = vpop.f32.mrb[0].mxu0
        %v1679 = vpop.f32.mrb[0].mxu0
        %v1680 = vadd.f32 %v1514, %v1679
        %v1681 = vpop.f32.mrb[0].mxu0
        %1682 = vmatprep.mubr.bf16.mxu0 %v1583
        %1683 = vmatmul.mubr.bf16.gmra.mrb[0].mxu0 %v1467
        %v1684 = vpop.f32.mrb[0].mxu0
        %v1685 = vadd.f32 %v1514, %v1684
        %v1686 = vpop.f32.mrb[0].mxu0
        %v1687 = vpop.f32.mrb[0].mxu0
        %v1688 = vadd.f32 %v1514, %v1687
        %v1689 = vpop.f32.mrb[0].mxu0
        %1690 = vmatprep.mubr.bf16.mxu0 %v1586
        %1691 = vmatmul.mubr.bf16.gmra.mrb[0].mxu0 %v1469
        %v1692 = vpop.f32.mrb[0].mxu0
        %v1693 = vadd.f32 %v1514, %v1692
        %v1694 = vpop.f32.mrb[0].mxu0
        %v1695 = vpop.f32.mrb[0].mxu0
        %v1696 = vadd.f32 %v1514, %v1695
        %v1697 = vpop.f32.mrb[0].mxu0
        %1698 = vmatprep.mubr.bf16.mxu0 %v1589
        %1699 = vmatmul.mubr.bf16.gmra.mrb[0].mxu0 %v1471
        %v1700 = vpop.f32.mrb[0].mxu0
        %v1701 = vadd.f32 %v1514, %v1700
        %v1702 = vpop.f32.mrb[0].mxu0
        %v1703 = vpop.f32.mrb[0].mxu0
        %v1704 = vadd.f32 %v1514, %v1703
        %v1705 = vpop.f32.mrb[0].mxu0
        %1706 = vmatprep.mubr.bf16.mxu0 %v1592
        %1707 = vmatmul.mubr.bf16.gmra.mrb[0].mxu0 %v1473
        %v1708 = vpop.f32.mrb[0].mxu0
        %v1709 = vadd.f32 %v1514, %v1708
        %v1710 = vpop.f32.mrb[0].mxu0
        %v1711 = vpop.f32.mrb[0].mxu0
        %v1712 = vadd.f32 %v1514, %v1711
        %v1713 = vpop.f32.mrb[0].mxu0
        %1714 = vmatprep.mubr.bf16.mxu0 %v1595
        %1715 = vmatmul.mubr.bf16.gmra.mrb[0].mxu0 %v1475
        %v1716 = vpop.f32.mrb[0].mxu0
        %v1717 = vadd.f32 %v1514, %v1716
        %v1718 = vpop.f32.mrb[0].mxu0
        %v1719 = vpop.f32.mrb[0].mxu0
        %v1720 = vadd.f32 %v1514, %v1719
        %v1721 = vpop.f32.mrb[0].mxu0
        %1722 = vmatprep.mubr.bf16.mxu0 %v1598
        %1723 = vmatmul.mubr.bf16.gmra.mrb[0].mxu0 %v1477
        %v1724 = vpop.f32.mrb[0].mxu0
        %v1725 = vadd.f32 %v1514, %v1724
        %v1726 = vpop.f32.mrb[0].mxu0
        %v1727 = vpop.f32.mrb[0].mxu0
        %v1728 = vadd.f32 %v1514, %v1727
        %v1729 = vpop.f32.mrb[0].mxu0
        %1730 = vmatprep.mubr.bf16.mxu0 %v1601
        %1731 = vmatmul.mubr.bf16.gmra.mrb[0].mxu0 %v1479
        %v1732 = vpop.f32.mrb[0].mxu0
        %v1733 = vadd.f32 %v1514, %v1732
        %v1734 = vpop.f32.mrb[0].mxu0
        %v1735 = vpop.f32.mrb[0].mxu0
        %v1736 = vadd.f32 %v1514, %v1735
        %v1737 = vpop.f32.mrb[0].mxu0
        %1738 = vmatprep.mubr.bf16.mxu0 %v1604
        %1739 = vmatmul.mubr.bf16.gmra.mrb[0].mxu0 %v1481
        %v1740 = vpop.f32.mrb[0].mxu0
        %v1741 = vadd.f32 %v1514, %v1740
        %v1742 = vpop.f32.mrb[0].mxu0
        %v1743 = vpop.f32.mrb[0].mxu0
        %v1744 = vadd.f32 %v1514, %v1743
        %v1745 = vpop.f32.mrb[0].mxu0
        %1746 = vmatprep.mubr.bf16.mxu0 %v1607
        %1747 = vmatmul.mubr.bf16.gmra.mrb[0].mxu0 %v1483
        %v1748 = vpop.f32.mrb[0].mxu0
        %v1749 = vadd.f32 %v1514, %v1748
        %v1750 = vpop.f32.mrb[0].mxu0
        %v1751 = vpop.f32.mrb[0].mxu0
        %v1752 = vadd.f32 %v1514, %v1751
        %v1753 = vpop.f32.mrb[0].mxu0
        %1754 = vmatprep.mubr.bf16.mxu0 %v1610
        %1755 = vmatmul.mubr.bf16.gmra.mrb[0].mxu0 %v1485
        %v1756 = vpop.f32.mrb[0].mxu0
        %v1757 = vadd.f32 %v1514, %v1756
        %v1758 = vpop.f32.mrb[0].mxu0
        %v1759 = vpop.f32.mrb[0].mxu0
        %v1760 = vadd.f32 %v1514, %v1759
        %v1761 = vpop.f32.mrb[0].mxu0
        %1762 = vmatprep.mubr.bf16.mxu0 %v1613
        %1763 = vmatmul.mubr.bf16.gmra.mrb[0].mxu0 %v1487
        %v1764 = vpop.f32.mrb[0].mxu0
        %v1765 = vadd.f32 %v1514, %v1764
        %v1766 = vpop.f32.mrb[0].mxu0
        %v1767 = vpop.f32.mrb[0].mxu0
        %v1768 = vadd.f32 %v1514, %v1767
        %v1769 = vpop.f32.mrb[0].mxu0
        %1770 = vmatprep.mubr.bf16.mxu0 %v1616
        %1771 = vmatmul.mubr.bf16.gmra.mrb[0].mxu0 %v1489
        %v1772 = vpop.f32.mrb[0].mxu0
        %v1773 = vadd.f32 %v1514, %v1772
        %v1774 = vpop.f32.mrb[0].mxu0
        %v1775 = vpop.f32.mrb[0].mxu0
        %v1776 = vadd.f32 %v1514, %v1775
        %v1777 = vpop.f32.mrb[0].mxu0
        %1778 = vdwg.mxu0
        %v1779 = vmax.f32 %v1653, 0.0
        %v1780 = vmax.f32 %v1656, 0.0
        %v1781 = vmax.f32 %v1661, 0.0
        %v1782 = vmax.f32 %v1664, 0.0
        %v1783 = vmax.f32 %v1669, 0.0
        %v1784 = vmax.f32 %v1672, 0.0
        %v1785 = vmax.f32 %v1677, 0.0
        %v1786 = vmax.f32 %v1680, 0.0
        %v1787 = vmax.f32 %v1685, 0.0
        %v1788 = vmax.f32 %v1688, 0.0
        %v1789 = vmax.f32 %v1693, 0.0
        %v1790 = vmax.f32 %v1696, 0.0
        %v1791 = vmax.f32 %v1701, 0.0
        %v1792 = vmax.f32 %v1704, 0.0
        %v1793 = vmax.f32 %v1709, 0.0
        %v1794 = vmax.f32 %v1712, 0.0
        %v1795 = vmax.f32 %v1717, 0.0
        %v1796 = vmax.f32 %v1720, 0.0
        %v1797 = vmax.f32 %v1725, 0.0
        %v1798 = vmax.f32 %v1728, 0.0
        %v1799 = vmax.f32 %v1733, 0.0
        %v1800 = vmax.f32 %v1736, 0.0
        %v1801 = vmax.f32 %v1741, 0.0
        %v1802 = vmax.f32 %v1744, 0.0
        %v1803 = vmax.f32 %v1749, 0.0
        %v1804 = vmax.f32 %v1752, 0.0
        %v1805 = vmax.f32 %v1757, 0.0
        %v1806 = vmax.f32 %v1760, 0.0
        %v1807 = vmax.f32 %v1765, 0.0
        %v1808 = vmax.f32 %v1768, 0.0
        %v1809 = vmax.f32 %v1773, 0.0
        %v1810 = vmax.f32 %v1776, 0.0
        %v1811 = vmax.f32 %v1779, %v1781
        %v1812 = vmax.f32 %v1780, %v1782
        %v1813 = vmax.f32 %v1783, %v1785
        %v1814 = vmax.f32 %v1784, %v1786
        %v1815 = vmax.f32 %v1787, %v1789
        %v1816 = vmax.f32 %v1788, %v1790
        %v1817 = vmax.f32 %v1791, %v1793
        %v1818 = vmax.f32 %v1792, %v1794
        %v1819 = vmax.f32 %v1795, %v1797
        %v1820 = vmax.f32 %v1796, %v1798
        %v1821 = vmax.f32 %v1799, %v1801
        %v1822 = vmax.f32 %v1800, %v1802
        %v1823 = vmax.f32 %v1803, %v1805
        %v1824 = vmax.f32 %v1804, %v1806
        %v1825 = vmax.f32 %v1807, %v1809
        %v1826 = vmax.f32 %v1808, %v1810
        %v1843 = vcombine.high %v1811, %v1811
        %v1845 = vunpack.c.l.s4 1983009808
        %v1846 = vunpack.c.0.s8 %v1845
        %v1847 = vlaneseq
        %v1848 = vshrl.u32 %v1847, 7
        %v1849 = vsub.s32 %v1846, %v1848
        %v1850 = vrot.slane %v1811, %v1849
        %v1852 = vunpack.c.l.s4 1983009808
        %v1853 = vunpack.c.0.s8 %v1852
        %v1854 = vlaneseq
        %v1855 = vshrl.u32 %v1854, 7
        %v1856 = vsub.s32 %v1853, %v1855
        %v1857 = vrot.slane %v1843, %v1856
        %v1858 = vcombine.high %v1850, %v1850
        %v1859 = vcombine.high %v1857, %v1857
        %v1860 = vcombine.high %v1812, %v1812
        %v1862 = vunpack.c.l.s4 1983009808
        %v1863 = vunpack.c.0.s8 %v1862
        %v1864 = vlaneseq
        %v1865 = vshrl.u32 %v1864, 7
        %v1866 = vsub.s32 %v1863, %v1865
        %v1867 = vrot.slane %v1812, %v1866
        %v1869 = vunpack.c.l.s4 1983009808
        %v1870 = vunpack.c.0.s8 %v1869
        %v1871 = vlaneseq
        %v1872 = vshrl.u32 %v1871, 7
        %v1873 = vsub.s32 %v1870, %v1872
        %v1874 = vrot.slane %v1860, %v1873
        %v1875 = vcombine.high %v1867, %v1867
        %v1876 = vcombine.high %v1874, %v1874
        %v1877 = vcombine.high %v1813, %v1813
        %v1879 = vunpack.c.l.s4 1983009808
        %v1880 = vunpack.c.0.s8 %v1879
        %v1881 = vlaneseq
        %v1882 = vshrl.u32 %v1881, 7
        %v1883 = vsub.s32 %v1880, %v1882
        %v1884 = vrot.slane %v1813, %v1883
        %v1886 = vunpack.c.l.s4 1983009808
        %v1887 = vunpack.c.0.s8 %v1886
        %v1888 = vlaneseq
        %v1889 = vshrl.u32 %v1888, 7
        %v1890 = vsub.s32 %v1887, %v1889
        %v1891 = vrot.slane %v1877, %v1890
        %v1892 = vcombine.high %v1884, %v1884
        %v1893 = vcombine.high %v1891, %v1891
        %v1894 = vcombine.high %v1814, %v1814
        %v1896 = vunpack.c.l.s4 1983009808
        %v1897 = vunpack.c.0.s8 %v1896
        %v1898 = vlaneseq
        %v1899 = vshrl.u32 %v1898, 7
        %v1900 = vsub.s32 %v1897, %v1899
        %v1901 = vrot.slane %v1814, %v1900
        %v1903 = vunpack.c.l.s4 1983009808
        %v1904 = vunpack.c.0.s8 %v1903
        %v1905 = vlaneseq
        %v1906 = vshrl.u32 %v1905, 7
        %v1907 = vsub.s32 %v1904, %v1906
        %v1908 = vrot.slane %v1894, %v1907
        %v1909 = vcombine.high %v1901, %v1901
        %v1910 = vcombine.high %v1908, %v1908
        %v1911 = vcombine.high %v1815, %v1815
        %v1913 = vunpack.c.l.s4 1983009808
        %v1914 = vunpack.c.0.s8 %v1913
        %v1915 = vlaneseq
        %v1916 = vshrl.u32 %v1915, 7
        %v1917 = vsub.s32 %v1914, %v1916
        %v1918 = vrot.slane %v1815, %v1917
        %v1920 = vunpack.c.l.s4 1983009808
        %v1921 = vunpack.c.0.s8 %v1920
        %v1922 = vlaneseq
        %v1923 = vshrl.u32 %v1922, 7
        %v1924 = vsub.s32 %v1921, %v1923
        %v1925 = vrot.slane %v1911, %v1924
        %v1926 = vcombine.high %v1918, %v1918
        %v1927 = vcombine.high %v1925, %v1925
        %v1928 = vcombine.high %v1816, %v1816
        %v1930 = vunpack.c.l.s4 1983009808
        %v1931 = vunpack.c.0.s8 %v1930
        %v1932 = vlaneseq
        %v1933 = vshrl.u32 %v1932, 7
        %v1934 = vsub.s32 %v1931, %v1933
        %v1935 = vrot.slane %v1816, %v1934
        %v1937 = vunpack.c.l.s4 1983009808
        %v1938 = vunpack.c.0.s8 %v1937
        %v1939 = vlaneseq
        %v1940 = vshrl.u32 %v1939, 7
        %v1941 = vsub.s32 %v1938, %v1940
        %v1942 = vrot.slane %v1928, %v1941
        %v1943 = vcombine.high %v1935, %v1935
        %v1944 = vcombine.high %v1942, %v1942
        %v1945 = vcombine.high %v1817, %v1817
        %v1947 = vunpack.c.l.s4 1983009808
        %v1948 = vunpack.c.0.s8 %v1947
        %v1949 = vlaneseq
        %v1950 = vshrl.u32 %v1949, 7
        %v1951 = vsub.s32 %v1948, %v1950
        %v1952 = vrot.slane %v1817, %v1951
        %v1954 = vunpack.c.l.s4 1983009808
        %v1955 = vunpack.c.0.s8 %v1954
        %v1956 = vlaneseq
        %v1957 = vshrl.u32 %v1956, 7
        %v1958 = vsub.s32 %v1955, %v1957
        %v1959 = vrot.slane %v1945, %v1958
        %v1960 = vcombine.high %v1952, %v1952
        %v1961 = vcombine.high %v1959, %v1959
        %v1962 = vcombine.high %v1818, %v1818
        %v1964 = vunpack.c.l.s4 1983009808
        %v1965 = vunpack.c.0.s8 %v1964
        %v1966 = vlaneseq
        %v1967 = vshrl.u32 %v1966, 7
        %v1968 = vsub.s32 %v1965, %v1967
        %v1969 = vrot.slane %v1818, %v1968
        %v1971 = vunpack.c.l.s4 1983009808
        %v1972 = vunpack.c.0.s8 %v1971
        %v1973 = vlaneseq
        %v1974 = vshrl.u32 %v1973, 7
        %v1975 = vsub.s32 %v1972, %v1974
        %v1976 = vrot.slane %v1962, %v1975
        %v1977 = vcombine.high %v1969, %v1969
        %v1978 = vcombine.high %v1976, %v1976
        %v1979 = vcombine.high %v1819, %v1819
        %v1981 = vunpack.c.l.s4 1983009808
        %v1982 = vunpack.c.0.s8 %v1981
        %v1983 = vlaneseq
        %v1984 = vshrl.u32 %v1983, 7
        %v1985 = vsub.s32 %v1982, %v1984
        %v1986 = vrot.slane %v1819, %v1985
        %v1988 = vunpack.c.l.s4 1983009808
        %v1989 = vunpack.c.0.s8 %v1988
        %v1990 = vlaneseq
        %v1991 = vshrl.u32 %v1990, 7
        %v1992 = vsub.s32 %v1989, %v1991
        %v1993 = vrot.slane %v1979, %v1992
        %v1994 = vcombine.high %v1986, %v1986
        %v1995 = vcombine.high %v1993, %v1993
        %v1996 = vcombine.high %v1820, %v1820
        %v1998 = vunpack.c.l.s4 1983009808
        %v1999 = vunpack.c.0.s8 %v1998
        %v2000 = vlaneseq
        %v2001 = vshrl.u32 %v2000, 7
        %v2002 = vsub.s32 %v1999, %v2001
        %v2003 = vrot.slane %v1820, %v2002
        %v2005 = vunpack.c.l.s4 1983009808
        %v2006 = vunpack.c.0.s8 %v2005
        %v2007 = vlaneseq
        %v2008 = vshrl.u32 %v2007, 7
        %v2009 = vsub.s32 %v2006, %v2008
        %v2010 = vrot.slane %v1996, %v2009
        %v2011 = vcombine.high %v2003, %v2003
        %v2012 = vcombine.high %v2010, %v2010
        %v2013 = vcombine.high %v1821, %v1821
        %v2015 = vunpack.c.l.s4 1983009808
        %v2016 = vunpack.c.0.s8 %v2015
        %v2017 = vlaneseq
        %v2018 = vshrl.u32 %v2017, 7
        %v2019 = vsub.s32 %v2016, %v2018
        %v2020 = vrot.slane %v1821, %v2019
        %v2022 = vunpack.c.l.s4 1983009808
        %v2023 = vunpack.c.0.s8 %v2022
        %v2024 = vlaneseq
        %v2025 = vshrl.u32 %v2024, 7
        %v2026 = vsub.s32 %v2023, %v2025
        %v2027 = vrot.slane %v2013, %v2026
        %v2028 = vcombine.high %v2020, %v2020
        %v2029 = vcombine.high %v2027, %v2027
        %v2030 = vcombine.high %v1822, %v1822
        %v2032 = vunpack.c.l.s4 1983009808
        %v2033 = vunpack.c.0.s8 %v2032
        %v2034 = vlaneseq
        %v2035 = vshrl.u32 %v2034, 7
        %v2036 = vsub.s32 %v2033, %v2035
        %v2037 = vrot.slane %v1822, %v2036
        %v2039 = vunpack.c.l.s4 1983009808
        %v2040 = vunpack.c.0.s8 %v2039
        %v2041 = vlaneseq
        %v2042 = vshrl.u32 %v2041, 7
        %v2043 = vsub.s32 %v2040, %v2042
        %v2044 = vrot.slane %v2030, %v2043
        %v2045 = vcombine.high %v2037, %v2037
        %v2046 = vcombine.high %v2044, %v2044
        %v2047 = vcombine.high %v1823, %v1823
        %v2049 = vunpack.c.l.s4 1983009808
        %v2050 = vunpack.c.0.s8 %v2049
        %v2051 = vlaneseq
        %v2052 = vshrl.u32 %v2051, 7
        %v2053 = vsub.s32 %v2050, %v2052
        %v2054 = vrot.slane %v1823, %v2053
        %v2056 = vunpack.c.l.s4 1983009808
        %v2057 = vunpack.c.0.s8 %v2056
        %v2058 = vlaneseq
        %v2059 = vshrl.u32 %v2058, 7
        %v2060 = vsub.s32 %v2057, %v2059
        %v2061 = vrot.slane %v2047, %v2060
        %v2062 = vcombine.high %v2054, %v2054
        %v2063 = vcombine.high %v2061, %v2061
        %v2064 = vcombine.high %v1824, %v1824
        %v2066 = vunpack.c.l.s4 1983009808
        %v2067 = vunpack.c.0.s8 %v2066
        %v2068 = vlaneseq
        %v2069 = vshrl.u32 %v2068, 7
        %v2070 = vsub.s32 %v2067, %v2069
        %v2071 = vrot.slane %v1824, %v2070
        %v2073 = vunpack.c.l.s4 1983009808
        %v2074 = vunpack.c.0.s8 %v2073
        %v2075 = vlaneseq
        %v2076 = vshrl.u32 %v2075, 7
        %v2077 = vsub.s32 %v2074, %v2076
        %v2078 = vrot.slane %v2064, %v2077
        %v2079 = vcombine.high %v2071, %v2071
        %v2080 = vcombine.high %v2078, %v2078
        %v2081 = vcombine.high %v1825, %v1825
        %v2083 = vunpack.c.l.s4 1983009808
        %v2084 = vunpack.c.0.s8 %v2083
        %v2085 = vlaneseq
        %v2086 = vshrl.u32 %v2085, 7
        %v2087 = vsub.s32 %v2084, %v2086
        %v2088 = vrot.slane %v1825, %v2087
        %v2090 = vunpack.c.l.s4 1983009808
        %v2091 = vunpack.c.0.s8 %v2090
        %v2092 = vlaneseq
        %v2093 = vshrl.u32 %v2092, 7
        %v2094 = vsub.s32 %v2091, %v2093
        %v2095 = vrot.slane %v2081, %v2094
        %v2096 = vcombine.high %v2088, %v2088
        %v2097 = vcombine.high %v2095, %v2095
        %v2098 = vcombine.high %v1826, %v1826
        %v2100 = vunpack.c.l.s4 1983009808
        %v2101 = vunpack.c.0.s8 %v2100
        %v2102 = vlaneseq
        %v2103 = vshrl.u32 %v2102, 7
        %v2104 = vsub.s32 %v2101, %v2103
        %v2105 = vrot.slane %v1826, %v2104
        %v2107 = vunpack.c.l.s4 1983009808
        %v2108 = vunpack.c.0.s8 %v2107
        %v2109 = vlaneseq
        %v2110 = vshrl.u32 %v2109, 7
        %v2111 = vsub.s32 %v2108, %v2110
        %v2112 = vrot.slane %v2098, %v2111
        %v2113 = vcombine.high %v2105, %v2105
        %v2114 = vcombine.high %v2112, %v2112
        %v2179 = vrot.slane %v1850, 7
        %v2180 = vrot.slane %v2179, 2
        %v2181 = vrot.slane %v1858, 7
        %v2182 = vrot.slane %v2181, 2
        %v2183 = vrot.slane %v1857, 7
        %v2184 = vrot.slane %v2183, 2
        %v2185 = vrot.slane %v1859, 7
        %v2186 = vrot.slane %v2185, 2
        %v2187 = vrot.slane %v1867, 7
        %v2188 = vrot.slane %v2187, 2
        %v2189 = vrot.slane %v1875, 7
        %v2190 = vrot.slane %v2189, 2
        %v2191 = vrot.slane %v1874, 7
        %v2192 = vrot.slane %v2191, 2
        %v2193 = vrot.slane %v1876, 7
        %v2194 = vrot.slane %v2193, 2
        %v2195 = vrot.slane %v1884, 7
        %v2196 = vrot.slane %v2195, 2
        %v2197 = vrot.slane %v1892, 7
        %v2198 = vrot.slane %v2197, 2
        %v2199 = vrot.slane %v1891, 7
        %v2200 = vrot.slane %v2199, 2
        %v2201 = vrot.slane %v1893, 7
        %v2202 = vrot.slane %v2201, 2
        %v2203 = vrot.slane %v1901, 7
        %v2204 = vrot.slane %v2203, 2
        %v2205 = vrot.slane %v1909, 7
        %v2206 = vrot.slane %v2205, 2
        %v2207 = vrot.slane %v1908, 7
        %v2208 = vrot.slane %v2207, 2
        %v2209 = vrot.slane %v1910, 7
        %v2210 = vrot.slane %v2209, 2
        %v2211 = vrot.slane %v1918, 7
        %v2212 = vrot.slane %v2211, 2
        %v2213 = vrot.slane %v1926, 7
        %v2214 = vrot.slane %v2213, 2
        %v2215 = vrot.slane %v1925, 7
        %v2216 = vrot.slane %v2215, 2
        %v2217 = vrot.slane %v1927, 7
        %v2218 = vrot.slane %v2217, 2
        %v2219 = vrot.slane %v1935, 7
        %v2220 = vrot.slane %v2219, 2
        %v2221 = vrot.slane %v1943, 7
        %v2222 = vrot.slane %v2221, 2
        %v2223 = vrot.slane %v1942, 7
        %v2224 = vrot.slane %v2223, 2
        %v2225 = vrot.slane %v1944, 7
        %v2226 = vrot.slane %v2225, 2
        %v2227 = vrot.slane %v1952, 7
        %v2228 = vrot.slane %v2227, 2
        %v2229 = vrot.slane %v1960, 7
        %v2230 = vrot.slane %v2229, 2
        %v2231 = vrot.slane %v1959, 7
        %v2232 = vrot.slane %v2231, 2
        %v2233 = vrot.slane %v1961, 7
        %v2234 = vrot.slane %v2233, 2
        %v2235 = vrot.slane %v1969, 7
        %v2236 = vrot.slane %v2235, 2
        %v2237 = vrot.slane %v1977, 7
        %v2238 = vrot.slane %v2237, 2
        %v2239 = vrot.slane %v1976, 7
        %v2240 = vrot.slane %v2239, 2
        %v2241 = vrot.slane %v1978, 7
        %v2242 = vrot.slane %v2241, 2
        %v2243 = vrot.slane %v1986, 7
        %v2244 = vrot.slane %v2243, 2
        %v2245 = vrot.slane %v1994, 7
        %v2246 = vrot.slane %v2245, 2
        %v2247 = vrot.slane %v1993, 7
        %v2248 = vrot.slane %v2247, 2
        %v2249 = vrot.slane %v1995, 7
        %v2250 = vrot.slane %v2249, 2
        %v2251 = vrot.slane %v2003, 7
        %v2252 = vrot.slane %v2251, 2
        %v2253 = vrot.slane %v2011, 7
        %v2254 = vrot.slane %v2253, 2
        %v2255 = vrot.slane %v2010, 7
        %v2256 = vrot.slane %v2255, 2
        %v2257 = vrot.slane %v2012, 7
        %v2258 = vrot.slane %v2257, 2
        %v2259 = vrot.slane %v2020, 7
        %v2260 = vrot.slane %v2259, 2
        %v2261 = vrot.slane %v2028, 7
        %v2262 = vrot.slane %v2261, 2
        %v2263 = vrot.slane %v2027, 7
        %v2264 = vrot.slane %v2263, 2
        %v2265 = vrot.slane %v2029, 7
        %v2266 = vrot.slane %v2265, 2
        %v2267 = vrot.slane %v2037, 7
        %v2268 = vrot.slane %v2267, 2
        %v2269 = vrot.slane %v2045, 7
        %v2270 = vrot.slane %v2269, 2
        %v2271 = vrot.slane %v2044, 7
        %v2272 = vrot.slane %v2271, 2
        %v2273 = vrot.slane %v2046, 7
        %v2274 = vrot.slane %v2273, 2
        %v2275 = vrot.slane %v2054, 7
        %v2276 = vrot.slane %v2275, 2
        %v2277 = vrot.slane %v2062, 7
        %v2278 = vrot.slane %v2277, 2
        %v2279 = vrot.slane %v2061, 7
        %v2280 = vrot.slane %v2279, 2
        %v2281 = vrot.slane %v2063, 7
        %v2282 = vrot.slane %v2281, 2
        %v2283 = vrot.slane %v2071, 7
        %v2284 = vrot.slane %v2283, 2
        %v2285 = vrot.slane %v2079, 7
        %v2286 = vrot.slane %v2285, 2
        %v2287 = vrot.slane %v2078, 7
        %v2288 = vrot.slane %v2287, 2
        %v2289 = vrot.slane %v2080, 7
        %v2290 = vrot.slane %v2289, 2
        %v2291 = vrot.slane %v2088, 7
        %v2292 = vrot.slane %v2291, 2
        %v2293 = vrot.slane %v2096, 7
        %v2294 = vrot.slane %v2293, 2
        %v2295 = vrot.slane %v2095, 7
        %v2296 = vrot.slane %v2295, 2
        %v2297 = vrot.slane %v2097, 7
        %v2298 = vrot.slane %v2297, 2
        %v2299 = vrot.slane %v2105, 7
        %v2300 = vrot.slane %v2299, 2
        %v2301 = vrot.slane %v2113, 7
        %v2302 = vrot.slane %v2301, 2
        %v2303 = vrot.slane %v2112, 7
        %v2304 = vrot.slane %v2303, 2
        %v2305 = vrot.slane %v2114, 7
        %v2306 = vrot.slane %v2305, 2
        %v2371 = vmax.f32 %v1850, %v2180
        %v2372 = vmax.f32 %v1858, %v2182
        %v2373 = vmax.f32 %v1857, %v2184
        %v2374 = vmax.f32 %v1859, %v2186
        %v2375 = vmax.f32 %v1867, %v2188
        %v2376 = vmax.f32 %v1875, %v2190
        %v2377 = vmax.f32 %v1874, %v2192
        %v2378 = vmax.f32 %v1876, %v2194
        %v2379 = vmax.f32 %v1884, %v2196
        %v2380 = vmax.f32 %v1892, %v2198
        %v2381 = vmax.f32 %v1891, %v2200
        %v2382 = vmax.f32 %v1893, %v2202
        %v2383 = vmax.f32 %v1901, %v2204
        %v2384 = vmax.f32 %v1909, %v2206
        %v2385 = vmax.f32 %v1908, %v2208
        %v2386 = vmax.f32 %v1910, %v2210
        %v2387 = vmax.f32 %v1918, %v2212
        %v2388 = vmax.f32 %v1926, %v2214
        %v2389 = vmax.f32 %v1925, %v2216
        %v2390 = vmax.f32 %v1927, %v2218
        %v2391 = vmax.f32 %v1935, %v2220
        %v2392 = vmax.f32 %v1943, %v2222
        %v2393 = vmax.f32 %v1942, %v2224
        %v2394 = vmax.f32 %v1944, %v2226
        %v2395 = vmax.f32 %v1952, %v2228
        %v2396 = vmax.f32 %v1960, %v2230
        %v2397 = vmax.f32 %v1959, %v2232
        %v2398 = vmax.f32 %v1961, %v2234
        %v2399 = vmax.f32 %v1969, %v2236
        %v2400 = vmax.f32 %v1977, %v2238
        %v2401 = vmax.f32 %v1976, %v2240
        %v2402 = vmax.f32 %v1978, %v2242
        %v2403 = vmax.f32 %v1986, %v2244
        %v2404 = vmax.f32 %v1994, %v2246
        %v2405 = vmax.f32 %v1993, %v2248
        %v2406 = vmax.f32 %v1995, %v2250
        %v2407 = vmax.f32 %v2003, %v2252
        %v2408 = vmax.f32 %v2011, %v2254
        %v2409 = vmax.f32 %v2010, %v2256
        %v2410 = vmax.f32 %v2012, %v2258
        %v2411 = vmax.f32 %v2020, %v2260
        %v2412 = vmax.f32 %v2028, %v2262
        %v2413 = vmax.f32 %v2027, %v2264
        %v2414 = vmax.f32 %v2029, %v2266
        %v2415 = vmax.f32 %v2037, %v2268
        %v2416 = vmax.f32 %v2045, %v2270
        %v2417 = vmax.f32 %v2044, %v2272
        %v2418 = vmax.f32 %v2046, %v2274
        %v2419 = vmax.f32 %v2054, %v2276
        %v2420 = vmax.f32 %v2062, %v2278
        %v2421 = vmax.f32 %v2061, %v2280
        %v2422 = vmax.f32 %v2063, %v2282
        %v2423 = vmax.f32 %v2071, %v2284
        %v2424 = vmax.f32 %v2079, %v2286
        %v2425 = vmax.f32 %v2078, %v2288
        %v2426 = vmax.f32 %v2080, %v2290
        %v2427 = vmax.f32 %v2088, %v2292
        %v2428 = vmax.f32 %v2096, %v2294
        %v2429 = vmax.f32 %v2095, %v2296
        %v2430 = vmax.f32 %v2097, %v2298
        %v2431 = vmax.f32 %v2105, %v2300
        %v2432 = vmax.f32 %v2113, %v2302
        %v2433 = vmax.f32 %v2112, %v2304
        %v2434 = vmax.f32 %v2114, %v2306
        %vm2499 = vcmask 1044484
        %v2500 = vsel %vm2499, %v2371, %v2371
        %vm2501 = vcmask 1046534
        %v2502 = vsel %vm2501, %v2371, %v2500
        %v2503 = vrot.slane %v2372, 7
        %vm2504 = vcmask 1041409
        %v2505 = vsel %vm2504, %v2503, %v2502
        %vm2506 = vcmask 1043459
        %v2507 = vsel %vm2506, %v2503, %v2505
        %vm2508 = vcmask 1045509
        %v2509 = vsel %vm2508, %v2503, %v2507
        %vm2510 = vcmask 1047559
        %v2511 = vsel %vm2510, %v2503, %v2509
        %v2512 = vsel %vm2499, %v2373, %v2373
        %v2513 = vsel %vm2501, %v2373, %v2512
        %v2514 = vrot.slane %v2374, 7
        %v2515 = vsel %vm2504, %v2514, %v2513
        %v2516 = vsel %vm2506, %v2514, %v2515
        %v2517 = vsel %vm2508, %v2514, %v2516
        %v2518 = vsel %vm2510, %v2514, %v2517
        %v2519 = vsel %vm2499, %v2375, %v2375
        %v2520 = vsel %vm2501, %v2375, %v2519
        %v2521 = vrot.slane %v2376, 7
        %v2522 = vsel %vm2504, %v2521, %v2520
        %v2523 = vsel %vm2506, %v2521, %v2522
        %v2524 = vsel %vm2508, %v2521, %v2523
        %v2525 = vsel %vm2510, %v2521, %v2524
        %v2526 = vsel %vm2499, %v2377, %v2377
        %v2527 = vsel %vm2501, %v2377, %v2526
        %v2528 = vrot.slane %v2378, 7
        %v2529 = vsel %vm2504, %v2528, %v2527
        %v2530 = vsel %vm2506, %v2528, %v2529
        %v2531 = vsel %vm2508, %v2528, %v2530
        %v2532 = vsel %vm2510, %v2528, %v2531
        %v2533 = vsel %vm2499, %v2379, %v2379
        %v2534 = vsel %vm2501, %v2379, %v2533
        %v2535 = vrot.slane %v2380, 7
        %v2536 = vsel %vm2504, %v2535, %v2534
        %v2537 = vsel %vm2506, %v2535, %v2536
        %v2538 = vsel %vm2508, %v2535, %v2537
        %v2539 = vsel %vm2510, %v2535, %v2538
        %v2540 = vsel %vm2499, %v2381, %v2381
        %v2541 = vsel %vm2501, %v2381, %v2540
        %v2542 = vrot.slane %v2382, 7
        %v2543 = vsel %vm2504, %v2542, %v2541
        %v2544 = vsel %vm2506, %v2542, %v2543
        %v2545 = vsel %vm2508, %v2542, %v2544
        %v2546 = vsel %vm2510, %v2542, %v2545
        %v2547 = vsel %vm2499, %v2383, %v2383
        %v2548 = vsel %vm2501, %v2383, %v2547
        %v2549 = vrot.slane %v2384, 7
        %v2550 = vsel %vm2504, %v2549, %v2548
        %v2551 = vsel %vm2506, %v2549, %v2550
        %v2552 = vsel %vm2508, %v2549, %v2551
        %v2553 = vsel %vm2510, %v2549, %v2552
        %v2554 = vsel %vm2499, %v2385, %v2385
        %v2555 = vsel %vm2501, %v2385, %v2554
        %v2556 = vrot.slane %v2386, 7
        %v2557 = vsel %vm2504, %v2556, %v2555
        %v2558 = vsel %vm2506, %v2556, %v2557
        %v2559 = vsel %vm2508, %v2556, %v2558
        %v2560 = vsel %vm2510, %v2556, %v2559
        %v2561 = vsel %vm2499, %v2387, %v2387
        %v2562 = vsel %vm2501, %v2387, %v2561
        %v2563 = vrot.slane %v2388, 7
        %v2564 = vsel %vm2504, %v2563, %v2562
        %v2565 = vsel %vm2506, %v2563, %v2564
        %v2566 = vsel %vm2508, %v2563, %v2565
        %v2567 = vsel %vm2510, %v2563, %v2566
        %v2568 = vsel %vm2499, %v2389, %v2389
        %v2569 = vsel %vm2501, %v2389, %v2568
        %v2570 = vrot.slane %v2390, 7
        %v2571 = vsel %vm2504, %v2570, %v2569
        %v2572 = vsel %vm2506, %v2570, %v2571
        %v2573 = vsel %vm2508, %v2570, %v2572
        %v2574 = vsel %vm2510, %v2570, %v2573
        %v2575 = vsel %vm2499, %v2391, %v2391
        %v2576 = vsel %vm2501, %v2391, %v2575
        %v2577 = vrot.slane %v2392, 7
        %v2578 = vsel %vm2504, %v2577, %v2576
        %v2579 = vsel %vm2506, %v2577, %v2578
        %v2580 = vsel %vm2508, %v2577, %v2579
        %v2581 = vsel %vm2510, %v2577, %v2580
        %v2582 = vsel %vm2499, %v2393, %v2393
        %v2583 = vsel %vm2501, %v2393, %v2582
        %v2584 = vrot.slane %v2394, 7
        %v2585 = vsel %vm2504, %v2584, %v2583
        %v2586 = vsel %vm2506, %v2584, %v2585
        %v2587 = vsel %vm2508, %v2584, %v2586
        %v2588 = vsel %vm2510, %v2584, %v2587
        %v2589 = vsel %vm2499, %v2395, %v2395
        %v2590 = vsel %vm2501, %v2395, %v2589
        %v2591 = vrot.slane %v2396, 7
        %v2592 = vsel %vm2504, %v2591, %v2590
        %v2593 = vsel %vm2506, %v2591, %v2592
        %v2594 = vsel %vm2508, %v2591, %v2593
        %v2595 = vsel %vm2510, %v2591, %v2594
        %v2596 = vsel %vm2499, %v2397, %v2397
        %v2597 = vsel %vm2501, %v2397, %v2596
        %v2598 = vrot.slane %v2398, 7
        %v2599 = vsel %vm2504, %v2598, %v2597
        %v2600 = vsel %vm2506, %v2598, %v2599
        %v2601 = vsel %vm2508, %v2598, %v2600
        %v2602 = vsel %vm2510, %v2598, %v2601
        %v2603 = vsel %vm2499, %v2399, %v2399
        %v2604 = vsel %vm2501, %v2399, %v2603
        %v2605 = vrot.slane %v2400, 7
        %v2606 = vsel %vm2504, %v2605, %v2604
        %v2607 = vsel %vm2506, %v2605, %v2606
        %v2608 = vsel %vm2508, %v2605, %v2607
        %v2609 = vsel %vm2510, %v2605, %v2608
        %v2610 = vsel %vm2499, %v2401, %v2401
        %v2611 = vsel %vm2501, %v2401, %v2610
        %v2612 = vrot.slane %v2402, 7
        %v2613 = vsel %vm2504, %v2612, %v2611
        %v2614 = vsel %vm2506, %v2612, %v2613
        %v2615 = vsel %vm2508, %v2612, %v2614
        %v2616 = vsel %vm2510, %v2612, %v2615
        %v2617 = vsel %vm2499, %v2403, %v2403
        %v2618 = vsel %vm2501, %v2403, %v2617
        %v2619 = vrot.slane %v2404, 7
        %v2620 = vsel %vm2504, %v2619, %v2618
        %v2621 = vsel %vm2506, %v2619, %v2620
        %v2622 = vsel %vm2508, %v2619, %v2621
        %v2623 = vsel %vm2510, %v2619, %v2622
        %v2624 = vsel %vm2499, %v2405, %v2405
        %v2625 = vsel %vm2501, %v2405, %v2624
        %v2626 = vrot.slane %v2406, 7
        %v2627 = vsel %vm2504, %v2626, %v2625
        %v2628 = vsel %vm2506, %v2626, %v2627
        %v2629 = vsel %vm2508, %v2626, %v2628
        %v2630 = vsel %vm2510, %v2626, %v2629
        %v2631 = vsel %vm2499, %v2407, %v2407
        %v2632 = vsel %vm2501, %v2407, %v2631
        %v2633 = vrot.slane %v2408, 7
        %v2634 = vsel %vm2504, %v2633, %v2632
        %v2635 = vsel %vm2506, %v2633, %v2634
        %v2636 = vsel %vm2508, %v2633, %v2635
        %v2637 = vsel %vm2510, %v2633, %v2636
        %v2638 = vsel %vm2499, %v2409, %v2409
        %v2639 = vsel %vm2501, %v2409, %v2638
        %v2640 = vrot.slane %v2410, 7
        %v2641 = vsel %vm2504, %v2640, %v2639
        %v2642 = vsel %vm2506, %v2640, %v2641
        %v2643 = vsel %vm2508, %v2640, %v2642
        %v2644 = vsel %vm2510, %v2640, %v2643
        %v2645 = vsel %vm2499, %v2411, %v2411
        %v2646 = vsel %vm2501, %v2411, %v2645
        %v2647 = vrot.slane %v2412, 7
        %v2648 = vsel %vm2504, %v2647, %v2646
        %v2649 = vsel %vm2506, %v2647, %v2648
        %v2650 = vsel %vm2508, %v2647, %v2649
        %v2651 = vsel %vm2510, %v2647, %v2650
        %v2652 = vsel %vm2499, %v2413, %v2413
        %v2653 = vsel %vm2501, %v2413, %v2652
        %v2654 = vrot.slane %v2414, 7
        %v2655 = vsel %vm2504, %v2654, %v2653
        %v2656 = vsel %vm2506, %v2654, %v2655
        %v2657 = vsel %vm2508, %v2654, %v2656
        %v2658 = vsel %vm2510, %v2654, %v2657
        %v2659 = vsel %vm2499, %v2415, %v2415
        %v2660 = vsel %vm2501, %v2415, %v2659
        %v2661 = vrot.slane %v2416, 7
        %v2662 = vsel %vm2504, %v2661, %v2660
        %v2663 = vsel %vm2506, %v2661, %v2662
        %v2664 = vsel %vm2508, %v2661, %v2663
        %v2665 = vsel %vm2510, %v2661, %v2664
        %v2666 = vsel %vm2499, %v2417, %v2417
        %v2667 = vsel %vm2501, %v2417, %v2666
        %v2668 = vrot.slane %v2418, 7
        %v2669 = vsel %vm2504, %v2668, %v2667
        %v2670 = vsel %vm2506, %v2668, %v2669
        %v2671 = vsel %vm2508, %v2668, %v2670
        %v2672 = vsel %vm2510, %v2668, %v2671
        %v2673 = vsel %vm2499, %v2419, %v2419
        %v2674 = vsel %vm2501, %v2419, %v2673
        %v2675 = vrot.slane %v2420, 7
        %v2676 = vsel %vm2504, %v2675, %v2674
        %v2677 = vsel %vm2506, %v2675, %v2676
        %v2678 = vsel %vm2508, %v2675, %v2677
        %v2679 = vsel %vm2510, %v2675, %v2678
        %v2680 = vsel %vm2499, %v2421, %v2421
        %v2681 = vsel %vm2501, %v2421, %v2680
        %v2682 = vrot.slane %v2422, 7
        %v2683 = vsel %vm2504, %v2682, %v2681
        %v2684 = vsel %vm2506, %v2682, %v2683
        %v2685 = vsel %vm2508, %v2682, %v2684
        %v2686 = vsel %vm2510, %v2682, %v2685
        %v2687 = vsel %vm2499, %v2423, %v2423
        %v2688 = vsel %vm2501, %v2423, %v2687
        %v2689 = vrot.slane %v2424, 7
        %v2690 = vsel %vm2504, %v2689, %v2688
        %v2691 = vsel %vm2506, %v2689, %v2690
        %v2692 = vsel %vm2508, %v2689, %v2691
        %v2693 = vsel %vm2510, %v2689, %v2692
        %v2694 = vsel %vm2499, %v2425, %v2425
        %v2695 = vsel %vm2501, %v2425, %v2694
        %v2696 = vrot.slane %v2426, 7
        %v2697 = vsel %vm2504, %v2696, %v2695
        %v2698 = vsel %vm2506, %v2696, %v2697
        %v2699 = vsel %vm2508, %v2696, %v2698
        %v2700 = vsel %vm2510, %v2696, %v2699
        %v2701 = vsel %vm2499, %v2427, %v2427
        %v2702 = vsel %vm2501, %v2427, %v2701
        %v2703 = vrot.slane %v2428, 7
        %v2704 = vsel %vm2504, %v2703, %v2702
        %v2705 = vsel %vm2506, %v2703, %v2704
        %v2706 = vsel %vm2508, %v2703, %v2705
        %v2707 = vsel %vm2510, %v2703, %v2706
        %v2708 = vsel %vm2499, %v2429, %v2429
        %v2709 = vsel %vm2501, %v2429, %v2708
        %v2710 = vrot.slane %v2430, 7
        %v2711 = vsel %vm2504, %v2710, %v2709
        %v2712 = vsel %vm2506, %v2710, %v2711
        %v2713 = vsel %vm2508, %v2710, %v2712
        %v2714 = vsel %vm2510, %v2710, %v2713
        %v2715 = vsel %vm2499, %v2431, %v2431
        %v2716 = vsel %vm2501, %v2431, %v2715
        %v2717 = vrot.slane %v2432, 7
        %v2718 = vsel %vm2504, %v2717, %v2716
        %v2719 = vsel %vm2506, %v2717, %v2718
        %v2720 = vsel %vm2508, %v2717, %v2719
        %v2721 = vsel %vm2510, %v2717, %v2720
        %v2722 = vsel %vm2499, %v2433, %v2433
        %v2723 = vsel %vm2501, %v2433, %v2722
        %v2724 = vrot.slane %v2434, 7
        %v2725 = vsel %vm2504, %v2724, %v2723
        %v2726 = vsel %vm2506, %v2724, %v2725
        %v2727 = vsel %vm2508, %v2724, %v2726
        %v2728 = vsel %vm2510, %v2724, %v2727
        %v2761 = vcombine.low %v2511, %v2539
        %v2763 = vunpack.c.l.s4 1934713408
        %v2764 = vunpack.c.0.s8 %v2763
        %v2765 = vlaneseq
        %v2766 = vshrl.u32 %v2765, 7
        %v2767 = vsub.s32 %v2764, %v2766
        %v2768 = vrot.slane %v2761, %v2767
        %v2769 = vcombine.high %v2768, 0.0
        %v2770 = vcombine.low %v2567, %v2595
        %v2772 = vunpack.c.l.s4 1934713408
        %v2773 = vunpack.c.0.s8 %v2772
        %v2774 = vlaneseq
        %v2775 = vshrl.u32 %v2774, 7
        %v2776 = vsub.s32 %v2773, %v2775
        %v2777 = vrot.slane %v2770, %v2776
        %v2778 = vcombine.high %v2777, 0.0
        %v2779 = vcombine.low %v2623, %v2651
        %v2781 = vunpack.c.l.s4 1934713408
        %v2782 = vunpack.c.0.s8 %v2781
        %v2783 = vlaneseq
        %v2784 = vshrl.u32 %v2783, 7
        %v2785 = vsub.s32 %v2782, %v2784
        %v2786 = vrot.slane %v2779, %v2785
        %v2787 = vcombine.high %v2786, 0.0
        %v2788 = vcombine.low %v2679, %v2707
        %v2790 = vunpack.c.l.s4 1934713408
        %v2791 = vunpack.c.0.s8 %v2790
        %v2792 = vlaneseq
        %v2793 = vshrl.u32 %v2792, 7
        %v2794 = vsub.s32 %v2791, %v2793
        %v2795 = vrot.slane %v2788, %v2794
        %v2796 = vcombine.high %v2795, 0.0
        %v2797 = vcombine.low %v2518, %v2546
        %v2799 = vunpack.c.l.s4 1934713408
        %v2800 = vunpack.c.0.s8 %v2799
        %v2801 = vlaneseq
        %v2802 = vshrl.u32 %v2801, 7
        %v2803 = vsub.s32 %v2800, %v2802
        %v2804 = vrot.slane %v2797, %v2803
        %v2805 = vcombine.high %v2804, 0.0
        %v2806 = vcombine.low %v2574, %v2602
        %v2808 = vunpack.c.l.s4 1934713408
        %v2809 = vunpack.c.0.s8 %v2808
        %v2810 = vlaneseq
        %v2811 = vshrl.u32 %v2810, 7
        %v2812 = vsub.s32 %v2809, %v2811
        %v2813 = vrot.slane %v2806, %v2812
        %v2814 = vcombine.high %v2813, 0.0
        %v2815 = vcombine.low %v2630, %v2658
        %v2817 = vunpack.c.l.s4 1934713408
        %v2818 = vunpack.c.0.s8 %v2817
        %v2819 = vlaneseq
        %v2820 = vshrl.u32 %v2819, 7
        %v2821 = vsub.s32 %v2818, %v2820
        %v2822 = vrot.slane %v2815, %v2821
        %v2823 = vcombine.high %v2822, 0.0
        %v2824 = vcombine.low %v2686, %v2714
        %v2826 = vunpack.c.l.s4 1934713408
        %v2827 = vunpack.c.0.s8 %v2826
        %v2828 = vlaneseq
        %v2829 = vshrl.u32 %v2828, 7
        %v2830 = vsub.s32 %v2827, %v2829
        %v2831 = vrot.slane %v2824, %v2830
        %v2832 = vcombine.high %v2831, 0.0
        %v2833 = vcombine.low %v2525, %v2553
        %v2835 = vunpack.c.l.s4 1934713408
        %v2836 = vunpack.c.0.s8 %v2835
        %v2837 = vlaneseq
        %v2838 = vshrl.u32 %v2837, 7
        %v2839 = vsub.s32 %v2836, %v2838
        %v2840 = vrot.slane %v2833, %v2839
        %v2841 = vcombine.high %v2840, 0.0
        %v2842 = vcombine.low %v2581, %v2609
        %v2844 = vunpack.c.l.s4 1934713408
        %v2845 = vunpack.c.0.s8 %v2844
        %v2846 = vlaneseq
        %v2847 = vshrl.u32 %v2846, 7
        %v2848 = vsub.s32 %v2845, %v2847
        %v2849 = vrot.slane %v2842, %v2848
        %v2850 = vcombine.high %v2849, 0.0
        %v2851 = vcombine.low %v2637, %v2665
        %v2853 = vunpack.c.l.s4 1934713408
        %v2854 = vunpack.c.0.s8 %v2853
        %v2855 = vlaneseq
        %v2856 = vshrl.u32 %v2855, 7
        %v2857 = vsub.s32 %v2854, %v2856
        %v2858 = vrot.slane %v2851, %v2857
        %v2859 = vcombine.high %v2858, 0.0
        %v2860 = vcombine.low %v2693, %v2721
        %v2862 = vunpack.c.l.s4 1934713408
        %v2863 = vunpack.c.0.s8 %v2862
        %v2864 = vlaneseq
        %v2865 = vshrl.u32 %v2864, 7
        %v2866 = vsub.s32 %v2863, %v2865
        %v2867 = vrot.slane %v2860, %v2866
        %v2868 = vcombine.high %v2867, 0.0
        %v2869 = vcombine.low %v2532, %v2560
        %v2871 = vunpack.c.l.s4 1934713408
        %v2872 = vunpack.c.0.s8 %v2871
        %v2873 = vlaneseq
        %v2874 = vshrl.u32 %v2873, 7
        %v2875 = vsub.s32 %v2872, %v2874
        %v2876 = vrot.slane %v2869, %v2875
        %v2877 = vcombine.high %v2876, 0.0
        %v2878 = vcombine.low %v2588, %v2616
        %v2880 = vunpack.c.l.s4 1934713408
        %v2881 = vunpack.c.0.s8 %v2880
        %v2882 = vlaneseq
        %v2883 = vshrl.u32 %v2882, 7
        %v2884 = vsub.s32 %v2881, %v2883
        %v2885 = vrot.slane %v2878, %v2884
        %v2886 = vcombine.high %v2885, 0.0
        %v2887 = vcombine.low %v2644, %v2672
        %v2889 = vunpack.c.l.s4 1934713408
        %v2890 = vunpack.c.0.s8 %v2889
        %v2891 = vlaneseq
        %v2892 = vshrl.u32 %v2891, 7
        %v2893 = vsub.s32 %v2890, %v2892
        %v2894 = vrot.slane %v2887, %v2893
        %v2895 = vcombine.high %v2894, 0.0
        %v2896 = vcombine.low %v2700, %v2728
        %v2898 = vunpack.c.l.s4 1934713408
        %v2899 = vunpack.c.0.s8 %v2898
        %v2900 = vlaneseq
        %v2901 = vshrl.u32 %v2900, 7
        %v2902 = vsub.s32 %v2899, %v2901
        %v2903 = vrot.slane %v2896, %v2902
        %v2904 = vcombine.high %v2903, 0.0
        %v2909 = vcombine.low %v2768, %v2777
        %v2910 = vcombine.low %v2786, %v2795
        %v2912 = vunpack.c.l.s4 1983009808
        %v2913 = vunpack.c.0.s8 %v2912
        %v2914 = vlaneseq
        %v2915 = vshrl.u32 %v2914, 7
        %v2916 = vsub.s32 %v2913, %v2915
        %v2917 = vrot.slane %v2909, %v2916
        %v2919 = vunpack.c.l.s4 1983009808
        %v2920 = vunpack.c.0.s8 %v2919
        %v2921 = vlaneseq
        %v2922 = vshrl.u32 %v2921, 7
        %v2923 = vsub.s32 %v2920, %v2922
        %v2924 = vrot.slane %v2910, %v2923
        %v2925 = vcombine.low %v2917, %v2924
        %v2931 = vcombine.low %v2769, %v2778
        %v2932 = vcombine.low %v2787, %v2796
        %v2934 = vunpack.c.l.s4 1983009808
        %v2935 = vunpack.c.0.s8 %v2934
        %v2936 = vlaneseq
        %v2937 = vshrl.u32 %v2936, 7
        %v2938 = vsub.s32 %v2935, %v2937
        %v2939 = vrot.slane %v2931, %v2938
        %v2941 = vunpack.c.l.s4 1983009808
        %v2942 = vunpack.c.0.s8 %v2941
        %v2943 = vlaneseq
        %v2944 = vshrl.u32 %v2943, 7
        %v2945 = vsub.s32 %v2942, %v2944
        %v2946 = vrot.slane %v2932, %v2945
        %v2947 = vcombine.low %v2939, %v2946
        %2948 = vrot.lane.b32.xlu0 %v2947, 32
        %v2949 = vpop.permute.xlu0 %2948
        %v2955 = vcombine.low %v2804, %v2813
        %v2956 = vcombine.low %v2822, %v2831
        %v2958 = vunpack.c.l.s4 1983009808
        %v2959 = vunpack.c.0.s8 %v2958
        %v2960 = vlaneseq
        %v2961 = vshrl.u32 %v2960, 7
        %v2962 = vsub.s32 %v2959, %v2961
        %v2963 = vrot.slane %v2955, %v2962
        %v2965 = vunpack.c.l.s4 1983009808
        %v2966 = vunpack.c.0.s8 %v2965
        %v2967 = vlaneseq
        %v2968 = vshrl.u32 %v2967, 7
        %v2969 = vsub.s32 %v2966, %v2968
        %v2970 = vrot.slane %v2956, %v2969
        %v2971 = vcombine.low %v2963, %v2970
        %2972 = vrot.lane.b32.xlu0 %v2971, 64
        %v2973 = vpop.permute.xlu0 %2972
        %v2979 = vcombine.low %v2805, %v2814
        %v2980 = vcombine.low %v2823, %v2832
        %v2982 = vunpack.c.l.s4 1983009808
        %v2983 = vunpack.c.0.s8 %v2982
        %v2984 = vlaneseq
        %v2985 = vshrl.u32 %v2984, 7
        %v2986 = vsub.s32 %v2983, %v2985
        %v2987 = vrot.slane %v2979, %v2986
        %v2989 = vunpack.c.l.s4 1983009808
        %v2990 = vunpack.c.0.s8 %v2989
        %v2991 = vlaneseq
        %v2992 = vshrl.u32 %v2991, 7
        %v2993 = vsub.s32 %v2990, %v2992
        %v2994 = vrot.slane %v2980, %v2993
        %v2995 = vcombine.low %v2987, %v2994
        %2996 = vrot.lane.b32.xlu0 %v2995, 96
        %v2997 = vpop.permute.xlu0 %2996
        %v3003 = vcombine.low %v2840, %v2849
        %v3004 = vcombine.low %v2858, %v2867
        %v3006 = vunpack.c.l.s4 1983009808
        %v3007 = vunpack.c.0.s8 %v3006
        %v3008 = vlaneseq
        %v3009 = vshrl.u32 %v3008, 7
        %v3010 = vsub.s32 %v3007, %v3009
        %v3011 = vrot.slane %v3003, %v3010
        %v3013 = vunpack.c.l.s4 1983009808
        %v3014 = vunpack.c.0.s8 %v3013
        %v3015 = vlaneseq
        %v3016 = vshrl.u32 %v3015, 7
        %v3017 = vsub.s32 %v3014, %v3016
        %v3018 = vrot.slane %v3004, %v3017
        %v3019 = vcombine.low %v3011, %v3018
        %v3025 = vcombine.low %v2841, %v2850
        %v3026 = vcombine.low %v2859, %v2868
        %v3028 = vunpack.c.l.s4 1983009808
        %v3029 = vunpack.c.0.s8 %v3028
        %v3030 = vlaneseq
        %v3031 = vshrl.u32 %v3030, 7
        %v3032 = vsub.s32 %v3029, %v3031
        %v3033 = vrot.slane %v3025, %v3032
        %v3035 = vunpack.c.l.s4 1983009808
        %v3036 = vunpack.c.0.s8 %v3035
        %v3037 = vlaneseq
        %v3038 = vshrl.u32 %v3037, 7
        %v3039 = vsub.s32 %v3036, %v3038
        %v3040 = vrot.slane %v3026, %v3039
        %v3041 = vcombine.low %v3033, %v3040
        %3042 = vrot.lane.b32.xlu0 %v3041, 32
        %v3043 = vpop.permute.xlu0 %3042
        %v3049 = vcombine.low %v2876, %v2885
        %v3050 = vcombine.low %v2894, %v2903
        %v3052 = vunpack.c.l.s4 1983009808
        %v3053 = vunpack.c.0.s8 %v3052
        %v3054 = vlaneseq
        %v3055 = vshrl.u32 %v3054, 7
        %v3056 = vsub.s32 %v3053, %v3055
        %v3057 = vrot.slane %v3049, %v3056
        %v3059 = vunpack.c.l.s4 1983009808
        %v3060 = vunpack.c.0.s8 %v3059
        %v3061 = vlaneseq
        %v3062 = vshrl.u32 %v3061, 7
        %v3063 = vsub.s32 %v3060, %v3062
        %v3064 = vrot.slane %v3050, %v3063
        %v3065 = vcombine.low %v3057, %v3064
        %3066 = vrot.lane.b32.xlu0 %v3065, 64
        %v3067 = vpop.permute.xlu0 %3066
        %v3073 = vcombine.low %v2877, %v2886
        %v3074 = vcombine.low %v2895, %v2904
        %v3076 = vunpack.c.l.s4 1983009808
        %v3077 = vunpack.c.0.s8 %v3076
        %v3078 = vlaneseq
        %v3079 = vshrl.u32 %v3078, 7
        %v3080 = vsub.s32 %v3077, %v3079
        %v3081 = vrot.slane %v3073, %v3080
        %v3083 = vunpack.c.l.s4 1983009808
        %v3084 = vunpack.c.0.s8 %v3083
        %v3085 = vlaneseq
        %v3086 = vshrl.u32 %v3085, 7
        %v3087 = vsub.s32 %v3084, %v3086
        %v3088 = vrot.slane %v3074, %v3087
        %v3089 = vcombine.low %v3081, %v3088
        %3090 = vrot.lane.b32.xlu0 %v3089, 96
        %v3091 = vpop.permute.xlu0 %3090
        %v3093 = vsel %vm1261, %v2925, %v2949
        %v3094 = vsel %vm1327, %v3093, %v2973
        %v3095 = vsel %vm1393, %v3094, %v2997
        %v3096 = vsel %vm1261, %v3019, %v3043
        %v3097 = vsel %vm1327, %v3096, %v3067
        %v3098 = vsel %vm1393, %v3097, %v3091
        %3099 = vst [vmem:[%s229] sm:$0xff] %v3095
        %3100 = vst [vmem:[%s229 + $0x8] sm:$0xff] %v3098
        %s3101 = sand.u32 %s111, 1
        %s3102 = scalar_lea.sflag [#allocation4], %s3101
        %s3103 = sand.u32 %s111, 1
        %s3104 = smul.addr %s3103, 16
        %s3105 = scalar_lea.vmem [#allocation8], %s3104
        // Predicated region
        $region45: #{simple_cnn_forward.4} parent=31 // pred_check
          %p3106 = pneg %p121
        $region46: #{simple_cnn_forward.4} parent=31 // pred_check_branch
          %3108 = sbr.rel (%p3106) target = $region48
        $region47: #{simple_cnn_forward.4} parent=31 // pred_region
          %s3110 = ssub.s32 256, 256
          %3111 = vsyncadd %s3102, %s3110
          %s3112 = smul.addr %s26, 2
          %s3113 = smul.addr %s25, 2
          %s3114 = sadd.s32 %s3112, %s3113
          %s3115 = smul.addr %s3114, 128
          %s3116 = scalar_lea.hbm %s3, %s3115
          %s3118 = sshll.u32 %s3105, 4
          %s3119 = int_to_ptr.vmem [resolvable:$true] %s3118
          %3121 = dma.vmem_to_hbm [thread:$0]  %s3119, 256, %s3116, %s3102
        $region48: #{simple_cnn_forward.4} parent=31 // pred_fallthru
          _
      $region32: #{simple_cnn_forward.4} parent=5 // pred_fallthru
        _
      %p3122 = scmp.le.s32.totalorder 2, %s16
      // Predicated region
      $region49: #{simple_cnn_forward.4} parent=5 // pred_check
        %p3123 = pneg %p3122
      $region50: #{simple_cnn_forward.4} parent=5 // pred_check_branch
        %3125 = sbr.rel (%p3123) target = $region52
      $region51: #{simple_cnn_forward.4} parent=5 // pred_region
        %s3126 = ssub.s32 %s16, 2
        // Predicated region
        $region53: #{simple_cnn_forward.4} parent=51 // pred_check
          %p3127 = pneg %p127
        $region54: #{simple_cnn_forward.4} parent=51 // pred_check_branch
          %3129 = sbr.rel (%p3127) target = $region56
        $region55: #{simple_cnn_forward.4} parent=51 // pred_region
          %s3130 = sand.u32 %s112, 1
          %s3131 = scalar_lea.sflag [#allocation4], %s3130
          %s3132 = sand.u32 %s112, 1
          %s3133 = smul.addr %s3132, 16
          %s3134 = scalar_lea.vmem [#allocation8], %s3133
          %3135 = dma.done %s3131, 256
        $region56: #{simple_cnn_forward.4} parent=51 // pred_fallthru
          _
      $region52: #{simple_cnn_forward.4} parent=5 // pred_fallthru
        _
    $region6: #{simple_cnn_forward.4} parent=1 // loop_footer
      %s20 = sadd.s32 1, %s16
    $region7: #{simple_cnn_forward.4} parent=1 // loop_footer_branch
      %15 = sbr.rel target = $region3
    $region8: #{simple_cnn_forward.4} parent=1 // loop_exit
      _
    %3136 = vsyncpa [#allocation3], 1
    %s3137 = scalar_lea.sflag [#allocation3], 1
    %3138 = vsyncpa %s3137, 1
    %3139 = vsyncpa [#allocation6], 1
    %3140 = vsyncpa [#allocation4], 1
    %s3141 = scalar_lea.sflag [#allocation4], 1
    %3142 = vsyncpa %s3141, 1

</llo_original>
